<compile_context>
chip_gen: v5e
topology: v5e:2x2
jax: 0.10.0
libtpu: 0.0.40
codegen_flags: <defaults>
</compile_context>

<pallas_src>
import functools

import jax
import jax.numpy as jnp
import numpy as np
from jax import lax
from jax.experimental import pallas as pl
from jax.experimental.pallas import tpu as pltpu


def _fused_kernel(x_ref, wr_ref, wrt_ref, wqkv_ref, wot_ref, g_ref, b_ref,
                  o_ref, pad_ref, slab_ref, *, B, H, W, Cin, C, eps):
    P = H * W
    M = B * P
    K1 = 9 * Cin
    K2 = 9 * C
    scale = 1.0 / float(C) ** 0.5
    inv_n = 1.0 / float(P * C)

    def build_slab(cin):
        # im2col: 9 strided (sublane-only) copies of the padded buffer's
        # interior windows into tap-major column blocks of the slab scratch.
        xp = pad_ref[...]
        for t in range(9):
            ky, kx = divmod(t, 3)
            patch = xp[:, ky:ky + H, kx:kx + W, :cin]            # (B, H, W, cin)
            slab_ref[:, t * cin:(t + 1) * cin] = patch.reshape(M, cin)

    # Zero the padded scratch ONCE; every stage below rewrites only the
    # interior, so the 1-pixel zero halo stays valid for all four convs.
    pad_ref[...] = jnp.zeros_like(pad_ref)

    # ---- conv_reduce: one im2col matmul (M, 9*Cin) x (9*Cin, C) -------------
    pad_ref[:, 1:H + 1, 1:W + 1, :Cin] = x_ref[...]
    build_slab(Cin)
    slab1 = slab_ref[:, :K1]
    feat = jnp.dot(slab1, wr_ref[...],
                   preferred_element_type=jnp.float32)            # (M, C)
    # Transposed residual (C, M): one extra tiny MXU matmul (contracting both
    # operands' last axis, the q@k.T pattern) instead of an in-kernel transpose.
    feat_t = lax.dot_general(wrt_ref[...], slab1,
                             (((1,), (1,)), ((), ())),
                             preferred_element_type=jnp.float32)  # (C, M)

    # ---- fused q/k/v conv for BOTH branches: (M, 9C) x (9C, 6C) -------------
    pad_ref[:, 1:H + 1, 1:W + 1, :C] = feat.reshape(B, H, W, C)
    build_slab(C)
    qkv = jnp.dot(slab_ref[:, :K2], wqkv_ref[...],
                  preferred_element_type=jnp.float32)             # (M, 6C)

    gamma = g_ref[...]   # (1, C)
    beta = b_ref[...]    # (1, C)

    for br in range(2):
        q = qkv[:, (3 * br + 0) * C:(3 * br + 1) * C]
        k = qkv[:, (3 * br + 1) * C:(3 * br + 2) * C]
        v = qkv[:, (3 * br + 2) * C:(3 * br + 3) * C]

        # Cross-batch attention vectorised over all M rows: shifting by d*P
        # rows aligns each pixel of image i with image (i + d) mod B.
        logits, vals = [], []
        for d in range(B):
            if d == 0:
                ks, vs = k, v
            else:
                off = d * P   # static shift == pltpu.roll(k, d*P, axis=0)
                ks = jnp.concatenate([k[off:, :], k[:off, :]], axis=0)
                vs = jnp.concatenate([v[off:, :], v[:off, :]], axis=0)
            logits.append(jnp.sum(q * ks, axis=-1, keepdims=True) * scale)
            vals.append(vs)
        mx = logits[0]
        for d in range(1, B):
            mx = jnp.maximum(mx, logits[d])
        es = [jnp.exp(s - mx) for s in logits]
        denom = es[0]
        for d in range(1, B):
            denom = denom + es[d]
        # approx=True would go to the EUP slot but risks the 1e-4 check below.
        inv = pl.reciprocal(denom, approx=False)                  # (M, 1)
        virt = (es[0] * inv) * vals[0]
        for d in range(1, B):
            virt = virt + (es[d] * inv) * vals[d]                 # (M, C)

        # GroupNorm(num_groups=1) + ReLU per image, one-pass stats over (C,H,W);
        # the result refills the (still zero-bordered) padded buffer.
        for i in range(B):
            blk = virt[i * P:(i + 1) * P, :]
            mean = jnp.sum(blk) * inv_n
            var = jnp.sum(blk * blk) * inv_n - mean * mean
            y = (blk - mean) * lax.rsqrt(var + eps)
            y = jnp.maximum(y * gamma + beta, 0.0)
            pad_ref[i:i + 1, 1:H + 1, 1:W + 1, :C] = y.reshape(1, H, W, C)

        # TODO(synk): nn.Dropout(0.2) is identity in eval mode; not implemented.

        # ---- output 3x3 conv + residual, computed directly in (C, M) layout -
        build_slab(C)
        out_t = lax.dot_general(wot_ref[br], slab_ref[:, :K2],
                                (((1,), (1,)), ((), ())),
                                preferred_element_type=jnp.float32) + feat_t
        for i in range(B):
            o_ref[br, i, :, :] = out_t[:, i * P:(i + 1) * P].astype(o_ref.dtype)


def pack_params(params):
    """One-time weight packing into tap-major MXU slabs (hoisted out of the
    per-call forward per the perf review)."""
    def tap(w):                   # HWIO (3,3,Ci,Co) -> (9*Ci, Co), tap-major rows
        return w.reshape(9 * w.shape[2], w.shape[3])

    wr = tap(params['w_reduce'])                                     # (9*Cin, C)
    wqkv = jnp.concatenate(
        [tap(params['w_q1']), tap(params['w_k1']), tap(params['w_v1']),
         tap(params['w_q2']), tap(params['w_k2']), tap(params['w_v2'])],
        axis=1)                                                      # (9C, 6C)
    wot = jnp.stack([tap(params['w_c1']).T, tap(params['w_c2']).T])  # (2, C, 9C)
    return {
        'wr': wr,
        'wrt': wr.T,                                                 # (C, 9*Cin)
        'wqkv': wqkv,
        'wot': wot,
        'gamma': params['gn_gamma'],                                 # (1, C)
        'beta': params['gn_beta'],                                   # (1, C)
    }


@functools.partial(jax.jit, static_argnums=(4,))
def monkey_forward(packed, status, rois, bbox_feat, hidden_dim):
    """Pallas forward.  status / rois are unused by the nostatus module."""
    del status, rois
    x = jnp.squeeze(bbox_feat, axis=2)            # (B, Cin, H, W)
    x = jnp.transpose(x, (0, 2, 3, 1))            # NHWC (tiny, fused in this jit)
    B, H, W, Cin = x.shape
    C = hidden_dim
    P = H * W
    M = B * P
    Cmax = max(Cin, C)

    kern = functools.partial(_fused_kernel, B=B, H=H, W=W, Cin=Cin, C=C,
                             eps=1e-5)

    out = pl.pallas_call(
        kern,
        out_shape=jax.ShapeDtypeStruct((2, B, C, P), jnp.float32),
        grid=(1,),
        in_specs=[
            pl.BlockSpec((B, H, W, Cin), lambda i: (0, 0, 0, 0)),
            pl.BlockSpec((9 * Cin, C), lambda i: (0, 0)),
            pl.BlockSpec((C, 9 * Cin), lambda i: (0, 0)),
            pl.BlockSpec((9 * C, 6 * C), lambda i: (0, 0)),
            pl.BlockSpec((2, C, 9 * C), lambda i: (0, 0, 0)),
            pl.BlockSpec((1, C), lambda i: (0, 0)),
            pl.BlockSpec((1, C), lambda i: (0, 0)),
        ],
        out_specs=pl.BlockSpec((2, B, C, P), lambda i: (0, 0, 0, 0)),
        scratch_shapes=[
            pltpu.VMEM((B, H + 2, W + 2, Cmax), jnp.float32),   # padded feature buf
            pltpu.VMEM((M, 9 * Cmax), jnp.float32),             # im2col slab
        ],
    )(x, packed['wr'], packed['wrt'], packed['wqkv'], packed['wot'],
      packed['gamma'], packed['beta'])

    out = out.reshape(2, B, C, 1, H, W)           # contiguous -> free reshape
    return [out[0], out[1]]


# ----------------------------------------------------------------------------
# Pure-JAX reference (for correctness check)
# ----------------------------------------------------------------------------
def _conv_ref(x_nhwc, w_kkio):
    return jax.lax.conv_general_dilated(
        x_nhwc, w_kkio, window_strides=(1, 1), padding='SAME',
        dimension_numbers=('NHWC', 'HWIO', 'NHWC'))


def monkey_forward_ref(params, status, rois, bbox_feat, hidden_dim):
    del status, rois
    x = jnp.squeeze(bbox_feat, axis=2)
    x = jnp.transpose(x, (0, 2, 3, 1))
    feat = _conv_ref(x, params['w_reduce'])

    def attn(qw, kw, vw):
        q = _conv_ref(feat, qw)
        k = _conv_ref(feat, kw)
        v = _conv_ref(feat, vw)
        att = jnp.einsum('ihwc,jhwc->ijhw', q, k) / float(hidden_dim) ** 0.5
        att = jax.nn.softmax(att, axis=1)
        return jnp.einsum('ijhw,jhwc->ihwc', att, v)

    def gn_relu(t):
        mean = jnp.mean(t, axis=(1, 2, 3), keepdims=True)
        var = jnp.mean((t - mean) ** 2, axis=(1, 2, 3), keepdims=True)
        y = (t - mean) / jnp.sqrt(var + 1e-5)
        y = y * params['gn_gamma'][0] + params['gn_beta'][0]
        return jnp.maximum(y, 0.0)

    virt1 = gn_relu(attn(params['w_q1'], params['w_k1'], params['w_v1']))
    virt2 = gn_relu(attn(params['w_q2'], params['w_k2'], params['w_v2']))
    o1 = _conv_ref(virt1, params['w_c1']) + feat
    o2 = _conv_ref(virt2, params['w_c2']) + feat

    def to_out(t):
        return jnp.transpose(t, (0, 3, 1, 2))[:, :, None, :, :]

    return [to_out(o1), to_out(o2)]


# ----------------------------------------------------------------------------
if __name__ == "__main__":
    # Small shapes consistent with the module's forward:
    #   bbox_feat: (B, input_dim, 1, H, W)
    B, INPUT_DIM, HIDDEN, H, W = 2, 16, 32, 8, 8
    STATUS_DIM = 2

    key = jax.random.PRNGKey(0)
    keys = jax.random.split(key, 16)

    def conv_w(k, cin, cout):
        # HWIO layout: (3, 3, Cin, Cout)
        return 0.05 * jax.random.normal(k, (3, 3, cin, cout), jnp.float32)

    params = {
        'w_reduce': conv_w(keys[0], INPUT_DIM, HIDDEN),
        'w_q1': conv_w(keys[1], HIDDEN, HIDDEN),
        'w_q2': conv_w(keys[2], HIDDEN, HIDDEN),
        'w_k1': conv_w(keys[3], HIDDEN, HIDDEN),
        'w_v1': conv_w(keys[4], HIDDEN, HIDDEN),
        'w_k2': conv_w(keys[5], HIDDEN, HIDDEN),
        'w_v2': conv_w(keys[6], HIDDEN, HIDDEN),
        'w_c1': conv_w(keys[7], HIDDEN, HIDDEN),
        'w_c2': conv_w(keys[8], HIDDEN, HIDDEN),
        # GroupNorm affine params (non-trivial to exercise the path)
        'gn_gamma': (1.0 + 0.1 * jax.random.normal(keys[9], (1, HIDDEN), jnp.float32)),
        'gn_beta': 0.1 * jax.random.normal(keys[10], (1, HIDDEN), jnp.float32),
    }

    status = jax.random.normal(keys[11], (B, STATUS_DIM), jnp.float32)   # unused
    rois = jax.random.normal(keys[12], (B, 5), jnp.float32)              # unused
    bbox_feat = jax.random.normal(keys[13], (B, INPUT_DIM, 1, H, W), jnp.float32)

    packed = pack_params(params)                 # one-time weight packing
    outs = monkey_forward(packed, status, rois, bbox_feat, HIDDEN)
    outs = [jax.block_until_ready(o) for o in outs]

    refs = monkey_forward_ref(params, status, rois, bbox_feat, HIDDEN)
    refs = [jax.block_until_ready(r) for r in refs]

    for o, r in zip(outs, refs):
        assert o.shape == (B, HIDDEN, 1, H, W), o.shape
        np.testing.assert_allclose(np.asarray(o), np.asarray(r), rtol=1e-4, atol=1e-4)

    print("KERNEL_OK")
</pallas_src>

<mosaic_0001>
module attributes {stable_mosaic.version = 11 : i64} {
  func.func @_fused_kernel(%arg0: i32, %arg1: memref<2x8x8x16xf32, #tpu.memory_space<vmem>>, %arg2: memref<144x32xf32, #tpu.memory_space<vmem>>, %arg3: memref<32x144xf32, #tpu.memory_space<vmem>>, %arg4: memref<288x192xf32, #tpu.memory_space<vmem>>, %arg5: memref<2x32x288xf32, #tpu.memory_space<vmem>>, %arg6: memref<1x32xf32, #tpu.memory_space<vmem>>, %arg7: memref<1x32xf32, #tpu.memory_space<vmem>>, %arg8: memref<2x2x32x64xf32, #tpu.memory_space<vmem>>, %arg9: memref<2x10x10x32xf32, #tpu.memory_space<vmem>>, %arg10: memref<128x288xf32, #tpu.memory_space<vmem>>) attributes {dimension_semantics = [#tpu.dimension_semantics<arbitrary>], iteration_bounds = array<i64: 1>, scalar_prefetch = 0 : i64, scratch_operands = 2 : i64, tpu.core_type = #tpu.core_type<tc>, window_params = [{pipeline_mode = #tpu.pipeline_mode<synchronous>, transform_indices = @transform_0, window_bounds = array<i64: 2, 8, 8, 16>}, {pipeline_mode = #tpu.pipeline_mode<synchronous>, transform_indices = @transform_1, window_bounds = array<i64: 144, 32>}, {pipeline_mode = #tpu.pipeline_mode<synchronous>, transform_indices = @transform_2, window_bounds = array<i64: 32, 144>}, {pipeline_mode = #tpu.pipeline_mode<synchronous>, transform_indices = @transform_3, window_bounds = array<i64: 288, 192>}, {pipeline_mode = #tpu.pipeline_mode<synchronous>, transform_indices = @transform_4, window_bounds = array<i64: 2, 32, 288>}, {pipeline_mode = #tpu.pipeline_mode<synchronous>, transform_indices = @transform_5, window_bounds = array<i64: 1, 32>}, {pipeline_mode = #tpu.pipeline_mode<synchronous>, transform_indices = @transform_6, window_bounds = array<i64: 1, 32>}, {pipeline_mode = #tpu.pipeline_mode<synchronous>, transform_indices = @transform_7, window_bounds = array<i64: 2, 2, 32, 64>}]} {
    %cst = arith.constant 0.000000e+00 : f32
    %0 = vector.broadcast %cst : f32 to vector<2x10x10x32xf32>
    %c0 = arith.constant 0 : index
    %c0_0 = arith.constant 0 : index
    %c0_1 = arith.constant 0 : index
    %c0_2 = arith.constant 0 : index
    %1 = vector.load %arg9[%c0, %c0_0, %c0_1, %c0_2] : memref<2x10x10x32xf32, #tpu.memory_space<vmem>>, vector<2x10x10x32xf32>
    tpu.vector_store %arg9[%c0, %c0_0, %c0_1, %c0_2], %0 {strides = array<i32>} : memref<2x10x10x32xf32, #tpu.memory_space<vmem>>, vector<2x10x10x32xf32>,
    %c0_3 = arith.constant 0 : index
    %c0_4 = arith.constant 0 : index
    %c0_5 = arith.constant 0 : index
    %c0_6 = arith.constant 0 : index
    %2 = vector.load %arg1[%c0_3, %c0_4, %c0_5, %c0_6] : memref<2x8x8x16xf32, #tpu.memory_space<vmem>>, vector<2x8x8x16xf32>
    %c0_7 = arith.constant 0 : index
    %c1 = arith.constant 1 : index
    %c1_8 = arith.constant 1 : index
    %c0_9 = arith.constant 0 : index
    %3 = vector.load %arg9[%c0_7, %c1, %c1_8, %c0_9] : memref<2x10x10x32xf32, #tpu.memory_space<vmem>>, vector<2x8x8x16xf32>
    tpu.vector_store %arg9[%c0_7, %c1, %c1_8, %c0_9], %2 {strides = array<i32>} : memref<2x10x10x32xf32, #tpu.memory_space<vmem>>, vector<2x8x8x16xf32>,
    %c0_10 = arith.constant 0 : index
    %c0_11 = arith.constant 0 : index
    %c0_12 = arith.constant 0 : index
    %c0_13 = arith.constant 0 : index
    %4 = vector.load %arg9[%c0_10, %c0_11, %c0_12, %c0_13] : memref<2x10x10x32xf32, #tpu.memory_space<vmem>>, vector<2x10x10x32xf32>
    %5 = vector.extract_strided_slice %4 {offsets = [0, 0, 0, 0], sizes = [2, 8, 8, 16], strides = [1, 1, 1, 1]} : vector<2x10x10x32xf32> to vector<2x8x8x16xf32>
    %6 = vector.shape_cast %5 : vector<2x8x8x16xf32> to vector<128x16xf32>
    %c0_14 = arith.constant 0 : index
    %c0_15 = arith.constant 0 : index
    %7 = vector.load %arg10[%c0_14, %c0_15] : memref<128x288xf32, #tpu.memory_space<vmem>>, vector<128x16xf32>
    tpu.vector_store %arg10[%c0_14, %c0_15], %6 {strides = array<i32>} : memref<128x288xf32, #tpu.memory_space<vmem>>, vector<128x16xf32>,
    %8 = vector.extract_strided_slice %4 {offsets = [0, 0, 1, 0], sizes = [2, 8, 8, 16], strides = [1, 1, 1, 1]} : vector<2x10x10x32xf32> to vector<2x8x8x16xf32>
    %9 = vector.shape_cast %8 : vector<2x8x8x16xf32> to vector<128x16xf32>
    %c0_16 = arith.constant 0 : index
    %c16 = arith.constant 16 : index
    %10 = vector.load %arg10[%c0_16, %c16] : memref<128x288xf32, #tpu.memory_space<vmem>>, vector<128x16xf32>
    tpu.vector_store %arg10[%c0_16, %c16], %9 {strides = array<i32>} : memref<128x288xf32, #tpu.memory_space<vmem>>, vector<128x16xf32>,
    %11 = vector.extract_strided_slice %4 {offsets = [0, 0, 2, 0], sizes = [2, 8, 8, 16], strides = [1, 1, 1, 1]} : vector<2x10x10x32xf32> to vector<2x8x8x16xf32>
    %12 = vector.shape_cast %11 : vector<2x8x8x16xf32> to vector<128x16xf32>
    %c0_17 = arith.constant 0 : index
    %c32 = arith.constant 32 : index
    %13 = vector.load %arg10[%c0_17, %c32] : memref<128x288xf32, #tpu.memory_space<vmem>>, vector<128x16xf32>
    tpu.vector_store %arg10[%c0_17, %c32], %12 {strides = array<i32>} : memref<128x288xf32, #tpu.memory_space<vmem>>, vector<128x16xf32>,
    %14 = vector.extract_strided_slice %4 {offsets = [0, 1, 0, 0], sizes = [2, 8, 8, 16], strides = [1, 1, 1, 1]} : vector<2x10x10x32xf32> to vector<2x8x8x16xf32>
    %15 = vector.shape_cast %14 : vector<2x8x8x16xf32> to vector<128x16xf32>
    %c0_18 = arith.constant 0 : index
    %c48 = arith.constant 48 : index
    %16 = vector.load %arg10[%c0_18, %c48] : memref<128x288xf32, #tpu.memory_space<vmem>>, vector<128x16xf32>
    tpu.vector_store %arg10[%c0_18, %c48], %15 {strides = array<i32>} : memref<128x288xf32, #tpu.memory_space<vmem>>, vector<128x16xf32>,
    %17 = vector.extract_strided_slice %4 {offsets = [0, 1, 1, 0], sizes = [2, 8, 8, 16], strides = [1, 1, 1, 1]} : vector<2x10x10x32xf32> to vector<2x8x8x16xf32>
    %18 = vector.shape_cast %17 : vector<2x8x8x16xf32> to vector<128x16xf32>
    %c0_19 = arith.constant 0 : index
    %c64 = arith.constant 64 : index
    %19 = vector.load %arg10[%c0_19, %c64] : memref<128x288xf32, #tpu.memory_space<vmem>>, vector<128x16xf32>
    tpu.vector_store %arg10[%c0_19, %c64], %18 {strides = array<i32>} : memref<128x288xf32, #tpu.memory_space<vmem>>, vector<128x16xf32>,
    %20 = vector.extract_strided_slice %4 {offsets = [0, 1, 2, 0], sizes = [2, 8, 8, 16], strides = [1, 1, 1, 1]} : vector<2x10x10x32xf32> to vector<2x8x8x16xf32>
    %21 = vector.shape_cast %20 : vector<2x8x8x16xf32> to vector<128x16xf32>
    %c0_20 = arith.constant 0 : index
    %c80 = arith.constant 80 : index
    %22 = vector.load %arg10[%c0_20, %c80] : memref<128x288xf32, #tpu.memory_space<vmem>>, vector<128x16xf32>
    tpu.vector_store %arg10[%c0_20, %c80], %21 {strides = array<i32>} : memref<128x288xf32, #tpu.memory_space<vmem>>, vector<128x16xf32>,
    %23 = vector.extract_strided_slice %4 {offsets = [0, 2, 0, 0], sizes = [2, 8, 8, 16], strides = [1, 1, 1, 1]} : vector<2x10x10x32xf32> to vector<2x8x8x16xf32>
    %24 = vector.shape_cast %23 : vector<2x8x8x16xf32> to vector<128x16xf32>
    %c0_21 = arith.constant 0 : index
    %c96 = arith.constant 96 : index
    %25 = vector.load %arg10[%c0_21, %c96] : memref<128x288xf32, #tpu.memory_space<vmem>>, vector<128x16xf32>
    tpu.vector_store %arg10[%c0_21, %c96], %24 {strides = array<i32>} : memref<128x288xf32, #tpu.memory_space<vmem>>, vector<128x16xf32>,
    %26 = vector.extract_strided_slice %4 {offsets = [0, 2, 1, 0], sizes = [2, 8, 8, 16], strides = [1, 1, 1, 1]} : vector<2x10x10x32xf32> to vector<2x8x8x16xf32>
    %27 = vector.shape_cast %26 : vector<2x8x8x16xf32> to vector<128x16xf32>
    %c0_22 = arith.constant 0 : index
    %c112 = arith.constant 112 : index
    %28 = vector.load %arg10[%c0_22, %c112] : memref<128x288xf32, #tpu.memory_space<vmem>>, vector<128x16xf32>
    tpu.vector_store %arg10[%c0_22, %c112], %27 {strides = array<i32>} : memref<128x288xf32, #tpu.memory_space<vmem>>, vector<128x16xf32>,
    %29 = vector.extract_strided_slice %4 {offsets = [0, 2, 2, 0], sizes = [2, 8, 8, 16], strides = [1, 1, 1, 1]} : vector<2x10x10x32xf32> to vector<2x8x8x16xf32>
    %30 = vector.shape_cast %29 : vector<2x8x8x16xf32> to vector<128x16xf32>
    %c0_23 = arith.constant 0 : index
    %c128 = arith.constant 128 : index
    %31 = vector.load %arg10[%c0_23, %c128] : memref<128x288xf32, #tpu.memory_space<vmem>>, vector<128x16xf32>
    tpu.vector_store %arg10[%c0_23, %c128], %30 {strides = array<i32>} : memref<128x288xf32, #tpu.memory_space<vmem>>, vector<128x16xf32>,
    %c0_24 = arith.constant 0 : index
    %c0_25 = arith.constant 0 : index
    %32 = vector.load %arg10[%c0_24, %c0_25] : memref<128x288xf32, #tpu.memory_space<vmem>>, vector<128x144xf32>
    %c0_26 = arith.constant 0 : index
    %c0_27 = arith.constant 0 : index
    %33 = vector.load %arg2[%c0_26, %c0_27] : memref<144x32xf32, #tpu.memory_space<vmem>>, vector<144x32xf32>
    %cst_28 = arith.constant dense<0.000000e+00> : vector<128x32xf32>
    %34 = tpu.matmul %32, %33, %cst_28 {dimension_numbers = #tpu.dot_dimension_numbers<[1], [0], [0], [1], [0, 0, 1, 1], [], []>} : vector<128x144xf32>, vector<144x32xf32>, vector<128x32xf32> -> vector<128x32xf32>
    %c0_29 = arith.constant 0 : index
    %c0_30 = arith.constant 0 : index
    %35 = vector.load %arg3[%c0_29, %c0_30] : memref<32x144xf32, #tpu.memory_space<vmem>>, vector<32x144xf32>
    %cst_31 = arith.constant dense<0.000000e+00> : vector<32x128xf32>
    %36 = tpu.matmul %35, %32, %cst_31 {dimension_numbers = #tpu.dot_dimension_numbers<[1], [1], [0], [0], [0, 0, 1, 0], [], []>} : vector<32x144xf32>, vector<128x144xf32>, vector<32x128xf32> -> vector<32x128xf32>
    %37 = vector.shape_cast %34 : vector<128x32xf32> to vector<2x8x8x32xf32>
    %c0_32 = arith.constant 0 : index
    %c1_33 = arith.constant 1 : index
    %c1_34 = arith.constant 1 : index
    %c0_35 = arith.constant 0 : index
    %38 = vector.load %arg9[%c0_32, %c1_33, %c1_34, %c0_35] : memref<2x10x10x32xf32, #tpu.memory_space<vmem>>, vector<2x8x8x32xf32>
    tpu.vector_store %arg9[%c0_32, %c1_33, %c1_34, %c0_35], %37 {strides = array<i32>} : memref<2x10x10x32xf32, #tpu.memory_space<vmem>>, vector<2x8x8x32xf32>,
    %c0_36 = arith.constant 0 : index
    %c0_37 = arith.constant 0 : index
    %c0_38 = arith.constant 0 : index
    %c0_39 = arith.constant 0 : index
    %39 = vector.load %arg9[%c0_36, %c0_37, %c0_38, %c0_39] : memref<2x10x10x32xf32, #tpu.memory_space<vmem>>, vector<2x10x10x32xf32>
    %40 = vector.extract_strided_slice %39 {offsets = [0, 0, 0, 0], sizes = [2, 8, 8, 32], strides = [1, 1, 1, 1]} : vector<2x10x10x32xf32> to vector<2x8x8x32xf32>
    %41 = vector.shape_cast %40 : vector<2x8x8x32xf32> to vector<128x32xf32>
    %c0_40 = arith.constant 0 : index
    %c0_41 = arith.constant 0 : index
    %42 = vector.load %arg10[%c0_40, %c0_41] : memref<128x288xf32, #tpu.memory_space<vmem>>, vector<128x32xf32>
    tpu.vector_store %arg10[%c0_40, %c0_41], %41 {strides = array<i32>} : memref<128x288xf32, #tpu.memory_space<vmem>>, vector<128x32xf32>,
    %43 = vector.extract_strided_slice %39 {offsets = [0, 0, 1, 0], sizes = [2, 8, 8, 32], strides = [1, 1, 1, 1]} : vector<2x10x10x32xf32> to vector<2x8x8x32xf32>
    %44 = vector.shape_cast %43 : vector<2x8x8x32xf32> to vector<128x32xf32>
    %c0_42 = arith.constant 0 : index
    %c32_43 = arith.constant 32 : index
    %45 = vector.load %arg10[%c0_42, %c32_43] : memref<128x288xf32, #tpu.memory_space<vmem>>, vector<128x32xf32>
    tpu.vector_store %arg10[%c0_42, %c32_43], %44 {strides = array<i32>} : memref<128x288xf32, #tpu.memory_space<vmem>>, vector<128x32xf32>,
    %46 = vector.extract_strided_slice %39 {offsets = [0, 0, 2, 0], sizes = [2, 8, 8, 32], strides = [1, 1, 1, 1]} : vector<2x10x10x32xf32> to vector<2x8x8x32xf32>
    %47 = vector.shape_cast %46 : vector<2x8x8x32xf32> to vector<128x32xf32>
    %c0_44 = arith.constant 0 : index
    %c64_45 = arith.constant 64 : index
    %48 = vector.load %arg10[%c0_44, %c64_45] : memref<128x288xf32, #tpu.memory_space<vmem>>, vector<128x32xf32>
    tpu.vector_store %arg10[%c0_44, %c64_45], %47 {strides = array<i32>} : memref<128x288xf32, #tpu.memory_space<vmem>>, vector<128x32xf32>,
    %49 = vector.extract_strided_slice %39 {offsets = [0, 1, 0, 0], sizes = [2, 8, 8, 32], strides = [1, 1, 1, 1]} : vector<2x10x10x32xf32> to vector<2x8x8x32xf32>
    %50 = vector.shape_cast %49 : vector<2x8x8x32xf32> to vector<128x32xf32>
    %c0_46 = arith.constant 0 : index
    %c96_47 = arith.constant 96 : index
    %51 = vector.load %arg10[%c0_46, %c96_47] : memref<128x288xf32, #tpu.memory_space<vmem>>, vector<128x32xf32>
    tpu.vector_store %arg10[%c0_46, %c96_47], %50 {strides = array<i32>} : memref<128x288xf32, #tpu.memory_space<vmem>>, vector<128x32xf32>,
    %52 = vector.extract_strided_slice %39 {offsets = [0, 1, 1, 0], sizes = [2, 8, 8, 32], strides = [1, 1, 1, 1]} : vector<2x10x10x32xf32> to vector<2x8x8x32xf32>
    %53 = vector.shape_cast %52 : vector<2x8x8x32xf32> to vector<128x32xf32>
    %c0_48 = arith.constant 0 : index
    %c128_49 = arith.constant 128 : index
    %54 = vector.load %arg10[%c0_48, %c128_49] : memref<128x288xf32, #tpu.memory_space<vmem>>, vector<128x32xf32>
    tpu.vector_store %arg10[%c0_48, %c128_49], %53 {strides = array<i32>} : memref<128x288xf32, #tpu.memory_space<vmem>>, vector<128x32xf32>,
    %55 = vector.extract_strided_slice %39 {offsets = [0, 1, 2, 0], sizes = [2, 8, 8, 32], strides = [1, 1, 1, 1]} : vector<2x10x10x32xf32> to vector<2x8x8x32xf32>
    %56 = vector.shape_cast %55 : vector<2x8x8x32xf32> to vector<128x32xf32>
    %c0_50 = arith.constant 0 : index
    %c160 = arith.constant 160 : index
    %57 = vector.load %arg10[%c0_50, %c160] : memref<128x288xf32, #tpu.memory_space<vmem>>, vector<128x32xf32>
    tpu.vector_store %arg10[%c0_50, %c160], %56 {strides = array<i32>} : memref<128x288xf32, #tpu.memory_space<vmem>>, vector<128x32xf32>,
    %58 = vector.extract_strided_slice %39 {offsets = [0, 2, 0, 0], sizes = [2, 8, 8, 32], strides = [1, 1, 1, 1]} : vector<2x10x10x32xf32> to vector<2x8x8x32xf32>
    %59 = vector.shape_cast %58 : vector<2x8x8x32xf32> to vector<128x32xf32>
    %c0_51 = arith.constant 0 : index
    %c192 = arith.constant 192 : index
    %60 = vector.load %arg10[%c0_51, %c192] : memref<128x288xf32, #tpu.memory_space<vmem>>, vector<128x32xf32>
    tpu.vector_store %arg10[%c0_51, %c192], %59 {strides = array<i32>} : memref<128x288xf32, #tpu.memory_space<vmem>>, vector<128x32xf32>,
    %61 = vector.extract_strided_slice %39 {offsets = [0, 2, 1, 0], sizes = [2, 8, 8, 32], strides = [1, 1, 1, 1]} : vector<2x10x10x32xf32> to vector<2x8x8x32xf32>
    %62 = vector.shape_cast %61 : vector<2x8x8x32xf32> to vector<128x32xf32>
    %c0_52 = arith.constant 0 : index
    %c224 = arith.constant 224 : index
    %63 = vector.load %arg10[%c0_52, %c224] : memref<128x288xf32, #tpu.memory_space<vmem>>, vector<128x32xf32>
    tpu.vector_store %arg10[%c0_52, %c224], %62 {strides = array<i32>} : memref<128x288xf32, #tpu.memory_space<vmem>>, vector<128x32xf32>,
    %64 = vector.extract_strided_slice %39 {offsets = [0, 2, 2, 0], sizes = [2, 8, 8, 32], strides = [1, 1, 1, 1]} : vector<2x10x10x32xf32> to vector<2x8x8x32xf32>
    %65 = vector.shape_cast %64 : vector<2x8x8x32xf32> to vector<128x32xf32>
    %c0_53 = arith.constant 0 : index
    %c256 = arith.constant 256 : index
    %66 = vector.load %arg10[%c0_53, %c256] : memref<128x288xf32, #tpu.memory_space<vmem>>, vector<128x32xf32>
    tpu.vector_store %arg10[%c0_53, %c256], %65 {strides = array<i32>} : memref<128x288xf32, #tpu.memory_space<vmem>>, vector<128x32xf32>,
    %c0_54 = arith.constant 0 : index
    %c0_55 = arith.constant 0 : index
    %67 = vector.load %arg10[%c0_54, %c0_55] : memref<128x288xf32, #tpu.memory_space<vmem>>, vector<128x288xf32>
    %c0_56 = arith.constant 0 : index
    %c0_57 = arith.constant 0 : index
    %68 = vector.load %arg4[%c0_56, %c0_57] : memref<288x192xf32, #tpu.memory_space<vmem>>, vector<288x192xf32>
    %cst_58 = arith.constant dense<0.000000e+00> : vector<128x192xf32>
    %69 = tpu.matmul %67, %68, %cst_58 {dimension_numbers = #tpu.dot_dimension_numbers<[1], [0], [0], [1], [0, 0, 1, 1], [], []>} : vector<128x288xf32>, vector<288x192xf32>, vector<128x192xf32> -> vector<128x192xf32>
    %c0_59 = arith.constant 0 : index
    %c0_60 = arith.constant 0 : index
    %70 = vector.load %arg6[%c0_59, %c0_60] : memref<1x32xf32, #tpu.memory_space<vmem>>, vector<1x32xf32>
    %c0_61 = arith.constant 0 : index
    %c0_62 = arith.constant 0 : index
    %71 = vector.load %arg7[%c0_61, %c0_62] : memref<1x32xf32, #tpu.memory_space<vmem>>, vector<1x32xf32>
    %72 = vector.extract_strided_slice %69 {offsets = [0, 0], sizes = [128, 32], strides = [1, 1]} : vector<128x192xf32> to vector<128x32xf32>
    %73 = vector.extract_strided_slice %69 {offsets = [0, 32], sizes = [128, 32], strides = [1, 1]} : vector<128x192xf32> to vector<128x32xf32>
    %74 = vector.extract_strided_slice %69 {offsets = [0, 64], sizes = [128, 32], strides = [1, 1]} : vector<128x192xf32> to vector<128x32xf32>
    %75 = arith.mulf %72, %73 : vector<128x32xf32>
    %cst_63 = arith.constant dense<0.000000e+00> : vector<128xf32>
    %76 = vector.multi_reduction <add>, %75, %cst_63 [1] : vector<128x32xf32> to vector<128xf32>
    %77 = vector.shape_cast %76 : vector<128xf32> to vector<128x1xf32>
    %cst_64 = arith.constant 0.176776692 : f32
    %78 = vector.broadcast %cst_64 : f32 to vector<128x1xf32>
    %79 = arith.mulf %77, %78 : vector<128x1xf32>
    %80 = vector.extract_strided_slice %73 {offsets = [64, 0], sizes = [64, 32], strides = [1, 1]} : vector<128x32xf32> to vector<64x32xf32>
    %81 = vector.extract_strided_slice %73 {offsets = [0, 0], sizes = [64, 32], strides = [1, 1]} : vector<128x32xf32> to vector<64x32xf32>
    %82 = tpu.concatenate %80, %81 in 0 : vector<64x32xf32>, vector<64x32xf32> -> vector<128x32xf32>
    %83 = vector.extract_strided_slice %74 {offsets = [64, 0], sizes = [64, 32], strides = [1, 1]} : vector<128x32xf32> to vector<64x32xf32>
    %84 = vector.extract_strided_slice %74 {offsets = [0, 0], sizes = [64, 32], strides = [1, 1]} : vector<128x32xf32> to vector<64x32xf32>
    %85 = tpu.concatenate %83, %84 in 0 : vector<64x32xf32>, vector<64x32xf32> -> vector<128x32xf32>
    %86 = arith.mulf %72, %82 : vector<128x32xf32>
    %cst_65 = arith.constant dense<0.000000e+00> : vector<128xf32>
    %87 = vector.multi_reduction <add>, %86, %cst_65 [1] : vector<128x32xf32> to vector<128xf32>
    %88 = vector.shape_cast %87 : vector<128xf32> to vector<128x1xf32>
    %cst_66 = arith.constant 0.176776692 : f32
    %89 = vector.broadcast %cst_66 : f32 to vector<128x1xf32>
    %90 = arith.mulf %88, %89 : vector<128x1xf32>
    %91 = arith.maximumf %79, %90 : vector<128x1xf32>
    %92 = arith.subf %79, %91 : vector<128x1xf32>
    %93 = math.exp %92 : vector<128x1xf32>
    %94 = arith.subf %90, %91 : vector<128x1xf32>
    %95 = math.exp %94 : vector<128x1xf32>
    %96 = arith.addf %93, %95 : vector<128x1xf32>
    %97 = tpu.reciprocal %96 : vector<128x1xf32> -> vector<128x1xf32>
    %98 = arith.mulf %93, %97 : vector<128x1xf32>
    %99 = vector.broadcast %98 : vector<128x1xf32> to vector<128x32xf32>
    %100 = arith.mulf %99, %74 : vector<128x32xf32>
    %101 = arith.mulf %95, %97 : vector<128x1xf32>
    %102 = vector.broadcast %101 : vector<128x1xf32> to vector<128x32xf32>
    %103 = arith.mulf %102, %85 : vector<128x32xf32>
    %104 = arith.addf %100, %103 : vector<128x32xf32>
    %105 = vector.extract_strided_slice %104 {offsets = [0, 0], sizes = [64, 32], strides = [1, 1]} : vector<128x32xf32> to vector<64x32xf32>
    %106 = vector.shape_cast %105 : vector<64x32xf32> to vector<1x64x32xf32>
    %cst_67 = arith.constant dense<0.000000e+00> : vector<1xf32>
    %107 = vector.multi_reduction <add>, %106, %cst_67 [1, 2] : vector<1x64x32xf32> to vector<1xf32>
    %108 = vector.shape_cast %107 : vector<1xf32> to vector<1x1x1xf32>
    %109 = vector.extract %108[0, 0, 0] : f32 from vector<1x1x1xf32>
    %cst_68 = arith.constant 4.8828125E-4 : f32
    %110 = arith.mulf %109, %cst_68 : f32
    %111 = arith.mulf %105, %105 : vector<64x32xf32>
    %112 = vector.shape_cast %111 : vector<64x32xf32> to vector<1x64x32xf32>
    %cst_69 = arith.constant dense<0.000000e+00> : vector<1xf32>
    %113 = vector.multi_reduction <add>, %112, %cst_69 [1, 2] : vector<1x64x32xf32> to vector<1xf32>
    %114 = vector.shape_cast %113 : vector<1xf32> to vector<1x1x1xf32>
    %115 = vector.extract %114[0, 0, 0] : f32 from vector<1x1x1xf32>
    %cst_70 = arith.constant 4.8828125E-4 : f32
    %116 = arith.mulf %115, %cst_70 : f32
    %117 = arith.mulf %110, %110 : f32
    %118 = arith.subf %116, %117 : f32
    %119 = vector.broadcast %110 : f32 to vector<64x32xf32>
    %120 = arith.subf %105, %119 : vector<64x32xf32>
    %cst_71 = arith.constant 9.99999974E-6 : f32
    %121 = arith.addf %118, %cst_71 : f32
    %122 = math.rsqrt %121 : f32
    %123 = vector.broadcast %122 : f32 to vector<64x32xf32>
    %124 = arith.mulf %120, %123 : vector<64x32xf32>
    %125 = vector.broadcast %70 : vector<1x32xf32> to vector<64x32xf32>
    %126 = arith.mulf %124, %125 : vector<64x32xf32>
    %127 = vector.broadcast %71 : vector<1x32xf32> to vector<64x32xf32>
    %128 = arith.addf %126, %127 : vector<64x32xf32>
    %cst_72 = arith.constant 0.000000e+00 : f32
    %129 = vector.broadcast %cst_72 : f32 to vector<64x32xf32>
    %130 = arith.maximumf %128, %129 : vector<64x32xf32>
    %131 = vector.shape_cast %130 : vector<64x32xf32> to vector<1x8x8x32xf32>
    %c0_73 = arith.constant 0 : index
    %c1_74 = arith.constant 1 : index
    %c1_75 = arith.constant 1 : index
    %c0_76 = arith.constant 0 : index
    %132 = vector.load %arg9[%c0_73, %c1_74, %c1_75, %c0_76] : memref<2x10x10x32xf32, #tpu.memory_space<vmem>>, vector<1x8x8x32xf32>
    tpu.vector_store %arg9[%c0_73, %c1_74, %c1_75, %c0_76], %131 {strides = array<i32>} : memref<2x10x10x32xf32, #tpu.memory_space<vmem>>, vector<1x8x8x32xf32>,
    %133 = vector.extract_strided_slice %104 {offsets = [64, 0], sizes = [64, 32], strides = [1, 1]} : vector<128x32xf32> to vector<64x32xf32>
    %134 = vector.shape_cast %133 : vector<64x32xf32> to vector<1x64x32xf32>
    %cst_77 = arith.constant dense<0.000000e+00> : vector<1xf32>
    %135 = vector.multi_reduction <add>, %134, %cst_77 [1, 2] : vector<1x64x32xf32> to vector<1xf32>
    %136 = vector.shape_cast %135 : vector<1xf32> to vector<1x1x1xf32>
    %137 = vector.extract %136[0, 0, 0] : f32 from vector<1x1x1xf32>
    %cst_78 = arith.constant 4.8828125E-4 : f32
    %138 = arith.mulf %137, %cst_78 : f32
    %139 = arith.mulf %133, %133 : vector<64x32xf32>
    %140 = vector.shape_cast %139 : vector<64x32xf32> to vector<1x64x32xf32>
    %cst_79 = arith.constant dense<0.000000e+00> : vector<1xf32>
    %141 = vector.multi_reduction <add>, %140, %cst_79 [1, 2] : vector<1x64x32xf32> to vector<1xf32>
    %142 = vector.shape_cast %141 : vector<1xf32> to vector<1x1x1xf32>
    %143 = vector.extract %142[0, 0, 0] : f32 from vector<1x1x1xf32>
    %cst_80 = arith.constant 4.8828125E-4 : f32
    %144 = arith.mulf %143, %cst_80 : f32
    %145 = arith.mulf %138, %138 : f32
    %146 = arith.subf %144, %145 : f32
    %147 = vector.broadcast %138 : f32 to vector<64x32xf32>
    %148 = arith.subf %133, %147 : vector<64x32xf32>
    %cst_81 = arith.constant 9.99999974E-6 : f32
    %149 = arith.addf %146, %cst_81 : f32
    %150 = math.rsqrt %149 : f32
    %151 = vector.broadcast %150 : f32 to vector<64x32xf32>
    %152 = arith.mulf %148, %151 : vector<64x32xf32>
    %153 = vector.broadcast %70 : vector<1x32xf32> to vector<64x32xf32>
    %154 = arith.mulf %152, %153 : vector<64x32xf32>
    %155 = vector.broadcast %71 : vector<1x32xf32> to vector<64x32xf32>
    %156 = arith.addf %154, %155 : vector<64x32xf32>
    %cst_82 = arith.constant 0.000000e+00 : f32
    %157 = vector.broadcast %cst_82 : f32 to vector<64x32xf32>
    %158 = arith.maximumf %156, %157 : vector<64x32xf32>
    %159 = vector.shape_cast %158 : vector<64x32xf32> to vector<1x8x8x32xf32>
    %c1_83 = arith.constant 1 : index
    %c1_84 = arith.constant 1 : index
    %c1_85 = arith.constant 1 : index
    %c0_86 = arith.constant 0 : index
    %160 = vector.load %arg9[%c1_83, %c1_84, %c1_85, %c0_86] : memref<2x10x10x32xf32, #tpu.memory_space<vmem>>, vector<1x8x8x32xf32>
    tpu.vector_store %arg9[%c1_83, %c1_84, %c1_85, %c0_86], %159 {strides = array<i32>} : memref<2x10x10x32xf32, #tpu.memory_space<vmem>>, vector<1x8x8x32xf32>,
    %c0_87 = arith.constant 0 : index
    %c0_88 = arith.constant 0 : index
    %c0_89 = arith.constant 0 : index
    %c0_90 = arith.constant 0 : index
    %161 = vector.load %arg9[%c0_87, %c0_88, %c0_89, %c0_90] : memref<2x10x10x32xf32, #tpu.memory_space<vmem>>, vector<2x10x10x32xf32>
    %162 = vector.extract_strided_slice %161 {offsets = [0, 0, 0, 0], sizes = [2, 8, 8, 32], strides = [1, 1, 1, 1]} : vector<2x10x10x32xf32> to vector<2x8x8x32xf32>
    %163 = vector.shape_cast %162 : vector<2x8x8x32xf32> to vector<128x32xf32>
    %c0_91 = arith.constant 0 : index
    %c0_92 = arith.constant 0 : index
    %164 = vector.load %arg10[%c0_91, %c0_92] : memref<128x288xf32, #tpu.memory_space<vmem>>, vector<128x32xf32>
    tpu.vector_store %arg10[%c0_91, %c0_92], %163 {strides = array<i32>} : memref<128x288xf32, #tpu.memory_space<vmem>>, vector<128x32xf32>,
    %165 = vector.extract_strided_slice %161 {offsets = [0, 0, 1, 0], sizes = [2, 8, 8, 32], strides = [1, 1, 1, 1]} : vector<2x10x10x32xf32> to vector<2x8x8x32xf32>
    %166 = vector.shape_cast %165 : vector<2x8x8x32xf32> to vector<128x32xf32>
    %c0_93 = arith.constant 0 : index
    %c32_94 = arith.constant 32 : index
    %167 = vector.load %arg10[%c0_93, %c32_94] : memref<128x288xf32, #tpu.memory_space<vmem>>, vector<128x32xf32>
    tpu.vector_store %arg10[%c0_93, %c32_94], %166 {strides = array<i32>} : memref<128x288xf32, #tpu.memory_space<vmem>>, vector<128x32xf32>,
    %168 = vector.extract_strided_slice %161 {offsets = [0, 0, 2, 0], sizes = [2, 8, 8, 32], strides = [1, 1, 1, 1]} : vector<2x10x10x32xf32> to vector<2x8x8x32xf32>
    %169 = vector.shape_cast %168 : vector<2x8x8x32xf32> to vector<128x32xf32>
    %c0_95 = arith.constant 0 : index
    %c64_96 = arith.constant 64 : index
    %170 = vector.load %arg10[%c0_95, %c64_96] : memref<128x288xf32, #tpu.memory_space<vmem>>, vector<128x32xf32>
    tpu.vector_store %arg10[%c0_95, %c64_96], %169 {strides = array<i32>} : memref<128x288xf32, #tpu.memory_space<vmem>>, vector<128x32xf32>,
    %171 = vector.extract_strided_slice %161 {offsets = [0, 1, 0, 0], sizes = [2, 8, 8, 32], strides = [1, 1, 1, 1]} : vector<2x10x10x32xf32> to vector<2x8x8x32xf32>
    %172 = vector.shape_cast %171 : vector<2x8x8x32xf32> to vector<128x32xf32>
    %c0_97 = arith.constant 0 : index
    %c96_98 = arith.constant 96 : index
    %173 = vector.load %arg10[%c0_97, %c96_98] : memref<128x288xf32, #tpu.memory_space<vmem>>, vector<128x32xf32>
    tpu.vector_store %arg10[%c0_97, %c96_98], %172 {strides = array<i32>} : memref<128x288xf32, #tpu.memory_space<vmem>>, vector<128x32xf32>,
    %174 = vector.extract_strided_slice %161 {offsets = [0, 1, 1, 0], sizes = [2, 8, 8, 32], strides = [1, 1, 1, 1]} : vector<2x10x10x32xf32> to vector<2x8x8x32xf32>
    %175 = vector.shape_cast %174 : vector<2x8x8x32xf32> to vector<128x32xf32>
    %c0_99 = arith.constant 0 : index
    %c128_100 = arith.constant 128 : index
    %176 = vector.load %arg10[%c0_99, %c128_100] : memref<128x288xf32, #tpu.memory_space<vmem>>, vector<128x32xf32>
    tpu.vector_store %arg10[%c0_99, %c128_100], %175 {strides = array<i32>} : memref<128x288xf32, #tpu.memory_space<vmem>>, vector<128x32xf32>,
    %177 = vector.extract_strided_slice %161 {offsets = [0, 1, 2, 0], sizes = [2, 8, 8, 32], strides = [1, 1, 1, 1]} : vector<2x10x10x32xf32> to vector<2x8x8x32xf32>
    %178 = vector.shape_cast %177 : vector<2x8x8x32xf32> to vector<128x32xf32>
    %c0_101 = arith.constant 0 : index
    %c160_102 = arith.constant 160 : index
    %179 = vector.load %arg10[%c0_101, %c160_102] : memref<128x288xf32, #tpu.memory_space<vmem>>, vector<128x32xf32>
    tpu.vector_store %arg10[%c0_101, %c160_102], %178 {strides = array<i32>} : memref<128x288xf32, #tpu.memory_space<vmem>>, vector<128x32xf32>,
    %180 = vector.extract_strided_slice %161 {offsets = [0, 2, 0, 0], sizes = [2, 8, 8, 32], strides = [1, 1, 1, 1]} : vector<2x10x10x32xf32> to vector<2x8x8x32xf32>
    %181 = vector.shape_cast %180 : vector<2x8x8x32xf32> to vector<128x32xf32>
    %c0_103 = arith.constant 0 : index
    %c192_104 = arith.constant 192 : index
    %182 = vector.load %arg10[%c0_103, %c192_104] : memref<128x288xf32, #tpu.memory_space<vmem>>, vector<128x32xf32>
    tpu.vector_store %arg10[%c0_103, %c192_104], %181 {strides = array<i32>} : memref<128x288xf32, #tpu.memory_space<vmem>>, vector<128x32xf32>,
    %183 = vector.extract_strided_slice %161 {offsets = [0, 2, 1, 0], sizes = [2, 8, 8, 32], strides = [1, 1, 1, 1]} : vector<2x10x10x32xf32> to vector<2x8x8x32xf32>
    %184 = vector.shape_cast %183 : vector<2x8x8x32xf32> to vector<128x32xf32>
    %c0_105 = arith.constant 0 : index
    %c224_106 = arith.constant 224 : index
    %185 = vector.load %arg10[%c0_105, %c224_106] : memref<128x288xf32, #tpu.memory_space<vmem>>, vector<128x32xf32>
    tpu.vector_store %arg10[%c0_105, %c224_106], %184 {strides = array<i32>} : memref<128x288xf32, #tpu.memory_space<vmem>>, vector<128x32xf32>,
    %186 = vector.extract_strided_slice %161 {offsets = [0, 2, 2, 0], sizes = [2, 8, 8, 32], strides = [1, 1, 1, 1]} : vector<2x10x10x32xf32> to vector<2x8x8x32xf32>
    %187 = vector.shape_cast %186 : vector<2x8x8x32xf32> to vector<128x32xf32>
    %c0_107 = arith.constant 0 : index
    %c256_108 = arith.constant 256 : index
    %188 = vector.load %arg10[%c0_107, %c256_108] : memref<128x288xf32, #tpu.memory_space<vmem>>, vector<128x32xf32>
    tpu.vector_store %arg10[%c0_107, %c256_108], %187 {strides = array<i32>} : memref<128x288xf32, #tpu.memory_space<vmem>>, vector<128x32xf32>,
    %c0_109 = arith.constant 0 : index
    %c0_110 = arith.constant 0 : index
    %c0_111 = arith.constant 0 : index
    %189 = vector.load %arg5[%c0_109, %c0_110, %c0_111] : memref<2x32x288xf32, #tpu.memory_space<vmem>>, vector<1x32x288xf32>
    %190 = vector.shape_cast %189 : vector<1x32x288xf32> to vector<32x288xf32>
    %c0_112 = arith.constant 0 : index
    %c0_113 = arith.constant 0 : index
    %191 = vector.load %arg10[%c0_112, %c0_113] : memref<128x288xf32, #tpu.memory_space<vmem>>, vector<128x288xf32>
    %cst_114 = arith.constant dense<0.000000e+00> : vector<32x128xf32>
    %192 = tpu.matmul %190, %191, %cst_114 {dimension_numbers = #tpu.dot_dimension_numbers<[1], [1], [0], [0], [0, 0, 1, 0], [], []>} : vector<32x288xf32>, vector<128x288xf32>, vector<32x128xf32> -> vector<32x128xf32>
    %193 = arith.addf %192, %36 : vector<32x128xf32>
    %194 = vector.extract_strided_slice %193 {offsets = [0, 0], sizes = [32, 64], strides = [1, 1]} : vector<32x128xf32> to vector<32x64xf32>
    %c0_115 = arith.constant 0 : index
    %c0_116 = arith.constant 0 : index
    %c0_117 = arith.constant 0 : index
    %c0_118 = arith.constant 0 : index
    %195 = vector.load %arg8[%c0_115, %c0_116, %c0_117, %c0_118] : memref<2x2x32x64xf32, #tpu.memory_space<vmem>>, vector<1x1x32x64xf32>
    %196 = vector.shape_cast %195 : vector<1x1x32x64xf32> to vector<32x64xf32>
    %197 = vector.shape_cast %194 : vector<32x64xf32> to vector<1x1x32x64xf32>
    tpu.vector_store %arg8[%c0_115, %c0_116, %c0_117, %c0_118], %197 {strides = array<i32>} : memref<2x2x32x64xf32, #tpu.memory_space<vmem>>, vector<1x1x32x64xf32>,
    %198 = vector.extract_strided_slice %193 {offsets = [0, 64], sizes = [32, 64], strides = [1, 1]} : vector<32x128xf32> to vector<32x64xf32>
    %c0_119 = arith.constant 0 : index
    %c1_120 = arith.constant 1 : index
    %c0_121 = arith.constant 0 : index
    %c0_122 = arith.constant 0 : index
    %199 = vector.load %arg8[%c0_119, %c1_120, %c0_121, %c0_122] : memref<2x2x32x64xf32, #tpu.memory_space<vmem>>, vector<1x1x32x64xf32>
    %200 = vector.shape_cast %199 : vector<1x1x32x64xf32> to vector<32x64xf32>
    %201 = vector.shape_cast %198 : vector<32x64xf32> to vector<1x1x32x64xf32>
    tpu.vector_store %arg8[%c0_119, %c1_120, %c0_121, %c0_122], %201 {strides = array<i32>} : memref<2x2x32x64xf32, #tpu.memory_space<vmem>>, vector<1x1x32x64xf32>,
    %202 = vector.extract_strided_slice %69 {offsets = [0, 96], sizes = [128, 32], strides = [1, 1]} : vector<128x192xf32> to vector<128x32xf32>
    %203 = vector.extract_strided_slice %69 {offsets = [0, 128], sizes = [128, 32], strides = [1, 1]} : vector<128x192xf32> to vector<128x32xf32>
    %204 = vector.extract_strided_slice %69 {offsets = [0, 160], sizes = [128, 32], strides = [1, 1]} : vector<128x192xf32> to vector<128x32xf32>
    %205 = arith.mulf %202, %203 : vector<128x32xf32>
    %cst_123 = arith.constant dense<0.000000e+00> : vector<128xf32>
    %206 = vector.multi_reduction <add>, %205, %cst_123 [1] : vector<128x32xf32> to vector<128xf32>
    %207 = vector.shape_cast %206 : vector<128xf32> to vector<128x1xf32>
    %cst_124 = arith.constant 0.176776692 : f32
    %208 = vector.broadcast %cst_124 : f32 to vector<128x1xf32>
    %209 = arith.mulf %207, %208 : vector<128x1xf32>
    %210 = vector.extract_strided_slice %203 {offsets = [64, 0], sizes = [64, 32], strides = [1, 1]} : vector<128x32xf32> to vector<64x32xf32>
    %211 = vector.extract_strided_slice %203 {offsets = [0, 0], sizes = [64, 32], strides = [1, 1]} : vector<128x32xf32> to vector<64x32xf32>
    %212 = tpu.concatenate %210, %211 in 0 : vector<64x32xf32>, vector<64x32xf32> -> vector<128x32xf32>
    %213 = vector.extract_strided_slice %204 {offsets = [64, 0], sizes = [64, 32], strides = [1, 1]} : vector<128x32xf32> to vector<64x32xf32>
    %214 = vector.extract_strided_slice %204 {offsets = [0, 0], sizes = [64, 32], strides = [1, 1]} : vector<128x32xf32> to vector<64x32xf32>
    %215 = tpu.concatenate %213, %214 in 0 : vector<64x32xf32>, vector<64x32xf32> -> vector<128x32xf32>
    %216 = arith.mulf %202, %212 : vector<128x32xf32>
    %cst_125 = arith.constant dense<0.000000e+00> : vector<128xf32>
    %217 = vector.multi_reduction <add>, %216, %cst_125 [1] : vector<128x32xf32> to vector<128xf32>
    %218 = vector.shape_cast %217 : vector<128xf32> to vector<128x1xf32>
    %cst_126 = arith.constant 0.176776692 : f32
    %219 = vector.broadcast %cst_126 : f32 to vector<128x1xf32>
    %220 = arith.mulf %218, %219 : vector<128x1xf32>
    %221 = arith.maximumf %209, %220 : vector<128x1xf32>
    %222 = arith.subf %209, %221 : vector<128x1xf32>
    %223 = math.exp %222 : vector<128x1xf32>
    %224 = arith.subf %220, %221 : vector<128x1xf32>
    %225 = math.exp %224 : vector<128x1xf32>
    %226 = arith.addf %223, %225 : vector<128x1xf32>
    %227 = tpu.reciprocal %226 : vector<128x1xf32> -> vector<128x1xf32>
    %228 = arith.mulf %223, %227 : vector<128x1xf32>
    %229 = vector.broadcast %228 : vector<128x1xf32> to vector<128x32xf32>
    %230 = arith.mulf %229, %204 : vector<128x32xf32>
    %231 = arith.mulf %225, %227 : vector<128x1xf32>
    %232 = vector.broadcast %231 : vector<128x1xf32> to vector<128x32xf32>
    %233 = arith.mulf %232, %215 : vector<128x32xf32>
    %234 = arith.addf %230, %233 : vector<128x32xf32>
    %235 = vector.extract_strided_slice %234 {offsets = [0, 0], sizes = [64, 32], strides = [1, 1]} : vector<128x32xf32> to vector<64x32xf32>
    %236 = vector.shape_cast %235 : vector<64x32xf32> to vector<1x64x32xf32>
    %cst_127 = arith.constant dense<0.000000e+00> : vector<1xf32>
    %237 = vector.multi_reduction <add>, %236, %cst_127 [1, 2] : vector<1x64x32xf32> to vector<1xf32>
    %238 = vector.shape_cast %237 : vector<1xf32> to vector<1x1x1xf32>
    %239 = vector.extract %238[0, 0, 0] : f32 from vector<1x1x1xf32>
    %cst_128 = arith.constant 4.8828125E-4 : f32
    %240 = arith.mulf %239, %cst_128 : f32
    %241 = arith.mulf %235, %235 : vector<64x32xf32>
    %242 = vector.shape_cast %241 : vector<64x32xf32> to vector<1x64x32xf32>
    %cst_129 = arith.constant dense<0.000000e+00> : vector<1xf32>
    %243 = vector.multi_reduction <add>, %242, %cst_129 [1, 2] : vector<1x64x32xf32> to vector<1xf32>
    %244 = vector.shape_cast %243 : vector<1xf32> to vector<1x1x1xf32>
    %245 = vector.extract %244[0, 0, 0] : f32 from vector<1x1x1xf32>
    %cst_130 = arith.constant 4.8828125E-4 : f32
    %246 = arith.mulf %245, %cst_130 : f32
    %247 = arith.mulf %240, %240 : f32
    %248 = arith.subf %246, %247 : f32
    %249 = vector.broadcast %240 : f32 to vector<64x32xf32>
    %250 = arith.subf %235, %249 : vector<64x32xf32>
    %cst_131 = arith.constant 9.99999974E-6 : f32
    %251 = arith.addf %248, %cst_131 : f32
    %252 = math.rsqrt %251 : f32
    %253 = vector.broadcast %252 : f32 to vector<64x32xf32>
    %254 = arith.mulf %250, %253 : vector<64x32xf32>
    %255 = vector.broadcast %70 : vector<1x32xf32> to vector<64x32xf32>
    %256 = arith.mulf %254, %255 : vector<64x32xf32>
    %257 = vector.broadcast %71 : vector<1x32xf32> to vector<64x32xf32>
    %258 = arith.addf %256, %257 : vector<64x32xf32>
    %cst_132 = arith.constant 0.000000e+00 : f32
    %259 = vector.broadcast %cst_132 : f32 to vector<64x32xf32>
    %260 = arith.maximumf %258, %259 : vector<64x32xf32>
    %261 = vector.shape_cast %260 : vector<64x32xf32> to vector<1x8x8x32xf32>
    %c0_133 = arith.constant 0 : index
    %c1_134 = arith.constant 1 : index
    %c1_135 = arith.constant 1 : index
    %c0_136 = arith.constant 0 : index
    %262 = vector.load %arg9[%c0_133, %c1_134, %c1_135, %c0_136] : memref<2x10x10x32xf32, #tpu.memory_space<vmem>>, vector<1x8x8x32xf32>
    tpu.vector_store %arg9[%c0_133, %c1_134, %c1_135, %c0_136], %261 {strides = array<i32>} : memref<2x10x10x32xf32, #tpu.memory_space<vmem>>, vector<1x8x8x32xf32>,
    %263 = vector.extract_strided_slice %234 {offsets = [64, 0], sizes = [64, 32], strides = [1, 1]} : vector<128x32xf32> to vector<64x32xf32>
    %264 = vector.shape_cast %263 : vector<64x32xf32> to vector<1x64x32xf32>
    %cst_137 = arith.constant dense<0.000000e+00> : vector<1xf32>
    %265 = vector.multi_reduction <add>, %264, %cst_137 [1, 2] : vector<1x64x32xf32> to vector<1xf32>
    %266 = vector.shape_cast %265 : vector<1xf32> to vector<1x1x1xf32>
    %267 = vector.extract %266[0, 0, 0] : f32 from vector<1x1x1xf32>
    %cst_138 = arith.constant 4.8828125E-4 : f32
    %268 = arith.mulf %267, %cst_138 : f32
    %269 = arith.mulf %263, %263 : vector<64x32xf32>
    %270 = vector.shape_cast %269 : vector<64x32xf32> to vector<1x64x32xf32>
    %cst_139 = arith.constant dense<0.000000e+00> : vector<1xf32>
    %271 = vector.multi_reduction <add>, %270, %cst_139 [1, 2] : vector<1x64x32xf32> to vector<1xf32>
    %272 = vector.shape_cast %271 : vector<1xf32> to vector<1x1x1xf32>
    %273 = vector.extract %272[0, 0, 0] : f32 from vector<1x1x1xf32>
    %cst_140 = arith.constant 4.8828125E-4 : f32
    %274 = arith.mulf %273, %cst_140 : f32
    %275 = arith.mulf %268, %268 : f32
    %276 = arith.subf %274, %275 : f32
    %277 = vector.broadcast %268 : f32 to vector<64x32xf32>
    %278 = arith.subf %263, %277 : vector<64x32xf32>
    %cst_141 = arith.constant 9.99999974E-6 : f32
    %279 = arith.addf %276, %cst_141 : f32
    %280 = math.rsqrt %279 : f32
    %281 = vector.broadcast %280 : f32 to vector<64x32xf32>
    %282 = arith.mulf %278, %281 : vector<64x32xf32>
    %283 = vector.broadcast %70 : vector<1x32xf32> to vector<64x32xf32>
    %284 = arith.mulf %282, %283 : vector<64x32xf32>
    %285 = vector.broadcast %71 : vector<1x32xf32> to vector<64x32xf32>
    %286 = arith.addf %284, %285 : vector<64x32xf32>
    %cst_142 = arith.constant 0.000000e+00 : f32
    %287 = vector.broadcast %cst_142 : f32 to vector<64x32xf32>
    %288 = arith.maximumf %286, %287 : vector<64x32xf32>
    %289 = vector.shape_cast %288 : vector<64x32xf32> to vector<1x8x8x32xf32>
    %c1_143 = arith.constant 1 : index
    %c1_144 = arith.constant 1 : index
    %c1_145 = arith.constant 1 : index
    %c0_146 = arith.constant 0 : index
    %290 = vector.load %arg9[%c1_143, %c1_144, %c1_145, %c0_146] : memref<2x10x10x32xf32, #tpu.memory_space<vmem>>, vector<1x8x8x32xf32>
    tpu.vector_store %arg9[%c1_143, %c1_144, %c1_145, %c0_146], %289 {strides = array<i32>} : memref<2x10x10x32xf32, #tpu.memory_space<vmem>>, vector<1x8x8x32xf32>,
    %c0_147 = arith.constant 0 : index
    %c0_148 = arith.constant 0 : index
    %c0_149 = arith.constant 0 : index
    %c0_150 = arith.constant 0 : index
    %291 = vector.load %arg9[%c0_147, %c0_148, %c0_149, %c0_150] : memref<2x10x10x32xf32, #tpu.memory_space<vmem>>, vector<2x10x10x32xf32>
    %292 = vector.extract_strided_slice %291 {offsets = [0, 0, 0, 0], sizes = [2, 8, 8, 32], strides = [1, 1, 1, 1]} : vector<2x10x10x32xf32> to vector<2x8x8x32xf32>
    %293 = vector.shape_cast %292 : vector<2x8x8x32xf32> to vector<128x32xf32>
    %c0_151 = arith.constant 0 : index
    %c0_152 = arith.constant 0 : index
    %294 = vector.load %arg10[%c0_151, %c0_152] : memref<128x288xf32, #tpu.memory_space<vmem>>, vector<128x32xf32>
    tpu.vector_store %arg10[%c0_151, %c0_152], %293 {strides = array<i32>} : memref<128x288xf32, #tpu.memory_space<vmem>>, vector<128x32xf32>,
    %295 = vector.extract_strided_slice %291 {offsets = [0, 0, 1, 0], sizes = [2, 8, 8, 32], strides = [1, 1, 1, 1]} : vector<2x10x10x32xf32> to vector<2x8x8x32xf32>
    %296 = vector.shape_cast %295 : vector<2x8x8x32xf32> to vector<128x32xf32>
    %c0_153 = arith.constant 0 : index
    %c32_154 = arith.constant 32 : index
    %297 = vector.load %arg10[%c0_153, %c32_154] : memref<128x288xf32, #tpu.memory_space<vmem>>, vector<128x32xf32>
    tpu.vector_store %arg10[%c0_153, %c32_154], %296 {strides = array<i32>} : memref<128x288xf32, #tpu.memory_space<vmem>>, vector<128x32xf32>,
    %298 = vector.extract_strided_slice %291 {offsets = [0, 0, 2, 0], sizes = [2, 8, 8, 32], strides = [1, 1, 1, 1]} : vector<2x10x10x32xf32> to vector<2x8x8x32xf32>
    %299 = vector.shape_cast %298 : vector<2x8x8x32xf32> to vector<128x32xf32>
    %c0_155 = arith.constant 0 : index
    %c64_156 = arith.constant 64 : index
    %300 = vector.load %arg10[%c0_155, %c64_156] : memref<128x288xf32, #tpu.memory_space<vmem>>, vector<128x32xf32>
    tpu.vector_store %arg10[%c0_155, %c64_156], %299 {strides = array<i32>} : memref<128x288xf32, #tpu.memory_space<vmem>>, vector<128x32xf32>,
    %301 = vector.extract_strided_slice %291 {offsets = [0, 1, 0, 0], sizes = [2, 8, 8, 32], strides = [1, 1, 1, 1]} : vector<2x10x10x32xf32> to vector<2x8x8x32xf32>
    %302 = vector.shape_cast %301 : vector<2x8x8x32xf32> to vector<128x32xf32>
    %c0_157 = arith.constant 0 : index
    %c96_158 = arith.constant 96 : index
    %303 = vector.load %arg10[%c0_157, %c96_158] : memref<128x288xf32, #tpu.memory_space<vmem>>, vector<128x32xf32>
    tpu.vector_store %arg10[%c0_157, %c96_158], %302 {strides = array<i32>} : memref<128x288xf32, #tpu.memory_space<vmem>>, vector<128x32xf32>,
    %304 = vector.extract_strided_slice %291 {offsets = [0, 1, 1, 0], sizes = [2, 8, 8, 32], strides = [1, 1, 1, 1]} : vector<2x10x10x32xf32> to vector<2x8x8x32xf32>
    %305 = vector.shape_cast %304 : vector<2x8x8x32xf32> to vector<128x32xf32>
    %c0_159 = arith.constant 0 : index
    %c128_160 = arith.constant 128 : index
    %306 = vector.load %arg10[%c0_159, %c128_160] : memref<128x288xf32, #tpu.memory_space<vmem>>, vector<128x32xf32>
    tpu.vector_store %arg10[%c0_159, %c128_160], %305 {strides = array<i32>} : memref<128x288xf32, #tpu.memory_space<vmem>>, vector<128x32xf32>,
    %307 = vector.extract_strided_slice %291 {offsets = [0, 1, 2, 0], sizes = [2, 8, 8, 32], strides = [1, 1, 1, 1]} : vector<2x10x10x32xf32> to vector<2x8x8x32xf32>
    %308 = vector.shape_cast %307 : vector<2x8x8x32xf32> to vector<128x32xf32>
    %c0_161 = arith.constant 0 : index
    %c160_162 = arith.constant 160 : index
    %309 = vector.load %arg10[%c0_161, %c160_162] : memref<128x288xf32, #tpu.memory_space<vmem>>, vector<128x32xf32>
    tpu.vector_store %arg10[%c0_161, %c160_162], %308 {strides = array<i32>} : memref<128x288xf32, #tpu.memory_space<vmem>>, vector<128x32xf32>,
    %310 = vector.extract_strided_slice %291 {offsets = [0, 2, 0, 0], sizes = [2, 8, 8, 32], strides = [1, 1, 1, 1]} : vector<2x10x10x32xf32> to vector<2x8x8x32xf32>
    %311 = vector.shape_cast %310 : vector<2x8x8x32xf32> to vector<128x32xf32>
    %c0_163 = arith.constant 0 : index
    %c192_164 = arith.constant 192 : index
    %312 = vector.load %arg10[%c0_163, %c192_164] : memref<128x288xf32, #tpu.memory_space<vmem>>, vector<128x32xf32>
    tpu.vector_store %arg10[%c0_163, %c192_164], %311 {strides = array<i32>} : memref<128x288xf32, #tpu.memory_space<vmem>>, vector<128x32xf32>,
    %313 = vector.extract_strided_slice %291 {offsets = [0, 2, 1, 0], sizes = [2, 8, 8, 32], strides = [1, 1, 1, 1]} : vector<2x10x10x32xf32> to vector<2x8x8x32xf32>
    %314 = vector.shape_cast %313 : vector<2x8x8x32xf32> to vector<128x32xf32>
    %c0_165 = arith.constant 0 : index
    %c224_166 = arith.constant 224 : index
    %315 = vector.load %arg10[%c0_165, %c224_166] : memref<128x288xf32, #tpu.memory_space<vmem>>, vector<128x32xf32>
    tpu.vector_store %arg10[%c0_165, %c224_166], %314 {strides = array<i32>} : memref<128x288xf32, #tpu.memory_space<vmem>>, vector<128x32xf32>,
    %316 = vector.extract_strided_slice %291 {offsets = [0, 2, 2, 0], sizes = [2, 8, 8, 32], strides = [1, 1, 1, 1]} : vector<2x10x10x32xf32> to vector<2x8x8x32xf32>
    %317 = vector.shape_cast %316 : vector<2x8x8x32xf32> to vector<128x32xf32>
    %c0_167 = arith.constant 0 : index
    %c256_168 = arith.constant 256 : index
    %318 = vector.load %arg10[%c0_167, %c256_168] : memref<128x288xf32, #tpu.memory_space<vmem>>, vector<128x32xf32>
    tpu.vector_store %arg10[%c0_167, %c256_168], %317 {strides = array<i32>} : memref<128x288xf32, #tpu.memory_space<vmem>>, vector<128x32xf32>,
    %c1_169 = arith.constant 1 : index
    %c0_170 = arith.constant 0 : index
    %c0_171 = arith.constant 0 : index
    %319 = vector.load %arg5[%c1_169, %c0_170, %c0_171] : memref<2x32x288xf32, #tpu.memory_space<vmem>>, vector<1x32x288xf32>
    %320 = vector.shape_cast %319 : vector<1x32x288xf32> to vector<32x288xf32>
    %c0_172 = arith.constant 0 : index
    %c0_173 = arith.constant 0 : index
    %321 = vector.load %arg10[%c0_172, %c0_173] : memref<128x288xf32, #tpu.memory_space<vmem>>, vector<128x288xf32>
    %cst_174 = arith.constant dense<0.000000e+00> : vector<32x128xf32>
    %322 = tpu.matmul %320, %321, %cst_174 {dimension_numbers = #tpu.dot_dimension_numbers<[1], [1], [0], [0], [0, 0, 1, 0], [], []>} : vector<32x288xf32>, vector<128x288xf32>, vector<32x128xf32> -> vector<32x128xf32>
    %323 = arith.addf %322, %36 : vector<32x128xf32>
    %324 = vector.extract_strided_slice %323 {offsets = [0, 0], sizes = [32, 64], strides = [1, 1]} : vector<32x128xf32> to vector<32x64xf32>
    %c1_175 = arith.constant 1 : index
    %c0_176 = arith.constant 0 : index
    %c0_177 = arith.constant 0 : index
    %c0_178 = arith.constant 0 : index
    %325 = vector.load %arg8[%c1_175, %c0_176, %c0_177, %c0_178] : memref<2x2x32x64xf32, #tpu.memory_space<vmem>>, vector<1x1x32x64xf32>
    %326 = vector.shape_cast %325 : vector<1x1x32x64xf32> to vector<32x64xf32>
    %327 = vector.shape_cast %324 : vector<32x64xf32> to vector<1x1x32x64xf32>
    tpu.vector_store %arg8[%c1_175, %c0_176, %c0_177, %c0_178], %327 {strides = array<i32>} : memref<2x2x32x64xf32, #tpu.memory_space<vmem>>, vector<1x1x32x64xf32>,
    %328 = vector.extract_strided_slice %323 {offsets = [0, 64], sizes = [32, 64], strides = [1, 1]} : vector<32x128xf32> to vector<32x64xf32>
    %c1_179 = arith.constant 1 : index
    %c1_180 = arith.constant 1 : index
    %c0_181 = arith.constant 0 : index
    %c0_182 = arith.constant 0 : index
    %329 = vector.load %arg8[%c1_179, %c1_180, %c0_181, %c0_182] : memref<2x2x32x64xf32, #tpu.memory_space<vmem>>, vector<1x1x32x64xf32>
    %330 = vector.shape_cast %329 : vector<1x1x32x64xf32> to vector<32x64xf32>
    %331 = vector.shape_cast %328 : vector<32x64xf32> to vector<1x1x32x64xf32>
    tpu.vector_store %arg8[%c1_179, %c1_180, %c0_181, %c0_182], %331 {strides = array<i32>} : memref<2x2x32x64xf32, #tpu.memory_space<vmem>>, vector<1x1x32x64xf32>,
    return
  }
  func.func @transform_0(%arg0: i32) -> (i32, i32, i32, i32) {
    %c0_i32 = arith.constant 0 : i32
    %c0_i32_0 = arith.constant 0 : i32
    %c0_i32_1 = arith.constant 0 : i32
    %c0_i32_2 = arith.constant 0 : i32
    %c0_i32_3 = arith.constant 0 : i32
    return %c0_i32, %c0_i32_0, %c0_i32_1, %c0_i32_2 : i32, i32, i32, i32
  }
  func.func @transform_1(%arg0: i32) -> (i32, i32) {
    %c0_i32 = arith.constant 0 : i32
    %c0_i32_0 = arith.constant 0 : i32
    %c0_i32_1 = arith.constant 0 : i32
    return %c0_i32, %c0_i32_0 : i32, i32
  }
  func.func @transform_2(%arg0: i32) -> (i32, i32) {
    %c0_i32 = arith.constant 0 : i32
    %c0_i32_0 = arith.constant 0 : i32
    %c0_i32_1 = arith.constant 0 : i32
    return %c0_i32, %c0_i32_0 : i32, i32
  }
  func.func @transform_3(%arg0: i32) -> (i32, i32) {
    %c0_i32 = arith.constant 0 : i32
    %c0_i32_0 = arith.constant 0 : i32
    %c0_i32_1 = arith.constant 0 : i32
    return %c0_i32, %c0_i32_0 : i32, i32
  }
  func.func @transform_4(%arg0: i32) -> (i32, i32, i32) {
    %c0_i32 = arith.constant 0 : i32
    %c0_i32_0 = arith.constant 0 : i32
    %c0_i32_1 = arith.constant 0 : i32
    %c0_i32_2 = arith.constant 0 : i32
    return %c0_i32, %c0_i32_0, %c0_i32_1 : i32, i32, i32
  }
  func.func @transform_5(%arg0: i32) -> (i32, i32) {
    %c0_i32 = arith.constant 0 : i32
    %c0_i32_0 = arith.constant 0 : i32
    %c0_i32_1 = arith.constant 0 : i32
    return %c0_i32, %c0_i32_0 : i32, i32
  }
  func.func @transform_6(%arg0: i32) -> (i32, i32) {
    %c0_i32 = arith.constant 0 : i32
    %c0_i32_0 = arith.constant 0 : i32
    %c0_i32_1 = arith.constant 0 : i32
    return %c0_i32, %c0_i32_0 : i32, i32
  }
  func.func @transform_7(%arg0: i32) -> (i32, i32, i32, i32) {
    %c0_i32 = arith.constant 0 : i32
    %c0_i32_0 = arith.constant 0 : i32
    %c0_i32_1 = arith.constant 0 : i32
    %c0_i32_2 = arith.constant 0 : i32
    %c0_i32_3 = arith.constant 0 : i32
    return %c0_i32, %c0_i32_0, %c0_i32_1, %c0_i32_2 : i32, i32, i32, i32
  }
}

</mosaic_0001>

<llo_original>
// kernel: monkey_forward.1
$region0: #{monkey_forward.1}
  #allocation0 [shape = 'u32[]', space=smem, size = 0x4, offset = 0x4, fixed_abs, tag = 'smem constant byte address 0x4 - core index']
  #allocation1 [shape = 'u32[72,128]{1,0:T(1,128)}', space=vmem, size = 0x9000, scoped, tag = 'internal scratch']
  #allocation2 [shape = 'f32[2,10,10,32]{3,2,1,0:T(8,128)}', space=vmem, size = 0x28000, scoped, tag = 'scratch operand']
  #allocation3 [shape = 'f32[128,288]{1,0:T(8,128)}', space=vmem, size = 0x30000, scoped, tag = 'scratch operand']
  %s0 = inlined_call_operand.hbm [shape: f32[2,8,8,16], index: 0, kind: input, shape index: {}]
  %s1 = inlined_call_operand.vmem [shape: f32[144,32], index: 1, kind: input, shape index: {}]
  %s2 = inlined_call_operand.hbm [shape: f32[32,144], index: 2, kind: input, shape index: {}]
  %s3 = inlined_call_operand.hbm [shape: f32[288,192], index: 3, kind: input, shape index: {}]
  %s4 = inlined_call_operand.vmem [shape: f32[2,32,288], index: 4, kind: input, shape index: {}]
  %s5 = inlined_call_operand.vmem [shape: f32[1,32], index: 5, kind: input, shape index: {}]
  %s6 = inlined_call_operand.vmem [shape: f32[1,32], index: 6, kind: input, shape index: {}]
  %s7 = inlined_call_operand.vmem [shape: f32[2,2,32,64], index: 7, kind: output, shape index: {}]
  %s8 = sld [smem:[#allocation0]]
  $region50: #{monkey_forward.1} parent=0
    _
  %s10 = ssub.s32 1, %s8
  %s11 = scalar_select 0, %s10, %s8
  $region1: #{monkey_forward.1} parent=0
    #allocation4 [shape = 'u8[65536]{0}', space=vmem, size = 0x10000, scoped, tag = 'input window, operand 0, single buffered']
    #allocation5 [shape = 's32[1]{0}', space=sflag, size = 0x4, scoped, tag = 'scoped memory for monkey_forward.1']
    #allocation6 [shape = 'u8[32768]{0}', space=vmem, size = 0x8000, scoped, tag = 'input window, operand 2, single buffered']
    #allocation7 [shape = 's32[1]{0}', space=sflag, size = 0x4, scoped, tag = 'scoped memory for monkey_forward.1']
    #allocation8 [shape = 'u8[294912]{0}', space=vmem, size = 0x48000, scoped, tag = 'input window, operand 3, single buffered']
    %12 = vsyncpa [#allocation5], 0
    %13 = vsyncpa [#allocation7], 0
    // Predicated region
    $region2: #{monkey_forward.1} parent=1 // pred_check
      _
    $region3: #{monkey_forward.1} parent=1 // pred_check_branch
      %15 = sbr.rel (0) target = $region5
    $region4: #{monkey_forward.1} parent=1 // pred_region
      %17 = vsyncadd [#allocation5], 0
      %s18 = sshll.u32 %s0, 4
      %s19 = int_to_ptr.hbm [resolvable:$true] %s18
      %s20 = sshll.u32 [#allocation4], 4
      %s21 = int_to_ptr.vmem [resolvable:$true] %s20
      %26 = dma.hbm_to_vmem [thread:$0]  %s19, 2048, %s21, [#allocation5], 128, 128, 8
    $region5: #{monkey_forward.1} parent=1 // pred_fallthru
      _
    // Predicated region
    $region6: #{monkey_forward.1} parent=1 // pred_check
      _
    $region7: #{monkey_forward.1} parent=1 // pred_check_branch
      %28 = sbr.rel (0) target = $region9
    $region8: #{monkey_forward.1} parent=1 // pred_region
      _
    $region9: #{monkey_forward.1} parent=1 // pred_fallthru
      _
    // Predicated region
    $region10: #{monkey_forward.1} parent=1 // pred_check
      _
    $region11: #{monkey_forward.1} parent=1 // pred_check_branch
      %30 = sbr.rel (0) target = $region13
    $region12: #{monkey_forward.1} parent=1 // pred_region
      %32 = vsyncadd [#allocation7], 0
      %s33 = sshll.u32 %s2, 4
      %s34 = int_to_ptr.hbm [resolvable:$true] %s33
      %s35 = sshll.u32 [#allocation6], 4
      %s36 = int_to_ptr.vmem [resolvable:$true] %s35
      %41 = dma.hbm_to_vmem [thread:$0]  %s34, 1024, %s36, [#allocation7], 256, 256, 16
    $region13: #{monkey_forward.1} parent=1 // pred_fallthru
      _
    // Predicated region
    $region14: #{monkey_forward.1} parent=1 // pred_check
      _
    $region15: #{monkey_forward.1} parent=1 // pred_check_branch
      %43 = sbr.rel (0) target = $region17
    $region16: #{monkey_forward.1} parent=1 // pred_region
      %45 = vsyncadd [#allocation7], 0
      %s46 = sshll.u32 %s3, 4
      %s47 = int_to_ptr.hbm [resolvable:$true] %s46
      %s48 = sshll.u32 [#allocation8], 4
      %s49 = int_to_ptr.vmem [resolvable:$true] %s48
      %54 = dma.hbm_to_vmem [thread:$0]  %s47, 9216, %s49, [#allocation7], 256, 256, 16
    $region17: #{monkey_forward.1} parent=1 // pred_fallthru
      _
    // Predicated region
    $region18: #{monkey_forward.1} parent=1 // pred_check
      _
    $region19: #{monkey_forward.1} parent=1 // pred_check_branch
      %56 = sbr.rel (0) target = $region21
    $region20: #{monkey_forward.1} parent=1 // pred_region
      _
    $region21: #{monkey_forward.1} parent=1 // pred_fallthru
      _
    // Predicated region
    $region22: #{monkey_forward.1} parent=1 // pred_check
      _
    $region23: #{monkey_forward.1} parent=1 // pred_check_branch
      %58 = sbr.rel (0) target = $region25
    $region24: #{monkey_forward.1} parent=1 // pred_region
      _
    $region25: #{monkey_forward.1} parent=1 // pred_fallthru
      _
    // Predicated region
    $region26: #{monkey_forward.1} parent=1 // pred_check
      _
    $region27: #{monkey_forward.1} parent=1 // pred_check_branch
      %60 = sbr.rel (0) target = $region29
    $region28: #{monkey_forward.1} parent=1 // pred_region
      _
    $region29: #{monkey_forward.1} parent=1 // pred_fallthru
      _
    // Predicated region
    $region30: #{monkey_forward.1} parent=1 // pred_check
      _
    $region31: #{monkey_forward.1} parent=1 // pred_check_branch
      %62 = sbr.rel (0) target = $region33
    $region32: #{monkey_forward.1} parent=1 // pred_region
      %64 = dma.done [#allocation5], 2048
    $region33: #{monkey_forward.1} parent=1 // pred_fallthru
      _
    // Predicated region
    $region34: #{monkey_forward.1} parent=1 // pred_check
      _
    $region35: #{monkey_forward.1} parent=1 // pred_check_branch
      %66 = sbr.rel (0) target = $region37
    $region36: #{monkey_forward.1} parent=1 // pred_region
      %68 = dma.done [#allocation7], 1024
    $region37: #{monkey_forward.1} parent=1 // pred_fallthru
      _
    // Predicated region
    $region38: #{monkey_forward.1} parent=1 // pred_check
      _
    $region39: #{monkey_forward.1} parent=1 // pred_check_branch
      %70 = sbr.rel (0) target = $region41
    $region40: #{monkey_forward.1} parent=1 // pred_region
      %72 = dma.done [#allocation7], 9216
    $region41: #{monkey_forward.1} parent=1 // pred_fallthru
      _
    %vm73 = vcmask 261120
    %74 = vst.msk [vmem:[#allocation2] sm:$0xff] %vm73, 0.0
    %vm75 = vcmask 254976
    %76 = vst.msk [vmem:[#allocation2 + $0x8] sm:$0x3] %vm75, 0.0
    %77 = vst.msk [vmem:[#allocation2 + $0x10] sm:$0xff] %vm73, 0.0
    %78 = vst.msk [vmem:[#allocation2 + $0x18] sm:$0x3] %vm75, 0.0
    %79 = vst.msk [vmem:[#allocation2 + $0x20] sm:$0xff] %vm73, 0.0
    %80 = vst.msk [vmem:[#allocation2 + $0x28] sm:$0x3] %vm75, 0.0
    %81 = vst.msk [vmem:[#allocation2 + $0x30] sm:$0xff] %vm73, 0.0
    %82 = vst.msk [vmem:[#allocation2 + $0x38] sm:$0x3] %vm75, 0.0
    %83 = vst.msk [vmem:[#allocation2 + $0x40] sm:$0xff] %vm73, 0.0
    %84 = vst.msk [vmem:[#allocation2 + $0x48] sm:$0x3] %vm75, 0.0
    %85 = vst.msk [vmem:[#allocation2 + $0x50] sm:$0xff] %vm73, 0.0
    %86 = vst.msk [vmem:[#allocation2 + $0x58] sm:$0x3] %vm75, 0.0
    %87 = vst.msk [vmem:[#allocation2 + $0x60] sm:$0xff] %vm73, 0.0
    %88 = vst.msk [vmem:[#allocation2 + $0x68] sm:$0x3] %vm75, 0.0
    %89 = vst.msk [vmem:[#allocation2 + $0x70] sm:$0xff] %vm73, 0.0
    %90 = vst.msk [vmem:[#allocation2 + $0x78] sm:$0x3] %vm75, 0.0
    %91 = vst.msk [vmem:[#allocation2 + $0x80] sm:$0xff] %vm73, 0.0
    %92 = vst.msk [vmem:[#allocation2 + $0x88] sm:$0x3] %vm75, 0.0
    %93 = vst.msk [vmem:[#allocation2 + $0x90] sm:$0xff] %vm73, 0.0
    %94 = vst.msk [vmem:[#allocation2 + $0x98] sm:$0x3] %vm75, 0.0
    %95 = vst.msk [vmem:[#allocation2 + $0xa0] sm:$0xff] %vm73, 0.0
    %96 = vst.msk [vmem:[#allocation2 + $0xa8] sm:$0x3] %vm75, 0.0
    %97 = vst.msk [vmem:[#allocation2 + $0xb0] sm:$0xff] %vm73, 0.0
    %98 = vst.msk [vmem:[#allocation2 + $0xb8] sm:$0x3] %vm75, 0.0
    %99 = vst.msk [vmem:[#allocation2 + $0xc0] sm:$0xff] %vm73, 0.0
    %100 = vst.msk [vmem:[#allocation2 + $0xc8] sm:$0x3] %vm75, 0.0
    %101 = vst.msk [vmem:[#allocation2 + $0xd0] sm:$0xff] %vm73, 0.0
    %102 = vst.msk [vmem:[#allocation2 + $0xd8] sm:$0x3] %vm75, 0.0
    %103 = vst.msk [vmem:[#allocation2 + $0xe0] sm:$0xff] %vm73, 0.0
    %104 = vst.msk [vmem:[#allocation2 + $0xe8] sm:$0x3] %vm75, 0.0
    %105 = vst.msk [vmem:[#allocation2 + $0xf0] sm:$0xff] %vm73, 0.0
    %106 = vst.msk [vmem:[#allocation2 + $0xf8] sm:$0x3] %vm75, 0.0
    %107 = vst.msk [vmem:[#allocation2 + $0x100] sm:$0xff] %vm73, 0.0
    %108 = vst.msk [vmem:[#allocation2 + $0x108] sm:$0x3] %vm75, 0.0
    %109 = vst.msk [vmem:[#allocation2 + $0x110] sm:$0xff] %vm73, 0.0
    %110 = vst.msk [vmem:[#allocation2 + $0x118] sm:$0x3] %vm75, 0.0
    %111 = vst.msk [vmem:[#allocation2 + $0x120] sm:$0xff] %vm73, 0.0
    %112 = vst.msk [vmem:[#allocation2 + $0x128] sm:$0x3] %vm75, 0.0
    %113 = vst.msk [vmem:[#allocation2 + $0x130] sm:$0xff] %vm73, 0.0
    %114 = vst.msk [vmem:[#allocation2 + $0x138] sm:$0x3] %vm75, 0.0
    %v115 = vld [vmem:[#allocation4] sm:$0xff]
    %v116 = vld [vmem:[#allocation4 + $0x8] sm:$0xff]
    %v117 = vld [vmem:[#allocation4 + $0x10] sm:$0xff]
    %v118 = vld [vmem:[#allocation4 + $0x18] sm:$0xff]
    %v119 = vld [vmem:[#allocation4 + $0x20] sm:$0xff]
    %v120 = vld [vmem:[#allocation4 + $0x28] sm:$0xff]
    %v121 = vld [vmem:[#allocation4 + $0x30] sm:$0xff]
    %v122 = vld [vmem:[#allocation4 + $0x38] sm:$0xff]
    %v123 = vld [vmem:[#allocation4 + $0x40] sm:$0xff]
    %v124 = vld [vmem:[#allocation4 + $0x48] sm:$0xff]
    %v125 = vld [vmem:[#allocation4 + $0x50] sm:$0xff]
    %v126 = vld [vmem:[#allocation4 + $0x58] sm:$0xff]
    %v127 = vld [vmem:[#allocation4 + $0x60] sm:$0xff]
    %v128 = vld [vmem:[#allocation4 + $0x68] sm:$0xff]
    %v129 = vld [vmem:[#allocation4 + $0x70] sm:$0xff]
    %v130 = vld [vmem:[#allocation4 + $0x78] sm:$0xff]
    %s131 = scalar_lea.vmem [#allocation2], 16
    %vm132 = vcmask 130048
    %133 = vst.msk [vmem:[%s131 + $0x1] sm:$0xff] %vm132, %v115
    %134 = vst.msk [vmem:[%s131 + $0x11] sm:$0xff] %vm132, %v116
    %135 = vst.msk [vmem:[%s131 + $0x21] sm:$0xff] %vm132, %v117
    %136 = vst.msk [vmem:[%s131 + $0x31] sm:$0xff] %vm132, %v118
    %137 = vst.msk [vmem:[%s131 + $0x41] sm:$0xff] %vm132, %v119
    %138 = vst.msk [vmem:[%s131 + $0x51] sm:$0xff] %vm132, %v120
    %139 = vst.msk [vmem:[%s131 + $0x61] sm:$0xff] %vm132, %v121
    %140 = vst.msk [vmem:[%s131 + $0x71] sm:$0xff] %vm132, %v122
    %141 = vst.msk [vmem:[%s131 + $0xa1] sm:$0xff] %vm132, %v123
    %142 = vst.msk [vmem:[%s131 + $0xb1] sm:$0xff] %vm132, %v124
    %143 = vst.msk [vmem:[%s131 + $0xc1] sm:$0xff] %vm132, %v125
    %144 = vst.msk [vmem:[%s131 + $0xd1] sm:$0xff] %vm132, %v126
    %145 = vst.msk [vmem:[%s131 + $0xe1] sm:$0xff] %vm132, %v127
    %146 = vst.msk [vmem:[%s131 + $0xf1] sm:$0xff] %vm132, %v128
    %147 = vst.msk [vmem:[%s131 + $0x101] sm:$0xff] %vm132, %v129
    %148 = vst.msk [vmem:[%s131 + $0x111] sm:$0xff] %vm132, %v130
    %v149 = vld [vmem:[#allocation2] sm:$0xff]
    %v150 = vld [vmem:[#allocation2 + $0x8] sm:$0x3]
    %v151 = vld [vmem:[#allocation2 + $0x10] sm:$0xff]
    %v152 = vld [vmem:[#allocation2 + $0x18] sm:$0x3]
    %v153 = vld [vmem:[#allocation2 + $0x20] sm:$0xff]
    %v154 = vld [vmem:[#allocation2 + $0x28] sm:$0x3]
    %v155 = vld [vmem:[#allocation2 + $0x30] sm:$0xff]
    %v156 = vld [vmem:[#allocation2 + $0x38] sm:$0x3]
    %v157 = vld [vmem:[#allocation2 + $0x40] sm:$0xff]
    %v158 = vld [vmem:[#allocation2 + $0x48] sm:$0x3]
    %v159 = vld [vmem:[#allocation2 + $0x50] sm:$0xff]
    %v160 = vld [vmem:[#allocation2 + $0x58] sm:$0x3]
    %v161 = vld [vmem:[#allocation2 + $0x60] sm:$0xff]
    %v162 = vld [vmem:[#allocation2 + $0x68] sm:$0x3]
    %v163 = vld [vmem:[#allocation2 + $0x70] sm:$0xff]
    %v164 = vld [vmem:[#allocation2 + $0x78] sm:$0x3]
    %v165 = vld [vmem:[#allocation2 + $0x80] sm:$0xff]
    %v166 = vld [vmem:[#allocation2 + $0x88] sm:$0x3]
    %v167 = vld [vmem:[#allocation2 + $0x90] sm:$0xff]
    %v168 = vld [vmem:[#allocation2 + $0x98] sm:$0x3]
    %v169 = vld [vmem:[#allocation2 + $0xa0] sm:$0xff]
    %v170 = vld [vmem:[#allocation2 + $0xa8] sm:$0x3]
    %v171 = vld [vmem:[#allocation2 + $0xb0] sm:$0xff]
    %v172 = vld [vmem:[#allocation2 + $0xb8] sm:$0x3]
    %v173 = vld [vmem:[#allocation2 + $0xc0] sm:$0xff]
    %v174 = vld [vmem:[#allocation2 + $0xc8] sm:$0x3]
    %v175 = vld [vmem:[#allocation2 + $0xd0] sm:$0xff]
    %v176 = vld [vmem:[#allocation2 + $0xd8] sm:$0x3]
    %v177 = vld [vmem:[#allocation2 + $0xe0] sm:$0xff]
    %v178 = vld [vmem:[#allocation2 + $0xe8] sm:$0x3]
    %v179 = vld [vmem:[#allocation2 + $0xf0] sm:$0xff]
    %v180 = vld [vmem:[#allocation2 + $0xf8] sm:$0x3]
    %v181 = vld [vmem:[#allocation2 + $0x100] sm:$0xff]
    %v182 = vld [vmem:[#allocation2 + $0x108] sm:$0x3]
    %v183 = vld [vmem:[#allocation2 + $0x110] sm:$0xff]
    %v184 = vld [vmem:[#allocation2 + $0x118] sm:$0x3]
    %v185 = vld [vmem:[#allocation2 + $0x120] sm:$0xff]
    %v186 = vld [vmem:[#allocation2 + $0x128] sm:$0x3]
    %v187 = vld [vmem:[#allocation2 + $0x130] sm:$0xff]
    %v188 = vld [vmem:[#allocation2 + $0x138] sm:$0x3]
    %189 = vst.msk [vmem:[#allocation3] sm:$0xff] %vm132, %v149
    %190 = vst.msk [vmem:[#allocation3 + $0x18] sm:$0xff] %vm132, %v151
    %191 = vst.msk [vmem:[#allocation3 + $0x30] sm:$0xff] %vm132, %v153
    %192 = vst.msk [vmem:[#allocation3 + $0x48] sm:$0xff] %vm132, %v155
    %193 = vst.msk [vmem:[#allocation3 + $0x60] sm:$0xff] %vm132, %v157
    %194 = vst.msk [vmem:[#allocation3 + $0x78] sm:$0xff] %vm132, %v159
    %195 = vst.msk [vmem:[#allocation3 + $0x90] sm:$0xff] %vm132, %v161
    %196 = vst.msk [vmem:[#allocation3 + $0xa8] sm:$0xff] %vm132, %v163
    %197 = vst.msk [vmem:[#allocation3 + $0xc0] sm:$0xff] %vm132, %v169
    %198 = vst.msk [vmem:[#allocation3 + $0xd8] sm:$0xff] %vm132, %v171
    %199 = vst.msk [vmem:[#allocation3 + $0xf0] sm:$0xff] %vm132, %v173
    %200 = vst.msk [vmem:[#allocation3 + $0x108] sm:$0xff] %vm132, %v175
    %201 = vst.msk [vmem:[#allocation3 + $0x120] sm:$0xff] %vm132, %v177
    %202 = vst.msk [vmem:[#allocation3 + $0x138] sm:$0xff] %vm132, %v179
    %203 = vst.msk [vmem:[#allocation3 + $0x150] sm:$0xff] %vm132, %v181
    %204 = vst.msk [vmem:[#allocation3 + $0x168] sm:$0xff] %vm132, %v183
    %vm237 = vcmask 1046528
    %v238 = vrot.slane %v149, 1
    %v239 = vrot.slane %v150, 1
    %v240 = vsel %vm237, %v238, %v239
    %v241 = vrot.slane %v151, 1
    %v242 = vrot.slane %v152, 1
    %v243 = vsel %vm237, %v241, %v242
    %v244 = vrot.slane %v153, 1
    %v245 = vrot.slane %v154, 1
    %v246 = vsel %vm237, %v244, %v245
    %v247 = vrot.slane %v155, 1
    %v248 = vrot.slane %v156, 1
    %v249 = vsel %vm237, %v247, %v248
    %v250 = vrot.slane %v157, 1
    %v251 = vrot.slane %v158, 1
    %v252 = vsel %vm237, %v250, %v251
    %v253 = vrot.slane %v159, 1
    %v254 = vrot.slane %v160, 1
    %v255 = vsel %vm237, %v253, %v254
    %v256 = vrot.slane %v161, 1
    %v257 = vrot.slane %v162, 1
    %v258 = vsel %vm237, %v256, %v257
    %v259 = vrot.slane %v163, 1
    %v260 = vrot.slane %v164, 1
    %v261 = vsel %vm237, %v259, %v260
    %v262 = vrot.slane %v169, 1
    %v263 = vrot.slane %v170, 1
    %v264 = vsel %vm237, %v262, %v263
    %v265 = vrot.slane %v171, 1
    %v266 = vrot.slane %v172, 1
    %v267 = vsel %vm237, %v265, %v266
    %v268 = vrot.slane %v173, 1
    %v269 = vrot.slane %v174, 1
    %v270 = vsel %vm237, %v268, %v269
    %v271 = vrot.slane %v175, 1
    %v272 = vrot.slane %v176, 1
    %v273 = vsel %vm237, %v271, %v272
    %v274 = vrot.slane %v177, 1
    %v275 = vrot.slane %v178, 1
    %v276 = vsel %vm237, %v274, %v275
    %v277 = vrot.slane %v179, 1
    %v278 = vrot.slane %v180, 1
    %v279 = vsel %vm237, %v277, %v278
    %v280 = vrot.slane %v181, 1
    %v281 = vrot.slane %v182, 1
    %v282 = vsel %vm237, %v280, %v281
    %v283 = vrot.slane %v183, 1
    %v284 = vrot.slane %v184, 1
    %v285 = vsel %vm237, %v283, %v284
    %286 = vrot.lane.b32.xlu0 %v240, 16
    %v287 = vpop.permute.xlu0 %286
    %288 = vrot.lane.b32.xlu0 %v243, 16
    %v289 = vpop.permute.xlu0 %288
    %290 = vrot.lane.b32.xlu0 %v246, 16
    %v291 = vpop.permute.xlu0 %290
    %292 = vrot.lane.b32.xlu0 %v249, 16
    %v293 = vpop.permute.xlu0 %292
    %294 = vrot.lane.b32.xlu0 %v252, 16
    %v295 = vpop.permute.xlu0 %294
    %296 = vrot.lane.b32.xlu0 %v255, 16
    %v297 = vpop.permute.xlu0 %296
    %298 = vrot.lane.b32.xlu0 %v258, 16
    %v299 = vpop.permute.xlu0 %298
    %300 = vrot.lane.b32.xlu0 %v261, 16
    %v301 = vpop.permute.xlu0 %300
    %302 = vrot.lane.b32.xlu0 %v264, 16
    %v303 = vpop.permute.xlu0 %302
    %304 = vrot.lane.b32.xlu0 %v267, 16
    %v305 = vpop.permute.xlu0 %304
    %306 = vrot.lane.b32.xlu0 %v270, 16
    %v307 = vpop.permute.xlu0 %306
    %308 = vrot.lane.b32.xlu0 %v273, 16
    %v309 = vpop.permute.xlu0 %308
    %310 = vrot.lane.b32.xlu0 %v276, 16
    %v311 = vpop.permute.xlu0 %310
    %312 = vrot.lane.b32.xlu0 %v279, 16
    %v313 = vpop.permute.xlu0 %312
    %314 = vrot.lane.b32.xlu0 %v282, 16
    %v315 = vpop.permute.xlu0 %314
    %316 = vrot.lane.b32.xlu0 %v285, 16
    %v317 = vpop.permute.xlu0 %316
    %vm334 = vcmask 261248
    %335 = vst.msk [vmem:[#allocation3] sm:$0xff] %vm334, %v287
    %336 = vst.msk [vmem:[#allocation3 + $0x18] sm:$0xff] %vm334, %v289
    %337 = vst.msk [vmem:[#allocation3 + $0x30] sm:$0xff] %vm334, %v291
    %338 = vst.msk [vmem:[#allocation3 + $0x48] sm:$0xff] %vm334, %v293
    %339 = vst.msk [vmem:[#allocation3 + $0x60] sm:$0xff] %vm334, %v295
    %340 = vst.msk [vmem:[#allocation3 + $0x78] sm:$0xff] %vm334, %v297
    %341 = vst.msk [vmem:[#allocation3 + $0x90] sm:$0xff] %vm334, %v299
    %342 = vst.msk [vmem:[#allocation3 + $0xa8] sm:$0xff] %vm334, %v301
    %343 = vst.msk [vmem:[#allocation3 + $0xc0] sm:$0xff] %vm334, %v303
    %344 = vst.msk [vmem:[#allocation3 + $0xd8] sm:$0xff] %vm334, %v305
    %345 = vst.msk [vmem:[#allocation3 + $0xf0] sm:$0xff] %vm334, %v307
    %346 = vst.msk [vmem:[#allocation3 + $0x108] sm:$0xff] %vm334, %v309
    %347 = vst.msk [vmem:[#allocation3 + $0x120] sm:$0xff] %vm334, %v311
    %348 = vst.msk [vmem:[#allocation3 + $0x138] sm:$0xff] %vm334, %v313
    %349 = vst.msk [vmem:[#allocation3 + $0x150] sm:$0xff] %vm334, %v315
    %350 = vst.msk [vmem:[#allocation3 + $0x168] sm:$0xff] %vm334, %v317
    %vm351 = vcmask 1045504
    %v352 = vrot.slane %v149, 2
    %v353 = vrot.slane %v150, 2
    %v354 = vsel %vm351, %v352, %v353
    %v355 = vrot.slane %v151, 2
    %v356 = vrot.slane %v152, 2
    %v357 = vsel %vm351, %v355, %v356
    %v358 = vrot.slane %v153, 2
    %v359 = vrot.slane %v154, 2
    %v360 = vsel %vm351, %v358, %v359
    %v361 = vrot.slane %v155, 2
    %v362 = vrot.slane %v156, 2
    %v363 = vsel %vm351, %v361, %v362
    %v364 = vrot.slane %v157, 2
    %v365 = vrot.slane %v158, 2
    %v366 = vsel %vm351, %v364, %v365
    %v367 = vrot.slane %v159, 2
    %v368 = vrot.slane %v160, 2
    %v369 = vsel %vm351, %v367, %v368
    %v370 = vrot.slane %v161, 2
    %v371 = vrot.slane %v162, 2
    %v372 = vsel %vm351, %v370, %v371
    %v373 = vrot.slane %v163, 2
    %v374 = vrot.slane %v164, 2
    %v375 = vsel %vm351, %v373, %v374
    %v376 = vrot.slane %v169, 2
    %v377 = vrot.slane %v170, 2
    %v378 = vsel %vm351, %v376, %v377
    %v379 = vrot.slane %v171, 2
    %v380 = vrot.slane %v172, 2
    %v381 = vsel %vm351, %v379, %v380
    %v382 = vrot.slane %v173, 2
    %v383 = vrot.slane %v174, 2
    %v384 = vsel %vm351, %v382, %v383
    %v385 = vrot.slane %v175, 2
    %v386 = vrot.slane %v176, 2
    %v387 = vsel %vm351, %v385, %v386
    %v388 = vrot.slane %v177, 2
    %v389 = vrot.slane %v178, 2
    %v390 = vsel %vm351, %v388, %v389
    %v391 = vrot.slane %v179, 2
    %v392 = vrot.slane %v180, 2
    %v393 = vsel %vm351, %v391, %v392
    %v394 = vrot.slane %v181, 2
    %v395 = vrot.slane %v182, 2
    %v396 = vsel %vm351, %v394, %v395
    %v397 = vrot.slane %v183, 2
    %v398 = vrot.slane %v184, 2
    %v399 = vsel %vm351, %v397, %v398
    %400 = vrot.lane.b32.xlu0 %v354, 32
    %v401 = vpop.permute.xlu0 %400
    %402 = vrot.lane.b32.xlu0 %v357, 32
    %v403 = vpop.permute.xlu0 %402
    %404 = vrot.lane.b32.xlu0 %v360, 32
    %v405 = vpop.permute.xlu0 %404
    %406 = vrot.lane.b32.xlu0 %v363, 32
    %v407 = vpop.permute.xlu0 %406
    %408 = vrot.lane.b32.xlu0 %v366, 32
    %v409 = vpop.permute.xlu0 %408
    %410 = vrot.lane.b32.xlu0 %v369, 32
    %v411 = vpop.permute.xlu0 %410
    %412 = vrot.lane.b32.xlu0 %v372, 32
    %v413 = vpop.permute.xlu0 %412
    %414 = vrot.lane.b32.xlu0 %v375, 32
    %v415 = vpop.permute.xlu0 %414
    %416 = vrot.lane.b32.xlu0 %v378, 32
    %v417 = vpop.permute.xlu0 %416
    %418 = vrot.lane.b32.xlu0 %v381, 32
    %v419 = vpop.permute.xlu0 %418
    %420 = vrot.lane.b32.xlu0 %v384, 32
    %v421 = vpop.permute.xlu0 %420
    %422 = vrot.lane.b32.xlu0 %v387, 32
    %v423 = vpop.permute.xlu0 %422
    %424 = vrot.lane.b32.xlu0 %v390, 32
    %v425 = vpop.permute.xlu0 %424
    %426 = vrot.lane.b32.xlu0 %v393, 32
    %v427 = vpop.permute.xlu0 %426
    %428 = vrot.lane.b32.xlu0 %v396, 32
    %v429 = vpop.permute.xlu0 %428
    %430 = vrot.lane.b32.xlu0 %v399, 32
    %v431 = vpop.permute.xlu0 %430
    %vm448 = vcmask 392448
    %449 = vst.msk [vmem:[#allocation3] sm:$0xff] %vm448, %v401
    %450 = vst.msk [vmem:[#allocation3 + $0x18] sm:$0xff] %vm448, %v403
    %451 = vst.msk [vmem:[#allocation3 + $0x30] sm:$0xff] %vm448, %v405
    %452 = vst.msk [vmem:[#allocation3 + $0x48] sm:$0xff] %vm448, %v407
    %453 = vst.msk [vmem:[#allocation3 + $0x60] sm:$0xff] %vm448, %v409
    %454 = vst.msk [vmem:[#allocation3 + $0x78] sm:$0xff] %vm448, %v411
    %455 = vst.msk [vmem:[#allocation3 + $0x90] sm:$0xff] %vm448, %v413
    %456 = vst.msk [vmem:[#allocation3 + $0xa8] sm:$0xff] %vm448, %v415
    %457 = vst.msk [vmem:[#allocation3 + $0xc0] sm:$0xff] %vm448, %v417
    %458 = vst.msk [vmem:[#allocation3 + $0xd8] sm:$0xff] %vm448, %v419
    %459 = vst.msk [vmem:[#allocation3 + $0xf0] sm:$0xff] %vm448, %v421
    %460 = vst.msk [vmem:[#allocation3 + $0x108] sm:$0xff] %vm448, %v423
    %461 = vst.msk [vmem:[#allocation3 + $0x120] sm:$0xff] %vm448, %v425
    %462 = vst.msk [vmem:[#allocation3 + $0x138] sm:$0xff] %vm448, %v427
    %463 = vst.msk [vmem:[#allocation3 + $0x150] sm:$0xff] %vm448, %v429
    %464 = vst.msk [vmem:[#allocation3 + $0x168] sm:$0xff] %vm448, %v431
    %467 = vrot.lane.b32.xlu0 %v151, 48
    %v468 = vpop.permute.xlu0 %467
    %469 = vrot.lane.b32.xlu0 %v153, 48
    %v470 = vpop.permute.xlu0 %469
    %471 = vrot.lane.b32.xlu0 %v155, 48
    %v472 = vpop.permute.xlu0 %471
    %473 = vrot.lane.b32.xlu0 %v157, 48
    %v474 = vpop.permute.xlu0 %473
    %475 = vrot.lane.b32.xlu0 %v159, 48
    %v476 = vpop.permute.xlu0 %475
    %477 = vrot.lane.b32.xlu0 %v161, 48
    %v478 = vpop.permute.xlu0 %477
    %479 = vrot.lane.b32.xlu0 %v163, 48
    %v480 = vpop.permute.xlu0 %479
    %481 = vrot.lane.b32.xlu0 %v165, 48
    %v482 = vpop.permute.xlu0 %481
    %483 = vrot.lane.b32.xlu0 %v171, 48
    %v484 = vpop.permute.xlu0 %483
    %485 = vrot.lane.b32.xlu0 %v173, 48
    %v486 = vpop.permute.xlu0 %485
    %487 = vrot.lane.b32.xlu0 %v175, 48
    %v488 = vpop.permute.xlu0 %487
    %489 = vrot.lane.b32.xlu0 %v177, 48
    %v490 = vpop.permute.xlu0 %489
    %491 = vrot.lane.b32.xlu0 %v179, 48
    %v492 = vpop.permute.xlu0 %491
    %493 = vrot.lane.b32.xlu0 %v181, 48
    %v494 = vpop.permute.xlu0 %493
    %495 = vrot.lane.b32.xlu0 %v183, 48
    %v496 = vpop.permute.xlu0 %495
    %497 = vrot.lane.b32.xlu0 %v185, 48
    %v498 = vpop.permute.xlu0 %497
    %vm515 = vcmask 523648
    %516 = vst.msk [vmem:[#allocation3] sm:$0xff] %vm515, %v468
    %517 = vst.msk [vmem:[#allocation3 + $0x18] sm:$0xff] %vm515, %v470
    %518 = vst.msk [vmem:[#allocation3 + $0x30] sm:$0xff] %vm515, %v472
    %519 = vst.msk [vmem:[#allocation3 + $0x48] sm:$0xff] %vm515, %v474
    %520 = vst.msk [vmem:[#allocation3 + $0x60] sm:$0xff] %vm515, %v476
    %521 = vst.msk [vmem:[#allocation3 + $0x78] sm:$0xff] %vm515, %v478
    %522 = vst.msk [vmem:[#allocation3 + $0x90] sm:$0xff] %vm515, %v480
    %523 = vst.msk [vmem:[#allocation3 + $0xa8] sm:$0xff] %vm515, %v482
    %524 = vst.msk [vmem:[#allocation3 + $0xc0] sm:$0xff] %vm515, %v484
    %525 = vst.msk [vmem:[#allocation3 + $0xd8] sm:$0xff] %vm515, %v486
    %526 = vst.msk [vmem:[#allocation3 + $0xf0] sm:$0xff] %vm515, %v488
    %527 = vst.msk [vmem:[#allocation3 + $0x108] sm:$0xff] %vm515, %v490
    %528 = vst.msk [vmem:[#allocation3 + $0x120] sm:$0xff] %vm515, %v492
    %529 = vst.msk [vmem:[#allocation3 + $0x138] sm:$0xff] %vm515, %v494
    %530 = vst.msk [vmem:[#allocation3 + $0x150] sm:$0xff] %vm515, %v496
    %531 = vst.msk [vmem:[#allocation3 + $0x168] sm:$0xff] %vm515, %v498
    %v534 = vrot.slane %v165, 1
    %v535 = vrot.slane %v166, 1
    %v536 = vsel %vm237, %v534, %v535
    %v537 = vrot.slane %v185, 1
    %v538 = vrot.slane %v186, 1
    %v539 = vsel %vm237, %v537, %v538
    %540 = vrot.lane.b32.xlu0 %v243, 64
    %v541 = vpop.permute.xlu0 %540
    %542 = vrot.lane.b32.xlu0 %v246, 64
    %v543 = vpop.permute.xlu0 %542
    %544 = vrot.lane.b32.xlu0 %v249, 64
    %v545 = vpop.permute.xlu0 %544
    %546 = vrot.lane.b32.xlu0 %v252, 64
    %v547 = vpop.permute.xlu0 %546
    %548 = vrot.lane.b32.xlu0 %v255, 64
    %v549 = vpop.permute.xlu0 %548
    %550 = vrot.lane.b32.xlu0 %v258, 64
    %v551 = vpop.permute.xlu0 %550
    %552 = vrot.lane.b32.xlu0 %v261, 64
    %v553 = vpop.permute.xlu0 %552
    %554 = vrot.lane.b32.xlu0 %v536, 64
    %v555 = vpop.permute.xlu0 %554
    %556 = vrot.lane.b32.xlu0 %v267, 64
    %v557 = vpop.permute.xlu0 %556
    %558 = vrot.lane.b32.xlu0 %v270, 64
    %v559 = vpop.permute.xlu0 %558
    %560 = vrot.lane.b32.xlu0 %v273, 64
    %v561 = vpop.permute.xlu0 %560
    %562 = vrot.lane.b32.xlu0 %v276, 64
    %v563 = vpop.permute.xlu0 %562
    %564 = vrot.lane.b32.xlu0 %v279, 64
    %v565 = vpop.permute.xlu0 %564
    %566 = vrot.lane.b32.xlu0 %v282, 64
    %v567 = vpop.permute.xlu0 %566
    %568 = vrot.lane.b32.xlu0 %v285, 64
    %v569 = vpop.permute.xlu0 %568
    %570 = vrot.lane.b32.xlu0 %v539, 64
    %v571 = vpop.permute.xlu0 %570
    %vm588 = vcmask 654848
    %589 = vst.msk [vmem:[#allocation3] sm:$0xff] %vm588, %v541
    %590 = vst.msk [vmem:[#allocation3 + $0x18] sm:$0xff] %vm588, %v543
    %591 = vst.msk [vmem:[#allocation3 + $0x30] sm:$0xff] %vm588, %v545
    %592 = vst.msk [vmem:[#allocation3 + $0x48] sm:$0xff] %vm588, %v547
    %593 = vst.msk [vmem:[#allocation3 + $0x60] sm:$0xff] %vm588, %v549
    %594 = vst.msk [vmem:[#allocation3 + $0x78] sm:$0xff] %vm588, %v551
    %595 = vst.msk [vmem:[#allocation3 + $0x90] sm:$0xff] %vm588, %v553
    %596 = vst.msk [vmem:[#allocation3 + $0xa8] sm:$0xff] %vm588, %v555
    %597 = vst.msk [vmem:[#allocation3 + $0xc0] sm:$0xff] %vm588, %v557
    %598 = vst.msk [vmem:[#allocation3 + $0xd8] sm:$0xff] %vm588, %v559
    %599 = vst.msk [vmem:[#allocation3 + $0xf0] sm:$0xff] %vm588, %v561
    %600 = vst.msk [vmem:[#allocation3 + $0x108] sm:$0xff] %vm588, %v563
    %601 = vst.msk [vmem:[#allocation3 + $0x120] sm:$0xff] %vm588, %v565
    %602 = vst.msk [vmem:[#allocation3 + $0x138] sm:$0xff] %vm588, %v567
    %603 = vst.msk [vmem:[#allocation3 + $0x150] sm:$0xff] %vm588, %v569
    %604 = vst.msk [vmem:[#allocation3 + $0x168] sm:$0xff] %vm588, %v571
    %v605 = vrot.slane %v165, 2
    %v606 = vrot.slane %v166, 2
    %v607 = vsel %vm351, %v605, %v606
    %v608 = vrot.slane %v185, 2
    %v609 = vrot.slane %v186, 2
    %v610 = vsel %vm351, %v608, %v609
    %611 = vrot.lane.b32.xlu0 %v357, 80
    %v612 = vpop.permute.xlu0 %611
    %613 = vrot.lane.b32.xlu0 %v360, 80
    %v614 = vpop.permute.xlu0 %613
    %615 = vrot.lane.b32.xlu0 %v363, 80
    %v616 = vpop.permute.xlu0 %615
    %617 = vrot.lane.b32.xlu0 %v366, 80
    %v618 = vpop.permute.xlu0 %617
    %619 = vrot.lane.b32.xlu0 %v369, 80
    %v620 = vpop.permute.xlu0 %619
    %621 = vrot.lane.b32.xlu0 %v372, 80
    %v622 = vpop.permute.xlu0 %621
    %623 = vrot.lane.b32.xlu0 %v375, 80
    %v624 = vpop.permute.xlu0 %623
    %625 = vrot.lane.b32.xlu0 %v607, 80
    %v626 = vpop.permute.xlu0 %625
    %627 = vrot.lane.b32.xlu0 %v381, 80
    %v628 = vpop.permute.xlu0 %627
    %629 = vrot.lane.b32.xlu0 %v384, 80
    %v630 = vpop.permute.xlu0 %629
    %631 = vrot.lane.b32.xlu0 %v387, 80
    %v632 = vpop.permute.xlu0 %631
    %633 = vrot.lane.b32.xlu0 %v390, 80
    %v634 = vpop.permute.xlu0 %633
    %635 = vrot.lane.b32.xlu0 %v393, 80
    %v636 = vpop.permute.xlu0 %635
    %637 = vrot.lane.b32.xlu0 %v396, 80
    %v638 = vpop.permute.xlu0 %637
    %639 = vrot.lane.b32.xlu0 %v399, 80
    %v640 = vpop.permute.xlu0 %639
    %641 = vrot.lane.b32.xlu0 %v610, 80
    %v642 = vpop.permute.xlu0 %641
    %vm659 = vcmask 786048
    %660 = vst.msk [vmem:[#allocation3] sm:$0xff] %vm659, %v612
    %661 = vst.msk [vmem:[#allocation3 + $0x18] sm:$0xff] %vm659, %v614
    %662 = vst.msk [vmem:[#allocation3 + $0x30] sm:$0xff] %vm659, %v616
    %663 = vst.msk [vmem:[#allocation3 + $0x48] sm:$0xff] %vm659, %v618
    %664 = vst.msk [vmem:[#allocation3 + $0x60] sm:$0xff] %vm659, %v620
    %665 = vst.msk [vmem:[#allocation3 + $0x78] sm:$0xff] %vm659, %v622
    %666 = vst.msk [vmem:[#allocation3 + $0x90] sm:$0xff] %vm659, %v624
    %667 = vst.msk [vmem:[#allocation3 + $0xa8] sm:$0xff] %vm659, %v626
    %668 = vst.msk [vmem:[#allocation3 + $0xc0] sm:$0xff] %vm659, %v628
    %669 = vst.msk [vmem:[#allocation3 + $0xd8] sm:$0xff] %vm659, %v630
    %670 = vst.msk [vmem:[#allocation3 + $0xf0] sm:$0xff] %vm659, %v632
    %671 = vst.msk [vmem:[#allocation3 + $0x108] sm:$0xff] %vm659, %v634
    %672 = vst.msk [vmem:[#allocation3 + $0x120] sm:$0xff] %vm659, %v636
    %673 = vst.msk [vmem:[#allocation3 + $0x138] sm:$0xff] %vm659, %v638
    %674 = vst.msk [vmem:[#allocation3 + $0x150] sm:$0xff] %vm659, %v640
    %675 = vst.msk [vmem:[#allocation3 + $0x168] sm:$0xff] %vm659, %v642
    %678 = vrot.lane.b32.xlu0 %v153, 96
    %v679 = vpop.permute.xlu0 %678
    %680 = vrot.lane.b32.xlu0 %v155, 96
    %v681 = vpop.permute.xlu0 %680
    %682 = vrot.lane.b32.xlu0 %v157, 96
    %v683 = vpop.permute.xlu0 %682
    %684 = vrot.lane.b32.xlu0 %v159, 96
    %v685 = vpop.permute.xlu0 %684
    %686 = vrot.lane.b32.xlu0 %v161, 96
    %v687 = vpop.permute.xlu0 %686
    %688 = vrot.lane.b32.xlu0 %v163, 96
    %v689 = vpop.permute.xlu0 %688
    %690 = vrot.lane.b32.xlu0 %v165, 96
    %v691 = vpop.permute.xlu0 %690
    %692 = vrot.lane.b32.xlu0 %v167, 96
    %v693 = vpop.permute.xlu0 %692
    %694 = vrot.lane.b32.xlu0 %v173, 96
    %v695 = vpop.permute.xlu0 %694
    %696 = vrot.lane.b32.xlu0 %v175, 96
    %v697 = vpop.permute.xlu0 %696
    %698 = vrot.lane.b32.xlu0 %v177, 96
    %v699 = vpop.permute.xlu0 %698
    %700 = vrot.lane.b32.xlu0 %v179, 96
    %v701 = vpop.permute.xlu0 %700
    %702 = vrot.lane.b32.xlu0 %v181, 96
    %v703 = vpop.permute.xlu0 %702
    %704 = vrot.lane.b32.xlu0 %v183, 96
    %v705 = vpop.permute.xlu0 %704
    %706 = vrot.lane.b32.xlu0 %v185, 96
    %v707 = vpop.permute.xlu0 %706
    %708 = vrot.lane.b32.xlu0 %v187, 96
    %v709 = vpop.permute.xlu0 %708
    %vm726 = vcmask 917248
    %727 = vst.msk [vmem:[#allocation3] sm:$0xff] %vm726, %v679
    %728 = vst.msk [vmem:[#allocation3 + $0x18] sm:$0xff] %vm726, %v681
    %729 = vst.msk [vmem:[#allocation3 + $0x30] sm:$0xff] %vm726, %v683
    %730 = vst.msk [vmem:[#allocation3 + $0x48] sm:$0xff] %vm726, %v685
    %731 = vst.msk [vmem:[#allocation3 + $0x60] sm:$0xff] %vm726, %v687
    %732 = vst.msk [vmem:[#allocation3 + $0x78] sm:$0xff] %vm726, %v689
    %733 = vst.msk [vmem:[#allocation3 + $0x90] sm:$0xff] %vm726, %v691
    %734 = vst.msk [vmem:[#allocation3 + $0xa8] sm:$0xff] %vm726, %v693
    %735 = vst.msk [vmem:[#allocation3 + $0xc0] sm:$0xff] %vm726, %v695
    %736 = vst.msk [vmem:[#allocation3 + $0xd8] sm:$0xff] %vm726, %v697
    %737 = vst.msk [vmem:[#allocation3 + $0xf0] sm:$0xff] %vm726, %v699
    %738 = vst.msk [vmem:[#allocation3 + $0x108] sm:$0xff] %vm726, %v701
    %739 = vst.msk [vmem:[#allocation3 + $0x120] sm:$0xff] %vm726, %v703
    %740 = vst.msk [vmem:[#allocation3 + $0x138] sm:$0xff] %vm726, %v705
    %741 = vst.msk [vmem:[#allocation3 + $0x150] sm:$0xff] %vm726, %v707
    %742 = vst.msk [vmem:[#allocation3 + $0x168] sm:$0xff] %vm726, %v709
    %v745 = vrot.slane %v167, 1
    %v746 = vrot.slane %v168, 1
    %v747 = vsel %vm237, %v745, %v746
    %v748 = vrot.slane %v187, 1
    %v749 = vrot.slane %v188, 1
    %v750 = vsel %vm237, %v748, %v749
    %751 = vrot.lane.b32.xlu0 %v246, 112
    %v752 = vpop.permute.xlu0 %751
    %753 = vrot.lane.b32.xlu0 %v249, 112
    %v754 = vpop.permute.xlu0 %753
    %755 = vrot.lane.b32.xlu0 %v252, 112
    %v756 = vpop.permute.xlu0 %755
    %757 = vrot.lane.b32.xlu0 %v255, 112
    %v758 = vpop.permute.xlu0 %757
    %759 = vrot.lane.b32.xlu0 %v258, 112
    %v760 = vpop.permute.xlu0 %759
    %761 = vrot.lane.b32.xlu0 %v261, 112
    %v762 = vpop.permute.xlu0 %761
    %763 = vrot.lane.b32.xlu0 %v536, 112
    %v764 = vpop.permute.xlu0 %763
    %765 = vrot.lane.b32.xlu0 %v747, 112
    %v766 = vpop.permute.xlu0 %765
    %767 = vrot.lane.b32.xlu0 %v270, 112
    %v768 = vpop.permute.xlu0 %767
    %769 = vrot.lane.b32.xlu0 %v273, 112
    %v770 = vpop.permute.xlu0 %769
    %771 = vrot.lane.b32.xlu0 %v276, 112
    %v772 = vpop.permute.xlu0 %771
    %773 = vrot.lane.b32.xlu0 %v279, 112
    %v774 = vpop.permute.xlu0 %773
    %775 = vrot.lane.b32.xlu0 %v282, 112
    %v776 = vpop.permute.xlu0 %775
    %777 = vrot.lane.b32.xlu0 %v285, 112
    %v778 = vpop.permute.xlu0 %777
    %779 = vrot.lane.b32.xlu0 %v539, 112
    %v780 = vpop.permute.xlu0 %779
    %781 = vrot.lane.b32.xlu0 %v750, 112
    %v782 = vpop.permute.xlu0 %781
    %vm799 = vcmask 1048448
    %800 = vst.msk [vmem:[#allocation3] sm:$0xff] %vm799, %v752
    %801 = vst.msk [vmem:[#allocation3 + $0x18] sm:$0xff] %vm799, %v754
    %802 = vst.msk [vmem:[#allocation3 + $0x30] sm:$0xff] %vm799, %v756
    %803 = vst.msk [vmem:[#allocation3 + $0x48] sm:$0xff] %vm799, %v758
    %804 = vst.msk [vmem:[#allocation3 + $0x60] sm:$0xff] %vm799, %v760
    %805 = vst.msk [vmem:[#allocation3 + $0x78] sm:$0xff] %vm799, %v762
    %806 = vst.msk [vmem:[#allocation3 + $0x90] sm:$0xff] %vm799, %v764
    %807 = vst.msk [vmem:[#allocation3 + $0xa8] sm:$0xff] %vm799, %v766
    %808 = vst.msk [vmem:[#allocation3 + $0xc0] sm:$0xff] %vm799, %v768
    %809 = vst.msk [vmem:[#allocation3 + $0xd8] sm:$0xff] %vm799, %v770
    %810 = vst.msk [vmem:[#allocation3 + $0xf0] sm:$0xff] %vm799, %v772
    %811 = vst.msk [vmem:[#allocation3 + $0x108] sm:$0xff] %vm799, %v774
    %812 = vst.msk [vmem:[#allocation3 + $0x120] sm:$0xff] %vm799, %v776
    %813 = vst.msk [vmem:[#allocation3 + $0x138] sm:$0xff] %vm799, %v778
    %814 = vst.msk [vmem:[#allocation3 + $0x150] sm:$0xff] %vm799, %v780
    %815 = vst.msk [vmem:[#allocation3 + $0x168] sm:$0xff] %vm799, %v782
    %v816 = vrot.slane %v167, 2
    %v817 = vrot.slane %v168, 2
    %v818 = vsel %vm351, %v816, %v817
    %v819 = vrot.slane %v187, 2
    %v820 = vrot.slane %v188, 2
    %v821 = vsel %vm351, %v819, %v820
    %838 = vst.msk [vmem:[#allocation3 + $0x8] sm:$0xff] %vm132, %v360
    %839 = vst.msk [vmem:[#allocation3 + $0x20] sm:$0xff] %vm132, %v363
    %840 = vst.msk [vmem:[#allocation3 + $0x38] sm:$0xff] %vm132, %v366
    %841 = vst.msk [vmem:[#allocation3 + $0x50] sm:$0xff] %vm132, %v369
    %842 = vst.msk [vmem:[#allocation3 + $0x68] sm:$0xff] %vm132, %v372
    %843 = vst.msk [vmem:[#allocation3 + $0x80] sm:$0xff] %vm132, %v375
    %844 = vst.msk [vmem:[#allocation3 + $0x98] sm:$0xff] %vm132, %v607
    %845 = vst.msk [vmem:[#allocation3 + $0xb0] sm:$0xff] %vm132, %v818
    %846 = vst.msk [vmem:[#allocation3 + $0xc8] sm:$0xff] %vm132, %v384
    %847 = vst.msk [vmem:[#allocation3 + $0xe0] sm:$0xff] %vm132, %v387
    %848 = vst.msk [vmem:[#allocation3 + $0xf8] sm:$0xff] %vm132, %v390
    %849 = vst.msk [vmem:[#allocation3 + $0x110] sm:$0xff] %vm132, %v393
    %850 = vst.msk [vmem:[#allocation3 + $0x128] sm:$0xff] %vm132, %v396
    %851 = vst.msk [vmem:[#allocation3 + $0x140] sm:$0xff] %vm132, %v399
    %852 = vst.msk [vmem:[#allocation3 + $0x158] sm:$0xff] %vm132, %v610
    %853 = vst.msk [vmem:[#allocation3 + $0x170] sm:$0xff] %vm132, %v821
    %v854 = vld [vmem:[#allocation3] sm:$0xff]
    %v855 = vld [vmem:[#allocation3 + $0x8] sm:$0xff]
    %v856 = vld [vmem:[#allocation3 + $0x18] sm:$0xff]
    %v857 = vld [vmem:[#allocation3 + $0x20] sm:$0xff]
    %v858 = vld [vmem:[#allocation3 + $0x30] sm:$0xff]
    %v859 = vld [vmem:[#allocation3 + $0x38] sm:$0xff]
    %v860 = vld [vmem:[#allocation3 + $0x48] sm:$0xff]
    %v861 = vld [vmem:[#allocation3 + $0x50] sm:$0xff]
    %v862 = vld [vmem:[#allocation3 + $0x60] sm:$0xff]
    %v863 = vld [vmem:[#allocation3 + $0x68] sm:$0xff]
    %v864 = vld [vmem:[#allocation3 + $0x78] sm:$0xff]
    %v865 = vld [vmem:[#allocation3 + $0x80] sm:$0xff]
    %v866 = vld [vmem:[#allocation3 + $0x90] sm:$0xff]
    %v867 = vld [vmem:[#allocation3 + $0x98] sm:$0xff]
    %v868 = vld [vmem:[#allocation3 + $0xa8] sm:$0xff]
    %v869 = vld [vmem:[#allocation3 + $0xb0] sm:$0xff]
    %v870 = vld [vmem:[#allocation3 + $0xc0] sm:$0xff]
    %v871 = vld [vmem:[#allocation3 + $0xc8] sm:$0xff]
    %v872 = vld [vmem:[#allocation3 + $0xd8] sm:$0xff]
    %v873 = vld [vmem:[#allocation3 + $0xe0] sm:$0xff]
    %v874 = vld [vmem:[#allocation3 + $0xf0] sm:$0xff]
    %v875 = vld [vmem:[#allocation3 + $0xf8] sm:$0xff]
    %v876 = vld [vmem:[#allocation3 + $0x108] sm:$0xff]
    %v877 = vld [vmem:[#allocation3 + $0x110] sm:$0xff]
    %v878 = vld [vmem:[#allocation3 + $0x120] sm:$0xff]
    %v879 = vld [vmem:[#allocation3 + $0x128] sm:$0xff]
    %v880 = vld [vmem:[#allocation3 + $0x138] sm:$0xff]
    %v881 = vld [vmem:[#allocation3 + $0x140] sm:$0xff]
    %v882 = vld [vmem:[#allocation3 + $0x150] sm:$0xff]
    %v883 = vld [vmem:[#allocation3 + $0x158] sm:$0xff]
    %v884 = vld [vmem:[#allocation3 + $0x168] sm:$0xff]
    %v885 = vld [vmem:[#allocation3 + $0x170] sm:$0xff]
    %v886 = vld [vmem:[%s1] sm:$0xff]
    %v887 = vld [vmem:[%s1 + $0x8] sm:$0xff]
    %v888 = vld [vmem:[%s1 + $0x10] sm:$0xff]
    %v889 = vld [vmem:[%s1 + $0x18] sm:$0xff]
    %v890 = vld [vmem:[%s1 + $0x20] sm:$0xff]
    %v891 = vld [vmem:[%s1 + $0x28] sm:$0xff]
    %v892 = vld [vmem:[%s1 + $0x30] sm:$0xff]
    %v893 = vld [vmem:[%s1 + $0x38] sm:$0xff]
    %v894 = vld [vmem:[%s1 + $0x40] sm:$0xff]
    %v895 = vld [vmem:[%s1 + $0x48] sm:$0xff]
    %v896 = vld [vmem:[%s1 + $0x50] sm:$0xff]
    %v897 = vld [vmem:[%s1 + $0x58] sm:$0xff]
    %v898 = vld [vmem:[%s1 + $0x60] sm:$0xff]
    %v899 = vld [vmem:[%s1 + $0x68] sm:$0xff]
    %v900 = vld [vmem:[%s1 + $0x70] sm:$0xff]
    %v901 = vld [vmem:[%s1 + $0x78] sm:$0xff]
    %v902 = vld [vmem:[%s1 + $0x80] sm:$0xff]
    %v903 = vld [vmem:[%s1 + $0x88] sm:$0xff]
    %v905 = vsel %vm132, %v855, 0
    %v908 = vsel %vm132, %v857, 0
    %v911 = vsel %vm132, %v859, 0
    %v914 = vsel %vm132, %v861, 0
    %v917 = vsel %vm132, %v863, 0
    %v920 = vsel %vm132, %v865, 0
    %v923 = vsel %vm132, %v867, 0
    %v926 = vsel %vm132, %v869, 0
    %v929 = vsel %vm132, %v871, 0
    %v932 = vsel %vm132, %v873, 0
    %v935 = vsel %vm132, %v875, 0
    %v938 = vsel %vm132, %v877, 0
    %v941 = vsel %vm132, %v879, 0
    %v944 = vsel %vm132, %v881, 0
    %v947 = vsel %vm132, %v883, 0
    %v950 = vsel %vm132, %v885, 0
    %952 = vmatpush.msra.mxu0 %v901
    %953 = vmatpush.msra.mxu0 %v900
    %954 = vmatpush.msra.mxu0 %v899
    %955 = vmatpush.msra.mxu0 %v898
    %956 = vmatpush.msra.mxu0 %v897
    %957 = vmatpush.msra.mxu0 %v896
    %958 = vmatpush.msra.mxu0 %v895
    %959 = vmatpush.msra.mxu0 %v894
    %960 = vmatpush.msra.mxu0 %v893
    %961 = vmatpush.msra.mxu0 %v892
    %962 = vmatpush.msra.mxu0 %v891
    %963 = vmatpush.msra.mxu0 %v890
    %964 = vmatpush.msra.mxu0 %v889
    %965 = vmatpush.msra.mxu0 %v888
    %966 = vmatpush.msra.mxu0 %v887
    %967 = vmatpush.msra.mxu0 %v886
    %968 = vmatmul.f32.gmra.mxu0 %v854
    %v969 = vpop.f32.mrf.mxu0
    %v970 = vadd.f32 0.0, %v969
    %971 = vmatmul.f32.gmra.mxu0 %v856
    %v972 = vpop.f32.mrf.mxu0
    %v973 = vadd.f32 0.0, %v972
    %974 = vmatmul.f32.gmra.mxu0 %v858
    %v975 = vpop.f32.mrf.mxu0
    %v976 = vadd.f32 0.0, %v975
    %977 = vmatmul.f32.gmra.mxu0 %v860
    %v978 = vpop.f32.mrf.mxu0
    %v979 = vadd.f32 0.0, %v978
    %980 = vmatmul.f32.gmra.mxu0 %v862
    %v981 = vpop.f32.mrf.mxu0
    %v982 = vadd.f32 0.0, %v981
    %983 = vmatmul.f32.gmra.mxu0 %v864
    %v984 = vpop.f32.mrf.mxu0
    %v985 = vadd.f32 0.0, %v984
    %986 = vmatmul.f32.gmra.mxu0 %v866
    %v987 = vpop.f32.mrf.mxu0
    %v988 = vadd.f32 0.0, %v987
    %989 = vmatmul.f32.gmra.mxu0 %v868
    %v990 = vpop.f32.mrf.mxu0
    %v991 = vadd.f32 0.0, %v990
    %992 = vmatmul.f32.gmra.mxu0 %v870
    %v993 = vpop.f32.mrf.mxu0
    %v994 = vadd.f32 0.0, %v993
    %995 = vmatmul.f32.gmra.mxu0 %v872
    %v996 = vpop.f32.mrf.mxu0
    %v997 = vadd.f32 0.0, %v996
    %998 = vmatmul.f32.gmra.mxu0 %v874
    %v999 = vpop.f32.mrf.mxu0
    %v1000 = vadd.f32 0.0, %v999
    %1001 = vmatmul.f32.gmra.mxu0 %v876
    %v1002 = vpop.f32.mrf.mxu0
    %v1003 = vadd.f32 0.0, %v1002
    %1004 = vmatmul.f32.gmra.mxu0 %v878
    %v1005 = vpop.f32.mrf.mxu0
    %v1006 = vadd.f32 0.0, %v1005
    %1007 = vmatmul.f32.gmra.mxu0 %v880
    %v1008 = vpop.f32.mrf.mxu0
    %v1009 = vadd.f32 0.0, %v1008
    %1010 = vmatmul.f32.gmra.mxu0 %v882
    %v1011 = vpop.f32.mrf.mxu0
    %v1012 = vadd.f32 0.0, %v1011
    %1013 = vmatmul.f32.gmra.mxu0 %v884
    %v1014 = vpop.f32.mrf.mxu0
    %v1015 = vadd.f32 0.0, %v1014
    %1016 = vdwg.mxu0
    %1017 = vmatpush.msra.mxu0 0.0
    %1018 = vmatpush.msra.mxu0 0.0
    %1019 = vmatpush.msra.mxu0 0.0
    %1020 = vmatpush.msra.mxu0 0.0
    %1021 = vmatpush.msra.mxu0 0.0
    %1022 = vmatpush.msra.mxu0 0.0
    %1023 = vmatpush.msra.mxu0 0.0
    %1024 = vmatpush.msra.mxu0 0.0
    %1025 = vmatpush.msra.mxu0 0.0
    %1026 = vmatpush.msra.mxu0 0.0
    %1027 = vmatpush.msra.mxu0 0.0
    %1028 = vmatpush.msra.mxu0 0.0
    %1029 = vmatpush.msra.mxu0 0.0
    %1030 = vmatpush.msra.mxu0 0.0
    %1031 = vmatpush.msra.mxu0 %v903
    %1032 = vmatpush.msra.mxu0 %v902
    %1033 = vmatmul.f32.gmra.mxu0 %v905
    %v1034 = vpop.f32.mrf.mxu0
    %v1035 = vadd.f32 %v970, %v1034
    %1036 = vmatmul.f32.gmra.mxu0 %v908
    %v1037 = vpop.f32.mrf.mxu0
    %v1038 = vadd.f32 %v973, %v1037
    %1039 = vmatmul.f32.gmra.mxu0 %v911
    %v1040 = vpop.f32.mrf.mxu0
    %v1041 = vadd.f32 %v976, %v1040
    %1042 = vmatmul.f32.gmra.mxu0 %v914
    %v1043 = vpop.f32.mrf.mxu0
    %v1044 = vadd.f32 %v979, %v1043
    %1045 = vmatmul.f32.gmra.mxu0 %v917
    %v1046 = vpop.f32.mrf.mxu0
    %v1047 = vadd.f32 %v982, %v1046
    %1048 = vmatmul.f32.gmra.mxu0 %v920
    %v1049 = vpop.f32.mrf.mxu0
    %v1050 = vadd.f32 %v985, %v1049
    %1051 = vmatmul.f32.gmra.mxu0 %v923
    %v1052 = vpop.f32.mrf.mxu0
    %v1053 = vadd.f32 %v988, %v1052
    %1054 = vmatmul.f32.gmra.mxu0 %v926
    %v1055 = vpop.f32.mrf.mxu0
    %v1056 = vadd.f32 %v991, %v1055
    %1057 = vmatmul.f32.gmra.mxu0 %v929
    %v1058 = vpop.f32.mrf.mxu0
    %v1059 = vadd.f32 %v994, %v1058
    %1060 = vmatmul.f32.gmra.mxu0 %v932
    %v1061 = vpop.f32.mrf.mxu0
    %v1062 = vadd.f32 %v997, %v1061
    %1063 = vmatmul.f32.gmra.mxu0 %v935
    %v1064 = vpop.f32.mrf.mxu0
    %v1065 = vadd.f32 %v1000, %v1064
    %1066 = vmatmul.f32.gmra.mxu0 %v938
    %v1067 = vpop.f32.mrf.mxu0
    %v1068 = vadd.f32 %v1003, %v1067
    %1069 = vmatmul.f32.gmra.mxu0 %v941
    %v1070 = vpop.f32.mrf.mxu0
    %v1071 = vadd.f32 %v1006, %v1070
    %1072 = vmatmul.f32.gmra.mxu0 %v944
    %v1073 = vpop.f32.mrf.mxu0
    %v1074 = vadd.f32 %v1009, %v1073
    %1075 = vmatmul.f32.gmra.mxu0 %v947
    %v1076 = vpop.f32.mrf.mxu0
    %v1077 = vadd.f32 %v1012, %v1076
    %1078 = vmatmul.f32.gmra.mxu0 %v950
    %v1079 = vpop.f32.mrf.mxu0
    %v1080 = vadd.f32 %v1015, %v1079
    %1081 = vdwg.mxu0
    %v1082 = vld [vmem:[#allocation6] sm:$0xff]
    %v1083 = vld [vmem:[#allocation6 + $0x8] sm:$0xff]
    %v1084 = vld [vmem:[#allocation6 + $0x10] sm:$0xff]
    %v1085 = vld [vmem:[#allocation6 + $0x18] sm:$0xff]
    %v1086 = vld [vmem:[#allocation6 + $0x20] sm:$0xff]
    %v1087 = vld [vmem:[#allocation6 + $0x28] sm:$0xff]
    %v1088 = vld [vmem:[#allocation6 + $0x30] sm:$0xff]
    %v1089 = vld [vmem:[#allocation6 + $0x38] sm:$0xff]
    %v1091 = vsel %vm132, %v1083, 0
    %v1094 = vsel %vm132, %v1085, 0
    %v1097 = vsel %vm132, %v1087, 0
    %v1100 = vsel %vm132, %v1089, 0
    %1102 = vmatpush.xpose.msra.mxu0 %v884
    %1103 = vmatpush.xpose.msra.mxu0 %v882
    %1104 = vmatpush.xpose.msra.mxu0 %v880
    %1105 = vmatpush.xpose.msra.mxu0 %v878
    %1106 = vmatpush.xpose.msra.mxu0 %v876
    %1107 = vmatpush.xpose.msra.mxu0 %v874
    %1108 = vmatpush.xpose.msra.mxu0 %v872
    %1109 = vmatpush.xpose.msra.mxu0 %v870
    %1110 = vmatpush.xpose.msra.mxu0 %v868
    %1111 = vmatpush.xpose.msra.mxu0 %v866
    %1112 = vmatpush.xpose.msra.mxu0 %v864
    %1113 = vmatpush.xpose.msra.mxu0 %v862
    %1114 = vmatpush.xpose.msra.mxu0 %v860
    %1115 = vmatpush.xpose.msra.mxu0 %v858
    %1116 = vmatpush.xpose.msra.mxu0 %v856
    %1117 = vmatpush.xpose.msra.mxu0 %v854
    %1118 = vmatmul.f32.gmra.mxu0 %v1082
    %v1119 = vpop.f32.mrf.mxu0
    %v1120 = vadd.f32 0.0, %v1119
    %1121 = vmatmul.f32.gmra.mxu0 %v1084
    %v1122 = vpop.f32.mrf.mxu0
    %v1123 = vadd.f32 0.0, %v1122
    %1124 = vmatmul.f32.gmra.mxu0 %v1086
    %v1125 = vpop.f32.mrf.mxu0
    %v1126 = vadd.f32 0.0, %v1125
    %1127 = vmatmul.f32.gmra.mxu0 %v1088
    %v1128 = vpop.f32.mrf.mxu0
    %v1129 = vadd.f32 0.0, %v1128
    %1130 = vdwg.mxu0
    %1131 = vmatpush.xpose.msra.mxu0 %v950
    %1132 = vmatpush.xpose.msra.mxu0 %v947
    %1133 = vmatpush.xpose.msra.mxu0 %v944
    %1134 = vmatpush.xpose.msra.mxu0 %v941
    %1135 = vmatpush.xpose.msra.mxu0 %v938
    %1136 = vmatpush.xpose.msra.mxu0 %v935
    %1137 = vmatpush.xpose.msra.mxu0 %v932
    %1138 = vmatpush.xpose.msra.mxu0 %v929
    %1139 = vmatpush.xpose.msra.mxu0 %v926
    %1140 = vmatpush.xpose.msra.mxu0 %v923
    %1141 = vmatpush.xpose.msra.mxu0 %v920
    %1142 = vmatpush.xpose.msra.mxu0 %v917
    %1143 = vmatpush.xpose.msra.mxu0 %v914
    %1144 = vmatpush.xpose.msra.mxu0 %v911
    %1145 = vmatpush.xpose.msra.mxu0 %v908
    %1146 = vmatpush.xpose.msra.mxu0 %v905
    %1147 = vmatmul.f32.gmra.mxu0 %v1091
    %v1148 = vpop.f32.mrf.mxu0
    %v1149 = vadd.f32 %v1120, %v1148
    %1150 = vmatmul.f32.gmra.mxu0 %v1094
    %v1151 = vpop.f32.mrf.mxu0
    %v1152 = vadd.f32 %v1123, %v1151
    %1153 = vmatmul.f32.gmra.mxu0 %v1097
    %v1154 = vpop.f32.mrf.mxu0
    %v1155 = vadd.f32 %v1126, %v1154
    %1156 = vmatmul.f32.gmra.mxu0 %v1100
    %v1157 = vpop.f32.mrf.mxu0
    %v1158 = vadd.f32 %v1129, %v1157
    %1159 = vdwg.mxu0
    %1160 = vst.msk [vmem:[%s131 + $0x1] sm:$0xff] %vm73, %v1035
    %1161 = vst.msk [vmem:[%s131 + $0x11] sm:$0xff] %vm73, %v1038
    %1162 = vst.msk [vmem:[%s131 + $0x21] sm:$0xff] %vm73, %v1041
    %1163 = vst.msk [vmem:[%s131 + $0x31] sm:$0xff] %vm73, %v1044
    %1164 = vst.msk [vmem:[%s131 + $0x41] sm:$0xff] %vm73, %v1047
    %1165 = vst.msk [vmem:[%s131 + $0x51] sm:$0xff] %vm73, %v1050
    %1166 = vst.msk [vmem:[%s131 + $0x61] sm:$0xff] %vm73, %v1053
    %1167 = vst.msk [vmem:[%s131 + $0x71] sm:$0xff] %vm73, %v1056
    %1168 = vst.msk [vmem:[%s131 + $0xa1] sm:$0xff] %vm73, %v1059
    %1169 = vst.msk [vmem:[%s131 + $0xb1] sm:$0xff] %vm73, %v1062
    %1170 = vst.msk [vmem:[%s131 + $0xc1] sm:$0xff] %vm73, %v1065
    %1171 = vst.msk [vmem:[%s131 + $0xd1] sm:$0xff] %vm73, %v1068
    %1172 = vst.msk [vmem:[%s131 + $0xe1] sm:$0xff] %vm73, %v1071
    %1173 = vst.msk [vmem:[%s131 + $0xf1] sm:$0xff] %vm73, %v1074
    %1174 = vst.msk [vmem:[%s131 + $0x101] sm:$0xff] %vm73, %v1077
    %1175 = vst.msk [vmem:[%s131 + $0x111] sm:$0xff] %vm73, %v1080
    %v1176 = vld [vmem:[#allocation2] sm:$0xff]
    %v1177 = vld [vmem:[#allocation2 + $0x8] sm:$0x3]
    %v1178 = vld [vmem:[#allocation2 + $0x10] sm:$0xff]
    %v1179 = vld [vmem:[#allocation2 + $0x18] sm:$0x3]
    %v1180 = vld [vmem:[#allocation2 + $0x20] sm:$0xff]
    %v1181 = vld [vmem:[#allocation2 + $0x28] sm:$0x3]
    %v1182 = vld [vmem:[#allocation2 + $0x30] sm:$0xff]
    %v1183 = vld [vmem:[#allocation2 + $0x38] sm:$0x3]
    %v1184 = vld [vmem:[#allocation2 + $0x40] sm:$0xff]
    %v1185 = vld [vmem:[#allocation2 + $0x48] sm:$0x3]
    %v1186 = vld [vmem:[#allocation2 + $0x50] sm:$0xff]
    %v1187 = vld [vmem:[#allocation2 + $0x58] sm:$0x3]
    %v1188 = vld [vmem:[#allocation2 + $0x60] sm:$0xff]
    %v1189 = vld [vmem:[#allocation2 + $0x68] sm:$0x3]
    %v1190 = vld [vmem:[#allocation2 + $0x70] sm:$0xff]
    %v1191 = vld [vmem:[#allocation2 + $0x78] sm:$0x3]
    %v1192 = vld [vmem:[#allocation2 + $0x80] sm:$0xff]
    %v1193 = vld [vmem:[#allocation2 + $0x88] sm:$0x3]
    %v1194 = vld [vmem:[#allocation2 + $0x90] sm:$0xff]
    %v1195 = vld [vmem:[#allocation2 + $0x98] sm:$0x3]
    %v1196 = vld [vmem:[#allocation2 + $0xa0] sm:$0xff]
    %v1197 = vld [vmem:[#allocation2 + $0xa8] sm:$0x3]
    %v1198 = vld [vmem:[#allocation2 + $0xb0] sm:$0xff]
    %v1199 = vld [vmem:[#allocation2 + $0xb8] sm:$0x3]
    %v1200 = vld [vmem:[#allocation2 + $0xc0] sm:$0xff]
    %v1201 = vld [vmem:[#allocation2 + $0xc8] sm:$0x3]
    %v1202 = vld [vmem:[#allocation2 + $0xd0] sm:$0xff]
    %v1203 = vld [vmem:[#allocation2 + $0xd8] sm:$0x3]
    %v1204 = vld [vmem:[#allocation2 + $0xe0] sm:$0xff]
    %v1205 = vld [vmem:[#allocation2 + $0xe8] sm:$0x3]
    %v1206 = vld [vmem:[#allocation2 + $0xf0] sm:$0xff]
    %v1207 = vld [vmem:[#allocation2 + $0xf8] sm:$0x3]
    %v1208 = vld [vmem:[#allocation2 + $0x100] sm:$0xff]
    %v1209 = vld [vmem:[#allocation2 + $0x108] sm:$0x3]
    %v1210 = vld [vmem:[#allocation2 + $0x110] sm:$0xff]
    %v1211 = vld [vmem:[#allocation2 + $0x118] sm:$0x3]
    %v1212 = vld [vmem:[#allocation2 + $0x120] sm:$0xff]
    %v1213 = vld [vmem:[#allocation2 + $0x128] sm:$0x3]
    %v1214 = vld [vmem:[#allocation2 + $0x130] sm:$0xff]
    %v1215 = vld [vmem:[#allocation2 + $0x138] sm:$0x3]
    %1216 = vst.msk [vmem:[#allocation3] sm:$0xff] %vm73, %v1176
    %1217 = vst.msk [vmem:[#allocation3 + $0x18] sm:$0xff] %vm73, %v1178
    %1218 = vst.msk [vmem:[#allocation3 + $0x30] sm:$0xff] %vm73, %v1180
    %1219 = vst.msk [vmem:[#allocation3 + $0x48] sm:$0xff] %vm73, %v1182
    %1220 = vst.msk [vmem:[#allocation3 + $0x60] sm:$0xff] %vm73, %v1184
    %1221 = vst.msk [vmem:[#allocation3 + $0x78] sm:$0xff] %vm73, %v1186
    %1222 = vst.msk [vmem:[#allocation3 + $0x90] sm:$0xff] %vm73, %v1188
    %1223 = vst.msk [vmem:[#allocation3 + $0xa8] sm:$0xff] %vm73, %v1190
    %1224 = vst.msk [vmem:[#allocation3 + $0xc0] sm:$0xff] %vm73, %v1196
    %1225 = vst.msk [vmem:[#allocation3 + $0xd8] sm:$0xff] %vm73, %v1198
    %1226 = vst.msk [vmem:[#allocation3 + $0xf0] sm:$0xff] %vm73, %v1200
    %1227 = vst.msk [vmem:[#allocation3 + $0x108] sm:$0xff] %vm73, %v1202
    %1228 = vst.msk [vmem:[#allocation3 + $0x120] sm:$0xff] %vm73, %v1204
    %1229 = vst.msk [vmem:[#allocation3 + $0x138] sm:$0xff] %vm73, %v1206
    %1230 = vst.msk [vmem:[#allocation3 + $0x150] sm:$0xff] %vm73, %v1208
    %1231 = vst.msk [vmem:[#allocation3 + $0x168] sm:$0xff] %vm73, %v1210
    %v1264 = vrot.slane %v1176, 1
    %v1265 = vrot.slane %v1177, 1
    %v1266 = vsel %vm237, %v1264, %v1265
    %v1267 = vrot.slane %v1178, 1
    %v1268 = vrot.slane %v1179, 1
    %v1269 = vsel %vm237, %v1267, %v1268
    %v1270 = vrot.slane %v1180, 1
    %v1271 = vrot.slane %v1181, 1
    %v1272 = vsel %vm237, %v1270, %v1271
    %v1273 = vrot.slane %v1182, 1
    %v1274 = vrot.slane %v1183, 1
    %v1275 = vsel %vm237, %v1273, %v1274
    %v1276 = vrot.slane %v1184, 1
    %v1277 = vrot.slane %v1185, 1
    %v1278 = vsel %vm237, %v1276, %v1277
    %v1279 = vrot.slane %v1186, 1
    %v1280 = vrot.slane %v1187, 1
    %v1281 = vsel %vm237, %v1279, %v1280
    %v1282 = vrot.slane %v1188, 1
    %v1283 = vrot.slane %v1189, 1
    %v1284 = vsel %vm237, %v1282, %v1283
    %v1285 = vrot.slane %v1190, 1
    %v1286 = vrot.slane %v1191, 1
    %v1287 = vsel %vm237, %v1285, %v1286
    %v1288 = vrot.slane %v1196, 1
    %v1289 = vrot.slane %v1197, 1
    %v1290 = vsel %vm237, %v1288, %v1289
    %v1291 = vrot.slane %v1198, 1
    %v1292 = vrot.slane %v1199, 1
    %v1293 = vsel %vm237, %v1291, %v1292
    %v1294 = vrot.slane %v1200, 1
    %v1295 = vrot.slane %v1201, 1
    %v1296 = vsel %vm237, %v1294, %v1295
    %v1297 = vrot.slane %v1202, 1
    %v1298 = vrot.slane %v1203, 1
    %v1299 = vsel %vm237, %v1297, %v1298
    %v1300 = vrot.slane %v1204, 1
    %v1301 = vrot.slane %v1205, 1
    %v1302 = vsel %vm237, %v1300, %v1301
    %v1303 = vrot.slane %v1206, 1
    %v1304 = vrot.slane %v1207, 1
    %v1305 = vsel %vm237, %v1303, %v1304
    %v1306 = vrot.slane %v1208, 1
    %v1307 = vrot.slane %v1209, 1
    %v1308 = vsel %vm237, %v1306, %v1307
    %v1309 = vrot.slane %v1210, 1
    %v1310 = vrot.slane %v1211, 1
    %v1311 = vsel %vm237, %v1309, %v1310
    %1312 = vrot.lane.b32.xlu0 %v1266, 32
    %v1313 = vpop.permute.xlu0 %1312
    %1314 = vrot.lane.b32.xlu0 %v1269, 32
    %v1315 = vpop.permute.xlu0 %1314
    %1316 = vrot.lane.b32.xlu0 %v1272, 32
    %v1317 = vpop.permute.xlu0 %1316
    %1318 = vrot.lane.b32.xlu0 %v1275, 32
    %v1319 = vpop.permute.xlu0 %1318
    %1320 = vrot.lane.b32.xlu0 %v1278, 32
    %v1321 = vpop.permute.xlu0 %1320
    %1322 = vrot.lane.b32.xlu0 %v1281, 32
    %v1323 = vpop.permute.xlu0 %1322
    %1324 = vrot.lane.b32.xlu0 %v1284, 32
    %v1325 = vpop.permute.xlu0 %1324
    %1326 = vrot.lane.b32.xlu0 %v1287, 32
    %v1327 = vpop.permute.xlu0 %1326
    %1328 = vrot.lane.b32.xlu0 %v1290, 32
    %v1329 = vpop.permute.xlu0 %1328
    %1330 = vrot.lane.b32.xlu0 %v1293, 32
    %v1331 = vpop.permute.xlu0 %1330
    %1332 = vrot.lane.b32.xlu0 %v1296, 32
    %v1333 = vpop.permute.xlu0 %1332
    %1334 = vrot.lane.b32.xlu0 %v1299, 32
    %v1335 = vpop.permute.xlu0 %1334
    %1336 = vrot.lane.b32.xlu0 %v1302, 32
    %v1337 = vpop.permute.xlu0 %1336
    %1338 = vrot.lane.b32.xlu0 %v1305, 32
    %v1339 = vpop.permute.xlu0 %1338
    %1340 = vrot.lane.b32.xlu0 %v1308, 32
    %v1341 = vpop.permute.xlu0 %1340
    %1342 = vrot.lane.b32.xlu0 %v1311, 32
    %v1343 = vpop.permute.xlu0 %1342
    %vm1360 = vcmask 523520
    %1361 = vst.msk [vmem:[#allocation3] sm:$0xff] %vm1360, %v1313
    %1362 = vst.msk [vmem:[#allocation3 + $0x18] sm:$0xff] %vm1360, %v1315
    %1363 = vst.msk [vmem:[#allocation3 + $0x30] sm:$0xff] %vm1360, %v1317
    %1364 = vst.msk [vmem:[#allocation3 + $0x48] sm:$0xff] %vm1360, %v1319
    %1365 = vst.msk [vmem:[#allocation3 + $0x60] sm:$0xff] %vm1360, %v1321
    %1366 = vst.msk [vmem:[#allocation3 + $0x78] sm:$0xff] %vm1360, %v1323
    %1367 = vst.msk [vmem:[#allocation3 + $0x90] sm:$0xff] %vm1360, %v1325
    %1368 = vst.msk [vmem:[#allocation3 + $0xa8] sm:$0xff] %vm1360, %v1327
    %1369 = vst.msk [vmem:[#allocation3 + $0xc0] sm:$0xff] %vm1360, %v1329
    %1370 = vst.msk [vmem:[#allocation3 + $0xd8] sm:$0xff] %vm1360, %v1331
    %1371 = vst.msk [vmem:[#allocation3 + $0xf0] sm:$0xff] %vm1360, %v1333
    %1372 = vst.msk [vmem:[#allocation3 + $0x108] sm:$0xff] %vm1360, %v1335
    %1373 = vst.msk [vmem:[#allocation3 + $0x120] sm:$0xff] %vm1360, %v1337
    %1374 = vst.msk [vmem:[#allocation3 + $0x138] sm:$0xff] %vm1360, %v1339
    %1375 = vst.msk [vmem:[#allocation3 + $0x150] sm:$0xff] %vm1360, %v1341
    %1376 = vst.msk [vmem:[#allocation3 + $0x168] sm:$0xff] %vm1360, %v1343
    %v1377 = vrot.slane %v1176, 2
    %v1378 = vrot.slane %v1177, 2
    %v1379 = vsel %vm351, %v1377, %v1378
    %v1380 = vrot.slane %v1178, 2
    %v1381 = vrot.slane %v1179, 2
    %v1382 = vsel %vm351, %v1380, %v1381
    %v1383 = vrot.slane %v1180, 2
    %v1384 = vrot.slane %v1181, 2
    %v1385 = vsel %vm351, %v1383, %v1384
    %v1386 = vrot.slane %v1182, 2
    %v1387 = vrot.slane %v1183, 2
    %v1388 = vsel %vm351, %v1386, %v1387
    %v1389 = vrot.slane %v1184, 2
    %v1390 = vrot.slane %v1185, 2
    %v1391 = vsel %vm351, %v1389, %v1390
    %v1392 = vrot.slane %v1186, 2
    %v1393 = vrot.slane %v1187, 2
    %v1394 = vsel %vm351, %v1392, %v1393
    %v1395 = vrot.slane %v1188, 2
    %v1396 = vrot.slane %v1189, 2
    %v1397 = vsel %vm351, %v1395, %v1396
    %v1398 = vrot.slane %v1190, 2
    %v1399 = vrot.slane %v1191, 2
    %v1400 = vsel %vm351, %v1398, %v1399
    %v1401 = vrot.slane %v1196, 2
    %v1402 = vrot.slane %v1197, 2
    %v1403 = vsel %vm351, %v1401, %v1402
    %v1404 = vrot.slane %v1198, 2
    %v1405 = vrot.slane %v1199, 2
    %v1406 = vsel %vm351, %v1404, %v1405
    %v1407 = vrot.slane %v1200, 2
    %v1408 = vrot.slane %v1201, 2
    %v1409 = vsel %vm351, %v1407, %v1408
    %v1410 = vrot.slane %v1202, 2
    %v1411 = vrot.slane %v1203, 2
    %v1412 = vsel %vm351, %v1410, %v1411
    %v1413 = vrot.slane %v1204, 2
    %v1414 = vrot.slane %v1205, 2
    %v1415 = vsel %vm351, %v1413, %v1414
    %v1416 = vrot.slane %v1206, 2
    %v1417 = vrot.slane %v1207, 2
    %v1418 = vsel %vm351, %v1416, %v1417
    %v1419 = vrot.slane %v1208, 2
    %v1420 = vrot.slane %v1209, 2
    %v1421 = vsel %vm351, %v1419, %v1420
    %v1422 = vrot.slane %v1210, 2
    %v1423 = vrot.slane %v1211, 2
    %v1424 = vsel %vm351, %v1422, %v1423
    %1425 = vrot.lane.b32.xlu0 %v1379, 64
    %v1426 = vpop.permute.xlu0 %1425
    %1427 = vrot.lane.b32.xlu0 %v1382, 64
    %v1428 = vpop.permute.xlu0 %1427
    %1429 = vrot.lane.b32.xlu0 %v1385, 64
    %v1430 = vpop.permute.xlu0 %1429
    %1431 = vrot.lane.b32.xlu0 %v1388, 64
    %v1432 = vpop.permute.xlu0 %1431
    %1433 = vrot.lane.b32.xlu0 %v1391, 64
    %v1434 = vpop.permute.xlu0 %1433
    %1435 = vrot.lane.b32.xlu0 %v1394, 64
    %v1436 = vpop.permute.xlu0 %1435
    %1437 = vrot.lane.b32.xlu0 %v1397, 64
    %v1438 = vpop.permute.xlu0 %1437
    %1439 = vrot.lane.b32.xlu0 %v1400, 64
    %v1440 = vpop.permute.xlu0 %1439
    %1441 = vrot.lane.b32.xlu0 %v1403, 64
    %v1442 = vpop.permute.xlu0 %1441
    %1443 = vrot.lane.b32.xlu0 %v1406, 64
    %v1444 = vpop.permute.xlu0 %1443
    %1445 = vrot.lane.b32.xlu0 %v1409, 64
    %v1446 = vpop.permute.xlu0 %1445
    %1447 = vrot.lane.b32.xlu0 %v1412, 64
    %v1448 = vpop.permute.xlu0 %1447
    %1449 = vrot.lane.b32.xlu0 %v1415, 64
    %v1450 = vpop.permute.xlu0 %1449
    %1451 = vrot.lane.b32.xlu0 %v1418, 64
    %v1452 = vpop.permute.xlu0 %1451
    %1453 = vrot.lane.b32.xlu0 %v1421, 64
    %v1454 = vpop.permute.xlu0 %1453
    %1455 = vrot.lane.b32.xlu0 %v1424, 64
    %v1456 = vpop.permute.xlu0 %1455
    %vm1473 = vcmask 785920
    %1474 = vst.msk [vmem:[#allocation3] sm:$0xff] %vm1473, %v1426
    %1475 = vst.msk [vmem:[#allocation3 + $0x18] sm:$0xff] %vm1473, %v1428
    %1476 = vst.msk [vmem:[#allocation3 + $0x30] sm:$0xff] %vm1473, %v1430
    %1477 = vst.msk [vmem:[#allocation3 + $0x48] sm:$0xff] %vm1473, %v1432
    %1478 = vst.msk [vmem:[#allocation3 + $0x60] sm:$0xff] %vm1473, %v1434
    %1479 = vst.msk [vmem:[#allocation3 + $0x78] sm:$0xff] %vm1473, %v1436
    %1480 = vst.msk [vmem:[#allocation3 + $0x90] sm:$0xff] %vm1473, %v1438
    %1481 = vst.msk [vmem:[#allocation3 + $0xa8] sm:$0xff] %vm1473, %v1440
    %1482 = vst.msk [vmem:[#allocation3 + $0xc0] sm:$0xff] %vm1473, %v1442
    %1483 = vst.msk [vmem:[#allocation3 + $0xd8] sm:$0xff] %vm1473, %v1444
    %1484 = vst.msk [vmem:[#allocation3 + $0xf0] sm:$0xff] %vm1473, %v1446
    %1485 = vst.msk [vmem:[#allocation3 + $0x108] sm:$0xff] %vm1473, %v1448
    %1486 = vst.msk [vmem:[#allocation3 + $0x120] sm:$0xff] %vm1473, %v1450
    %1487 = vst.msk [vmem:[#allocation3 + $0x138] sm:$0xff] %vm1473, %v1452
    %1488 = vst.msk [vmem:[#allocation3 + $0x150] sm:$0xff] %vm1473, %v1454
    %1489 = vst.msk [vmem:[#allocation3 + $0x168] sm:$0xff] %vm1473, %v1456
    %1492 = vrot.lane.b32.xlu0 %v1178, 96
    %v1493 = vpop.permute.xlu0 %1492
    %1494 = vrot.lane.b32.xlu0 %v1180, 96
    %v1495 = vpop.permute.xlu0 %1494
    %1496 = vrot.lane.b32.xlu0 %v1182, 96
    %v1497 = vpop.permute.xlu0 %1496
    %1498 = vrot.lane.b32.xlu0 %v1184, 96
    %v1499 = vpop.permute.xlu0 %1498
    %1500 = vrot.lane.b32.xlu0 %v1186, 96
    %v1501 = vpop.permute.xlu0 %1500
    %1502 = vrot.lane.b32.xlu0 %v1188, 96
    %v1503 = vpop.permute.xlu0 %1502
    %1504 = vrot.lane.b32.xlu0 %v1190, 96
    %v1505 = vpop.permute.xlu0 %1504
    %1506 = vrot.lane.b32.xlu0 %v1192, 96
    %v1507 = vpop.permute.xlu0 %1506
    %1508 = vrot.lane.b32.xlu0 %v1198, 96
    %v1509 = vpop.permute.xlu0 %1508
    %1510 = vrot.lane.b32.xlu0 %v1200, 96
    %v1511 = vpop.permute.xlu0 %1510
    %1512 = vrot.lane.b32.xlu0 %v1202, 96
    %v1513 = vpop.permute.xlu0 %1512
    %1514 = vrot.lane.b32.xlu0 %v1204, 96
    %v1515 = vpop.permute.xlu0 %1514
    %1516 = vrot.lane.b32.xlu0 %v1206, 96
    %v1517 = vpop.permute.xlu0 %1516
    %1518 = vrot.lane.b32.xlu0 %v1208, 96
    %v1519 = vpop.permute.xlu0 %1518
    %1520 = vrot.lane.b32.xlu0 %v1210, 96
    %v1521 = vpop.permute.xlu0 %1520
    %1522 = vrot.lane.b32.xlu0 %v1212, 96
    %v1523 = vpop.permute.xlu0 %1522
    %vm1540 = vcmask 1048320
    %1541 = vst.msk [vmem:[#allocation3] sm:$0xff] %vm1540, %v1493
    %1542 = vst.msk [vmem:[#allocation3 + $0x18] sm:$0xff] %vm1540, %v1495
    %1543 = vst.msk [vmem:[#allocation3 + $0x30] sm:$0xff] %vm1540, %v1497
    %1544 = vst.msk [vmem:[#allocation3 + $0x48] sm:$0xff] %vm1540, %v1499
    %1545 = vst.msk [vmem:[#allocation3 + $0x60] sm:$0xff] %vm1540, %v1501
    %1546 = vst.msk [vmem:[#allocation3 + $0x78] sm:$0xff] %vm1540, %v1503
    %1547 = vst.msk [vmem:[#allocation3 + $0x90] sm:$0xff] %vm1540, %v1505
    %1548 = vst.msk [vmem:[#allocation3 + $0xa8] sm:$0xff] %vm1540, %v1507
    %1549 = vst.msk [vmem:[#allocation3 + $0xc0] sm:$0xff] %vm1540, %v1509
    %1550 = vst.msk [vmem:[#allocation3 + $0xd8] sm:$0xff] %vm1540, %v1511
    %1551 = vst.msk [vmem:[#allocation3 + $0xf0] sm:$0xff] %vm1540, %v1513
    %1552 = vst.msk [vmem:[#allocation3 + $0x108] sm:$0xff] %vm1540, %v1515
    %1553 = vst.msk [vmem:[#allocation3 + $0x120] sm:$0xff] %vm1540, %v1517
    %1554 = vst.msk [vmem:[#allocation3 + $0x138] sm:$0xff] %vm1540, %v1519
    %1555 = vst.msk [vmem:[#allocation3 + $0x150] sm:$0xff] %vm1540, %v1521
    %1556 = vst.msk [vmem:[#allocation3 + $0x168] sm:$0xff] %vm1540, %v1523
    %v1559 = vrot.slane %v1192, 1
    %v1560 = vrot.slane %v1193, 1
    %v1561 = vsel %vm237, %v1559, %v1560
    %v1562 = vrot.slane %v1212, 1
    %v1563 = vrot.slane %v1213, 1
    %v1564 = vsel %vm237, %v1562, %v1563
    %1581 = vst.msk [vmem:[#allocation3 + $0x8] sm:$0xff] %vm73, %v1269
    %1582 = vst.msk [vmem:[#allocation3 + $0x20] sm:$0xff] %vm73, %v1272
    %1583 = vst.msk [vmem:[#allocation3 + $0x38] sm:$0xff] %vm73, %v1275
    %1584 = vst.msk [vmem:[#allocation3 + $0x50] sm:$0xff] %vm73, %v1278
    %1585 = vst.msk [vmem:[#allocation3 + $0x68] sm:$0xff] %vm73, %v1281
    %1586 = vst.msk [vmem:[#allocation3 + $0x80] sm:$0xff] %vm73, %v1284
    %1587 = vst.msk [vmem:[#allocation3 + $0x98] sm:$0xff] %vm73, %v1287
    %1588 = vst.msk [vmem:[#allocation3 + $0xb0] sm:$0xff] %vm73, %v1561
    %1589 = vst.msk [vmem:[#allocation3 + $0xc8] sm:$0xff] %vm73, %v1293
    %1590 = vst.msk [vmem:[#allocation3 + $0xe0] sm:$0xff] %vm73, %v1296
    %1591 = vst.msk [vmem:[#allocation3 + $0xf8] sm:$0xff] %vm73, %v1299
    %1592 = vst.msk [vmem:[#allocation3 + $0x110] sm:$0xff] %vm73, %v1302
    %1593 = vst.msk [vmem:[#allocation3 + $0x128] sm:$0xff] %vm73, %v1305
    %1594 = vst.msk [vmem:[#allocation3 + $0x140] sm:$0xff] %vm73, %v1308
    %1595 = vst.msk [vmem:[#allocation3 + $0x158] sm:$0xff] %vm73, %v1311
    %1596 = vst.msk [vmem:[#allocation3 + $0x170] sm:$0xff] %vm73, %v1564
    %v1597 = vrot.slane %v1192, 2
    %v1598 = vrot.slane %v1193, 2
    %v1599 = vsel %vm351, %v1597, %v1598
    %v1600 = vrot.slane %v1212, 2
    %v1601 = vrot.slane %v1213, 2
    %v1602 = vsel %vm351, %v1600, %v1601
    %1603 = vrot.lane.b32.xlu0 %v1382, 32
    %v1604 = vpop.permute.xlu0 %1603
    %1605 = vrot.lane.b32.xlu0 %v1385, 32
    %v1606 = vpop.permute.xlu0 %1605
    %1607 = vrot.lane.b32.xlu0 %v1388, 32
    %v1608 = vpop.permute.xlu0 %1607
    %1609 = vrot.lane.b32.xlu0 %v1391, 32
    %v1610 = vpop.permute.xlu0 %1609
    %1611 = vrot.lane.b32.xlu0 %v1394, 32
    %v1612 = vpop.permute.xlu0 %1611
    %1613 = vrot.lane.b32.xlu0 %v1397, 32
    %v1614 = vpop.permute.xlu0 %1613
    %1615 = vrot.lane.b32.xlu0 %v1400, 32
    %v1616 = vpop.permute.xlu0 %1615
    %1617 = vrot.lane.b32.xlu0 %v1599, 32
    %v1618 = vpop.permute.xlu0 %1617
    %1619 = vrot.lane.b32.xlu0 %v1406, 32
    %v1620 = vpop.permute.xlu0 %1619
    %1621 = vrot.lane.b32.xlu0 %v1409, 32
    %v1622 = vpop.permute.xlu0 %1621
    %1623 = vrot.lane.b32.xlu0 %v1412, 32
    %v1624 = vpop.permute.xlu0 %1623
    %1625 = vrot.lane.b32.xlu0 %v1415, 32
    %v1626 = vpop.permute.xlu0 %1625
    %1627 = vrot.lane.b32.xlu0 %v1418, 32
    %v1628 = vpop.permute.xlu0 %1627
    %1629 = vrot.lane.b32.xlu0 %v1421, 32
    %v1630 = vpop.permute.xlu0 %1629
    %1631 = vrot.lane.b32.xlu0 %v1424, 32
    %v1632 = vpop.permute.xlu0 %1631
    %1633 = vrot.lane.b32.xlu0 %v1602, 32
    %v1634 = vpop.permute.xlu0 %1633
    %1651 = vst.msk [vmem:[#allocation3 + $0x8] sm:$0xff] %vm1360, %v1604
    %1652 = vst.msk [vmem:[#allocation3 + $0x20] sm:$0xff] %vm1360, %v1606
    %1653 = vst.msk [vmem:[#allocation3 + $0x38] sm:$0xff] %vm1360, %v1608
    %1654 = vst.msk [vmem:[#allocation3 + $0x50] sm:$0xff] %vm1360, %v1610
    %1655 = vst.msk [vmem:[#allocation3 + $0x68] sm:$0xff] %vm1360, %v1612
    %1656 = vst.msk [vmem:[#allocation3 + $0x80] sm:$0xff] %vm1360, %v1614
    %1657 = vst.msk [vmem:[#allocation3 + $0x98] sm:$0xff] %vm1360, %v1616
    %1658 = vst.msk [vmem:[#allocation3 + $0xb0] sm:$0xff] %vm1360, %v1618
    %1659 = vst.msk [vmem:[#allocation3 + $0xc8] sm:$0xff] %vm1360, %v1620
    %1660 = vst.msk [vmem:[#allocation3 + $0xe0] sm:$0xff] %vm1360, %v1622
    %1661 = vst.msk [vmem:[#allocation3 + $0xf8] sm:$0xff] %vm1360, %v1624
    %1662 = vst.msk [vmem:[#allocation3 + $0x110] sm:$0xff] %vm1360, %v1626
    %1663 = vst.msk [vmem:[#allocation3 + $0x128] sm:$0xff] %vm1360, %v1628
    %1664 = vst.msk [vmem:[#allocation3 + $0x140] sm:$0xff] %vm1360, %v1630
    %1665 = vst.msk [vmem:[#allocation3 + $0x158] sm:$0xff] %vm1360, %v1632
    %1666 = vst.msk [vmem:[#allocation3 + $0x170] sm:$0xff] %vm1360, %v1634
    %1669 = vrot.lane.b32.xlu0 %v1180, 64
    %v1670 = vpop.permute.xlu0 %1669
    %1671 = vrot.lane.b32.xlu0 %v1182, 64
    %v1672 = vpop.permute.xlu0 %1671
    %1673 = vrot.lane.b32.xlu0 %v1184, 64
    %v1674 = vpop.permute.xlu0 %1673
    %1675 = vrot.lane.b32.xlu0 %v1186, 64
    %v1676 = vpop.permute.xlu0 %1675
    %1677 = vrot.lane.b32.xlu0 %v1188, 64
    %v1678 = vpop.permute.xlu0 %1677
    %1679 = vrot.lane.b32.xlu0 %v1190, 64
    %v1680 = vpop.permute.xlu0 %1679
    %1681 = vrot.lane.b32.xlu0 %v1192, 64
    %v1682 = vpop.permute.xlu0 %1681
    %1683 = vrot.lane.b32.xlu0 %v1194, 64
    %v1684 = vpop.permute.xlu0 %1683
    %1685 = vrot.lane.b32.xlu0 %v1200, 64
    %v1686 = vpop.permute.xlu0 %1685
    %1687 = vrot.lane.b32.xlu0 %v1202, 64
    %v1688 = vpop.permute.xlu0 %1687
    %1689 = vrot.lane.b32.xlu0 %v1204, 64
    %v1690 = vpop.permute.xlu0 %1689
    %1691 = vrot.lane.b32.xlu0 %v1206, 64
    %v1692 = vpop.permute.xlu0 %1691
    %1693 = vrot.lane.b32.xlu0 %v1208, 64
    %v1694 = vpop.permute.xlu0 %1693
    %1695 = vrot.lane.b32.xlu0 %v1210, 64
    %v1696 = vpop.permute.xlu0 %1695
    %1697 = vrot.lane.b32.xlu0 %v1212, 64
    %v1698 = vpop.permute.xlu0 %1697
    %1699 = vrot.lane.b32.xlu0 %v1214, 64
    %v1700 = vpop.permute.xlu0 %1699
    %1717 = vst.msk [vmem:[#allocation3 + $0x8] sm:$0xff] %vm1473, %v1670
    %1718 = vst.msk [vmem:[#allocation3 + $0x20] sm:$0xff] %vm1473, %v1672
    %1719 = vst.msk [vmem:[#allocation3 + $0x38] sm:$0xff] %vm1473, %v1674
    %1720 = vst.msk [vmem:[#allocation3 + $0x50] sm:$0xff] %vm1473, %v1676
    %1721 = vst.msk [vmem:[#allocation3 + $0x68] sm:$0xff] %vm1473, %v1678
    %1722 = vst.msk [vmem:[#allocation3 + $0x80] sm:$0xff] %vm1473, %v1680
    %1723 = vst.msk [vmem:[#allocation3 + $0x98] sm:$0xff] %vm1473, %v1682
    %1724 = vst.msk [vmem:[#allocation3 + $0xb0] sm:$0xff] %vm1473, %v1684
    %1725 = vst.msk [vmem:[#allocation3 + $0xc8] sm:$0xff] %vm1473, %v1686
    %1726 = vst.msk [vmem:[#allocation3 + $0xe0] sm:$0xff] %vm1473, %v1688
    %1727 = vst.msk [vmem:[#allocation3 + $0xf8] sm:$0xff] %vm1473, %v1690
    %1728 = vst.msk [vmem:[#allocation3 + $0x110] sm:$0xff] %vm1473, %v1692
    %1729 = vst.msk [vmem:[#allocation3 + $0x128] sm:$0xff] %vm1473, %v1694
    %1730 = vst.msk [vmem:[#allocation3 + $0x140] sm:$0xff] %vm1473, %v1696
    %1731 = vst.msk [vmem:[#allocation3 + $0x158] sm:$0xff] %vm1473, %v1698
    %1732 = vst.msk [vmem:[#allocation3 + $0x170] sm:$0xff] %vm1473, %v1700
    %v1735 = vrot.slane %v1194, 1
    %v1736 = vrot.slane %v1195, 1
    %v1737 = vsel %vm237, %v1735, %v1736
    %v1738 = vrot.slane %v1214, 1
    %v1739 = vrot.slane %v1215, 1
    %v1740 = vsel %vm237, %v1738, %v1739
    %1741 = vrot.lane.b32.xlu0 %v1272, 96
    %v1742 = vpop.permute.xlu0 %1741
    %1743 = vrot.lane.b32.xlu0 %v1275, 96
    %v1744 = vpop.permute.xlu0 %1743
    %1745 = vrot.lane.b32.xlu0 %v1278, 96
    %v1746 = vpop.permute.xlu0 %1745
    %1747 = vrot.lane.b32.xlu0 %v1281, 96
    %v1748 = vpop.permute.xlu0 %1747
    %1749 = vrot.lane.b32.xlu0 %v1284, 96
    %v1750 = vpop.permute.xlu0 %1749
    %1751 = vrot.lane.b32.xlu0 %v1287, 96
    %v1752 = vpop.permute.xlu0 %1751
    %1753 = vrot.lane.b32.xlu0 %v1561, 96
    %v1754 = vpop.permute.xlu0 %1753
    %1755 = vrot.lane.b32.xlu0 %v1737, 96
    %v1756 = vpop.permute.xlu0 %1755
    %1757 = vrot.lane.b32.xlu0 %v1296, 96
    %v1758 = vpop.permute.xlu0 %1757
    %1759 = vrot.lane.b32.xlu0 %v1299, 96
    %v1760 = vpop.permute.xlu0 %1759
    %1761 = vrot.lane.b32.xlu0 %v1302, 96
    %v1762 = vpop.permute.xlu0 %1761
    %1763 = vrot.lane.b32.xlu0 %v1305, 96
    %v1764 = vpop.permute.xlu0 %1763
    %1765 = vrot.lane.b32.xlu0 %v1308, 96
    %v1766 = vpop.permute.xlu0 %1765
    %1767 = vrot.lane.b32.xlu0 %v1311, 96
    %v1768 = vpop.permute.xlu0 %1767
    %1769 = vrot.lane.b32.xlu0 %v1564, 96
    %v1770 = vpop.permute.xlu0 %1769
    %1771 = vrot.lane.b32.xlu0 %v1740, 96
    %v1772 = vpop.permute.xlu0 %1771
    %1789 = vst.msk [vmem:[#allocation3 + $0x8] sm:$0xff] %vm1540, %v1742
    %1790 = vst.msk [vmem:[#allocation3 + $0x20] sm:$0xff] %vm1540, %v1744
    %1791 = vst.msk [vmem:[#allocation3 + $0x38] sm:$0xff] %vm1540, %v1746
    %1792 = vst.msk [vmem:[#allocation3 + $0x50] sm:$0xff] %vm1540, %v1748
    %1793 = vst.msk [vmem:[#allocation3 + $0x68] sm:$0xff] %vm1540, %v1750
    %1794 = vst.msk [vmem:[#allocation3 + $0x80] sm:$0xff] %vm1540, %v1752
    %1795 = vst.msk [vmem:[#allocation3 + $0x98] sm:$0xff] %vm1540, %v1754
    %1796 = vst.msk [vmem:[#allocation3 + $0xb0] sm:$0xff] %vm1540, %v1756
    %1797 = vst.msk [vmem:[#allocation3 + $0xc8] sm:$0xff] %vm1540, %v1758
    %1798 = vst.msk [vmem:[#allocation3 + $0xe0] sm:$0xff] %vm1540, %v1760
    %1799 = vst.msk [vmem:[#allocation3 + $0xf8] sm:$0xff] %vm1540, %v1762
    %1800 = vst.msk [vmem:[#allocation3 + $0x110] sm:$0xff] %vm1540, %v1764
    %1801 = vst.msk [vmem:[#allocation3 + $0x128] sm:$0xff] %vm1540, %v1766
    %1802 = vst.msk [vmem:[#allocation3 + $0x140] sm:$0xff] %vm1540, %v1768
    %1803 = vst.msk [vmem:[#allocation3 + $0x158] sm:$0xff] %vm1540, %v1770
    %1804 = vst.msk [vmem:[#allocation3 + $0x170] sm:$0xff] %vm1540, %v1772
    %v1805 = vrot.slane %v1194, 2
    %v1806 = vrot.slane %v1195, 2
    %v1807 = vsel %vm351, %v1805, %v1806
    %v1808 = vrot.slane %v1214, 2
    %v1809 = vrot.slane %v1215, 2
    %v1810 = vsel %vm351, %v1808, %v1809
    %1827 = vst.msk [vmem:[#allocation3 + $0x10] sm:$0xff] %vm73, %v1385
    %1828 = vst.msk [vmem:[#allocation3 + $0x28] sm:$0xff] %vm73, %v1388
    %1829 = vst.msk [vmem:[#allocation3 + $0x40] sm:$0xff] %vm73, %v1391
    %1830 = vst.msk [vmem:[#allocation3 + $0x58] sm:$0xff] %vm73, %v1394
    %1831 = vst.msk [vmem:[#allocation3 + $0x70] sm:$0xff] %vm73, %v1397
    %1832 = vst.msk [vmem:[#allocation3 + $0x88] sm:$0xff] %vm73, %v1400
    %1833 = vst.msk [vmem:[#allocation3 + $0xa0] sm:$0xff] %vm73, %v1599
    %1834 = vst.msk [vmem:[#allocation3 + $0xb8] sm:$0xff] %vm73, %v1807
    %1835 = vst.msk [vmem:[#allocation3 + $0xd0] sm:$0xff] %vm73, %v1409
    %1836 = vst.msk [vmem:[#allocation3 + $0xe8] sm:$0xff] %vm73, %v1412
    %1837 = vst.msk [vmem:[#allocation3 + $0x100] sm:$0xff] %vm73, %v1415
    %1838 = vst.msk [vmem:[#allocation3 + $0x118] sm:$0xff] %vm73, %v1418
    %1839 = vst.msk [vmem:[#allocation3 + $0x130] sm:$0xff] %vm73, %v1421
    %1840 = vst.msk [vmem:[#allocation3 + $0x148] sm:$0xff] %vm73, %v1424
    %1841 = vst.msk [vmem:[#allocation3 + $0x160] sm:$0xff] %vm73, %v1602
    %1842 = vst.msk [vmem:[#allocation3 + $0x178] sm:$0xff] %vm73, %v1810
    %v1843 = vld [vmem:[#allocation3] sm:$0xff]
    %v1844 = vld [vmem:[#allocation3 + $0x8] sm:$0xff]
    %v1845 = vld [vmem:[#allocation3 + $0x10] sm:$0xff]
    %v1846 = vld [vmem:[#allocation3 + $0x18] sm:$0xff]
    %v1847 = vld [vmem:[#allocation3 + $0x20] sm:$0xff]
    %v1848 = vld [vmem:[#allocation3 + $0x28] sm:$0xff]
    %v1849 = vld [vmem:[#allocation3 + $0x30] sm:$0xff]
    %v1850 = vld [vmem:[#allocation3 + $0x38] sm:$0xff]
    %v1851 = vld [vmem:[#allocation3 + $0x40] sm:$0xff]
    %v1852 = vld [vmem:[#allocation3 + $0x48] sm:$0xff]
    %v1853 = vld [vmem:[#allocation3 + $0x50] sm:$0xff]
    %v1854 = vld [vmem:[#allocation3 + $0x58] sm:$0xff]
    %v1855 = vld [vmem:[#allocation3 + $0x60] sm:$0xff]
    %v1856 = vld [vmem:[#allocation3 + $0x68] sm:$0xff]
    %v1857 = vld [vmem:[#allocation3 + $0x70] sm:$0xff]
    %v1858 = vld [vmem:[#allocation3 + $0x78] sm:$0xff]
    %v1859 = vld [vmem:[#allocation3 + $0x80] sm:$0xff]
    %v1860 = vld [vmem:[#allocation3 + $0x88] sm:$0xff]
    %v1861 = vld [vmem:[#allocation3 + $0x90] sm:$0xff]
    %v1862 = vld [vmem:[#allocation3 + $0x98] sm:$0xff]
    %v1863 = vld [vmem:[#allocation3 + $0xa0] sm:$0xff]
    %v1864 = vld [vmem:[#allocation3 + $0xa8] sm:$0xff]
    %v1865 = vld [vmem:[#allocation3 + $0xb0] sm:$0xff]
    %v1866 = vld [vmem:[#allocation3 + $0xb8] sm:$0xff]
    %v1867 = vld [vmem:[#allocation3 + $0xc0] sm:$0xff]
    %v1868 = vld [vmem:[#allocation3 + $0xc8] sm:$0xff]
    %v1869 = vld [vmem:[#allocation3 + $0xd0] sm:$0xff]
    %v1870 = vld [vmem:[#allocation3 + $0xd8] sm:$0xff]
    %v1871 = vld [vmem:[#allocation3 + $0xe0] sm:$0xff]
    %v1872 = vld [vmem:[#allocation3 + $0xe8] sm:$0xff]
    %v1873 = vld [vmem:[#allocation3 + $0xf0] sm:$0xff]
    %v1874 = vld [vmem:[#allocation3 + $0xf8] sm:$0xff]
    %v1875 = vld [vmem:[#allocation3 + $0x100] sm:$0xff]
    %v1876 = vld [vmem:[#allocation3 + $0x108] sm:$0xff]
    %v1877 = vld [vmem:[#allocation3 + $0x110] sm:$0xff]
    %v1878 = vld [vmem:[#allocation3 + $0x118] sm:$0xff]
    %v1879 = vld [vmem:[#allocation3 + $0x120] sm:$0xff]
    %v1880 = vld [vmem:[#allocation3 + $0x128] sm:$0xff]
    %v1881 = vld [vmem:[#allocation3 + $0x130] sm:$0xff]
    %v1882 = vld [vmem:[#allocation3 + $0x138] sm:$0xff]
    %v1883 = vld [vmem:[#allocation3 + $0x140] sm:$0xff]
    %v1884 = vld [vmem:[#allocation3 + $0x148] sm:$0xff]
    %v1885 = vld [vmem:[#allocation3 + $0x150] sm:$0xff]
    %v1886 = vld [vmem:[#allocation3 + $0x158] sm:$0xff]
    %v1887 = vld [vmem:[#allocation3 + $0x160] sm:$0xff]
    %v1888 = vld [vmem:[#allocation3 + $0x168] sm:$0xff]
    %v1889 = vld [vmem:[#allocation3 + $0x170] sm:$0xff]
    %v1890 = vld [vmem:[#allocation3 + $0x178] sm:$0xff]
    %v1891 = vld [vmem:[#allocation8] sm:$0xff]
    %v1892 = vld [vmem:[#allocation8 + $0x8] sm:$0xff]
    %v1893 = vld [vmem:[#allocation8 + $0x10] sm:$0xff]
    %v1894 = vld [vmem:[#allocation8 + $0x18] sm:$0xff]
    %v1895 = vld [vmem:[#allocation8 + $0x20] sm:$0xff]
    %v1896 = vld [vmem:[#allocation8 + $0x28] sm:$0xff]
    %v1897 = vld [vmem:[#allocation8 + $0x30] sm:$0xff]
    %v1898 = vld [vmem:[#allocation8 + $0x38] sm:$0xff]
    %v1899 = vld [vmem:[#allocation8 + $0x40] sm:$0xff]
    %v1900 = vld [vmem:[#allocation8 + $0x48] sm:$0xff]
    %v1901 = vld [vmem:[#allocation8 + $0x50] sm:$0xff]
    %v1902 = vld [vmem:[#allocation8 + $0x58] sm:$0xff]
    %v1903 = vld [vmem:[#allocation8 + $0x60] sm:$0xff]
    %v1904 = vld [vmem:[#allocation8 + $0x68] sm:$0xff]
    %v1905 = vld [vmem:[#allocation8 + $0x70] sm:$0xff]
    %v1906 = vld [vmem:[#allocation8 + $0x78] sm:$0xff]
    %v1907 = vld [vmem:[#allocation8 + $0x80] sm:$0xff]
    %v1908 = vld [vmem:[#allocation8 + $0x88] sm:$0xff]
    %v1909 = vld [vmem:[#allocation8 + $0x90] sm:$0xff]
    %v1910 = vld [vmem:[#allocation8 + $0x98] sm:$0xff]
    %v1911 = vld [vmem:[#allocation8 + $0xa0] sm:$0xff]
    %v1912 = vld [vmem:[#allocation8 + $0xa8] sm:$0xff]
    %v1913 = vld [vmem:[#allocation8 + $0xb0] sm:$0xff]
    %v1914 = vld [vmem:[#allocation8 + $0xb8] sm:$0xff]
    %v1915 = vld [vmem:[#allocation8 + $0xc0] sm:$0xff]
    %v1916 = vld [vmem:[#allocation8 + $0xc8] sm:$0xff]
    %v1917 = vld [vmem:[#allocation8 + $0xd0] sm:$0xff]
    %v1918 = vld [vmem:[#allocation8 + $0xd8] sm:$0xff]
    %v1919 = vld [vmem:[#allocation8 + $0xe0] sm:$0xff]
    %v1920 = vld [vmem:[#allocation8 + $0xe8] sm:$0xff]
    %v1921 = vld [vmem:[#allocation8 + $0xf0] sm:$0xff]
    %v1922 = vld [vmem:[#allocation8 + $0xf8] sm:$0xff]
    %v1923 = vld [vmem:[#allocation8 + $0x100] sm:$0xff]
    %v1924 = vld [vmem:[#allocation8 + $0x108] sm:$0xff]
    %v1925 = vld [vmem:[#allocation8 + $0x110] sm:$0xff]
    %v1926 = vld [vmem:[#allocation8 + $0x118] sm:$0xff]
    %v1927 = vld [vmem:[#allocation8 + $0x120] sm:$0xff]
    %v1928 = vld [vmem:[#allocation8 + $0x128] sm:$0xff]
    %v1929 = vld [vmem:[#allocation8 + $0x130] sm:$0xff]
    %v1930 = vld [vmem:[#allocation8 + $0x138] sm:$0xff]
    %v1931 = vld [vmem:[#allocation8 + $0x140] sm:$0xff]
    %v1932 = vld [vmem:[#allocation8 + $0x148] sm:$0xff]
    %v1933 = vld [vmem:[#allocation8 + $0x150] sm:$0xff]
    %v1934 = vld [vmem:[#allocation8 + $0x158] sm:$0xff]
    %v1935 = vld [vmem:[#allocation8 + $0x160] sm:$0xff]
    %v1936 = vld [vmem:[#allocation8 + $0x168] sm:$0xff]
    %v1937 = vld [vmem:[#allocation8 + $0x170] sm:$0xff]
    %v1938 = vld [vmem:[#allocation8 + $0x178] sm:$0xff]
    %v1939 = vld [vmem:[#allocation8 + $0x180] sm:$0xff]
    %v1940 = vld [vmem:[#allocation8 + $0x188] sm:$0xff]
    %v1941 = vld [vmem:[#allocation8 + $0x190] sm:$0xff]
    %v1942 = vld [vmem:[#allocation8 + $0x198] sm:$0xff]
    %v1943 = vld [vmem:[#allocation8 + $0x1a0] sm:$0xff]
    %v1944 = vld [vmem:[#allocation8 + $0x1a8] sm:$0xff]
    %v1945 = vld [vmem:[#allocation8 + $0x1b0] sm:$0xff]
    %v1946 = vld [vmem:[#allocation8 + $0x1b8] sm:$0xff]
    %v1947 = vld [vmem:[#allocation8 + $0x1c0] sm:$0xff]
    %v1948 = vld [vmem:[#allocation8 + $0x1c8] sm:$0xff]
    %v1949 = vld [vmem:[#allocation8 + $0x1d0] sm:$0xff]
    %v1950 = vld [vmem:[#allocation8 + $0x1d8] sm:$0xff]
    %v1951 = vld [vmem:[#allocation8 + $0x1e0] sm:$0xff]
    %v1952 = vld [vmem:[#allocation8 + $0x1e8] sm:$0xff]
    %v1953 = vld [vmem:[#allocation8 + $0x1f0] sm:$0xff]
    %v1954 = vld [vmem:[#allocation8 + $0x1f8] sm:$0xff]
    %v1955 = vld [vmem:[#allocation8 + $0x200] sm:$0xff]
    %v1956 = vld [vmem:[#allocation8 + $0x208] sm:$0xff]
    %v1957 = vld [vmem:[#allocation8 + $0x210] sm:$0xff]
    %v1958 = vld [vmem:[#allocation8 + $0x218] sm:$0xff]
    %v1959 = vld [vmem:[#allocation8 + $0x220] sm:$0xff]
    %v1960 = vld [vmem:[#allocation8 + $0x228] sm:$0xff]
    %v1961 = vld [vmem:[#allocation8 + $0x230] sm:$0xff]
    %v1962 = vld [vmem:[#allocation8 + $0x238] sm:$0xff]
    %v1964 = vsel %vm73, %v1845, 0
    %v1967 = vsel %vm73, %v1848, 0
    %v1970 = vsel %vm73, %v1851, 0
    %v1973 = vsel %vm73, %v1854, 0
    %v1976 = vsel %vm73, %v1857, 0
    %v1979 = vsel %vm73, %v1860, 0
    %v1982 = vsel %vm73, %v1863, 0
    %v1985 = vsel %vm73, %v1866, 0
    %v1988 = vsel %vm73, %v1869, 0
    %v1991 = vsel %vm73, %v1872, 0
    %v1994 = vsel %vm73, %v1875, 0
    %v1997 = vsel %vm73, %v1878, 0
    %v2000 = vsel %vm73, %v1881, 0
    %v2003 = vsel %vm73, %v1884, 0
    %v2006 = vsel %vm73, %v1887, 0
    %v2009 = vsel %vm73, %v1890, 0
    %2011 = vmatpush.msra.mxu0 %v1921
    %2012 = vmatpush.msra.mxu0 %v1919
    %2013 = vmatpush.msra.mxu0 %v1917
    %2014 = vmatpush.msra.mxu0 %v1915
    %2015 = vmatpush.msra.mxu0 %v1913
    %2016 = vmatpush.msra.mxu0 %v1911
    %2017 = vmatpush.msra.mxu0 %v1909
    %2018 = vmatpush.msra.mxu0 %v1907
    %2019 = vmatpush.msra.mxu0 %v1905
    %2020 = vmatpush.msra.mxu0 %v1903
    %2021 = vmatpush.msra.mxu0 %v1901
    %2022 = vmatpush.msra.mxu0 %v1899
    %2023 = vmatpush.msra.mxu0 %v1897
    %2024 = vmatpush.msra.mxu0 %v1895
    %2025 = vmatpush.msra.mxu0 %v1893
    %2026 = vmatpush.msra.mxu0 %v1891
    %2027 = vmatmul.f32.gmra.mxu0 %v1843
    %v2028 = vpop.f32.mrf.mxu0
    %v2029 = vadd.f32 0.0, %v2028
    %2030 = vmatmul.f32.gmra.mxu0 %v1846
    %v2031 = vpop.f32.mrf.mxu0
    %v2032 = vadd.f32 0.0, %v2031
    %2033 = vmatmul.f32.gmra.mxu0 %v1849
    %v2034 = vpop.f32.mrf.mxu0
    %v2035 = vadd.f32 0.0, %v2034
    %2036 = vmatmul.f32.gmra.mxu0 %v1852
    %v2037 = vpop.f32.mrf.mxu0
    %v2038 = vadd.f32 0.0, %v2037
    %2039 = vmatmul.f32.gmra.mxu0 %v1855
    %v2040 = vpop.f32.mrf.mxu0
    %v2041 = vadd.f32 0.0, %v2040
    %2042 = vmatmul.f32.gmra.mxu0 %v1858
    %v2043 = vpop.f32.mrf.mxu0
    %v2044 = vadd.f32 0.0, %v2043
    %2045 = vmatmul.f32.gmra.mxu0 %v1861
    %v2046 = vpop.f32.mrf.mxu0
    %v2047 = vadd.f32 0.0, %v2046
    %2048 = vmatmul.f32.gmra.mxu0 %v1864
    %v2049 = vpop.f32.mrf.mxu0
    %v2050 = vadd.f32 0.0, %v2049
    %2051 = vmatmul.f32.gmra.mxu0 %v1867
    %v2052 = vpop.f32.mrf.mxu0
    %v2053 = vadd.f32 0.0, %v2052
    %2054 = vmatmul.f32.gmra.mxu0 %v1870
    %v2055 = vpop.f32.mrf.mxu0
    %v2056 = vadd.f32 0.0, %v2055
    %2057 = vmatmul.f32.gmra.mxu0 %v1873
    %v2058 = vpop.f32.mrf.mxu0
    %v2059 = vadd.f32 0.0, %v2058
    %2060 = vmatmul.f32.gmra.mxu0 %v1876
    %v2061 = vpop.f32.mrf.mxu0
    %v2062 = vadd.f32 0.0, %v2061
    %2063 = vmatmul.f32.gmra.mxu0 %v1879
    %v2064 = vpop.f32.mrf.mxu0
    %v2065 = vadd.f32 0.0, %v2064
    %2066 = vmatmul.f32.gmra.mxu0 %v1882
    %v2067 = vpop.f32.mrf.mxu0
    %v2068 = vadd.f32 0.0, %v2067
    %2069 = vmatmul.f32.gmra.mxu0 %v1885
    %v2070 = vpop.f32.mrf.mxu0
    %v2071 = vadd.f32 0.0, %v2070
    %2072 = vmatmul.f32.gmra.mxu0 %v1888
    %v2073 = vpop.f32.mrf.mxu0
    %v2074 = vadd.f32 0.0, %v2073
    %2075 = vdwg.mxu0
    %2076 = vmatpush.msra.mxu0 %v1953
    %2077 = vmatpush.msra.mxu0 %v1951
    %2078 = vmatpush.msra.mxu0 %v1949
    %2079 = vmatpush.msra.mxu0 %v1947
    %2080 = vmatpush.msra.mxu0 %v1945
    %2081 = vmatpush.msra.mxu0 %v1943
    %2082 = vmatpush.msra.mxu0 %v1941
    %2083 = vmatpush.msra.mxu0 %v1939
    %2084 = vmatpush.msra.mxu0 %v1937
    %2085 = vmatpush.msra.mxu0 %v1935
    %2086 = vmatpush.msra.mxu0 %v1933
    %2087 = vmatpush.msra.mxu0 %v1931
    %2088 = vmatpush.msra.mxu0 %v1929
    %2089 = vmatpush.msra.mxu0 %v1927
    %2090 = vmatpush.msra.mxu0 %v1925
    %2091 = vmatpush.msra.mxu0 %v1923
    %2092 = vmatmul.f32.gmra.mxu0 %v1844
    %v2093 = vpop.f32.mrf.mxu0
    %v2094 = vadd.f32 %v2029, %v2093
    %2095 = vmatmul.f32.gmra.mxu0 %v1847
    %v2096 = vpop.f32.mrf.mxu0
    %v2097 = vadd.f32 %v2032, %v2096
    %2098 = vmatmul.f32.gmra.mxu0 %v1850
    %v2099 = vpop.f32.mrf.mxu0
    %v2100 = vadd.f32 %v2035, %v2099
    %2101 = vmatmul.f32.gmra.mxu0 %v1853
    %v2102 = vpop.f32.mrf.mxu0
    %v2103 = vadd.f32 %v2038, %v2102
    %2104 = vmatmul.f32.gmra.mxu0 %v1856
    %v2105 = vpop.f32.mrf.mxu0
    %v2106 = vadd.f32 %v2041, %v2105
    %2107 = vmatmul.f32.gmra.mxu0 %v1859
    %v2108 = vpop.f32.mrf.mxu0
    %v2109 = vadd.f32 %v2044, %v2108
    %2110 = vmatmul.f32.gmra.mxu0 %v1862
    %v2111 = vpop.f32.mrf.mxu0
    %v2112 = vadd.f32 %v2047, %v2111
    %2113 = vmatmul.f32.gmra.mxu0 %v1865
    %v2114 = vpop.f32.mrf.mxu0
    %v2115 = vadd.f32 %v2050, %v2114
    %2116 = vmatmul.f32.gmra.mxu0 %v1868
    %v2117 = vpop.f32.mrf.mxu0
    %v2118 = vadd.f32 %v2053, %v2117
    %2119 = vmatmul.f32.gmra.mxu0 %v1871
    %v2120 = vpop.f32.mrf.mxu0
    %v2121 = vadd.f32 %v2056, %v2120
    %2122 = vmatmul.f32.gmra.mxu0 %v1874
    %v2123 = vpop.f32.mrf.mxu0
    %v2124 = vadd.f32 %v2059, %v2123
    %2125 = vmatmul.f32.gmra.mxu0 %v1877
    %v2126 = vpop.f32.mrf.mxu0
    %v2127 = vadd.f32 %v2062, %v2126
    %2128 = vmatmul.f32.gmra.mxu0 %v1880
    %v2129 = vpop.f32.mrf.mxu0
    %v2130 = vadd.f32 %v2065, %v2129
    %2131 = vmatmul.f32.gmra.mxu0 %v1883
    %v2132 = vpop.f32.mrf.mxu0
    %v2133 = vadd.f32 %v2068, %v2132
    %2134 = vmatmul.f32.gmra.mxu0 %v1886
    %v2135 = vpop.f32.mrf.mxu0
    %v2136 = vadd.f32 %v2071, %v2135
    %2137 = vmatmul.f32.gmra.mxu0 %v1889
    %v2138 = vpop.f32.mrf.mxu0
    %v2139 = vadd.f32 %v2074, %v2138
    %2140 = vdwg.mxu0
    %2141 = vmatpush.msra.mxu0 0.0
    %2142 = vmatpush.msra.mxu0 0.0
    %2143 = vmatpush.msra.mxu0 0.0
    %2144 = vmatpush.msra.mxu0 0.0
    %2145 = vmatpush.msra.mxu0 0.0
    %2146 = vmatpush.msra.mxu0 0.0
    %2147 = vmatpush.msra.mxu0 0.0
    %2148 = vmatpush.msra.mxu0 0.0
    %2149 = vmatpush.msra.mxu0 0.0
    %2150 = vmatpush.msra.mxu0 0.0
    %2151 = vmatpush.msra.mxu0 0.0
    %2152 = vmatpush.msra.mxu0 0.0
    %2153 = vmatpush.msra.mxu0 %v1961
    %2154 = vmatpush.msra.mxu0 %v1959
    %2155 = vmatpush.msra.mxu0 %v1957
    %2156 = vmatpush.msra.mxu0 %v1955
    %2157 = vmatmul.f32.gmra.mxu0 %v1964
    %v2158 = vpop.f32.mrf.mxu0
    %v2159 = vadd.f32 %v2094, %v2158
    %2160 = vmatmul.f32.gmra.mxu0 %v1967
    %v2161 = vpop.f32.mrf.mxu0
    %v2162 = vadd.f32 %v2097, %v2161
    %2163 = vmatmul.f32.gmra.mxu0 %v1970
    %v2164 = vpop.f32.mrf.mxu0
    %v2165 = vadd.f32 %v2100, %v2164
    %2166 = vmatmul.f32.gmra.mxu0 %v1973
    %v2167 = vpop.f32.mrf.mxu0
    %v2168 = vadd.f32 %v2103, %v2167
    %2169 = vmatmul.f32.gmra.mxu0 %v1976
    %v2170 = vpop.f32.mrf.mxu0
    %v2171 = vadd.f32 %v2106, %v2170
    %2172 = vmatmul.f32.gmra.mxu0 %v1979
    %v2173 = vpop.f32.mrf.mxu0
    %v2174 = vadd.f32 %v2109, %v2173
    %2175 = vmatmul.f32.gmra.mxu0 %v1982
    %v2176 = vpop.f32.mrf.mxu0
    %v2177 = vadd.f32 %v2112, %v2176
    %2178 = vmatmul.f32.gmra.mxu0 %v1985
    %v2179 = vpop.f32.mrf.mxu0
    %v2180 = vadd.f32 %v2115, %v2179
    %2181 = vmatmul.f32.gmra.mxu0 %v1988
    %v2182 = vpop.f32.mrf.mxu0
    %v2183 = vadd.f32 %v2118, %v2182
    %2184 = vmatmul.f32.gmra.mxu0 %v1991
    %v2185 = vpop.f32.mrf.mxu0
    %v2186 = vadd.f32 %v2121, %v2185
    %2187 = vmatmul.f32.gmra.mxu0 %v1994
    %v2188 = vpop.f32.mrf.mxu0
    %v2189 = vadd.f32 %v2124, %v2188
    %2190 = vmatmul.f32.gmra.mxu0 %v1997
    %v2191 = vpop.f32.mrf.mxu0
    %v2192 = vadd.f32 %v2127, %v2191
    %2193 = vmatmul.f32.gmra.mxu0 %v2000
    %v2194 = vpop.f32.mrf.mxu0
    %v2195 = vadd.f32 %v2130, %v2194
    %2196 = vmatmul.f32.gmra.mxu0 %v2003
    %v2197 = vpop.f32.mrf.mxu0
    %v2198 = vadd.f32 %v2133, %v2197
    %2199 = vmatmul.f32.gmra.mxu0 %v2006
    %v2200 = vpop.f32.mrf.mxu0
    %v2201 = vadd.f32 %v2136, %v2200
    %2202 = vmatmul.f32.gmra.mxu0 %v2009
    %v2203 = vpop.f32.mrf.mxu0
    %v2204 = vadd.f32 %v2139, %v2203
    %2205 = vdwg.mxu0
    %2206 = vmatpush.msra.mxu0 %v1922
    %2207 = vmatpush.msra.mxu0 %v1920
    %2208 = vmatpush.msra.mxu0 %v1918
    %2209 = vmatpush.msra.mxu0 %v1916
    %2210 = vmatpush.msra.mxu0 %v1914
    %2211 = vmatpush.msra.mxu0 %v1912
    %2212 = vmatpush.msra.mxu0 %v1910
    %2213 = vmatpush.msra.mxu0 %v1908
    %2214 = vmatpush.msra.mxu0 %v1906
    %2215 = vmatpush.msra.mxu0 %v1904
    %2216 = vmatpush.msra.mxu0 %v1902
    %2217 = vmatpush.msra.mxu0 %v1900
    %2218 = vmatpush.msra.mxu0 %v1898
    %2219 = vmatpush.msra.mxu0 %v1896
    %2220 = vmatpush.msra.mxu0 %v1894
    %2221 = vmatpush.msra.mxu0 %v1892
    %2222 = vmatmul.f32.gmra.mxu0 %v1843
    %v2223 = vpop.f32.mrf.mxu0
    %v2224 = vadd.f32 0.0, %v2223
    %2225 = vmatmul.f32.gmra.mxu0 %v1846
    %v2226 = vpop.f32.mrf.mxu0
    %v2227 = vadd.f32 0.0, %v2226
    %2228 = vmatmul.f32.gmra.mxu0 %v1849
    %v2229 = vpop.f32.mrf.mxu0
    %v2230 = vadd.f32 0.0, %v2229
    %2231 = vmatmul.f32.gmra.mxu0 %v1852
    %v2232 = vpop.f32.mrf.mxu0
    %v2233 = vadd.f32 0.0, %v2232
    %2234 = vmatmul.f32.gmra.mxu0 %v1855
    %v2235 = vpop.f32.mrf.mxu0
    %v2236 = vadd.f32 0.0, %v2235
    %2237 = vmatmul.f32.gmra.mxu0 %v1858
    %v2238 = vpop.f32.mrf.mxu0
    %v2239 = vadd.f32 0.0, %v2238
    %2240 = vmatmul.f32.gmra.mxu0 %v1861
    %v2241 = vpop.f32.mrf.mxu0
    %v2242 = vadd.f32 0.0, %v2241
    %2243 = vmatmul.f32.gmra.mxu0 %v1864
    %v2244 = vpop.f32.mrf.mxu0
    %v2245 = vadd.f32 0.0, %v2244
    %2246 = vmatmul.f32.gmra.mxu0 %v1867
    %v2247 = vpop.f32.mrf.mxu0
    %v2248 = vadd.f32 0.0, %v2247
    %2249 = vmatmul.f32.gmra.mxu0 %v1870
    %v2250 = vpop.f32.mrf.mxu0
    %v2251 = vadd.f32 0.0, %v2250
    %2252 = vmatmul.f32.gmra.mxu0 %v1873
    %v2253 = vpop.f32.mrf.mxu0
    %v2254 = vadd.f32 0.0, %v2253
    %2255 = vmatmul.f32.gmra.mxu0 %v1876
    %v2256 = vpop.f32.mrf.mxu0
    %v2257 = vadd.f32 0.0, %v2256
    %2258 = vmatmul.f32.gmra.mxu0 %v1879
    %v2259 = vpop.f32.mrf.mxu0
    %v2260 = vadd.f32 0.0, %v2259
    %2261 = vmatmul.f32.gmra.mxu0 %v1882
    %v2262 = vpop.f32.mrf.mxu0
    %v2263 = vadd.f32 0.0, %v2262
    %2264 = vmatmul.f32.gmra.mxu0 %v1885
    %v2265 = vpop.f32.mrf.mxu0
    %v2266 = vadd.f32 0.0, %v2265
    %2267 = vmatmul.f32.gmra.mxu0 %v1888
    %v2268 = vpop.f32.mrf.mxu0
    %v2269 = vadd.f32 0.0, %v2268
    %2270 = vdwg.mxu0
    %2271 = vmatpush.msra.mxu0 %v1954
    %2272 = vmatpush.msra.mxu0 %v1952
    %2273 = vmatpush.msra.mxu0 %v1950
    %2274 = vmatpush.msra.mxu0 %v1948
    %2275 = vmatpush.msra.mxu0 %v1946
    %2276 = vmatpush.msra.mxu0 %v1944
    %2277 = vmatpush.msra.mxu0 %v1942
    %2278 = vmatpush.msra.mxu0 %v1940
    %2279 = vmatpush.msra.mxu0 %v1938
    %2280 = vmatpush.msra.mxu0 %v1936
    %2281 = vmatpush.msra.mxu0 %v1934
    %2282 = vmatpush.msra.mxu0 %v1932
    %2283 = vmatpush.msra.mxu0 %v1930
    %2284 = vmatpush.msra.mxu0 %v1928
    %2285 = vmatpush.msra.mxu0 %v1926
    %2286 = vmatpush.msra.mxu0 %v1924
    %2287 = vmatmul.f32.gmra.mxu0 %v1844
    %v2288 = vpop.f32.mrf.mxu0
    %v2289 = vadd.f32 %v2224, %v2288
    %2290 = vmatmul.f32.gmra.mxu0 %v1847
    %v2291 = vpop.f32.mrf.mxu0
    %v2292 = vadd.f32 %v2227, %v2291
    %2293 = vmatmul.f32.gmra.mxu0 %v1850
    %v2294 = vpop.f32.mrf.mxu0
    %v2295 = vadd.f32 %v2230, %v2294
    %2296 = vmatmul.f32.gmra.mxu0 %v1853
    %v2297 = vpop.f32.mrf.mxu0
    %v2298 = vadd.f32 %v2233, %v2297
    %2299 = vmatmul.f32.gmra.mxu0 %v1856
    %v2300 = vpop.f32.mrf.mxu0
    %v2301 = vadd.f32 %v2236, %v2300
    %2302 = vmatmul.f32.gmra.mxu0 %v1859
    %v2303 = vpop.f32.mrf.mxu0
    %v2304 = vadd.f32 %v2239, %v2303
    %2305 = vmatmul.f32.gmra.mxu0 %v1862
    %v2306 = vpop.f32.mrf.mxu0
    %v2307 = vadd.f32 %v2242, %v2306
    %2308 = vmatmul.f32.gmra.mxu0 %v1865
    %v2309 = vpop.f32.mrf.mxu0
    %v2310 = vadd.f32 %v2245, %v2309
    %2311 = vmatmul.f32.gmra.mxu0 %v1868
    %v2312 = vpop.f32.mrf.mxu0
    %v2313 = vadd.f32 %v2248, %v2312
    %2314 = vmatmul.f32.gmra.mxu0 %v1871
    %v2315 = vpop.f32.mrf.mxu0
    %v2316 = vadd.f32 %v2251, %v2315
    %2317 = vmatmul.f32.gmra.mxu0 %v1874
    %v2318 = vpop.f32.mrf.mxu0
    %v2319 = vadd.f32 %v2254, %v2318
    %2320 = vmatmul.f32.gmra.mxu0 %v1877
    %v2321 = vpop.f32.mrf.mxu0
    %v2322 = vadd.f32 %v2257, %v2321
    %2323 = vmatmul.f32.gmra.mxu0 %v1880
    %v2324 = vpop.f32.mrf.mxu0
    %v2325 = vadd.f32 %v2260, %v2324
    %2326 = vmatmul.f32.gmra.mxu0 %v1883
    %v2327 = vpop.f32.mrf.mxu0
    %v2328 = vadd.f32 %v2263, %v2327
    %2329 = vmatmul.f32.gmra.mxu0 %v1886
    %v2330 = vpop.f32.mrf.mxu0
    %v2331 = vadd.f32 %v2266, %v2330
    %2332 = vmatmul.f32.gmra.mxu0 %v1889
    %v2333 = vpop.f32.mrf.mxu0
    %v2334 = vadd.f32 %v2269, %v2333
    %2335 = vdwg.mxu0
    %2336 = vmatpush.msra.mxu0 0.0
    %2337 = vmatpush.msra.mxu0 0.0
    %2338 = vmatpush.msra.mxu0 0.0
    %2339 = vmatpush.msra.mxu0 0.0
    %2340 = vmatpush.msra.mxu0 0.0
    %2341 = vmatpush.msra.mxu0 0.0
    %2342 = vmatpush.msra.mxu0 0.0
    %2343 = vmatpush.msra.mxu0 0.0
    %2344 = vmatpush.msra.mxu0 0.0
    %2345 = vmatpush.msra.mxu0 0.0
    %2346 = vmatpush.msra.mxu0 0.0
    %2347 = vmatpush.msra.mxu0 0.0
    %2348 = vmatpush.msra.mxu0 %v1962
    %2349 = vmatpush.msra.mxu0 %v1960
    %2350 = vmatpush.msra.mxu0 %v1958
    %2351 = vmatpush.msra.mxu0 %v1956
    %2352 = vmatmul.f32.gmra.mxu0 %v1964
    %v2353 = vpop.f32.mrf.mxu0
    %v2354 = vadd.f32 %v2289, %v2353
    %2355 = vmatmul.f32.gmra.mxu0 %v1967
    %v2356 = vpop.f32.mrf.mxu0
    %v2357 = vadd.f32 %v2292, %v2356
    %2358 = vmatmul.f32.gmra.mxu0 %v1970
    %v2359 = vpop.f32.mrf.mxu0
    %v2360 = vadd.f32 %v2295, %v2359
    %2361 = vmatmul.f32.gmra.mxu0 %v1973
    %v2362 = vpop.f32.mrf.mxu0
    %v2363 = vadd.f32 %v2298, %v2362
    %2364 = vmatmul.f32.gmra.mxu0 %v1976
    %v2365 = vpop.f32.mrf.mxu0
    %v2366 = vadd.f32 %v2301, %v2365
    %2367 = vmatmul.f32.gmra.mxu0 %v1979
    %v2368 = vpop.f32.mrf.mxu0
    %v2369 = vadd.f32 %v2304, %v2368
    %2370 = vmatmul.f32.gmra.mxu0 %v1982
    %v2371 = vpop.f32.mrf.mxu0
    %v2372 = vadd.f32 %v2307, %v2371
    %2373 = vmatmul.f32.gmra.mxu0 %v1985
    %v2374 = vpop.f32.mrf.mxu0
    %v2375 = vadd.f32 %v2310, %v2374
    %2376 = vmatmul.f32.gmra.mxu0 %v1988
    %v2377 = vpop.f32.mrf.mxu0
    %v2378 = vadd.f32 %v2313, %v2377
    %2379 = vmatmul.f32.gmra.mxu0 %v1991
    %v2380 = vpop.f32.mrf.mxu0
    %v2381 = vadd.f32 %v2316, %v2380
    %2382 = vmatmul.f32.gmra.mxu0 %v1994
    %v2383 = vpop.f32.mrf.mxu0
    %v2384 = vadd.f32 %v2319, %v2383
    %2385 = vmatmul.f32.gmra.mxu0 %v1997
    %v2386 = vpop.f32.mrf.mxu0
    %v2387 = vadd.f32 %v2322, %v2386
    %2388 = vmatmul.f32.gmra.mxu0 %v2000
    %v2389 = vpop.f32.mrf.mxu0
    %v2390 = vadd.f32 %v2325, %v2389
    %2391 = vmatmul.f32.gmra.mxu0 %v2003
    %v2392 = vpop.f32.mrf.mxu0
    %v2393 = vadd.f32 %v2328, %v2392
    %2394 = vmatmul.f32.gmra.mxu0 %v2006
    %v2395 = vpop.f32.mrf.mxu0
    %v2396 = vadd.f32 %v2331, %v2395
    %2397 = vmatmul.f32.gmra.mxu0 %v2009
    %v2398 = vpop.f32.mrf.mxu0
    %v2399 = vadd.f32 %v2334, %v2398
    %2400 = vdwg.mxu0
    %v2401 = vld [vmem:[%s5] sm:$0x1]
    %v2402 = vld [vmem:[%s6] sm:$0x1]
    %2419 = vrot.lane.b32.xlu0 %v2159, 96
    %v2420 = vpop.permute.xlu0 %2419
    %2421 = vrot.lane.b32.xlu0 %v2162, 96
    %v2422 = vpop.permute.xlu0 %2421
    %2423 = vrot.lane.b32.xlu0 %v2165, 96
    %v2424 = vpop.permute.xlu0 %2423
    %2425 = vrot.lane.b32.xlu0 %v2168, 96
    %v2426 = vpop.permute.xlu0 %2425
    %2427 = vrot.lane.b32.xlu0 %v2171, 96
    %v2428 = vpop.permute.xlu0 %2427
    %2429 = vrot.lane.b32.xlu0 %v2174, 96
    %v2430 = vpop.permute.xlu0 %2429
    %2431 = vrot.lane.b32.xlu0 %v2177, 96
    %v2432 = vpop.permute.xlu0 %2431
    %2433 = vrot.lane.b32.xlu0 %v2180, 96
    %v2434 = vpop.permute.xlu0 %2433
    %2435 = vrot.lane.b32.xlu0 %v2183, 96
    %v2436 = vpop.permute.xlu0 %2435
    %2437 = vrot.lane.b32.xlu0 %v2186, 96
    %v2438 = vpop.permute.xlu0 %2437
    %2439 = vrot.lane.b32.xlu0 %v2189, 96
    %v2440 = vpop.permute.xlu0 %2439
    %2441 = vrot.lane.b32.xlu0 %v2192, 96
    %v2442 = vpop.permute.xlu0 %2441
    %2443 = vrot.lane.b32.xlu0 %v2195, 96
    %v2444 = vpop.permute.xlu0 %2443
    %2445 = vrot.lane.b32.xlu0 %v2198, 96
    %v2446 = vpop.permute.xlu0 %2445
    %2447 = vrot.lane.b32.xlu0 %v2201, 96
    %v2448 = vpop.permute.xlu0 %2447
    %2449 = vrot.lane.b32.xlu0 %v2204, 96
    %v2450 = vpop.permute.xlu0 %2449
    %v2467 = vmul.f32 %v2159, %v2420
    %v2468 = vmul.f32 %v2162, %v2422
    %v2469 = vmul.f32 %v2165, %v2424
    %v2470 = vmul.f32 %v2168, %v2426
    %v2471 = vmul.f32 %v2171, %v2428
    %v2472 = vmul.f32 %v2174, %v2430
    %v2473 = vmul.f32 %v2177, %v2432
    %v2474 = vmul.f32 %v2180, %v2434
    %v2475 = vmul.f32 %v2183, %v2436
    %v2476 = vmul.f32 %v2186, %v2438
    %v2477 = vmul.f32 %v2189, %v2440
    %v2478 = vmul.f32 %v2192, %v2442
    %v2479 = vmul.f32 %v2195, %v2444
    %v2480 = vmul.f32 %v2198, %v2446
    %v2481 = vmul.f32 %v2201, %v2448
    %v2482 = vmul.f32 %v2204, %v2450
    %v2483 = vsel %vm73, %v2467, 0.0
    %2484 = vadd.xlane.f32.xlu0 %v2483
    %v2485 = vpop.xlane.xlu0 %2484
    %v2486 = vsel %vm73, %v2468, 0.0
    %2487 = vadd.xlane.f32.xlu0 %v2486
    %v2488 = vpop.xlane.xlu0 %2487
    %v2489 = vsel %vm73, %v2469, 0.0
    %2490 = vadd.xlane.f32.xlu0 %v2489
    %v2491 = vpop.xlane.xlu0 %2490
    %v2492 = vsel %vm73, %v2470, 0.0
    %2493 = vadd.xlane.f32.xlu0 %v2492
    %v2494 = vpop.xlane.xlu0 %2493
    %v2495 = vsel %vm73, %v2471, 0.0
    %2496 = vadd.xlane.f32.xlu0 %v2495
    %v2497 = vpop.xlane.xlu0 %2496
    %v2498 = vsel %vm73, %v2472, 0.0
    %2499 = vadd.xlane.f32.xlu0 %v2498
    %v2500 = vpop.xlane.xlu0 %2499
    %v2501 = vsel %vm73, %v2473, 0.0
    %2502 = vadd.xlane.f32.xlu0 %v2501
    %v2503 = vpop.xlane.xlu0 %2502
    %v2504 = vsel %vm73, %v2474, 0.0
    %2505 = vadd.xlane.f32.xlu0 %v2504
    %v2506 = vpop.xlane.xlu0 %2505
    %v2507 = vsel %vm73, %v2475, 0.0
    %2508 = vadd.xlane.f32.xlu0 %v2507
    %v2509 = vpop.xlane.xlu0 %2508
    %v2510 = vsel %vm73, %v2476, 0.0
    %2511 = vadd.xlane.f32.xlu0 %v2510
    %v2512 = vpop.xlane.xlu0 %2511
    %v2513 = vsel %vm73, %v2477, 0.0
    %2514 = vadd.xlane.f32.xlu0 %v2513
    %v2515 = vpop.xlane.xlu0 %2514
    %v2516 = vsel %vm73, %v2478, 0.0
    %2517 = vadd.xlane.f32.xlu0 %v2516
    %v2518 = vpop.xlane.xlu0 %2517
    %v2519 = vsel %vm73, %v2479, 0.0
    %2520 = vadd.xlane.f32.xlu0 %v2519
    %v2521 = vpop.xlane.xlu0 %2520
    %v2522 = vsel %vm73, %v2480, 0.0
    %2523 = vadd.xlane.f32.xlu0 %v2522
    %v2524 = vpop.xlane.xlu0 %2523
    %v2525 = vsel %vm73, %v2481, 0.0
    %2526 = vadd.xlane.f32.xlu0 %v2525
    %v2527 = vpop.xlane.xlu0 %2526
    %v2528 = vsel %vm73, %v2482, 0.0
    %2529 = vadd.xlane.f32.xlu0 %v2528
    %v2530 = vpop.xlane.xlu0 %2529
    %v2531 = vmul.f32 %v2485, 0.17677669
    %v2532 = vmul.f32 %v2488, 0.17677669
    %v2533 = vmul.f32 %v2491, 0.17677669
    %v2534 = vmul.f32 %v2494, 0.17677669
    %v2535 = vmul.f32 %v2497, 0.17677669
    %v2536 = vmul.f32 %v2500, 0.17677669
    %v2537 = vmul.f32 %v2503, 0.17677669
    %v2538 = vmul.f32 %v2506, 0.17677669
    %v2539 = vmul.f32 %v2509, 0.17677669
    %v2540 = vmul.f32 %v2512, 0.17677669
    %v2541 = vmul.f32 %v2515, 0.17677669
    %v2542 = vmul.f32 %v2518, 0.17677669
    %v2543 = vmul.f32 %v2521, 0.17677669
    %v2544 = vmul.f32 %v2524, 0.17677669
    %v2545 = vmul.f32 %v2527, 0.17677669
    %v2546 = vmul.f32 %v2530, 0.17677669
    %v2547 = vmul.f32 %v2159, %v2436
    %v2548 = vmul.f32 %v2162, %v2438
    %v2549 = vmul.f32 %v2165, %v2440
    %v2550 = vmul.f32 %v2168, %v2442
    %v2551 = vmul.f32 %v2171, %v2444
    %v2552 = vmul.f32 %v2174, %v2446
    %v2553 = vmul.f32 %v2177, %v2448
    %v2554 = vmul.f32 %v2180, %v2450
    %v2555 = vmul.f32 %v2183, %v2420
    %v2556 = vmul.f32 %v2186, %v2422
    %v2557 = vmul.f32 %v2189, %v2424
    %v2558 = vmul.f32 %v2192, %v2426
    %v2559 = vmul.f32 %v2195, %v2428
    %v2560 = vmul.f32 %v2198, %v2430
    %v2561 = vmul.f32 %v2201, %v2432
    %v2562 = vmul.f32 %v2204, %v2434
    %v2563 = vsel %vm73, %v2547, 0.0
    %2564 = vadd.xlane.f32.xlu0 %v2563
    %v2565 = vpop.xlane.xlu0 %2564
    %v2566 = vsel %vm73, %v2548, 0.0
    %2567 = vadd.xlane.f32.xlu0 %v2566
    %v2568 = vpop.xlane.xlu0 %2567
    %v2569 = vsel %vm73, %v2549, 0.0
    %2570 = vadd.xlane.f32.xlu0 %v2569
    %v2571 = vpop.xlane.xlu0 %2570
    %v2572 = vsel %vm73, %v2550, 0.0
    %2573 = vadd.xlane.f32.xlu0 %v2572
    %v2574 = vpop.xlane.xlu0 %2573
    %v2575 = vsel %vm73, %v2551, 0.0
    %2576 = vadd.xlane.f32.xlu0 %v2575
    %v2577 = vpop.xlane.xlu0 %2576
    %v2578 = vsel %vm73, %v2552, 0.0
    %2579 = vadd.xlane.f32.xlu0 %v2578
    %v2580 = vpop.xlane.xlu0 %2579
    %v2581 = vsel %vm73, %v2553, 0.0
    %2582 = vadd.xlane.f32.xlu0 %v2581
    %v2583 = vpop.xlane.xlu0 %2582
    %v2584 = vsel %vm73, %v2554, 0.0
    %2585 = vadd.xlane.f32.xlu0 %v2584
    %v2586 = vpop.xlane.xlu0 %2585
    %v2587 = vsel %vm73, %v2555, 0.0
    %2588 = vadd.xlane.f32.xlu0 %v2587
    %v2589 = vpop.xlane.xlu0 %2588
    %v2590 = vsel %vm73, %v2556, 0.0
    %2591 = vadd.xlane.f32.xlu0 %v2590
    %v2592 = vpop.xlane.xlu0 %2591
    %v2593 = vsel %vm73, %v2557, 0.0
    %2594 = vadd.xlane.f32.xlu0 %v2593
    %v2595 = vpop.xlane.xlu0 %2594
    %v2596 = vsel %vm73, %v2558, 0.0
    %2597 = vadd.xlane.f32.xlu0 %v2596
    %v2598 = vpop.xlane.xlu0 %2597
    %v2599 = vsel %vm73, %v2559, 0.0
    %2600 = vadd.xlane.f32.xlu0 %v2599
    %v2601 = vpop.xlane.xlu0 %2600
    %v2602 = vsel %vm73, %v2560, 0.0
    %2603 = vadd.xlane.f32.xlu0 %v2602
    %v2604 = vpop.xlane.xlu0 %2603
    %v2605 = vsel %vm73, %v2561, 0.0
    %2606 = vadd.xlane.f32.xlu0 %v2605
    %v2607 = vpop.xlane.xlu0 %2606
    %v2608 = vsel %vm73, %v2562, 0.0
    %2609 = vadd.xlane.f32.xlu0 %v2608
    %v2610 = vpop.xlane.xlu0 %2609
    %v2611 = vmul.f32 %v2565, 0.17677669
    %v2612 = vmul.f32 %v2568, 0.17677669
    %v2613 = vmul.f32 %v2571, 0.17677669
    %v2614 = vmul.f32 %v2574, 0.17677669
    %v2615 = vmul.f32 %v2577, 0.17677669
    %v2616 = vmul.f32 %v2580, 0.17677669
    %v2617 = vmul.f32 %v2583, 0.17677669
    %v2618 = vmul.f32 %v2586, 0.17677669
    %v2619 = vmul.f32 %v2589, 0.17677669
    %v2620 = vmul.f32 %v2592, 0.17677669
    %v2621 = vmul.f32 %v2595, 0.17677669
    %v2622 = vmul.f32 %v2598, 0.17677669
    %v2623 = vmul.f32 %v2601, 0.17677669
    %v2624 = vmul.f32 %v2604, 0.17677669
    %v2625 = vmul.f32 %v2607, 0.17677669
    %v2626 = vmul.f32 %v2610, 0.17677669
    %v2627 = vmax.f32 %v2531, %v2611
    %v2628 = vmax.f32 %v2532, %v2612
    %v2629 = vmax.f32 %v2533, %v2613
    %v2630 = vmax.f32 %v2534, %v2614
    %v2631 = vmax.f32 %v2535, %v2615
    %v2632 = vmax.f32 %v2536, %v2616
    %v2633 = vmax.f32 %v2537, %v2617
    %v2634 = vmax.f32 %v2538, %v2618
    %v2635 = vmax.f32 %v2539, %v2619
    %v2636 = vmax.f32 %v2540, %v2620
    %v2637 = vmax.f32 %v2541, %v2621
    %v2638 = vmax.f32 %v2542, %v2622
    %v2639 = vmax.f32 %v2543, %v2623
    %v2640 = vmax.f32 %v2544, %v2624
    %v2641 = vmax.f32 %v2545, %v2625
    %v2642 = vmax.f32 %v2546, %v2626
    %v2643 = vsub.f32 %v2531, %v2627
    %v2644 = vsub.f32 %v2532, %v2628
    %v2645 = vsub.f32 %v2533, %v2629
    %v2646 = vsub.f32 %v2534, %v2630
    %v2647 = vsub.f32 %v2535, %v2631
    %v2648 = vsub.f32 %v2536, %v2632
    %v2649 = vsub.f32 %v2537, %v2633
    %v2650 = vsub.f32 %v2538, %v2634
    %v2651 = vsub.f32 %v2539, %v2635
    %v2652 = vsub.f32 %v2540, %v2636
    %v2653 = vsub.f32 %v2541, %v2637
    %v2654 = vsub.f32 %v2542, %v2638
    %v2655 = vsub.f32 %v2543, %v2639
    %v2656 = vsub.f32 %v2544, %v2640
    %v2657 = vsub.f32 %v2545, %v2641
    %v2658 = vsub.f32 %v2546, %v2642
    %v2659 = vmul.f32 %v2643, 1.442695
    %v2660 = vpow.pop %v2659
    %v2661 = vmul.f32 %v2644, 1.442695
    %v2662 = vpow.pop %v2661
    %v2663 = vmul.f32 %v2645, 1.442695
    %v2664 = vpow.pop %v2663
    %v2665 = vmul.f32 %v2646, 1.442695
    %v2666 = vpow.pop %v2665
    %v2667 = vmul.f32 %v2647, 1.442695
    %v2668 = vpow.pop %v2667
    %v2669 = vmul.f32 %v2648, 1.442695
    %v2670 = vpow.pop %v2669
    %v2671 = vmul.f32 %v2649, 1.442695
    %v2672 = vpow.pop %v2671
    %v2673 = vmul.f32 %v2650, 1.442695
    %v2674 = vpow.pop %v2673
    %v2675 = vmul.f32 %v2651, 1.442695
    %v2676 = vpow.pop %v2675
    %v2677 = vmul.f32 %v2652, 1.442695
    %v2678 = vpow.pop %v2677
    %v2679 = vmul.f32 %v2653, 1.442695
    %v2680 = vpow.pop %v2679
    %v2681 = vmul.f32 %v2654, 1.442695
    %v2682 = vpow.pop %v2681
    %v2683 = vmul.f32 %v2655, 1.442695
    %v2684 = vpow.pop %v2683
    %v2685 = vmul.f32 %v2656, 1.442695
    %v2686 = vpow.pop %v2685
    %v2687 = vmul.f32 %v2657, 1.442695
    %v2688 = vpow.pop %v2687
    %v2689 = vmul.f32 %v2658, 1.442695
    %v2690 = vpow.pop %v2689
    %v2691 = vsub.f32 %v2611, %v2627
    %v2692 = vsub.f32 %v2612, %v2628
    %v2693 = vsub.f32 %v2613, %v2629
    %v2694 = vsub.f32 %v2614, %v2630
    %v2695 = vsub.f32 %v2615, %v2631
    %v2696 = vsub.f32 %v2616, %v2632
    %v2697 = vsub.f32 %v2617, %v2633
    %v2698 = vsub.f32 %v2618, %v2634
    %v2699 = vsub.f32 %v2619, %v2635
    %v2700 = vsub.f32 %v2620, %v2636
    %v2701 = vsub.f32 %v2621, %v2637
    %v2702 = vsub.f32 %v2622, %v2638
    %v2703 = vsub.f32 %v2623, %v2639
    %v2704 = vsub.f32 %v2624, %v2640
    %v2705 = vsub.f32 %v2625, %v2641
    %v2706 = vsub.f32 %v2626, %v2642
    %v2707 = vmul.f32 %v2691, 1.442695
    %v2708 = vpow.pop %v2707
    %v2709 = vmul.f32 %v2692, 1.442695
    %v2710 = vpow.pop %v2709
    %v2711 = vmul.f32 %v2693, 1.442695
    %v2712 = vpow.pop %v2711
    %v2713 = vmul.f32 %v2694, 1.442695
    %v2714 = vpow.pop %v2713
    %v2715 = vmul.f32 %v2695, 1.442695
    %v2716 = vpow.pop %v2715
    %v2717 = vmul.f32 %v2696, 1.442695
    %v2718 = vpow.pop %v2717
    %v2719 = vmul.f32 %v2697, 1.442695
    %v2720 = vpow.pop %v2719
    %v2721 = vmul.f32 %v2698, 1.442695
    %v2722 = vpow.pop %v2721
    %v2723 = vmul.f32 %v2699, 1.442695
    %v2724 = vpow.pop %v2723
    %v2725 = vmul.f32 %v2700, 1.442695
    %v2726 = vpow.pop %v2725
    %v2727 = vmul.f32 %v2701, 1.442695
    %v2728 = vpow.pop %v2727
    %v2729 = vmul.f32 %v2702, 1.442695
    %v2730 = vpow.pop %v2729
    %v2731 = vmul.f32 %v2703, 1.442695
    %v2732 = vpow.pop %v2731
    %v2733 = vmul.f32 %v2704, 1.442695
    %v2734 = vpow.pop %v2733
    %v2735 = vmul.f32 %v2705, 1.442695
    %v2736 = vpow.pop %v2735
    %v2737 = vmul.f32 %v2706, 1.442695
    %v2738 = vpow.pop %v2737
    %v2739 = vadd.f32 %v2660, %v2708
    %v2740 = vadd.f32 %v2662, %v2710
    %v2741 = vadd.f32 %v2664, %v2712
    %v2742 = vadd.f32 %v2666, %v2714
    %v2743 = vadd.f32 %v2668, %v2716
    %v2744 = vadd.f32 %v2670, %v2718
    %v2745 = vadd.f32 %v2672, %v2720
    %v2746 = vadd.f32 %v2674, %v2722
    %v2747 = vadd.f32 %v2676, %v2724
    %v2748 = vadd.f32 %v2678, %v2726
    %v2749 = vadd.f32 %v2680, %v2728
    %v2750 = vadd.f32 %v2682, %v2730
    %v2751 = vadd.f32 %v2684, %v2732
    %v2752 = vadd.f32 %v2686, %v2734
    %v2753 = vadd.f32 %v2688, %v2736
    %v2754 = vadd.f32 %v2690, %v2738
    %v2755 = vrcp.pop %v2739
    %v2756 = vmul.f32 %v2739, %v2755
    %v2757 = vsub.f32 1.0, %v2756
    %v2758 = vmul.f32 %v2755, %v2757
    %v2759 = vadd.f32 %v2755, %v2758
    %vm2760 = vweird.f32 %v2739
    %vm2761 = vweird.f32 %v2755
    %vm2762 = vmor %vm2760, %vm2761
    %v2763 = vsel %vm2762, %v2755, %v2759
    %v2764 = vand.u32 2147483647, %v2739
    %vm2765 = vcmp.eq.f32.partialorder %v2764, 8.507059e+37
    %v2766 = vand.u32 %v2739, 2147483648
    %v2767 = vor.u32 1.1754944e-38, %v2766
    %v2768 = vsel %vm2765, %v2767, %v2763
    %v2769 = vrcp.pop %v2740
    %v2770 = vmul.f32 %v2740, %v2769
    %v2771 = vsub.f32 1.0, %v2770
    %v2772 = vmul.f32 %v2769, %v2771
    %v2773 = vadd.f32 %v2769, %v2772
    %vm2774 = vweird.f32 %v2740
    %vm2775 = vweird.f32 %v2769
    %vm2776 = vmor %vm2774, %vm2775
    %v2777 = vsel %vm2776, %v2769, %v2773
    %v2778 = vand.u32 2147483647, %v2740
    %vm2779 = vcmp.eq.f32.partialorder %v2778, 8.507059e+37
    %v2780 = vand.u32 %v2740, 2147483648
    %v2781 = vor.u32 1.1754944e-38, %v2780
    %v2782 = vsel %vm2779, %v2781, %v2777
    %v2783 = vrcp.pop %v2741
    %v2784 = vmul.f32 %v2741, %v2783
    %v2785 = vsub.f32 1.0, %v2784
    %v2786 = vmul.f32 %v2783, %v2785
    %v2787 = vadd.f32 %v2783, %v2786
    %vm2788 = vweird.f32 %v2741
    %vm2789 = vweird.f32 %v2783
    %vm2790 = vmor %vm2788, %vm2789
    %v2791 = vsel %vm2790, %v2783, %v2787
    %v2792 = vand.u32 2147483647, %v2741
    %vm2793 = vcmp.eq.f32.partialorder %v2792, 8.507059e+37
    %v2794 = vand.u32 %v2741, 2147483648
    %v2795 = vor.u32 1.1754944e-38, %v2794
    %v2796 = vsel %vm2793, %v2795, %v2791
    %v2797 = vrcp.pop %v2742
    %v2798 = vmul.f32 %v2742, %v2797
    %v2799 = vsub.f32 1.0, %v2798
    %v2800 = vmul.f32 %v2797, %v2799
    %v2801 = vadd.f32 %v2797, %v2800
    %vm2802 = vweird.f32 %v2742
    %vm2803 = vweird.f32 %v2797
    %vm2804 = vmor %vm2802, %vm2803
    %v2805 = vsel %vm2804, %v2797, %v2801
    %v2806 = vand.u32 2147483647, %v2742
    %vm2807 = vcmp.eq.f32.partialorder %v2806, 8.507059e+37
    %v2808 = vand.u32 %v2742, 2147483648
    %v2809 = vor.u32 1.1754944e-38, %v2808
    %v2810 = vsel %vm2807, %v2809, %v2805
    %v2811 = vrcp.pop %v2743
    %v2812 = vmul.f32 %v2743, %v2811
    %v2813 = vsub.f32 1.0, %v2812
    %v2814 = vmul.f32 %v2811, %v2813
    %v2815 = vadd.f32 %v2811, %v2814
    %vm2816 = vweird.f32 %v2743
    %vm2817 = vweird.f32 %v2811
    %vm2818 = vmor %vm2816, %vm2817
    %v2819 = vsel %vm2818, %v2811, %v2815
    %v2820 = vand.u32 2147483647, %v2743
    %vm2821 = vcmp.eq.f32.partialorder %v2820, 8.507059e+37
    %v2822 = vand.u32 %v2743, 2147483648
    %v2823 = vor.u32 1.1754944e-38, %v2822
    %v2824 = vsel %vm2821, %v2823, %v2819
    %v2825 = vrcp.pop %v2744
    %v2826 = vmul.f32 %v2744, %v2825
    %v2827 = vsub.f32 1.0, %v2826
    %v2828 = vmul.f32 %v2825, %v2827
    %v2829 = vadd.f32 %v2825, %v2828
    %vm2830 = vweird.f32 %v2744
    %vm2831 = vweird.f32 %v2825
    %vm2832 = vmor %vm2830, %vm2831
    %v2833 = vsel %vm2832, %v2825, %v2829
    %v2834 = vand.u32 2147483647, %v2744
    %vm2835 = vcmp.eq.f32.partialorder %v2834, 8.507059e+37
    %v2836 = vand.u32 %v2744, 2147483648
    %v2837 = vor.u32 1.1754944e-38, %v2836
    %v2838 = vsel %vm2835, %v2837, %v2833
    %v2839 = vrcp.pop %v2745
    %v2840 = vmul.f32 %v2745, %v2839
    %v2841 = vsub.f32 1.0, %v2840
    %v2842 = vmul.f32 %v2839, %v2841
    %v2843 = vadd.f32 %v2839, %v2842
    %vm2844 = vweird.f32 %v2745
    %vm2845 = vweird.f32 %v2839
    %vm2846 = vmor %vm2844, %vm2845
    %v2847 = vsel %vm2846, %v2839, %v2843
    %v2848 = vand.u32 2147483647, %v2745
    %vm2849 = vcmp.eq.f32.partialorder %v2848, 8.507059e+37
    %v2850 = vand.u32 %v2745, 2147483648
    %v2851 = vor.u32 1.1754944e-38, %v2850
    %v2852 = vsel %vm2849, %v2851, %v2847
    %v2853 = vrcp.pop %v2746
    %v2854 = vmul.f32 %v2746, %v2853
    %v2855 = vsub.f32 1.0, %v2854
    %v2856 = vmul.f32 %v2853, %v2855
    %v2857 = vadd.f32 %v2853, %v2856
    %vm2858 = vweird.f32 %v2746
    %vm2859 = vweird.f32 %v2853
    %vm2860 = vmor %vm2858, %vm2859
    %v2861 = vsel %vm2860, %v2853, %v2857
    %v2862 = vand.u32 2147483647, %v2746
    %vm2863 = vcmp.eq.f32.partialorder %v2862, 8.507059e+37
    %v2864 = vand.u32 %v2746, 2147483648
    %v2865 = vor.u32 1.1754944e-38, %v2864
    %v2866 = vsel %vm2863, %v2865, %v2861
    %v2867 = vrcp.pop %v2747
    %v2868 = vmul.f32 %v2747, %v2867
    %v2869 = vsub.f32 1.0, %v2868
    %v2870 = vmul.f32 %v2867, %v2869
    %v2871 = vadd.f32 %v2867, %v2870
    %vm2872 = vweird.f32 %v2747
    %vm2873 = vweird.f32 %v2867
    %vm2874 = vmor %vm2872, %vm2873
    %v2875 = vsel %vm2874, %v2867, %v2871
    %v2876 = vand.u32 2147483647, %v2747
    %vm2877 = vcmp.eq.f32.partialorder %v2876, 8.507059e+37
    %v2878 = vand.u32 %v2747, 2147483648
    %v2879 = vor.u32 1.1754944e-38, %v2878
    %v2880 = vsel %vm2877, %v2879, %v2875
    %v2881 = vrcp.pop %v2748
    %v2882 = vmul.f32 %v2748, %v2881
    %v2883 = vsub.f32 1.0, %v2882
    %v2884 = vmul.f32 %v2881, %v2883
    %v2885 = vadd.f32 %v2881, %v2884
    %vm2886 = vweird.f32 %v2748
    %vm2887 = vweird.f32 %v2881
    %vm2888 = vmor %vm2886, %vm2887
    %v2889 = vsel %vm2888, %v2881, %v2885
    %v2890 = vand.u32 2147483647, %v2748
    %vm2891 = vcmp.eq.f32.partialorder %v2890, 8.507059e+37
    %v2892 = vand.u32 %v2748, 2147483648
    %v2893 = vor.u32 1.1754944e-38, %v2892
    %v2894 = vsel %vm2891, %v2893, %v2889
    %v2895 = vrcp.pop %v2749
    %v2896 = vmul.f32 %v2749, %v2895
    %v2897 = vsub.f32 1.0, %v2896
    %v2898 = vmul.f32 %v2895, %v2897
    %v2899 = vadd.f32 %v2895, %v2898
    %vm2900 = vweird.f32 %v2749
    %vm2901 = vweird.f32 %v2895
    %vm2902 = vmor %vm2900, %vm2901
    %v2903 = vsel %vm2902, %v2895, %v2899
    %v2904 = vand.u32 2147483647, %v2749
    %vm2905 = vcmp.eq.f32.partialorder %v2904, 8.507059e+37
    %v2906 = vand.u32 %v2749, 2147483648
    %v2907 = vor.u32 1.1754944e-38, %v2906
    %v2908 = vsel %vm2905, %v2907, %v2903
    %v2909 = vrcp.pop %v2750
    %v2910 = vmul.f32 %v2750, %v2909
    %v2911 = vsub.f32 1.0, %v2910
    %v2912 = vmul.f32 %v2909, %v2911
    %v2913 = vadd.f32 %v2909, %v2912
    %vm2914 = vweird.f32 %v2750
    %vm2915 = vweird.f32 %v2909
    %vm2916 = vmor %vm2914, %vm2915
    %v2917 = vsel %vm2916, %v2909, %v2913
    %v2918 = vand.u32 2147483647, %v2750
    %vm2919 = vcmp.eq.f32.partialorder %v2918, 8.507059e+37
    %v2920 = vand.u32 %v2750, 2147483648
    %v2921 = vor.u32 1.1754944e-38, %v2920
    %v2922 = vsel %vm2919, %v2921, %v2917
    %v2923 = vrcp.pop %v2751
    %v2924 = vmul.f32 %v2751, %v2923
    %v2925 = vsub.f32 1.0, %v2924
    %v2926 = vmul.f32 %v2923, %v2925
    %v2927 = vadd.f32 %v2923, %v2926
    %vm2928 = vweird.f32 %v2751
    %vm2929 = vweird.f32 %v2923
    %vm2930 = vmor %vm2928, %vm2929
    %v2931 = vsel %vm2930, %v2923, %v2927
    %v2932 = vand.u32 2147483647, %v2751
    %vm2933 = vcmp.eq.f32.partialorder %v2932, 8.507059e+37
    %v2934 = vand.u32 %v2751, 2147483648
    %v2935 = vor.u32 1.1754944e-38, %v2934
    %v2936 = vsel %vm2933, %v2935, %v2931
    %v2937 = vrcp.pop %v2752
    %v2938 = vmul.f32 %v2752, %v2937
    %v2939 = vsub.f32 1.0, %v2938
    %v2940 = vmul.f32 %v2937, %v2939
    %v2941 = vadd.f32 %v2937, %v2940
    %vm2942 = vweird.f32 %v2752
    %vm2943 = vweird.f32 %v2937
    %vm2944 = vmor %vm2942, %vm2943
    %v2945 = vsel %vm2944, %v2937, %v2941
    %v2946 = vand.u32 2147483647, %v2752
    %vm2947 = vcmp.eq.f32.partialorder %v2946, 8.507059e+37
    %v2948 = vand.u32 %v2752, 2147483648
    %v2949 = vor.u32 1.1754944e-38, %v2948
    %v2950 = vsel %vm2947, %v2949, %v2945
    %v2951 = vrcp.pop %v2753
    %v2952 = vmul.f32 %v2753, %v2951
    %v2953 = vsub.f32 1.0, %v2952
    %v2954 = vmul.f32 %v2951, %v2953
    %v2955 = vadd.f32 %v2951, %v2954
    %vm2956 = vweird.f32 %v2753
    %vm2957 = vweird.f32 %v2951
    %vm2958 = vmor %vm2956, %vm2957
    %v2959 = vsel %vm2958, %v2951, %v2955
    %v2960 = vand.u32 2147483647, %v2753
    %vm2961 = vcmp.eq.f32.partialorder %v2960, 8.507059e+37
    %v2962 = vand.u32 %v2753, 2147483648
    %v2963 = vor.u32 1.1754944e-38, %v2962
    %v2964 = vsel %vm2961, %v2963, %v2959
    %v2965 = vrcp.pop %v2754
    %v2966 = vmul.f32 %v2754, %v2965
    %v2967 = vsub.f32 1.0, %v2966
    %v2968 = vmul.f32 %v2965, %v2967
    %v2969 = vadd.f32 %v2965, %v2968
    %vm2970 = vweird.f32 %v2754
    %vm2971 = vweird.f32 %v2965
    %vm2972 = vmor %vm2970, %vm2971
    %v2973 = vsel %vm2972, %v2965, %v2969
    %v2974 = vand.u32 2147483647, %v2754
    %vm2975 = vcmp.eq.f32.partialorder %v2974, 8.507059e+37
    %v2976 = vand.u32 %v2754, 2147483648
    %v2977 = vor.u32 1.1754944e-38, %v2976
    %v2978 = vsel %vm2975, %v2977, %v2973
    %v2979 = vmul.f32 %v2660, %v2768
    %v2980 = vmul.f32 %v2662, %v2782
    %v2981 = vmul.f32 %v2664, %v2796
    %v2982 = vmul.f32 %v2666, %v2810
    %v2983 = vmul.f32 %v2668, %v2824
    %v2984 = vmul.f32 %v2670, %v2838
    %v2985 = vmul.f32 %v2672, %v2852
    %v2986 = vmul.f32 %v2674, %v2866
    %v2987 = vmul.f32 %v2676, %v2880
    %v2988 = vmul.f32 %v2678, %v2894
    %v2989 = vmul.f32 %v2680, %v2908
    %v2990 = vmul.f32 %v2682, %v2922
    %v2991 = vmul.f32 %v2684, %v2936
    %v2992 = vmul.f32 %v2686, %v2950
    %v2993 = vmul.f32 %v2688, %v2964
    %v2994 = vmul.f32 %v2690, %v2978
    %v2995 = vmul.f32 %v2979, %v2159
    %v2996 = vmul.f32 %v2980, %v2162
    %v2997 = vmul.f32 %v2981, %v2165
    %v2998 = vmul.f32 %v2982, %v2168
    %v2999 = vmul.f32 %v2983, %v2171
    %v3000 = vmul.f32 %v2984, %v2174
    %v3001 = vmul.f32 %v2985, %v2177
    %v3002 = vmul.f32 %v2986, %v2180
    %v3003 = vmul.f32 %v2987, %v2183
    %v3004 = vmul.f32 %v2988, %v2186
    %v3005 = vmul.f32 %v2989, %v2189
    %v3006 = vmul.f32 %v2990, %v2192
    %v3007 = vmul.f32 %v2991, %v2195
    %v3008 = vmul.f32 %v2992, %v2198
    %v3009 = vmul.f32 %v2993, %v2201
    %v3010 = vmul.f32 %v2994, %v2204
    %v3011 = vmul.f32 %v2708, %v2768
    %v3012 = vmul.f32 %v2710, %v2782
    %v3013 = vmul.f32 %v2712, %v2796
    %v3014 = vmul.f32 %v2714, %v2810
    %v3015 = vmul.f32 %v2716, %v2824
    %v3016 = vmul.f32 %v2718, %v2838
    %v3017 = vmul.f32 %v2720, %v2852
    %v3018 = vmul.f32 %v2722, %v2866
    %v3019 = vmul.f32 %v2724, %v2880
    %v3020 = vmul.f32 %v2726, %v2894
    %v3021 = vmul.f32 %v2728, %v2908
    %v3022 = vmul.f32 %v2730, %v2922
    %v3023 = vmul.f32 %v2732, %v2936
    %v3024 = vmul.f32 %v2734, %v2950
    %v3025 = vmul.f32 %v2736, %v2964
    %v3026 = vmul.f32 %v2738, %v2978
    %v3027 = vmul.f32 %v3011, %v2183
    %v3028 = vmul.f32 %v3012, %v2186
    %v3029 = vmul.f32 %v3013, %v2189
    %v3030 = vmul.f32 %v3014, %v2192
    %v3031 = vmul.f32 %v3015, %v2195
    %v3032 = vmul.f32 %v3016, %v2198
    %v3033 = vmul.f32 %v3017, %v2201
    %v3034 = vmul.f32 %v3018, %v2204
    %v3035 = vmul.f32 %v3019, %v2159
    %v3036 = vmul.f32 %v3020, %v2162
    %v3037 = vmul.f32 %v3021, %v2165
    %v3038 = vmul.f32 %v3022, %v2168
    %v3039 = vmul.f32 %v3023, %v2171
    %v3040 = vmul.f32 %v3024, %v2174
    %v3041 = vmul.f32 %v3025, %v2177
    %v3042 = vmul.f32 %v3026, %v2180
    %v3043 = vadd.f32 %v2995, %v3027
    %v3044 = vadd.f32 %v2996, %v3028
    %v3045 = vadd.f32 %v2997, %v3029
    %v3046 = vadd.f32 %v2998, %v3030
    %v3047 = vadd.f32 %v2999, %v3031
    %v3048 = vadd.f32 %v3000, %v3032
    %v3049 = vadd.f32 %v3001, %v3033
    %v3050 = vadd.f32 %v3002, %v3034
    %v3051 = vadd.f32 %v3003, %v3035
    %v3052 = vadd.f32 %v3004, %v3036
    %v3053 = vadd.f32 %v3005, %v3037
    %v3054 = vadd.f32 %v3006, %v3038
    %v3055 = vadd.f32 %v3007, %v3039
    %v3056 = vadd.f32 %v3008, %v3040
    %v3057 = vadd.f32 %v3009, %v3041
    %v3058 = vadd.f32 %v3010, %v3042
    %3067 = vrot.lane.b32.xlu0 %v3043, 64
    %v3068 = vpop.permute.xlu0 %3067
    %3069 = vrot.lane.b32.xlu0 %v3044, 64
    %v3070 = vpop.permute.xlu0 %3069
    %3071 = vrot.lane.b32.xlu0 %v3045, 64
    %v3072 = vpop.permute.xlu0 %3071
    %3073 = vrot.lane.b32.xlu0 %v3046, 64
    %v3074 = vpop.permute.xlu0 %3073
    %3075 = vrot.lane.b32.xlu0 %v3047, 64
    %v3076 = vpop.permute.xlu0 %3075
    %3077 = vrot.lane.b32.xlu0 %v3048, 64
    %v3078 = vpop.permute.xlu0 %3077
    %3079 = vrot.lane.b32.xlu0 %v3049, 64
    %v3080 = vpop.permute.xlu0 %3079
    %3081 = vrot.lane.b32.xlu0 %v3050, 64
    %v3082 = vpop.permute.xlu0 %3081
    %v3091 = vsel %vm73, %v3068, 0.0
    %v3092 = vsel %vm73, %v3070, 0.0
    %v3093 = vadd.f32 %v3091, %v3092
    %v3094 = vsel %vm73, %v3072, 0.0
    %v3095 = vadd.f32 %v3093, %v3094
    %v3096 = vsel %vm73, %v3074, 0.0
    %v3097 = vadd.f32 %v3095, %v3096
    %v3098 = vsel %vm73, %v3076, 0.0
    %v3099 = vadd.f32 %v3097, %v3098
    %v3100 = vsel %vm73, %v3078, 0.0
    %v3101 = vadd.f32 %v3099, %v3100
    %v3102 = vsel %vm73, %v3080, 0.0
    %v3103 = vadd.f32 %v3101, %v3102
    %v3104 = vsel %vm73, %v3082, 0.0
    %v3105 = vadd.f32 %v3103, %v3104
    %3106 = vadd.xlane.f32.xlu0 %v3105
    %v3107 = vpop.xlane.xlu0 %3106
    %v3108 = vrot.slane %v3107, 4
    %v3109 = vadd.f32 %v3107, %v3108
    %v3110 = vrot.slane %v3109, 2
    %v3111 = vadd.f32 %v3109, %v3110
    %v3112 = vrot.slane %v3111, 1
    %v3113 = vadd.f32 %v3111, %v3112
    %s3114 = vtos %v3113
    %s3115 = smul.f32 %s3114, 0.00048828125
    %v3116 = vmul.f32 %v3043, %v3043
    %v3117 = vmul.f32 %v3044, %v3044
    %v3118 = vmul.f32 %v3045, %v3045
    %v3119 = vmul.f32 %v3046, %v3046
    %v3120 = vmul.f32 %v3047, %v3047
    %v3121 = vmul.f32 %v3048, %v3048
    %v3122 = vmul.f32 %v3049, %v3049
    %v3123 = vmul.f32 %v3050, %v3050
    %3132 = vrot.lane.b32.xlu0 %v3116, 64
    %v3133 = vpop.permute.xlu0 %3132
    %3134 = vrot.lane.b32.xlu0 %v3117, 64
    %v3135 = vpop.permute.xlu0 %3134
    %3136 = vrot.lane.b32.xlu0 %v3118, 64
    %v3137 = vpop.permute.xlu0 %3136
    %3138 = vrot.lane.b32.xlu0 %v3119, 64
    %v3139 = vpop.permute.xlu0 %3138
    %3140 = vrot.lane.b32.xlu0 %v3120, 64
    %v3141 = vpop.permute.xlu0 %3140
    %3142 = vrot.lane.b32.xlu0 %v3121, 64
    %v3143 = vpop.permute.xlu0 %3142
    %3144 = vrot.lane.b32.xlu0 %v3122, 64
    %v3145 = vpop.permute.xlu0 %3144
    %3146 = vrot.lane.b32.xlu0 %v3123, 64
    %v3147 = vpop.permute.xlu0 %3146
    %v3156 = vsel %vm73, %v3133, 0.0
    %v3157 = vsel %vm73, %v3135, 0.0
    %v3158 = vadd.f32 %v3156, %v3157
    %v3159 = vsel %vm73, %v3137, 0.0
    %v3160 = vadd.f32 %v3158, %v3159
    %v3161 = vsel %vm73, %v3139, 0.0
    %v3162 = vadd.f32 %v3160, %v3161
    %v3163 = vsel %vm73, %v3141, 0.0
    %v3164 = vadd.f32 %v3162, %v3163
    %v3165 = vsel %vm73, %v3143, 0.0
    %v3166 = vadd.f32 %v3164, %v3165
    %v3167 = vsel %vm73, %v3145, 0.0
    %v3168 = vadd.f32 %v3166, %v3167
    %v3169 = vsel %vm73, %v3147, 0.0
    %v3170 = vadd.f32 %v3168, %v3169
    %3171 = vadd.xlane.f32.xlu0 %v3170
    %v3172 = vpop.xlane.xlu0 %3171
    %v3173 = vrot.slane %v3172, 4
    %v3174 = vadd.f32 %v3172, %v3173
    %v3175 = vrot.slane %v3174, 2
    %v3176 = vadd.f32 %v3174, %v3175
    %v3177 = vrot.slane %v3176, 1
    %v3178 = vadd.f32 %v3176, %v3177
    %s3179 = vtos %v3178
    %s3180 = smul.f32 %s3179, 0.00048828125
    %s3181 = smul.f32 %s3115, %s3115
    %s3182 = ssub.f32 %s3180, %s3181
    %v3183 = vstv %s3115
    %v3184 = vsub.f32 %v3043, %v3183
    %v3185 = vsub.f32 %v3044, %v3183
    %v3186 = vsub.f32 %v3045, %v3183
    %v3187 = vsub.f32 %v3046, %v3183
    %v3188 = vsub.f32 %v3047, %v3183
    %v3189 = vsub.f32 %v3048, %v3183
    %v3190 = vsub.f32 %v3049, %v3183
    %v3191 = vsub.f32 %v3050, %v3183
    %s3192 = sadd.f32 %s3182, 1e-05
    %v3193 = vstv %s3192
    %v3194 = vrsqrt.pop %v3193
    %v3195 = vmul.f32 %v3194, %v3193
    %v3196 = vmul.f32 %v3195, %v3194
    %v3197 = vmul.f32 0.5, %v3196
    %v3198 = vsub.f32 1.5, %v3197
    %v3199 = vmul.f32 %v3194, %v3198
    %vm3200 = vweird.f32 %v3193
    %vm3201 = vweird.f32 %v3194
    %vm3202 = vmor %vm3200, %vm3201
    %v3203 = vsel %vm3202, %v3194, %v3199
    %s3204 = vtos %v3203
    %v3205 = vstv %s3204
    %v3206 = vmul.f32 %v3184, %v3205
    %v3207 = vmul.f32 %v3185, %v3205
    %v3208 = vmul.f32 %v3186, %v3205
    %v3209 = vmul.f32 %v3187, %v3205
    %v3210 = vmul.f32 %v3188, %v3205
    %v3211 = vmul.f32 %v3189, %v3205
    %v3212 = vmul.f32 %v3190, %v3205
    %v3213 = vmul.f32 %v3191, %v3205
    %v3215 = vperm.slane %v2401, 0
    %3216 = vrot.lane.b32.xlu0 %v3215, 64
    %v3217 = vpop.permute.xlu0 %3216
    %v3219 = vmul.f32 %v3206, %v3217
    %v3220 = vmul.f32 %v3207, %v3217
    %v3221 = vmul.f32 %v3208, %v3217
    %v3222 = vmul.f32 %v3209, %v3217
    %v3223 = vmul.f32 %v3210, %v3217
    %v3224 = vmul.f32 %v3211, %v3217
    %v3225 = vmul.f32 %v3212, %v3217
    %v3226 = vmul.f32 %v3213, %v3217
    %v3228 = vperm.slane %v2402, 0
    %3229 = vrot.lane.b32.xlu0 %v3228, 64
    %v3230 = vpop.permute.xlu0 %3229
    %v3232 = vadd.f32 %v3219, %v3230
    %v3233 = vadd.f32 %v3220, %v3230
    %v3234 = vadd.f32 %v3221, %v3230
    %v3235 = vadd.f32 %v3222, %v3230
    %v3236 = vadd.f32 %v3223, %v3230
    %v3237 = vadd.f32 %v3224, %v3230
    %v3238 = vadd.f32 %v3225, %v3230
    %v3239 = vadd.f32 %v3226, %v3230
    %v3240 = vmax.f32 %v3232, 0.0
    %v3241 = vmax.f32 %v3233, 0.0
    %v3242 = vmax.f32 %v3234, 0.0
    %v3243 = vmax.f32 %v3235, 0.0
    %v3244 = vmax.f32 %v3236, 0.0
    %v3245 = vmax.f32 %v3237, 0.0
    %v3246 = vmax.f32 %v3238, 0.0
    %v3247 = vmax.f32 %v3239, 0.0
    %3256 = vrot.lane.b32.xlu0 %v3240, 64
    %v3257 = vpop.permute.xlu0 %3256
    %3258 = vrot.lane.b32.xlu0 %v3241, 64
    %v3259 = vpop.permute.xlu0 %3258
    %3260 = vrot.lane.b32.xlu0 %v3242, 64
    %v3261 = vpop.permute.xlu0 %3260
    %3262 = vrot.lane.b32.xlu0 %v3243, 64
    %v3263 = vpop.permute.xlu0 %3262
    %3264 = vrot.lane.b32.xlu0 %v3244, 64
    %v3265 = vpop.permute.xlu0 %3264
    %3266 = vrot.lane.b32.xlu0 %v3245, 64
    %v3267 = vpop.permute.xlu0 %3266
    %3268 = vrot.lane.b32.xlu0 %v3246, 64
    %v3269 = vpop.permute.xlu0 %3268
    %3270 = vrot.lane.b32.xlu0 %v3247, 64
    %v3271 = vpop.permute.xlu0 %3270
    %3280 = vst.msk [vmem:[%s131 + $0x1] sm:$0xff] %vm73, %v3257
    %3281 = vst.msk [vmem:[%s131 + $0x11] sm:$0xff] %vm73, %v3259
    %3282 = vst.msk [vmem:[%s131 + $0x21] sm:$0xff] %vm73, %v3261
    %3283 = vst.msk [vmem:[%s131 + $0x31] sm:$0xff] %vm73, %v3263
    %3284 = vst.msk [vmem:[%s131 + $0x41] sm:$0xff] %vm73, %v3265
    %3285 = vst.msk [vmem:[%s131 + $0x51] sm:$0xff] %vm73, %v3267
    %3286 = vst.msk [vmem:[%s131 + $0x61] sm:$0xff] %vm73, %v3269
    %3287 = vst.msk [vmem:[%s131 + $0x71] sm:$0xff] %vm73, %v3271
    %3296 = vrot.lane.b32.xlu0 %v3051, 64
    %v3297 = vpop.permute.xlu0 %3296
    %3298 = vrot.lane.b32.xlu0 %v3052, 64
    %v3299 = vpop.permute.xlu0 %3298
    %3300 = vrot.lane.b32.xlu0 %v3053, 64
    %v3301 = vpop.permute.xlu0 %3300
    %3302 = vrot.lane.b32.xlu0 %v3054, 64
    %v3303 = vpop.permute.xlu0 %3302
    %3304 = vrot.lane.b32.xlu0 %v3055, 64
    %v3305 = vpop.permute.xlu0 %3304
    %3306 = vrot.lane.b32.xlu0 %v3056, 64
    %v3307 = vpop.permute.xlu0 %3306
    %3308 = vrot.lane.b32.xlu0 %v3057, 64
    %v3309 = vpop.permute.xlu0 %3308
    %3310 = vrot.lane.b32.xlu0 %v3058, 64
    %v3311 = vpop.permute.xlu0 %3310
    %v3320 = vsel %vm73, %v3297, 0.0
    %v3321 = vsel %vm73, %v3299, 0.0
    %v3322 = vadd.f32 %v3320, %v3321
    %v3323 = vsel %vm73, %v3301, 0.0
    %v3324 = vadd.f32 %v3322, %v3323
    %v3325 = vsel %vm73, %v3303, 0.0
    %v3326 = vadd.f32 %v3324, %v3325
    %v3327 = vsel %vm73, %v3305, 0.0
    %v3328 = vadd.f32 %v3326, %v3327
    %v3329 = vsel %vm73, %v3307, 0.0
    %v3330 = vadd.f32 %v3328, %v3329
    %v3331 = vsel %vm73, %v3309, 0.0
    %v3332 = vadd.f32 %v3330, %v3331
    %v3333 = vsel %vm73, %v3311, 0.0
    %v3334 = vadd.f32 %v3332, %v3333
    %3335 = vadd.xlane.f32.xlu0 %v3334
    %v3336 = vpop.xlane.xlu0 %3335
    %v3337 = vrot.slane %v3336, 4
    %v3338 = vadd.f32 %v3336, %v3337
    %v3339 = vrot.slane %v3338, 2
    %v3340 = vadd.f32 %v3338, %v3339
    %v3341 = vrot.slane %v3340, 1
    %v3342 = vadd.f32 %v3340, %v3341
    %s3343 = vtos %v3342
    %s3344 = smul.f32 %s3343, 0.00048828125
    %v3345 = vmul.f32 %v3051, %v3051
    %v3346 = vmul.f32 %v3052, %v3052
    %v3347 = vmul.f32 %v3053, %v3053
    %v3348 = vmul.f32 %v3054, %v3054
    %v3349 = vmul.f32 %v3055, %v3055
    %v3350 = vmul.f32 %v3056, %v3056
    %v3351 = vmul.f32 %v3057, %v3057
    %v3352 = vmul.f32 %v3058, %v3058
    %3361 = vrot.lane.b32.xlu0 %v3345, 64
    %v3362 = vpop.permute.xlu0 %3361
    %3363 = vrot.lane.b32.xlu0 %v3346, 64
    %v3364 = vpop.permute.xlu0 %3363
    %3365 = vrot.lane.b32.xlu0 %v3347, 64
    %v3366 = vpop.permute.xlu0 %3365
    %3367 = vrot.lane.b32.xlu0 %v3348, 64
    %v3368 = vpop.permute.xlu0 %3367
    %3369 = vrot.lane.b32.xlu0 %v3349, 64
    %v3370 = vpop.permute.xlu0 %3369
    %3371 = vrot.lane.b32.xlu0 %v3350, 64
    %v3372 = vpop.permute.xlu0 %3371
    %3373 = vrot.lane.b32.xlu0 %v3351, 64
    %v3374 = vpop.permute.xlu0 %3373
    %3375 = vrot.lane.b32.xlu0 %v3352, 64
    %v3376 = vpop.permute.xlu0 %3375
    %v3385 = vsel %vm73, %v3362, 0.0
    %v3386 = vsel %vm73, %v3364, 0.0
    %v3387 = vadd.f32 %v3385, %v3386
    %v3388 = vsel %vm73, %v3366, 0.0
    %v3389 = vadd.f32 %v3387, %v3388
    %v3390 = vsel %vm73, %v3368, 0.0
    %v3391 = vadd.f32 %v3389, %v3390
    %v3392 = vsel %vm73, %v3370, 0.0
    %v3393 = vadd.f32 %v3391, %v3392
    %v3394 = vsel %vm73, %v3372, 0.0
    %v3395 = vadd.f32 %v3393, %v3394
    %v3396 = vsel %vm73, %v3374, 0.0
    %v3397 = vadd.f32 %v3395, %v3396
    %v3398 = vsel %vm73, %v3376, 0.0
    %v3399 = vadd.f32 %v3397, %v3398
    %3400 = vadd.xlane.f32.xlu0 %v3399
    %v3401 = vpop.xlane.xlu0 %3400
    %v3402 = vrot.slane %v3401, 4
    %v3403 = vadd.f32 %v3401, %v3402
    %v3404 = vrot.slane %v3403, 2
    %v3405 = vadd.f32 %v3403, %v3404
    %v3406 = vrot.slane %v3405, 1
    %v3407 = vadd.f32 %v3405, %v3406
    %s3408 = vtos %v3407
    %s3409 = smul.f32 %s3408, 0.00048828125
    %s3410 = smul.f32 %s3344, %s3344
    %s3411 = ssub.f32 %s3409, %s3410
    %v3412 = vstv %s3344
    %v3413 = vsub.f32 %v3051, %v3412
    %v3414 = vsub.f32 %v3052, %v3412
    %v3415 = vsub.f32 %v3053, %v3412
    %v3416 = vsub.f32 %v3054, %v3412
    %v3417 = vsub.f32 %v3055, %v3412
    %v3418 = vsub.f32 %v3056, %v3412
    %v3419 = vsub.f32 %v3057, %v3412
    %v3420 = vsub.f32 %v3058, %v3412
    %s3421 = sadd.f32 %s3411, 1e-05
    %v3422 = vstv %s3421
    %v3423 = vrsqrt.pop %v3422
    %v3424 = vmul.f32 %v3423, %v3422
    %v3425 = vmul.f32 %v3424, %v3423
    %v3426 = vmul.f32 0.5, %v3425
    %v3427 = vsub.f32 1.5, %v3426
    %v3428 = vmul.f32 %v3423, %v3427
    %vm3429 = vweird.f32 %v3422
    %vm3430 = vweird.f32 %v3423
    %vm3431 = vmor %vm3429, %vm3430
    %v3432 = vsel %vm3431, %v3423, %v3428
    %s3433 = vtos %v3432
    %v3434 = vstv %s3433
    %v3435 = vmul.f32 %v3413, %v3434
    %v3436 = vmul.f32 %v3414, %v3434
    %v3437 = vmul.f32 %v3415, %v3434
    %v3438 = vmul.f32 %v3416, %v3434
    %v3439 = vmul.f32 %v3417, %v3434
    %v3440 = vmul.f32 %v3418, %v3434
    %v3441 = vmul.f32 %v3419, %v3434
    %v3442 = vmul.f32 %v3420, %v3434
    %v3443 = vmul.f32 %v3435, %v3217
    %v3444 = vmul.f32 %v3436, %v3217
    %v3445 = vmul.f32 %v3437, %v3217
    %v3446 = vmul.f32 %v3438, %v3217
    %v3447 = vmul.f32 %v3439, %v3217
    %v3448 = vmul.f32 %v3440, %v3217
    %v3449 = vmul.f32 %v3441, %v3217
    %v3450 = vmul.f32 %v3442, %v3217
    %v3451 = vadd.f32 %v3443, %v3230
    %v3452 = vadd.f32 %v3444, %v3230
    %v3453 = vadd.f32 %v3445, %v3230
    %v3454 = vadd.f32 %v3446, %v3230
    %v3455 = vadd.f32 %v3447, %v3230
    %v3456 = vadd.f32 %v3448, %v3230
    %v3457 = vadd.f32 %v3449, %v3230
    %v3458 = vadd.f32 %v3450, %v3230
    %v3459 = vmax.f32 %v3451, 0.0
    %v3460 = vmax.f32 %v3452, 0.0
    %v3461 = vmax.f32 %v3453, 0.0
    %v3462 = vmax.f32 %v3454, 0.0
    %v3463 = vmax.f32 %v3455, 0.0
    %v3464 = vmax.f32 %v3456, 0.0
    %v3465 = vmax.f32 %v3457, 0.0
    %v3466 = vmax.f32 %v3458, 0.0
    %3475 = vrot.lane.b32.xlu0 %v3459, 64
    %v3476 = vpop.permute.xlu0 %3475
    %3477 = vrot.lane.b32.xlu0 %v3460, 64
    %v3478 = vpop.permute.xlu0 %3477
    %3479 = vrot.lane.b32.xlu0 %v3461, 64
    %v3480 = vpop.permute.xlu0 %3479
    %3481 = vrot.lane.b32.xlu0 %v3462, 64
    %v3482 = vpop.permute.xlu0 %3481
    %3483 = vrot.lane.b32.xlu0 %v3463, 64
    %v3484 = vpop.permute.xlu0 %3483
    %3485 = vrot.lane.b32.xlu0 %v3464, 64
    %v3486 = vpop.permute.xlu0 %3485
    %3487 = vrot.lane.b32.xlu0 %v3465, 64
    %v3488 = vpop.permute.xlu0 %3487
    %3489 = vrot.lane.b32.xlu0 %v3466, 64
    %v3490 = vpop.permute.xlu0 %3489
    %s3499 = scalar_lea.vmem [#allocation2], 176
    %3500 = vst.msk [vmem:[%s3499 + $0x1] sm:$0xff] %vm73, %v3476
    %3501 = vst.msk [vmem:[%s3499 + $0x11] sm:$0xff] %vm73, %v3478
    %3502 = vst.msk [vmem:[%s3499 + $0x21] sm:$0xff] %vm73, %v3480
    %3503 = vst.msk [vmem:[%s3499 + $0x31] sm:$0xff] %vm73, %v3482
    %3504 = vst.msk [vmem:[%s3499 + $0x41] sm:$0xff] %vm73, %v3484
    %3505 = vst.msk [vmem:[%s3499 + $0x51] sm:$0xff] %vm73, %v3486
    %3506 = vst.msk [vmem:[%s3499 + $0x61] sm:$0xff] %vm73, %v3488
    %3507 = vst.msk [vmem:[%s3499 + $0x71] sm:$0xff] %vm73, %v3490
    %v3508 = vld [vmem:[#allocation2] sm:$0xff]
    %v3509 = vld [vmem:[#allocation2 + $0x8] sm:$0x3]
    %v3510 = vld [vmem:[#allocation2 + $0x10] sm:$0xff]
    %v3511 = vld [vmem:[#allocation2 + $0x18] sm:$0x3]
    %v3512 = vld [vmem:[#allocation2 + $0x20] sm:$0xff]
    %v3513 = vld [vmem:[#allocation2 + $0x28] sm:$0x3]
    %v3514 = vld [vmem:[#allocation2 + $0x30] sm:$0xff]
    %v3515 = vld [vmem:[#allocation2 + $0x38] sm:$0x3]
    %v3516 = vld [vmem:[#allocation2 + $0x40] sm:$0xff]
    %v3517 = vld [vmem:[#allocation2 + $0x48] sm:$0x3]
    %v3518 = vld [vmem:[#allocation2 + $0x50] sm:$0xff]
    %v3519 = vld [vmem:[#allocation2 + $0x58] sm:$0x3]
    %v3520 = vld [vmem:[#allocation2 + $0x60] sm:$0xff]
    %v3521 = vld [vmem:[#allocation2 + $0x68] sm:$0x3]
    %v3522 = vld [vmem:[#allocation2 + $0x70] sm:$0xff]
    %v3523 = vld [vmem:[#allocation2 + $0x78] sm:$0x3]
    %v3524 = vld [vmem:[#allocation2 + $0x80] sm:$0xff]
    %v3525 = vld [vmem:[#allocation2 + $0x88] sm:$0x3]
    %v3526 = vld [vmem:[#allocation2 + $0x90] sm:$0xff]
    %v3527 = vld [vmem:[#allocation2 + $0x98] sm:$0x3]
    %v3528 = vld [vmem:[#allocation2 + $0xa0] sm:$0xff]
    %v3529 = vld [vmem:[#allocation2 + $0xa8] sm:$0x3]
    %v3530 = vld [vmem:[#allocation2 + $0xb0] sm:$0xff]
    %v3531 = vld [vmem:[#allocation2 + $0xb8] sm:$0x3]
    %v3532 = vld [vmem:[#allocation2 + $0xc0] sm:$0xff]
    %v3533 = vld [vmem:[#allocation2 + $0xc8] sm:$0x3]
    %v3534 = vld [vmem:[#allocation2 + $0xd0] sm:$0xff]
    %v3535 = vld [vmem:[#allocation2 + $0xd8] sm:$0x3]
    %v3536 = vld [vmem:[#allocation2 + $0xe0] sm:$0xff]
    %v3537 = vld [vmem:[#allocation2 + $0xe8] sm:$0x3]
    %v3538 = vld [vmem:[#allocation2 + $0xf0] sm:$0xff]
    %v3539 = vld [vmem:[#allocation2 + $0xf8] sm:$0x3]
    %v3540 = vld [vmem:[#allocation2 + $0x100] sm:$0xff]
    %v3541 = vld [vmem:[#allocation2 + $0x108] sm:$0x3]
    %v3542 = vld [vmem:[#allocation2 + $0x110] sm:$0xff]
    %v3543 = vld [vmem:[#allocation2 + $0x118] sm:$0x3]
    %v3544 = vld [vmem:[#allocation2 + $0x120] sm:$0xff]
    %v3545 = vld [vmem:[#allocation2 + $0x128] sm:$0x3]
    %v3546 = vld [vmem:[#allocation2 + $0x130] sm:$0xff]
    %v3547 = vld [vmem:[#allocation2 + $0x138] sm:$0x3]
    %3548 = vst.msk [vmem:[#allocation3] sm:$0xff] %vm73, %v3508
    %3549 = vst.msk [vmem:[#allocation3 + $0x18] sm:$0xff] %vm73, %v3510
    %3550 = vst.msk [vmem:[#allocation3 + $0x30] sm:$0xff] %vm73, %v3512
    %3551 = vst.msk [vmem:[#allocation3 + $0x48] sm:$0xff] %vm73, %v3514
    %3552 = vst.msk [vmem:[#allocation3 + $0x60] sm:$0xff] %vm73, %v3516
    %3553 = vst.msk [vmem:[#allocation3 + $0x78] sm:$0xff] %vm73, %v3518
    %3554 = vst.msk [vmem:[#allocation3 + $0x90] sm:$0xff] %vm73, %v3520
    %3555 = vst.msk [vmem:[#allocation3 + $0xa8] sm:$0xff] %vm73, %v3522
    %3556 = vst.msk [vmem:[#allocation3 + $0xc0] sm:$0xff] %vm73, %v3528
    %3557 = vst.msk [vmem:[#allocation3 + $0xd8] sm:$0xff] %vm73, %v3530
    %3558 = vst.msk [vmem:[#allocation3 + $0xf0] sm:$0xff] %vm73, %v3532
    %3559 = vst.msk [vmem:[#allocation3 + $0x108] sm:$0xff] %vm73, %v3534
    %3560 = vst.msk [vmem:[#allocation3 + $0x120] sm:$0xff] %vm73, %v3536
    %3561 = vst.msk [vmem:[#allocation3 + $0x138] sm:$0xff] %vm73, %v3538
    %3562 = vst.msk [vmem:[#allocation3 + $0x150] sm:$0xff] %vm73, %v3540
    %3563 = vst.msk [vmem:[#allocation3 + $0x168] sm:$0xff] %vm73, %v3542
    %v3596 = vrot.slane %v3508, 1
    %v3597 = vrot.slane %v3509, 1
    %v3598 = vsel %vm237, %v3596, %v3597
    %v3599 = vrot.slane %v3510, 1
    %v3600 = vrot.slane %v3511, 1
    %v3601 = vsel %vm237, %v3599, %v3600
    %v3602 = vrot.slane %v3512, 1
    %v3603 = vrot.slane %v3513, 1
    %v3604 = vsel %vm237, %v3602, %v3603
    %v3605 = vrot.slane %v3514, 1
    %v3606 = vrot.slane %v3515, 1
    %v3607 = vsel %vm237, %v3605, %v3606
    %v3608 = vrot.slane %v3516, 1
    %v3609 = vrot.slane %v3517, 1
    %v3610 = vsel %vm237, %v3608, %v3609
    %v3611 = vrot.slane %v3518, 1
    %v3612 = vrot.slane %v3519, 1
    %v3613 = vsel %vm237, %v3611, %v3612
    %v3614 = vrot.slane %v3520, 1
    %v3615 = vrot.slane %v3521, 1
    %v3616 = vsel %vm237, %v3614, %v3615
    %v3617 = vrot.slane %v3522, 1
    %v3618 = vrot.slane %v3523, 1
    %v3619 = vsel %vm237, %v3617, %v3618
    %v3620 = vrot.slane %v3528, 1
    %v3621 = vrot.slane %v3529, 1
    %v3622 = vsel %vm237, %v3620, %v3621
    %v3623 = vrot.slane %v3530, 1
    %v3624 = vrot.slane %v3531, 1
    %v3625 = vsel %vm237, %v3623, %v3624
    %v3626 = vrot.slane %v3532, 1
    %v3627 = vrot.slane %v3533, 1
    %v3628 = vsel %vm237, %v3626, %v3627
    %v3629 = vrot.slane %v3534, 1
    %v3630 = vrot.slane %v3535, 1
    %v3631 = vsel %vm237, %v3629, %v3630
    %v3632 = vrot.slane %v3536, 1
    %v3633 = vrot.slane %v3537, 1
    %v3634 = vsel %vm237, %v3632, %v3633
    %v3635 = vrot.slane %v3538, 1
    %v3636 = vrot.slane %v3539, 1
    %v3637 = vsel %vm237, %v3635, %v3636
    %v3638 = vrot.slane %v3540, 1
    %v3639 = vrot.slane %v3541, 1
    %v3640 = vsel %vm237, %v3638, %v3639
    %v3641 = vrot.slane %v3542, 1
    %v3642 = vrot.slane %v3543, 1
    %v3643 = vsel %vm237, %v3641, %v3642
    %3644 = vrot.lane.b32.xlu0 %v3598, 32
    %v3645 = vpop.permute.xlu0 %3644
    %3646 = vrot.lane.b32.xlu0 %v3601, 32
    %v3647 = vpop.permute.xlu0 %3646
    %3648 = vrot.lane.b32.xlu0 %v3604, 32
    %v3649 = vpop.permute.xlu0 %3648
    %3650 = vrot.lane.b32.xlu0 %v3607, 32
    %v3651 = vpop.permute.xlu0 %3650
    %3652 = vrot.lane.b32.xlu0 %v3610, 32
    %v3653 = vpop.permute.xlu0 %3652
    %3654 = vrot.lane.b32.xlu0 %v3613, 32
    %v3655 = vpop.permute.xlu0 %3654
    %3656 = vrot.lane.b32.xlu0 %v3616, 32
    %v3657 = vpop.permute.xlu0 %3656
    %3658 = vrot.lane.b32.xlu0 %v3619, 32
    %v3659 = vpop.permute.xlu0 %3658
    %3660 = vrot.lane.b32.xlu0 %v3622, 32
    %v3661 = vpop.permute.xlu0 %3660
    %3662 = vrot.lane.b32.xlu0 %v3625, 32
    %v3663 = vpop.permute.xlu0 %3662
    %3664 = vrot.lane.b32.xlu0 %v3628, 32
    %v3665 = vpop.permute.xlu0 %3664
    %3666 = vrot.lane.b32.xlu0 %v3631, 32
    %v3667 = vpop.permute.xlu0 %3666
    %3668 = vrot.lane.b32.xlu0 %v3634, 32
    %v3669 = vpop.permute.xlu0 %3668
    %3670 = vrot.lane.b32.xlu0 %v3637, 32
    %v3671 = vpop.permute.xlu0 %3670
    %3672 = vrot.lane.b32.xlu0 %v3640, 32
    %v3673 = vpop.permute.xlu0 %3672
    %3674 = vrot.lane.b32.xlu0 %v3643, 32
    %v3675 = vpop.permute.xlu0 %3674
    %3692 = vst.msk [vmem:[#allocation3] sm:$0xff] %vm1360, %v3645
    %3693 = vst.msk [vmem:[#allocation3 + $0x18] sm:$0xff] %vm1360, %v3647
    %3694 = vst.msk [vmem:[#allocation3 + $0x30] sm:$0xff] %vm1360, %v3649
    %3695 = vst.msk [vmem:[#allocation3 + $0x48] sm:$0xff] %vm1360, %v3651
    %3696 = vst.msk [vmem:[#allocation3 + $0x60] sm:$0xff] %vm1360, %v3653
    %3697 = vst.msk [vmem:[#allocation3 + $0x78] sm:$0xff] %vm1360, %v3655
    %3698 = vst.msk [vmem:[#allocation3 + $0x90] sm:$0xff] %vm1360, %v3657
    %3699 = vst.msk [vmem:[#allocation3 + $0xa8] sm:$0xff] %vm1360, %v3659
    %3700 = vst.msk [vmem:[#allocation3 + $0xc0] sm:$0xff] %vm1360, %v3661
    %3701 = vst.msk [vmem:[#allocation3 + $0xd8] sm:$0xff] %vm1360, %v3663
    %3702 = vst.msk [vmem:[#allocation3 + $0xf0] sm:$0xff] %vm1360, %v3665
    %3703 = vst.msk [vmem:[#allocation3 + $0x108] sm:$0xff] %vm1360, %v3667
    %3704 = vst.msk [vmem:[#allocation3 + $0x120] sm:$0xff] %vm1360, %v3669
    %3705 = vst.msk [vmem:[#allocation3 + $0x138] sm:$0xff] %vm1360, %v3671
    %3706 = vst.msk [vmem:[#allocation3 + $0x150] sm:$0xff] %vm1360, %v3673
    %3707 = vst.msk [vmem:[#allocation3 + $0x168] sm:$0xff] %vm1360, %v3675
    %v3708 = vrot.slane %v3508, 2
    %v3709 = vrot.slane %v3509, 2
    %v3710 = vsel %vm351, %v3708, %v3709
    %v3711 = vrot.slane %v3510, 2
    %v3712 = vrot.slane %v3511, 2
    %v3713 = vsel %vm351, %v3711, %v3712
    %v3714 = vrot.slane %v3512, 2
    %v3715 = vrot.slane %v3513, 2
    %v3716 = vsel %vm351, %v3714, %v3715
    %v3717 = vrot.slane %v3514, 2
    %v3718 = vrot.slane %v3515, 2
    %v3719 = vsel %vm351, %v3717, %v3718
    %v3720 = vrot.slane %v3516, 2
    %v3721 = vrot.slane %v3517, 2
    %v3722 = vsel %vm351, %v3720, %v3721
    %v3723 = vrot.slane %v3518, 2
    %v3724 = vrot.slane %v3519, 2
    %v3725 = vsel %vm351, %v3723, %v3724
    %v3726 = vrot.slane %v3520, 2
    %v3727 = vrot.slane %v3521, 2
    %v3728 = vsel %vm351, %v3726, %v3727
    %v3729 = vrot.slane %v3522, 2
    %v3730 = vrot.slane %v3523, 2
    %v3731 = vsel %vm351, %v3729, %v3730
    %v3732 = vrot.slane %v3528, 2
    %v3733 = vrot.slane %v3529, 2
    %v3734 = vsel %vm351, %v3732, %v3733
    %v3735 = vrot.slane %v3530, 2
    %v3736 = vrot.slane %v3531, 2
    %v3737 = vsel %vm351, %v3735, %v3736
    %v3738 = vrot.slane %v3532, 2
    %v3739 = vrot.slane %v3533, 2
    %v3740 = vsel %vm351, %v3738, %v3739
    %v3741 = vrot.slane %v3534, 2
    %v3742 = vrot.slane %v3535, 2
    %v3743 = vsel %vm351, %v3741, %v3742
    %v3744 = vrot.slane %v3536, 2
    %v3745 = vrot.slane %v3537, 2
    %v3746 = vsel %vm351, %v3744, %v3745
    %v3747 = vrot.slane %v3538, 2
    %v3748 = vrot.slane %v3539, 2
    %v3749 = vsel %vm351, %v3747, %v3748
    %v3750 = vrot.slane %v3540, 2
    %v3751 = vrot.slane %v3541, 2
    %v3752 = vsel %vm351, %v3750, %v3751
    %v3753 = vrot.slane %v3542, 2
    %v3754 = vrot.slane %v3543, 2
    %v3755 = vsel %vm351, %v3753, %v3754
    %3756 = vrot.lane.b32.xlu0 %v3710, 64
    %v3757 = vpop.permute.xlu0 %3756
    %3758 = vrot.lane.b32.xlu0 %v3713, 64
    %v3759 = vpop.permute.xlu0 %3758
    %3760 = vrot.lane.b32.xlu0 %v3716, 64
    %v3761 = vpop.permute.xlu0 %3760
    %3762 = vrot.lane.b32.xlu0 %v3719, 64
    %v3763 = vpop.permute.xlu0 %3762
    %3764 = vrot.lane.b32.xlu0 %v3722, 64
    %v3765 = vpop.permute.xlu0 %3764
    %3766 = vrot.lane.b32.xlu0 %v3725, 64
    %v3767 = vpop.permute.xlu0 %3766
    %3768 = vrot.lane.b32.xlu0 %v3728, 64
    %v3769 = vpop.permute.xlu0 %3768
    %3770 = vrot.lane.b32.xlu0 %v3731, 64
    %v3771 = vpop.permute.xlu0 %3770
    %3772 = vrot.lane.b32.xlu0 %v3734, 64
    %v3773 = vpop.permute.xlu0 %3772
    %3774 = vrot.lane.b32.xlu0 %v3737, 64
    %v3775 = vpop.permute.xlu0 %3774
    %3776 = vrot.lane.b32.xlu0 %v3740, 64
    %v3777 = vpop.permute.xlu0 %3776
    %3778 = vrot.lane.b32.xlu0 %v3743, 64
    %v3779 = vpop.permute.xlu0 %3778
    %3780 = vrot.lane.b32.xlu0 %v3746, 64
    %v3781 = vpop.permute.xlu0 %3780
    %3782 = vrot.lane.b32.xlu0 %v3749, 64
    %v3783 = vpop.permute.xlu0 %3782
    %3784 = vrot.lane.b32.xlu0 %v3752, 64
    %v3785 = vpop.permute.xlu0 %3784
    %3786 = vrot.lane.b32.xlu0 %v3755, 64
    %v3787 = vpop.permute.xlu0 %3786
    %3804 = vst.msk [vmem:[#allocation3] sm:$0xff] %vm1473, %v3757
    %3805 = vst.msk [vmem:[#allocation3 + $0x18] sm:$0xff] %vm1473, %v3759
    %3806 = vst.msk [vmem:[#allocation3 + $0x30] sm:$0xff] %vm1473, %v3761
    %3807 = vst.msk [vmem:[#allocation3 + $0x48] sm:$0xff] %vm1473, %v3763
    %3808 = vst.msk [vmem:[#allocation3 + $0x60] sm:$0xff] %vm1473, %v3765
    %3809 = vst.msk [vmem:[#allocation3 + $0x78] sm:$0xff] %vm1473, %v3767
    %3810 = vst.msk [vmem:[#allocation3 + $0x90] sm:$0xff] %vm1473, %v3769
    %3811 = vst.msk [vmem:[#allocation3 + $0xa8] sm:$0xff] %vm1473, %v3771
    %3812 = vst.msk [vmem:[#allocation3 + $0xc0] sm:$0xff] %vm1473, %v3773
    %3813 = vst.msk [vmem:[#allocation3 + $0xd8] sm:$0xff] %vm1473, %v3775
    %3814 = vst.msk [vmem:[#allocation3 + $0xf0] sm:$0xff] %vm1473, %v3777
    %3815 = vst.msk [vmem:[#allocation3 + $0x108] sm:$0xff] %vm1473, %v3779
    %3816 = vst.msk [vmem:[#allocation3 + $0x120] sm:$0xff] %vm1473, %v3781
    %3817 = vst.msk [vmem:[#allocation3 + $0x138] sm:$0xff] %vm1473, %v3783
    %3818 = vst.msk [vmem:[#allocation3 + $0x150] sm:$0xff] %vm1473, %v3785
    %3819 = vst.msk [vmem:[#allocation3 + $0x168] sm:$0xff] %vm1473, %v3787
    %3822 = vrot.lane.b32.xlu0 %v3510, 96
    %v3823 = vpop.permute.xlu0 %3822
    %3824 = vrot.lane.b32.xlu0 %v3512, 96
    %v3825 = vpop.permute.xlu0 %3824
    %3826 = vrot.lane.b32.xlu0 %v3514, 96
    %v3827 = vpop.permute.xlu0 %3826
    %3828 = vrot.lane.b32.xlu0 %v3516, 96
    %v3829 = vpop.permute.xlu0 %3828
    %3830 = vrot.lane.b32.xlu0 %v3518, 96
    %v3831 = vpop.permute.xlu0 %3830
    %3832 = vrot.lane.b32.xlu0 %v3520, 96
    %v3833 = vpop.permute.xlu0 %3832
    %3834 = vrot.lane.b32.xlu0 %v3522, 96
    %v3835 = vpop.permute.xlu0 %3834
    %3836 = vrot.lane.b32.xlu0 %v3524, 96
    %v3837 = vpop.permute.xlu0 %3836
    %3838 = vrot.lane.b32.xlu0 %v3530, 96
    %v3839 = vpop.permute.xlu0 %3838
    %3840 = vrot.lane.b32.xlu0 %v3532, 96
    %v3841 = vpop.permute.xlu0 %3840
    %3842 = vrot.lane.b32.xlu0 %v3534, 96
    %v3843 = vpop.permute.xlu0 %3842
    %3844 = vrot.lane.b32.xlu0 %v3536, 96
    %v3845 = vpop.permute.xlu0 %3844
    %3846 = vrot.lane.b32.xlu0 %v3538, 96
    %v3847 = vpop.permute.xlu0 %3846
    %3848 = vrot.lane.b32.xlu0 %v3540, 96
    %v3849 = vpop.permute.xlu0 %3848
    %3850 = vrot.lane.b32.xlu0 %v3542, 96
    %v3851 = vpop.permute.xlu0 %3850
    %3852 = vrot.lane.b32.xlu0 %v3544, 96
    %v3853 = vpop.permute.xlu0 %3852
    %3870 = vst.msk [vmem:[#allocation3] sm:$0xff] %vm1540, %v3823
    %3871 = vst.msk [vmem:[#allocation3 + $0x18] sm:$0xff] %vm1540, %v3825
    %3872 = vst.msk [vmem:[#allocation3 + $0x30] sm:$0xff] %vm1540, %v3827
    %3873 = vst.msk [vmem:[#allocation3 + $0x48] sm:$0xff] %vm1540, %v3829
    %3874 = vst.msk [vmem:[#allocation3 + $0x60] sm:$0xff] %vm1540, %v3831
    %3875 = vst.msk [vmem:[#allocation3 + $0x78] sm:$0xff] %vm1540, %v3833
    %3876 = vst.msk [vmem:[#allocation3 + $0x90] sm:$0xff] %vm1540, %v3835
    %3877 = vst.msk [vmem:[#allocation3 + $0xa8] sm:$0xff] %vm1540, %v3837
    %3878 = vst.msk [vmem:[#allocation3 + $0xc0] sm:$0xff] %vm1540, %v3839
    %3879 = vst.msk [vmem:[#allocation3 + $0xd8] sm:$0xff] %vm1540, %v3841
    %3880 = vst.msk [vmem:[#allocation3 + $0xf0] sm:$0xff] %vm1540, %v3843
    %3881 = vst.msk [vmem:[#allocation3 + $0x108] sm:$0xff] %vm1540, %v3845
    %3882 = vst.msk [vmem:[#allocation3 + $0x120] sm:$0xff] %vm1540, %v3847
    %3883 = vst.msk [vmem:[#allocation3 + $0x138] sm:$0xff] %vm1540, %v3849
    %3884 = vst.msk [vmem:[#allocation3 + $0x150] sm:$0xff] %vm1540, %v3851
    %3885 = vst.msk [vmem:[#allocation3 + $0x168] sm:$0xff] %vm1540, %v3853
    %v3888 = vrot.slane %v3524, 1
    %v3889 = vrot.slane %v3525, 1
    %v3890 = vsel %vm237, %v3888, %v3889
    %v3891 = vrot.slane %v3544, 1
    %v3892 = vrot.slane %v3545, 1
    %v3893 = vsel %vm237, %v3891, %v3892
    %3910 = vst.msk [vmem:[#allocation3 + $0x8] sm:$0xff] %vm73, %v3601
    %3911 = vst.msk [vmem:[#allocation3 + $0x20] sm:$0xff] %vm73, %v3604
    %3912 = vst.msk [vmem:[#allocation3 + $0x38] sm:$0xff] %vm73, %v3607
    %3913 = vst.msk [vmem:[#allocation3 + $0x50] sm:$0xff] %vm73, %v3610
    %3914 = vst.msk [vmem:[#allocation3 + $0x68] sm:$0xff] %vm73, %v3613
    %3915 = vst.msk [vmem:[#allocation3 + $0x80] sm:$0xff] %vm73, %v3616
    %3916 = vst.msk [vmem:[#allocation3 + $0x98] sm:$0xff] %vm73, %v3619
    %3917 = vst.msk [vmem:[#allocation3 + $0xb0] sm:$0xff] %vm73, %v3890
    %3918 = vst.msk [vmem:[#allocation3 + $0xc8] sm:$0xff] %vm73, %v3625
    %3919 = vst.msk [vmem:[#allocation3 + $0xe0] sm:$0xff] %vm73, %v3628
    %3920 = vst.msk [vmem:[#allocation3 + $0xf8] sm:$0xff] %vm73, %v3631
    %3921 = vst.msk [vmem:[#allocation3 + $0x110] sm:$0xff] %vm73, %v3634
    %3922 = vst.msk [vmem:[#allocation3 + $0x128] sm:$0xff] %vm73, %v3637
    %3923 = vst.msk [vmem:[#allocation3 + $0x140] sm:$0xff] %vm73, %v3640
    %3924 = vst.msk [vmem:[#allocation3 + $0x158] sm:$0xff] %vm73, %v3643
    %3925 = vst.msk [vmem:[#allocation3 + $0x170] sm:$0xff] %vm73, %v3893
    %v3926 = vrot.slane %v3524, 2
    %v3927 = vrot.slane %v3525, 2
    %v3928 = vsel %vm351, %v3926, %v3927
    %v3929 = vrot.slane %v3544, 2
    %v3930 = vrot.slane %v3545, 2
    %v3931 = vsel %vm351, %v3929, %v3930
    %3932 = vrot.lane.b32.xlu0 %v3713, 32
    %v3933 = vpop.permute.xlu0 %3932
    %3934 = vrot.lane.b32.xlu0 %v3716, 32
    %v3935 = vpop.permute.xlu0 %3934
    %3936 = vrot.lane.b32.xlu0 %v3719, 32
    %v3937 = vpop.permute.xlu0 %3936
    %3938 = vrot.lane.b32.xlu0 %v3722, 32
    %v3939 = vpop.permute.xlu0 %3938
    %3940 = vrot.lane.b32.xlu0 %v3725, 32
    %v3941 = vpop.permute.xlu0 %3940
    %3942 = vrot.lane.b32.xlu0 %v3728, 32
    %v3943 = vpop.permute.xlu0 %3942
    %3944 = vrot.lane.b32.xlu0 %v3731, 32
    %v3945 = vpop.permute.xlu0 %3944
    %3946 = vrot.lane.b32.xlu0 %v3928, 32
    %v3947 = vpop.permute.xlu0 %3946
    %3948 = vrot.lane.b32.xlu0 %v3737, 32
    %v3949 = vpop.permute.xlu0 %3948
    %3950 = vrot.lane.b32.xlu0 %v3740, 32
    %v3951 = vpop.permute.xlu0 %3950
    %3952 = vrot.lane.b32.xlu0 %v3743, 32
    %v3953 = vpop.permute.xlu0 %3952
    %3954 = vrot.lane.b32.xlu0 %v3746, 32
    %v3955 = vpop.permute.xlu0 %3954
    %3956 = vrot.lane.b32.xlu0 %v3749, 32
    %v3957 = vpop.permute.xlu0 %3956
    %3958 = vrot.lane.b32.xlu0 %v3752, 32
    %v3959 = vpop.permute.xlu0 %3958
    %3960 = vrot.lane.b32.xlu0 %v3755, 32
    %v3961 = vpop.permute.xlu0 %3960
    %3962 = vrot.lane.b32.xlu0 %v3931, 32
    %v3963 = vpop.permute.xlu0 %3962
    %3980 = vst.msk [vmem:[#allocation3 + $0x8] sm:$0xff] %vm1360, %v3933
    %3981 = vst.msk [vmem:[#allocation3 + $0x20] sm:$0xff] %vm1360, %v3935
    %3982 = vst.msk [vmem:[#allocation3 + $0x38] sm:$0xff] %vm1360, %v3937
    %3983 = vst.msk [vmem:[#allocation3 + $0x50] sm:$0xff] %vm1360, %v3939
    %3984 = vst.msk [vmem:[#allocation3 + $0x68] sm:$0xff] %vm1360, %v3941
    %3985 = vst.msk [vmem:[#allocation3 + $0x80] sm:$0xff] %vm1360, %v3943
    %3986 = vst.msk [vmem:[#allocation3 + $0x98] sm:$0xff] %vm1360, %v3945
    %3987 = vst.msk [vmem:[#allocation3 + $0xb0] sm:$0xff] %vm1360, %v3947
    %3988 = vst.msk [vmem:[#allocation3 + $0xc8] sm:$0xff] %vm1360, %v3949
    %3989 = vst.msk [vmem:[#allocation3 + $0xe0] sm:$0xff] %vm1360, %v3951
    %3990 = vst.msk [vmem:[#allocation3 + $0xf8] sm:$0xff] %vm1360, %v3953
    %3991 = vst.msk [vmem:[#allocation3 + $0x110] sm:$0xff] %vm1360, %v3955
    %3992 = vst.msk [vmem:[#allocation3 + $0x128] sm:$0xff] %vm1360, %v3957
    %3993 = vst.msk [vmem:[#allocation3 + $0x140] sm:$0xff] %vm1360, %v3959
    %3994 = vst.msk [vmem:[#allocation3 + $0x158] sm:$0xff] %vm1360, %v3961
    %3995 = vst.msk [vmem:[#allocation3 + $0x170] sm:$0xff] %vm1360, %v3963
    %3998 = vrot.lane.b32.xlu0 %v3512, 64
    %v3999 = vpop.permute.xlu0 %3998
    %4000 = vrot.lane.b32.xlu0 %v3514, 64
    %v4001 = vpop.permute.xlu0 %4000
    %4002 = vrot.lane.b32.xlu0 %v3516, 64
    %v4003 = vpop.permute.xlu0 %4002
    %4004 = vrot.lane.b32.xlu0 %v3518, 64
    %v4005 = vpop.permute.xlu0 %4004
    %4006 = vrot.lane.b32.xlu0 %v3520, 64
    %v4007 = vpop.permute.xlu0 %4006
    %4008 = vrot.lane.b32.xlu0 %v3522, 64
    %v4009 = vpop.permute.xlu0 %4008
    %4010 = vrot.lane.b32.xlu0 %v3524, 64
    %v4011 = vpop.permute.xlu0 %4010
    %4012 = vrot.lane.b32.xlu0 %v3526, 64
    %v4013 = vpop.permute.xlu0 %4012
    %4014 = vrot.lane.b32.xlu0 %v3532, 64
    %v4015 = vpop.permute.xlu0 %4014
    %4016 = vrot.lane.b32.xlu0 %v3534, 64
    %v4017 = vpop.permute.xlu0 %4016
    %4018 = vrot.lane.b32.xlu0 %v3536, 64
    %v4019 = vpop.permute.xlu0 %4018
    %4020 = vrot.lane.b32.xlu0 %v3538, 64
    %v4021 = vpop.permute.xlu0 %4020
    %4022 = vrot.lane.b32.xlu0 %v3540, 64
    %v4023 = vpop.permute.xlu0 %4022
    %4024 = vrot.lane.b32.xlu0 %v3542, 64
    %v4025 = vpop.permute.xlu0 %4024
    %4026 = vrot.lane.b32.xlu0 %v3544, 64
    %v4027 = vpop.permute.xlu0 %4026
    %4028 = vrot.lane.b32.xlu0 %v3546, 64
    %v4029 = vpop.permute.xlu0 %4028
    %4046 = vst.msk [vmem:[#allocation3 + $0x8] sm:$0xff] %vm1473, %v3999
    %4047 = vst.msk [vmem:[#allocation3 + $0x20] sm:$0xff] %vm1473, %v4001
    %4048 = vst.msk [vmem:[#allocation3 + $0x38] sm:$0xff] %vm1473, %v4003
    %4049 = vst.msk [vmem:[#allocation3 + $0x50] sm:$0xff] %vm1473, %v4005
    %4050 = vst.msk [vmem:[#allocation3 + $0x68] sm:$0xff] %vm1473, %v4007
    %4051 = vst.msk [vmem:[#allocation3 + $0x80] sm:$0xff] %vm1473, %v4009
    %4052 = vst.msk [vmem:[#allocation3 + $0x98] sm:$0xff] %vm1473, %v4011
    %4053 = vst.msk [vmem:[#allocation3 + $0xb0] sm:$0xff] %vm1473, %v4013
    %4054 = vst.msk [vmem:[#allocation3 + $0xc8] sm:$0xff] %vm1473, %v4015
    %4055 = vst.msk [vmem:[#allocation3 + $0xe0] sm:$0xff] %vm1473, %v4017
    %4056 = vst.msk [vmem:[#allocation3 + $0xf8] sm:$0xff] %vm1473, %v4019
    %4057 = vst.msk [vmem:[#allocation3 + $0x110] sm:$0xff] %vm1473, %v4021
    %4058 = vst.msk [vmem:[#allocation3 + $0x128] sm:$0xff] %vm1473, %v4023
    %4059 = vst.msk [vmem:[#allocation3 + $0x140] sm:$0xff] %vm1473, %v4025
    %4060 = vst.msk [vmem:[#allocation3 + $0x158] sm:$0xff] %vm1473, %v4027
    %4061 = vst.msk [vmem:[#allocation3 + $0x170] sm:$0xff] %vm1473, %v4029
    %v4064 = vrot.slane %v3526, 1
    %v4065 = vrot.slane %v3527, 1
    %v4066 = vsel %vm237, %v4064, %v4065
    %v4067 = vrot.slane %v3546, 1
    %v4068 = vrot.slane %v3547, 1
    %v4069 = vsel %vm237, %v4067, %v4068
    %4070 = vrot.lane.b32.xlu0 %v3604, 96
    %v4071 = vpop.permute.xlu0 %4070
    %4072 = vrot.lane.b32.xlu0 %v3607, 96
    %v4073 = vpop.permute.xlu0 %4072
    %4074 = vrot.lane.b32.xlu0 %v3610, 96
    %v4075 = vpop.permute.xlu0 %4074
    %4076 = vrot.lane.b32.xlu0 %v3613, 96
    %v4077 = vpop.permute.xlu0 %4076
    %4078 = vrot.lane.b32.xlu0 %v3616, 96
    %v4079 = vpop.permute.xlu0 %4078
    %4080 = vrot.lane.b32.xlu0 %v3619, 96
    %v4081 = vpop.permute.xlu0 %4080
    %4082 = vrot.lane.b32.xlu0 %v3890, 96
    %v4083 = vpop.permute.xlu0 %4082
    %4084 = vrot.lane.b32.xlu0 %v4066, 96
    %v4085 = vpop.permute.xlu0 %4084
    %4086 = vrot.lane.b32.xlu0 %v3628, 96
    %v4087 = vpop.permute.xlu0 %4086
    %4088 = vrot.lane.b32.xlu0 %v3631, 96
    %v4089 = vpop.permute.xlu0 %4088
    %4090 = vrot.lane.b32.xlu0 %v3634, 96
    %v4091 = vpop.permute.xlu0 %4090
    %4092 = vrot.lane.b32.xlu0 %v3637, 96
    %v4093 = vpop.permute.xlu0 %4092
    %4094 = vrot.lane.b32.xlu0 %v3640, 96
    %v4095 = vpop.permute.xlu0 %4094
    %4096 = vrot.lane.b32.xlu0 %v3643, 96
    %v4097 = vpop.permute.xlu0 %4096
    %4098 = vrot.lane.b32.xlu0 %v3893, 96
    %v4099 = vpop.permute.xlu0 %4098
    %4100 = vrot.lane.b32.xlu0 %v4069, 96
    %v4101 = vpop.permute.xlu0 %4100
    %4118 = vst.msk [vmem:[#allocation3 + $0x8] sm:$0xff] %vm1540, %v4071
    %4119 = vst.msk [vmem:[#allocation3 + $0x20] sm:$0xff] %vm1540, %v4073
    %4120 = vst.msk [vmem:[#allocation3 + $0x38] sm:$0xff] %vm1540, %v4075
    %4121 = vst.msk [vmem:[#allocation3 + $0x50] sm:$0xff] %vm1540, %v4077
    %4122 = vst.msk [vmem:[#allocation3 + $0x68] sm:$0xff] %vm1540, %v4079
    %4123 = vst.msk [vmem:[#allocation3 + $0x80] sm:$0xff] %vm1540, %v4081
    %4124 = vst.msk [vmem:[#allocation3 + $0x98] sm:$0xff] %vm1540, %v4083
    %4125 = vst.msk [vmem:[#allocation3 + $0xb0] sm:$0xff] %vm1540, %v4085
    %4126 = vst.msk [vmem:[#allocation3 + $0xc8] sm:$0xff] %vm1540, %v4087
    %4127 = vst.msk [vmem:[#allocation3 + $0xe0] sm:$0xff] %vm1540, %v4089
    %4128 = vst.msk [vmem:[#allocation3 + $0xf8] sm:$0xff] %vm1540, %v4091
    %4129 = vst.msk [vmem:[#allocation3 + $0x110] sm:$0xff] %vm1540, %v4093
    %4130 = vst.msk [vmem:[#allocation3 + $0x128] sm:$0xff] %vm1540, %v4095
    %4131 = vst.msk [vmem:[#allocation3 + $0x140] sm:$0xff] %vm1540, %v4097
    %4132 = vst.msk [vmem:[#allocation3 + $0x158] sm:$0xff] %vm1540, %v4099
    %4133 = vst.msk [vmem:[#allocation3 + $0x170] sm:$0xff] %vm1540, %v4101
    %v4134 = vrot.slane %v3526, 2
    %v4135 = vrot.slane %v3527, 2
    %v4136 = vsel %vm351, %v4134, %v4135
    %v4137 = vrot.slane %v3546, 2
    %v4138 = vrot.slane %v3547, 2
    %v4139 = vsel %vm351, %v4137, %v4138
    %4156 = vst.msk [vmem:[#allocation3 + $0x10] sm:$0xff] %vm73, %v3716
    %4157 = vst.msk [vmem:[#allocation3 + $0x28] sm:$0xff] %vm73, %v3719
    %4158 = vst.msk [vmem:[#allocation3 + $0x40] sm:$0xff] %vm73, %v3722
    %4159 = vst.msk [vmem:[#allocation3 + $0x58] sm:$0xff] %vm73, %v3725
    %4160 = vst.msk [vmem:[#allocation3 + $0x70] sm:$0xff] %vm73, %v3728
    %4161 = vst.msk [vmem:[#allocation3 + $0x88] sm:$0xff] %vm73, %v3731
    %4162 = vst.msk [vmem:[#allocation3 + $0xa0] sm:$0xff] %vm73, %v3928
    %4163 = vst.msk [vmem:[#allocation3 + $0xb8] sm:$0xff] %vm73, %v4136
    %4164 = vst.msk [vmem:[#allocation3 + $0xd0] sm:$0xff] %vm73, %v3740
    %4165 = vst.msk [vmem:[#allocation3 + $0xe8] sm:$0xff] %vm73, %v3743
    %4166 = vst.msk [vmem:[#allocation3 + $0x100] sm:$0xff] %vm73, %v3746
    %4167 = vst.msk [vmem:[#allocation3 + $0x118] sm:$0xff] %vm73, %v3749
    %4168 = vst.msk [vmem:[#allocation3 + $0x130] sm:$0xff] %vm73, %v3752
    %4169 = vst.msk [vmem:[#allocation3 + $0x148] sm:$0xff] %vm73, %v3755
    %4170 = vst.msk [vmem:[#allocation3 + $0x160] sm:$0xff] %vm73, %v3931
    %4171 = vst.msk [vmem:[#allocation3 + $0x178] sm:$0xff] %vm73, %v4139
    %v4172 = vld [vmem:[%s4] sm:$0xff]
    %v4173 = vld [vmem:[%s4 + $0x8] sm:$0xff]
    %v4174 = vld [vmem:[%s4 + $0x10] sm:$0xff]
    %v4175 = vld [vmem:[%s4 + $0x18] sm:$0xff]
    %v4176 = vld [vmem:[%s4 + $0x20] sm:$0xff]
    %v4177 = vld [vmem:[%s4 + $0x28] sm:$0xff]
    %v4178 = vld [vmem:[%s4 + $0x30] sm:$0xff]
    %v4179 = vld [vmem:[%s4 + $0x38] sm:$0xff]
    %v4180 = vld [vmem:[%s4 + $0x40] sm:$0xff]
    %v4181 = vld [vmem:[%s4 + $0x48] sm:$0xff]
    %v4182 = vld [vmem:[%s4 + $0x50] sm:$0xff]
    %v4183 = vld [vmem:[%s4 + $0x58] sm:$0xff]
    %v4184 = vld [vmem:[#allocation3] sm:$0xff]
    %v4185 = vld [vmem:[#allocation3 + $0x8] sm:$0xff]
    %v4186 = vld [vmem:[#allocation3 + $0x10] sm:$0xff]
    %v4187 = vld [vmem:[#allocation3 + $0x18] sm:$0xff]
    %v4188 = vld [vmem:[#allocation3 + $0x20] sm:$0xff]
    %v4189 = vld [vmem:[#allocation3 + $0x28] sm:$0xff]
    %v4190 = vld [vmem:[#allocation3 + $0x30] sm:$0xff]
    %v4191 = vld [vmem:[#allocation3 + $0x38] sm:$0xff]
    %v4192 = vld [vmem:[#allocation3 + $0x40] sm:$0xff]
    %v4193 = vld [vmem:[#allocation3 + $0x48] sm:$0xff]
    %v4194 = vld [vmem:[#allocation3 + $0x50] sm:$0xff]
    %v4195 = vld [vmem:[#allocation3 + $0x58] sm:$0xff]
    %v4196 = vld [vmem:[#allocation3 + $0x60] sm:$0xff]
    %v4197 = vld [vmem:[#allocation3 + $0x68] sm:$0xff]
    %v4198 = vld [vmem:[#allocation3 + $0x70] sm:$0xff]
    %v4199 = vld [vmem:[#allocation3 + $0x78] sm:$0xff]
    %v4200 = vld [vmem:[#allocation3 + $0x80] sm:$0xff]
    %v4201 = vld [vmem:[#allocation3 + $0x88] sm:$0xff]
    %v4202 = vld [vmem:[#allocation3 + $0x90] sm:$0xff]
    %v4203 = vld [vmem:[#allocation3 + $0x98] sm:$0xff]
    %v4204 = vld [vmem:[#allocation3 + $0xa0] sm:$0xff]
    %v4205 = vld [vmem:[#allocation3 + $0xa8] sm:$0xff]
    %v4206 = vld [vmem:[#allocation3 + $0xb0] sm:$0xff]
    %v4207 = vld [vmem:[#allocation3 + $0xb8] sm:$0xff]
    %v4208 = vld [vmem:[#allocation3 + $0xc0] sm:$0xff]
    %v4209 = vld [vmem:[#allocation3 + $0xc8] sm:$0xff]
    %v4210 = vld [vmem:[#allocation3 + $0xd0] sm:$0xff]
    %v4211 = vld [vmem:[#allocation3 + $0xd8] sm:$0xff]
    %v4212 = vld [vmem:[#allocation3 + $0xe0] sm:$0xff]
    %v4213 = vld [vmem:[#allocation3 + $0xe8] sm:$0xff]
    %v4214 = vld [vmem:[#allocation3 + $0xf0] sm:$0xff]
    %v4215 = vld [vmem:[#allocation3 + $0xf8] sm:$0xff]
    %v4216 = vld [vmem:[#allocation3 + $0x100] sm:$0xff]
    %v4217 = vld [vmem:[#allocation3 + $0x108] sm:$0xff]
    %v4218 = vld [vmem:[#allocation3 + $0x110] sm:$0xff]
    %v4219 = vld [vmem:[#allocation3 + $0x118] sm:$0xff]
    %v4220 = vld [vmem:[#allocation3 + $0x120] sm:$0xff]
    %v4221 = vld [vmem:[#allocation3 + $0x128] sm:$0xff]
    %v4222 = vld [vmem:[#allocation3 + $0x130] sm:$0xff]
    %v4223 = vld [vmem:[#allocation3 + $0x138] sm:$0xff]
    %v4224 = vld [vmem:[#allocation3 + $0x140] sm:$0xff]
    %v4225 = vld [vmem:[#allocation3 + $0x148] sm:$0xff]
    %v4226 = vld [vmem:[#allocation3 + $0x150] sm:$0xff]
    %v4227 = vld [vmem:[#allocation3 + $0x158] sm:$0xff]
    %v4228 = vld [vmem:[#allocation3 + $0x160] sm:$0xff]
    %v4229 = vld [vmem:[#allocation3 + $0x168] sm:$0xff]
    %v4230 = vld [vmem:[#allocation3 + $0x170] sm:$0xff]
    %v4231 = vld [vmem:[#allocation3 + $0x178] sm:$0xff]
    %v4233 = vsel %vm73, %v4174, 0
    %v4236 = vsel %vm73, %v4177, 0
    %v4239 = vsel %vm73, %v4180, 0
    %v4242 = vsel %vm73, %v4183, 0
    %v4245 = vsel %vm73, %v4186, 0
    %v4248 = vsel %vm73, %v4189, 0
    %v4251 = vsel %vm73, %v4192, 0
    %v4254 = vsel %vm73, %v4195, 0
    %v4257 = vsel %vm73, %v4198, 0
    %v4260 = vsel %vm73, %v4201, 0
    %v4263 = vsel %vm73, %v4204, 0
    %v4266 = vsel %vm73, %v4207, 0
    %v4269 = vsel %vm73, %v4210, 0
    %v4272 = vsel %vm73, %v4213, 0
    %v4275 = vsel %vm73, %v4216, 0
    %v4278 = vsel %vm73, %v4219, 0
    %v4281 = vsel %vm73, %v4222, 0
    %v4284 = vsel %vm73, %v4225, 0
    %v4287 = vsel %vm73, %v4228, 0
    %v4290 = vsel %vm73, %v4231, 0
    %4292 = vmatpush.xpose.msra.mxu0 %v4229
    %4293 = vmatpush.xpose.msra.mxu0 %v4226
    %4294 = vmatpush.xpose.msra.mxu0 %v4223
    %4295 = vmatpush.xpose.msra.mxu0 %v4220
    %4296 = vmatpush.xpose.msra.mxu0 %v4217
    %4297 = vmatpush.xpose.msra.mxu0 %v4214
    %4298 = vmatpush.xpose.msra.mxu0 %v4211
    %4299 = vmatpush.xpose.msra.mxu0 %v4208
    %4300 = vmatpush.xpose.msra.mxu0 %v4205
    %4301 = vmatpush.xpose.msra.mxu0 %v4202
    %4302 = vmatpush.xpose.msra.mxu0 %v4199
    %4303 = vmatpush.xpose.msra.mxu0 %v4196
    %4304 = vmatpush.xpose.msra.mxu0 %v4193
    %4305 = vmatpush.xpose.msra.mxu0 %v4190
    %4306 = vmatpush.xpose.msra.mxu0 %v4187
    %4307 = vmatpush.xpose.msra.mxu0 %v4184
    %4308 = vmatmul.f32.gmra.mxu0 %v4172
    %v4309 = vpop.f32.mrf.mxu0
    %v4310 = vadd.f32 %v1149, %v4309
    %4311 = vmatmul.f32.gmra.mxu0 %v4175
    %v4312 = vpop.f32.mrf.mxu0
    %v4313 = vadd.f32 %v1152, %v4312
    %4314 = vmatmul.f32.gmra.mxu0 %v4178
    %v4315 = vpop.f32.mrf.mxu0
    %v4316 = vadd.f32 %v1155, %v4315
    %4317 = vmatmul.f32.gmra.mxu0 %v4181
    %v4318 = vpop.f32.mrf.mxu0
    %v4319 = vadd.f32 %v1158, %v4318
    %4320 = vdwg.mxu0
    %4321 = vmatpush.xpose.msra.mxu0 %v4230
    %4322 = vmatpush.xpose.msra.mxu0 %v4227
    %4323 = vmatpush.xpose.msra.mxu0 %v4224
    %4324 = vmatpush.xpose.msra.mxu0 %v4221
    %4325 = vmatpush.xpose.msra.mxu0 %v4218
    %4326 = vmatpush.xpose.msra.mxu0 %v4215
    %4327 = vmatpush.xpose.msra.mxu0 %v4212
    %4328 = vmatpush.xpose.msra.mxu0 %v4209
    %4329 = vmatpush.xpose.msra.mxu0 %v4206
    %4330 = vmatpush.xpose.msra.mxu0 %v4203
    %4331 = vmatpush.xpose.msra.mxu0 %v4200
    %4332 = vmatpush.xpose.msra.mxu0 %v4197
    %4333 = vmatpush.xpose.msra.mxu0 %v4194
    %4334 = vmatpush.xpose.msra.mxu0 %v4191
    %4335 = vmatpush.xpose.msra.mxu0 %v4188
    %4336 = vmatpush.xpose.msra.mxu0 %v4185
    %4337 = vmatmul.f32.gmra.mxu0 %v4173
    %v4338 = vpop.f32.mrf.mxu0
    %v4339 = vadd.f32 %v4310, %v4338
    %4340 = vmatmul.f32.gmra.mxu0 %v4176
    %v4341 = vpop.f32.mrf.mxu0
    %v4342 = vadd.f32 %v4313, %v4341
    %4343 = vmatmul.f32.gmra.mxu0 %v4179
    %v4344 = vpop.f32.mrf.mxu0
    %v4345 = vadd.f32 %v4316, %v4344
    %4346 = vmatmul.f32.gmra.mxu0 %v4182
    %v4347 = vpop.f32.mrf.mxu0
    %v4348 = vadd.f32 %v4319, %v4347
    %4349 = vdwg.mxu0
    %4350 = vmatpush.xpose.msra.mxu0 %v4290
    %4351 = vmatpush.xpose.msra.mxu0 %v4287
    %4352 = vmatpush.xpose.msra.mxu0 %v4284
    %4353 = vmatpush.xpose.msra.mxu0 %v4281
    %4354 = vmatpush.xpose.msra.mxu0 %v4278
    %4355 = vmatpush.xpose.msra.mxu0 %v4275
    %4356 = vmatpush.xpose.msra.mxu0 %v4272
    %4357 = vmatpush.xpose.msra.mxu0 %v4269
    %4358 = vmatpush.xpose.msra.mxu0 %v4266
    %4359 = vmatpush.xpose.msra.mxu0 %v4263
    %4360 = vmatpush.xpose.msra.mxu0 %v4260
    %4361 = vmatpush.xpose.msra.mxu0 %v4257
    %4362 = vmatpush.xpose.msra.mxu0 %v4254
    %4363 = vmatpush.xpose.msra.mxu0 %v4251
    %4364 = vmatpush.xpose.msra.mxu0 %v4248
    %4365 = vmatpush.xpose.msra.mxu0 %v4245
    %4366 = vmatmul.f32.gmra.mxu0 %v4233
    %v4367 = vpop.f32.mrf.mxu0
    %v4368 = vadd.f32 %v4339, %v4367
    %4369 = vmatmul.f32.gmra.mxu0 %v4236
    %v4370 = vpop.f32.mrf.mxu0
    %v4371 = vadd.f32 %v4342, %v4370
    %4372 = vmatmul.f32.gmra.mxu0 %v4239
    %v4373 = vpop.f32.mrf.mxu0
    %v4374 = vadd.f32 %v4345, %v4373
    %4375 = vmatmul.f32.gmra.mxu0 %v4242
    %v4376 = vpop.f32.mrf.mxu0
    %v4377 = vadd.f32 %v4348, %v4376
    %4378 = vdwg.mxu0
    %vm4379 = vcmask 523264
    %4380 = vst.msk [vmem:[%s7] sm:$0xff] %vm4379, %v4368
    %4381 = vst.msk [vmem:[%s7 + $0x8] sm:$0xff] %vm4379, %v4371
    %4382 = vst.msk [vmem:[%s7 + $0x10] sm:$0xff] %vm4379, %v4374
    %4383 = vst.msk [vmem:[%s7 + $0x18] sm:$0xff] %vm4379, %v4377
    %4388 = vrot.lane.b32.xlu0 %v4368, 64
    %v4389 = vpop.permute.xlu0 %4388
    %4390 = vrot.lane.b32.xlu0 %v4371, 64
    %v4391 = vpop.permute.xlu0 %4390
    %4392 = vrot.lane.b32.xlu0 %v4374, 64
    %v4393 = vpop.permute.xlu0 %4392
    %4394 = vrot.lane.b32.xlu0 %v4377, 64
    %v4395 = vpop.permute.xlu0 %4394
    %s4400 = scalar_lea.vmem %s7, 32
    %4401 = vst.msk [vmem:[%s4400] sm:$0xff] %vm4379, %v4389
    %4402 = vst.msk [vmem:[%s4400 + $0x8] sm:$0xff] %vm4379, %v4391
    %4403 = vst.msk [vmem:[%s4400 + $0x10] sm:$0xff] %vm4379, %v4393
    %4404 = vst.msk [vmem:[%s4400 + $0x18] sm:$0xff] %vm4379, %v4395
    %4421 = vrot.lane.b32.xlu0 %v2354, 96
    %v4422 = vpop.permute.xlu0 %4421
    %4423 = vrot.lane.b32.xlu0 %v2357, 96
    %v4424 = vpop.permute.xlu0 %4423
    %4425 = vrot.lane.b32.xlu0 %v2360, 96
    %v4426 = vpop.permute.xlu0 %4425
    %4427 = vrot.lane.b32.xlu0 %v2363, 96
    %v4428 = vpop.permute.xlu0 %4427
    %4429 = vrot.lane.b32.xlu0 %v2366, 96
    %v4430 = vpop.permute.xlu0 %4429
    %4431 = vrot.lane.b32.xlu0 %v2369, 96
    %v4432 = vpop.permute.xlu0 %4431
    %4433 = vrot.lane.b32.xlu0 %v2372, 96
    %v4434 = vpop.permute.xlu0 %4433
    %4435 = vrot.lane.b32.xlu0 %v2375, 96
    %v4436 = vpop.permute.xlu0 %4435
    %4437 = vrot.lane.b32.xlu0 %v2378, 96
    %v4438 = vpop.permute.xlu0 %4437
    %4439 = vrot.lane.b32.xlu0 %v2381, 96
    %v4440 = vpop.permute.xlu0 %4439
    %4441 = vrot.lane.b32.xlu0 %v2384, 96
    %v4442 = vpop.permute.xlu0 %4441
    %4443 = vrot.lane.b32.xlu0 %v2387, 96
    %v4444 = vpop.permute.xlu0 %4443
    %4445 = vrot.lane.b32.xlu0 %v2390, 96
    %v4446 = vpop.permute.xlu0 %4445
    %4447 = vrot.lane.b32.xlu0 %v2393, 96
    %v4448 = vpop.permute.xlu0 %4447
    %4449 = vrot.lane.b32.xlu0 %v2396, 96
    %v4450 = vpop.permute.xlu0 %4449
    %4451 = vrot.lane.b32.xlu0 %v2399, 96
    %v4452 = vpop.permute.xlu0 %4451
    %v4469 = vmul.f32 %v2159, %v4422
    %v4470 = vmul.f32 %v2162, %v4424
    %v4471 = vmul.f32 %v2165, %v4426
    %v4472 = vmul.f32 %v2168, %v4428
    %v4473 = vmul.f32 %v2171, %v4430
    %v4474 = vmul.f32 %v2174, %v4432
    %v4475 = vmul.f32 %v2177, %v4434
    %v4476 = vmul.f32 %v2180, %v4436
    %v4477 = vmul.f32 %v2183, %v4438
    %v4478 = vmul.f32 %v2186, %v4440
    %v4479 = vmul.f32 %v2189, %v4442
    %v4480 = vmul.f32 %v2192, %v4444
    %v4481 = vmul.f32 %v2195, %v4446
    %v4482 = vmul.f32 %v2198, %v4448
    %v4483 = vmul.f32 %v2201, %v4450
    %v4484 = vmul.f32 %v2204, %v4452
    %4501 = vrot.lane.b32.xlu0 %v4469, 32
    %v4502 = vpop.permute.xlu0 %4501
    %4503 = vrot.lane.b32.xlu0 %v4470, 32
    %v4504 = vpop.permute.xlu0 %4503
    %4505 = vrot.lane.b32.xlu0 %v4471, 32
    %v4506 = vpop.permute.xlu0 %4505
    %4507 = vrot.lane.b32.xlu0 %v4472, 32
    %v4508 = vpop.permute.xlu0 %4507
    %4509 = vrot.lane.b32.xlu0 %v4473, 32
    %v4510 = vpop.permute.xlu0 %4509
    %4511 = vrot.lane.b32.xlu0 %v4474, 32
    %v4512 = vpop.permute.xlu0 %4511
    %4513 = vrot.lane.b32.xlu0 %v4475, 32
    %v4514 = vpop.permute.xlu0 %4513
    %4515 = vrot.lane.b32.xlu0 %v4476, 32
    %v4516 = vpop.permute.xlu0 %4515
    %4517 = vrot.lane.b32.xlu0 %v4477, 32
    %v4518 = vpop.permute.xlu0 %4517
    %4519 = vrot.lane.b32.xlu0 %v4478, 32
    %v4520 = vpop.permute.xlu0 %4519
    %4521 = vrot.lane.b32.xlu0 %v4479, 32
    %v4522 = vpop.permute.xlu0 %4521
    %4523 = vrot.lane.b32.xlu0 %v4480, 32
    %v4524 = vpop.permute.xlu0 %4523
    %4525 = vrot.lane.b32.xlu0 %v4481, 32
    %v4526 = vpop.permute.xlu0 %4525
    %4527 = vrot.lane.b32.xlu0 %v4482, 32
    %v4528 = vpop.permute.xlu0 %4527
    %4529 = vrot.lane.b32.xlu0 %v4483, 32
    %v4530 = vpop.permute.xlu0 %4529
    %4531 = vrot.lane.b32.xlu0 %v4484, 32
    %v4532 = vpop.permute.xlu0 %4531
    %v4549 = vsel %vm73, %v4502, 0.0
    %4550 = vadd.xlane.f32.xlu0 %v4549
    %v4551 = vpop.xlane.xlu0 %4550
    %v4552 = vsel %vm73, %v4504, 0.0
    %4553 = vadd.xlane.f32.xlu0 %v4552
    %v4554 = vpop.xlane.xlu0 %4553
    %v4555 = vsel %vm73, %v4506, 0.0
    %4556 = vadd.xlane.f32.xlu0 %v4555
    %v4557 = vpop.xlane.xlu0 %4556
    %v4558 = vsel %vm73, %v4508, 0.0
    %4559 = vadd.xlane.f32.xlu0 %v4558
    %v4560 = vpop.xlane.xlu0 %4559
    %v4561 = vsel %vm73, %v4510, 0.0
    %4562 = vadd.xlane.f32.xlu0 %v4561
    %v4563 = vpop.xlane.xlu0 %4562
    %v4564 = vsel %vm73, %v4512, 0.0
    %4565 = vadd.xlane.f32.xlu0 %v4564
    %v4566 = vpop.xlane.xlu0 %4565
    %v4567 = vsel %vm73, %v4514, 0.0
    %4568 = vadd.xlane.f32.xlu0 %v4567
    %v4569 = vpop.xlane.xlu0 %4568
    %v4570 = vsel %vm73, %v4516, 0.0
    %4571 = vadd.xlane.f32.xlu0 %v4570
    %v4572 = vpop.xlane.xlu0 %4571
    %v4573 = vsel %vm73, %v4518, 0.0
    %4574 = vadd.xlane.f32.xlu0 %v4573
    %v4575 = vpop.xlane.xlu0 %4574
    %v4576 = vsel %vm73, %v4520, 0.0
    %4577 = vadd.xlane.f32.xlu0 %v4576
    %v4578 = vpop.xlane.xlu0 %4577
    %v4579 = vsel %vm73, %v4522, 0.0
    %4580 = vadd.xlane.f32.xlu0 %v4579
    %v4581 = vpop.xlane.xlu0 %4580
    %v4582 = vsel %vm73, %v4524, 0.0
    %4583 = vadd.xlane.f32.xlu0 %v4582
    %v4584 = vpop.xlane.xlu0 %4583
    %v4585 = vsel %vm73, %v4526, 0.0
    %4586 = vadd.xlane.f32.xlu0 %v4585
    %v4587 = vpop.xlane.xlu0 %4586
    %v4588 = vsel %vm73, %v4528, 0.0
    %4589 = vadd.xlane.f32.xlu0 %v4588
    %v4590 = vpop.xlane.xlu0 %4589
    %v4591 = vsel %vm73, %v4530, 0.0
    %4592 = vadd.xlane.f32.xlu0 %v4591
    %v4593 = vpop.xlane.xlu0 %4592
    %v4594 = vsel %vm73, %v4532, 0.0
    %4595 = vadd.xlane.f32.xlu0 %v4594
    %v4596 = vpop.xlane.xlu0 %4595
    %v4597 = vmul.f32 %v4551, 0.17677669
    %v4598 = vmul.f32 %v4554, 0.17677669
    %v4599 = vmul.f32 %v4557, 0.17677669
    %v4600 = vmul.f32 %v4560, 0.17677669
    %v4601 = vmul.f32 %v4563, 0.17677669
    %v4602 = vmul.f32 %v4566, 0.17677669
    %v4603 = vmul.f32 %v4569, 0.17677669
    %v4604 = vmul.f32 %v4572, 0.17677669
    %v4605 = vmul.f32 %v4575, 0.17677669
    %v4606 = vmul.f32 %v4578, 0.17677669
    %v4607 = vmul.f32 %v4581, 0.17677669
    %v4608 = vmul.f32 %v4584, 0.17677669
    %v4609 = vmul.f32 %v4587, 0.17677669
    %v4610 = vmul.f32 %v4590, 0.17677669
    %v4611 = vmul.f32 %v4593, 0.17677669
    %v4612 = vmul.f32 %v4596, 0.17677669
    %v4613 = vmul.f32 %v2159, %v4438
    %v4614 = vmul.f32 %v2162, %v4440
    %v4615 = vmul.f32 %v2165, %v4442
    %v4616 = vmul.f32 %v2168, %v4444
    %v4617 = vmul.f32 %v2171, %v4446
    %v4618 = vmul.f32 %v2174, %v4448
    %v4619 = vmul.f32 %v2177, %v4450
    %v4620 = vmul.f32 %v2180, %v4452
    %v4621 = vmul.f32 %v2183, %v4422
    %v4622 = vmul.f32 %v2186, %v4424
    %v4623 = vmul.f32 %v2189, %v4426
    %v4624 = vmul.f32 %v2192, %v4428
    %v4625 = vmul.f32 %v2195, %v4430
    %v4626 = vmul.f32 %v2198, %v4432
    %v4627 = vmul.f32 %v2201, %v4434
    %v4628 = vmul.f32 %v2204, %v4436
    %4645 = vrot.lane.b32.xlu0 %v4613, 32
    %v4646 = vpop.permute.xlu0 %4645
    %4647 = vrot.lane.b32.xlu0 %v4614, 32
    %v4648 = vpop.permute.xlu0 %4647
    %4649 = vrot.lane.b32.xlu0 %v4615, 32
    %v4650 = vpop.permute.xlu0 %4649
    %4651 = vrot.lane.b32.xlu0 %v4616, 32
    %v4652 = vpop.permute.xlu0 %4651
    %4653 = vrot.lane.b32.xlu0 %v4617, 32
    %v4654 = vpop.permute.xlu0 %4653
    %4655 = vrot.lane.b32.xlu0 %v4618, 32
    %v4656 = vpop.permute.xlu0 %4655
    %4657 = vrot.lane.b32.xlu0 %v4619, 32
    %v4658 = vpop.permute.xlu0 %4657
    %4659 = vrot.lane.b32.xlu0 %v4620, 32
    %v4660 = vpop.permute.xlu0 %4659
    %4661 = vrot.lane.b32.xlu0 %v4621, 32
    %v4662 = vpop.permute.xlu0 %4661
    %4663 = vrot.lane.b32.xlu0 %v4622, 32
    %v4664 = vpop.permute.xlu0 %4663
    %4665 = vrot.lane.b32.xlu0 %v4623, 32
    %v4666 = vpop.permute.xlu0 %4665
    %4667 = vrot.lane.b32.xlu0 %v4624, 32
    %v4668 = vpop.permute.xlu0 %4667
    %4669 = vrot.lane.b32.xlu0 %v4625, 32
    %v4670 = vpop.permute.xlu0 %4669
    %4671 = vrot.lane.b32.xlu0 %v4626, 32
    %v4672 = vpop.permute.xlu0 %4671
    %4673 = vrot.lane.b32.xlu0 %v4627, 32
    %v4674 = vpop.permute.xlu0 %4673
    %4675 = vrot.lane.b32.xlu0 %v4628, 32
    %v4676 = vpop.permute.xlu0 %4675
    %v4693 = vsel %vm73, %v4646, 0.0
    %4694 = vadd.xlane.f32.xlu0 %v4693
    %v4695 = vpop.xlane.xlu0 %4694
    %v4696 = vsel %vm73, %v4648, 0.0
    %4697 = vadd.xlane.f32.xlu0 %v4696
    %v4698 = vpop.xlane.xlu0 %4697
    %v4699 = vsel %vm73, %v4650, 0.0
    %4700 = vadd.xlane.f32.xlu0 %v4699
    %v4701 = vpop.xlane.xlu0 %4700
    %v4702 = vsel %vm73, %v4652, 0.0
    %4703 = vadd.xlane.f32.xlu0 %v4702
    %v4704 = vpop.xlane.xlu0 %4703
    %v4705 = vsel %vm73, %v4654, 0.0
    %4706 = vadd.xlane.f32.xlu0 %v4705
    %v4707 = vpop.xlane.xlu0 %4706
    %v4708 = vsel %vm73, %v4656, 0.0
    %4709 = vadd.xlane.f32.xlu0 %v4708
    %v4710 = vpop.xlane.xlu0 %4709
    %v4711 = vsel %vm73, %v4658, 0.0
    %4712 = vadd.xlane.f32.xlu0 %v4711
    %v4713 = vpop.xlane.xlu0 %4712
    %v4714 = vsel %vm73, %v4660, 0.0
    %4715 = vadd.xlane.f32.xlu0 %v4714
    %v4716 = vpop.xlane.xlu0 %4715
    %v4717 = vsel %vm73, %v4662, 0.0
    %4718 = vadd.xlane.f32.xlu0 %v4717
    %v4719 = vpop.xlane.xlu0 %4718
    %v4720 = vsel %vm73, %v4664, 0.0
    %4721 = vadd.xlane.f32.xlu0 %v4720
    %v4722 = vpop.xlane.xlu0 %4721
    %v4723 = vsel %vm73, %v4666, 0.0
    %4724 = vadd.xlane.f32.xlu0 %v4723
    %v4725 = vpop.xlane.xlu0 %4724
    %v4726 = vsel %vm73, %v4668, 0.0
    %4727 = vadd.xlane.f32.xlu0 %v4726
    %v4728 = vpop.xlane.xlu0 %4727
    %v4729 = vsel %vm73, %v4670, 0.0
    %4730 = vadd.xlane.f32.xlu0 %v4729
    %v4731 = vpop.xlane.xlu0 %4730
    %v4732 = vsel %vm73, %v4672, 0.0
    %4733 = vadd.xlane.f32.xlu0 %v4732
    %v4734 = vpop.xlane.xlu0 %4733
    %v4735 = vsel %vm73, %v4674, 0.0
    %4736 = vadd.xlane.f32.xlu0 %v4735
    %v4737 = vpop.xlane.xlu0 %4736
    %v4738 = vsel %vm73, %v4676, 0.0
    %4739 = vadd.xlane.f32.xlu0 %v4738
    %v4740 = vpop.xlane.xlu0 %4739
    %v4741 = vmul.f32 %v4695, 0.17677669
    %v4742 = vmul.f32 %v4698, 0.17677669
    %v4743 = vmul.f32 %v4701, 0.17677669
    %v4744 = vmul.f32 %v4704, 0.17677669
    %v4745 = vmul.f32 %v4707, 0.17677669
    %v4746 = vmul.f32 %v4710, 0.17677669
    %v4747 = vmul.f32 %v4713, 0.17677669
    %v4748 = vmul.f32 %v4716, 0.17677669
    %v4749 = vmul.f32 %v4719, 0.17677669
    %v4750 = vmul.f32 %v4722, 0.17677669
    %v4751 = vmul.f32 %v4725, 0.17677669
    %v4752 = vmul.f32 %v4728, 0.17677669
    %v4753 = vmul.f32 %v4731, 0.17677669
    %v4754 = vmul.f32 %v4734, 0.17677669
    %v4755 = vmul.f32 %v4737, 0.17677669
    %v4756 = vmul.f32 %v4740, 0.17677669
    %v4757 = vmax.f32 %v4597, %v4741
    %v4758 = vmax.f32 %v4598, %v4742
    %v4759 = vmax.f32 %v4599, %v4743
    %v4760 = vmax.f32 %v4600, %v4744
    %v4761 = vmax.f32 %v4601, %v4745
    %v4762 = vmax.f32 %v4602, %v4746
    %v4763 = vmax.f32 %v4603, %v4747
    %v4764 = vmax.f32 %v4604, %v4748
    %v4765 = vmax.f32 %v4605, %v4749
    %v4766 = vmax.f32 %v4606, %v4750
    %v4767 = vmax.f32 %v4607, %v4751
    %v4768 = vmax.f32 %v4608, %v4752
    %v4769 = vmax.f32 %v4609, %v4753
    %v4770 = vmax.f32 %v4610, %v4754
    %v4771 = vmax.f32 %v4611, %v4755
    %v4772 = vmax.f32 %v4612, %v4756
    %v4773 = vsub.f32 %v4597, %v4757
    %v4774 = vsub.f32 %v4598, %v4758
    %v4775 = vsub.f32 %v4599, %v4759
    %v4776 = vsub.f32 %v4600, %v4760
    %v4777 = vsub.f32 %v4601, %v4761
    %v4778 = vsub.f32 %v4602, %v4762
    %v4779 = vsub.f32 %v4603, %v4763
    %v4780 = vsub.f32 %v4604, %v4764
    %v4781 = vsub.f32 %v4605, %v4765
    %v4782 = vsub.f32 %v4606, %v4766
    %v4783 = vsub.f32 %v4607, %v4767
    %v4784 = vsub.f32 %v4608, %v4768
    %v4785 = vsub.f32 %v4609, %v4769
    %v4786 = vsub.f32 %v4610, %v4770
    %v4787 = vsub.f32 %v4611, %v4771
    %v4788 = vsub.f32 %v4612, %v4772
    %v4789 = vmul.f32 %v4773, 1.442695
    %v4790 = vpow.pop %v4789
    %v4791 = vmul.f32 %v4774, 1.442695
    %v4792 = vpow.pop %v4791
    %v4793 = vmul.f32 %v4775, 1.442695
    %v4794 = vpow.pop %v4793
    %v4795 = vmul.f32 %v4776, 1.442695
    %v4796 = vpow.pop %v4795
    %v4797 = vmul.f32 %v4777, 1.442695
    %v4798 = vpow.pop %v4797
    %v4799 = vmul.f32 %v4778, 1.442695
    %v4800 = vpow.pop %v4799
    %v4801 = vmul.f32 %v4779, 1.442695
    %v4802 = vpow.pop %v4801
    %v4803 = vmul.f32 %v4780, 1.442695
    %v4804 = vpow.pop %v4803
    %v4805 = vmul.f32 %v4781, 1.442695
    %v4806 = vpow.pop %v4805
    %v4807 = vmul.f32 %v4782, 1.442695
    %v4808 = vpow.pop %v4807
    %v4809 = vmul.f32 %v4783, 1.442695
    %v4810 = vpow.pop %v4809
    %v4811 = vmul.f32 %v4784, 1.442695
    %v4812 = vpow.pop %v4811
    %v4813 = vmul.f32 %v4785, 1.442695
    %v4814 = vpow.pop %v4813
    %v4815 = vmul.f32 %v4786, 1.442695
    %v4816 = vpow.pop %v4815
    %v4817 = vmul.f32 %v4787, 1.442695
    %v4818 = vpow.pop %v4817
    %v4819 = vmul.f32 %v4788, 1.442695
    %v4820 = vpow.pop %v4819
    %v4821 = vsub.f32 %v4741, %v4757
    %v4822 = vsub.f32 %v4742, %v4758
    %v4823 = vsub.f32 %v4743, %v4759
    %v4824 = vsub.f32 %v4744, %v4760
    %v4825 = vsub.f32 %v4745, %v4761
    %v4826 = vsub.f32 %v4746, %v4762
    %v4827 = vsub.f32 %v4747, %v4763
    %v4828 = vsub.f32 %v4748, %v4764
    %v4829 = vsub.f32 %v4749, %v4765
    %v4830 = vsub.f32 %v4750, %v4766
    %v4831 = vsub.f32 %v4751, %v4767
    %v4832 = vsub.f32 %v4752, %v4768
    %v4833 = vsub.f32 %v4753, %v4769
    %v4834 = vsub.f32 %v4754, %v4770
    %v4835 = vsub.f32 %v4755, %v4771
    %v4836 = vsub.f32 %v4756, %v4772
    %v4837 = vmul.f32 %v4821, 1.442695
    %v4838 = vpow.pop %v4837
    %v4839 = vmul.f32 %v4822, 1.442695
    %v4840 = vpow.pop %v4839
    %v4841 = vmul.f32 %v4823, 1.442695
    %v4842 = vpow.pop %v4841
    %v4843 = vmul.f32 %v4824, 1.442695
    %v4844 = vpow.pop %v4843
    %v4845 = vmul.f32 %v4825, 1.442695
    %v4846 = vpow.pop %v4845
    %v4847 = vmul.f32 %v4826, 1.442695
    %v4848 = vpow.pop %v4847
    %v4849 = vmul.f32 %v4827, 1.442695
    %v4850 = vpow.pop %v4849
    %v4851 = vmul.f32 %v4828, 1.442695
    %v4852 = vpow.pop %v4851
    %v4853 = vmul.f32 %v4829, 1.442695
    %v4854 = vpow.pop %v4853
    %v4855 = vmul.f32 %v4830, 1.442695
    %v4856 = vpow.pop %v4855
    %v4857 = vmul.f32 %v4831, 1.442695
    %v4858 = vpow.pop %v4857
    %v4859 = vmul.f32 %v4832, 1.442695
    %v4860 = vpow.pop %v4859
    %v4861 = vmul.f32 %v4833, 1.442695
    %v4862 = vpow.pop %v4861
    %v4863 = vmul.f32 %v4834, 1.442695
    %v4864 = vpow.pop %v4863
    %v4865 = vmul.f32 %v4835, 1.442695
    %v4866 = vpow.pop %v4865
    %v4867 = vmul.f32 %v4836, 1.442695
    %v4868 = vpow.pop %v4867
    %v4869 = vadd.f32 %v4790, %v4838
    %v4870 = vadd.f32 %v4792, %v4840
    %v4871 = vadd.f32 %v4794, %v4842
    %v4872 = vadd.f32 %v4796, %v4844
    %v4873 = vadd.f32 %v4798, %v4846
    %v4874 = vadd.f32 %v4800, %v4848
    %v4875 = vadd.f32 %v4802, %v4850
    %v4876 = vadd.f32 %v4804, %v4852
    %v4877 = vadd.f32 %v4806, %v4854
    %v4878 = vadd.f32 %v4808, %v4856
    %v4879 = vadd.f32 %v4810, %v4858
    %v4880 = vadd.f32 %v4812, %v4860
    %v4881 = vadd.f32 %v4814, %v4862
    %v4882 = vadd.f32 %v4816, %v4864
    %v4883 = vadd.f32 %v4818, %v4866
    %v4884 = vadd.f32 %v4820, %v4868
    %v4885 = vrcp.pop %v4869
    %v4886 = vmul.f32 %v4869, %v4885
    %v4887 = vsub.f32 1.0, %v4886
    %v4888 = vmul.f32 %v4885, %v4887
    %v4889 = vadd.f32 %v4885, %v4888
    %vm4890 = vweird.f32 %v4869
    %vm4891 = vweird.f32 %v4885
    %vm4892 = vmor %vm4890, %vm4891
    %v4893 = vsel %vm4892, %v4885, %v4889
    %v4894 = vand.u32 2147483647, %v4869
    %vm4895 = vcmp.eq.f32.partialorder %v4894, 8.507059e+37
    %v4896 = vand.u32 %v4869, 2147483648
    %v4897 = vor.u32 1.1754944e-38, %v4896
    %v4898 = vsel %vm4895, %v4897, %v4893
    %v4899 = vrcp.pop %v4870
    %v4900 = vmul.f32 %v4870, %v4899
    %v4901 = vsub.f32 1.0, %v4900
    %v4902 = vmul.f32 %v4899, %v4901
    %v4903 = vadd.f32 %v4899, %v4902
    %vm4904 = vweird.f32 %v4870
    %vm4905 = vweird.f32 %v4899
    %vm4906 = vmor %vm4904, %vm4905
    %v4907 = vsel %vm4906, %v4899, %v4903
    %v4908 = vand.u32 2147483647, %v4870
    %vm4909 = vcmp.eq.f32.partialorder %v4908, 8.507059e+37
    %v4910 = vand.u32 %v4870, 2147483648
    %v4911 = vor.u32 1.1754944e-38, %v4910
    %v4912 = vsel %vm4909, %v4911, %v4907
    %v4913 = vrcp.pop %v4871
    %v4914 = vmul.f32 %v4871, %v4913
    %v4915 = vsub.f32 1.0, %v4914
    %v4916 = vmul.f32 %v4913, %v4915
    %v4917 = vadd.f32 %v4913, %v4916
    %vm4918 = vweird.f32 %v4871
    %vm4919 = vweird.f32 %v4913
    %vm4920 = vmor %vm4918, %vm4919
    %v4921 = vsel %vm4920, %v4913, %v4917
    %v4922 = vand.u32 2147483647, %v4871
    %vm4923 = vcmp.eq.f32.partialorder %v4922, 8.507059e+37
    %v4924 = vand.u32 %v4871, 2147483648
    %v4925 = vor.u32 1.1754944e-38, %v4924
    %v4926 = vsel %vm4923, %v4925, %v4921
    %v4927 = vrcp.pop %v4872
    %v4928 = vmul.f32 %v4872, %v4927
    %v4929 = vsub.f32 1.0, %v4928
    %v4930 = vmul.f32 %v4927, %v4929
    %v4931 = vadd.f32 %v4927, %v4930
    %vm4932 = vweird.f32 %v4872
    %vm4933 = vweird.f32 %v4927
    %vm4934 = vmor %vm4932, %vm4933
    %v4935 = vsel %vm4934, %v4927, %v4931
    %v4936 = vand.u32 2147483647, %v4872
    %vm4937 = vcmp.eq.f32.partialorder %v4936, 8.507059e+37
    %v4938 = vand.u32 %v4872, 2147483648
    %v4939 = vor.u32 1.1754944e-38, %v4938
    %v4940 = vsel %vm4937, %v4939, %v4935
    %v4941 = vrcp.pop %v4873
    %v4942 = vmul.f32 %v4873, %v4941
    %v4943 = vsub.f32 1.0, %v4942
    %v4944 = vmul.f32 %v4941, %v4943
    %v4945 = vadd.f32 %v4941, %v4944
    %vm4946 = vweird.f32 %v4873
    %vm4947 = vweird.f32 %v4941
    %vm4948 = vmor %vm4946, %vm4947
    %v4949 = vsel %vm4948, %v4941, %v4945
    %v4950 = vand.u32 2147483647, %v4873
    %vm4951 = vcmp.eq.f32.partialorder %v4950, 8.507059e+37
    %v4952 = vand.u32 %v4873, 2147483648
    %v4953 = vor.u32 1.1754944e-38, %v4952
    %v4954 = vsel %vm4951, %v4953, %v4949
    %v4955 = vrcp.pop %v4874
    %v4956 = vmul.f32 %v4874, %v4955
    %v4957 = vsub.f32 1.0, %v4956
    %v4958 = vmul.f32 %v4955, %v4957
    %v4959 = vadd.f32 %v4955, %v4958
    %vm4960 = vweird.f32 %v4874
    %vm4961 = vweird.f32 %v4955
    %vm4962 = vmor %vm4960, %vm4961
    %v4963 = vsel %vm4962, %v4955, %v4959
    %v4964 = vand.u32 2147483647, %v4874
    %vm4965 = vcmp.eq.f32.partialorder %v4964, 8.507059e+37
    %v4966 = vand.u32 %v4874, 2147483648
    %v4967 = vor.u32 1.1754944e-38, %v4966
    %v4968 = vsel %vm4965, %v4967, %v4963
    %v4969 = vrcp.pop %v4875
    %v4970 = vmul.f32 %v4875, %v4969
    %v4971 = vsub.f32 1.0, %v4970
    %v4972 = vmul.f32 %v4969, %v4971
    %v4973 = vadd.f32 %v4969, %v4972
    %vm4974 = vweird.f32 %v4875
    %vm4975 = vweird.f32 %v4969
    %vm4976 = vmor %vm4974, %vm4975
    %v4977 = vsel %vm4976, %v4969, %v4973
    %v4978 = vand.u32 2147483647, %v4875
    %vm4979 = vcmp.eq.f32.partialorder %v4978, 8.507059e+37
    %v4980 = vand.u32 %v4875, 2147483648
    %v4981 = vor.u32 1.1754944e-38, %v4980
    %v4982 = vsel %vm4979, %v4981, %v4977
    %v4983 = vrcp.pop %v4876
    %v4984 = vmul.f32 %v4876, %v4983
    %v4985 = vsub.f32 1.0, %v4984
    %v4986 = vmul.f32 %v4983, %v4985
    %v4987 = vadd.f32 %v4983, %v4986
    %vm4988 = vweird.f32 %v4876
    %vm4989 = vweird.f32 %v4983
    %vm4990 = vmor %vm4988, %vm4989
    %v4991 = vsel %vm4990, %v4983, %v4987
    %v4992 = vand.u32 2147483647, %v4876
    %vm4993 = vcmp.eq.f32.partialorder %v4992, 8.507059e+37
    %v4994 = vand.u32 %v4876, 2147483648
    %v4995 = vor.u32 1.1754944e-38, %v4994
    %v4996 = vsel %vm4993, %v4995, %v4991
    %v4997 = vrcp.pop %v4877
    %v4998 = vmul.f32 %v4877, %v4997
    %v4999 = vsub.f32 1.0, %v4998
    %v5000 = vmul.f32 %v4997, %v4999
    %v5001 = vadd.f32 %v4997, %v5000
    %vm5002 = vweird.f32 %v4877
    %vm5003 = vweird.f32 %v4997
    %vm5004 = vmor %vm5002, %vm5003
    %v5005 = vsel %vm5004, %v4997, %v5001
    %v5006 = vand.u32 2147483647, %v4877
    %vm5007 = vcmp.eq.f32.partialorder %v5006, 8.507059e+37
    %v5008 = vand.u32 %v4877, 2147483648
    %v5009 = vor.u32 1.1754944e-38, %v5008
    %v5010 = vsel %vm5007, %v5009, %v5005
    %v5011 = vrcp.pop %v4878
    %v5012 = vmul.f32 %v4878, %v5011
    %v5013 = vsub.f32 1.0, %v5012
    %v5014 = vmul.f32 %v5011, %v5013
    %v5015 = vadd.f32 %v5011, %v5014
    %vm5016 = vweird.f32 %v4878
    %vm5017 = vweird.f32 %v5011
    %vm5018 = vmor %vm5016, %vm5017
    %v5019 = vsel %vm5018, %v5011, %v5015
    %v5020 = vand.u32 2147483647, %v4878
    %vm5021 = vcmp.eq.f32.partialorder %v5020, 8.507059e+37
    %v5022 = vand.u32 %v4878, 2147483648
    %v5023 = vor.u32 1.1754944e-38, %v5022
    %v5024 = vsel %vm5021, %v5023, %v5019
    %v5025 = vrcp.pop %v4879
    %v5026 = vmul.f32 %v4879, %v5025
    %v5027 = vsub.f32 1.0, %v5026
    %v5028 = vmul.f32 %v5025, %v5027
    %v5029 = vadd.f32 %v5025, %v5028
    %vm5030 = vweird.f32 %v4879
    %vm5031 = vweird.f32 %v5025
    %vm5032 = vmor %vm5030, %vm5031
    %v5033 = vsel %vm5032, %v5025, %v5029
    %v5034 = vand.u32 2147483647, %v4879
    %vm5035 = vcmp.eq.f32.partialorder %v5034, 8.507059e+37
    %v5036 = vand.u32 %v4879, 2147483648
    %v5037 = vor.u32 1.1754944e-38, %v5036
    %v5038 = vsel %vm5035, %v5037, %v5033
    %v5039 = vrcp.pop %v4880
    %v5040 = vmul.f32 %v4880, %v5039
    %v5041 = vsub.f32 1.0, %v5040
    %v5042 = vmul.f32 %v5039, %v5041
    %v5043 = vadd.f32 %v5039, %v5042
    %vm5044 = vweird.f32 %v4880
    %vm5045 = vweird.f32 %v5039
    %vm5046 = vmor %vm5044, %vm5045
    %v5047 = vsel %vm5046, %v5039, %v5043
    %v5048 = vand.u32 2147483647, %v4880
    %vm5049 = vcmp.eq.f32.partialorder %v5048, 8.507059e+37
    %v5050 = vand.u32 %v4880, 2147483648
    %v5051 = vor.u32 1.1754944e-38, %v5050
    %v5052 = vsel %vm5049, %v5051, %v5047
    %v5053 = vrcp.pop %v4881
    %v5054 = vmul.f32 %v4881, %v5053
    %v5055 = vsub.f32 1.0, %v5054
    %v5056 = vmul.f32 %v5053, %v5055
    %v5057 = vadd.f32 %v5053, %v5056
    %vm5058 = vweird.f32 %v4881
    %vm5059 = vweird.f32 %v5053
    %vm5060 = vmor %vm5058, %vm5059
    %v5061 = vsel %vm5060, %v5053, %v5057
    %v5062 = vand.u32 2147483647, %v4881
    %vm5063 = vcmp.eq.f32.partialorder %v5062, 8.507059e+37
    %v5064 = vand.u32 %v4881, 2147483648
    %v5065 = vor.u32 1.1754944e-38, %v5064
    %v5066 = vsel %vm5063, %v5065, %v5061
    %v5067 = vrcp.pop %v4882
    %v5068 = vmul.f32 %v4882, %v5067
    %v5069 = vsub.f32 1.0, %v5068
    %v5070 = vmul.f32 %v5067, %v5069
    %v5071 = vadd.f32 %v5067, %v5070
    %vm5072 = vweird.f32 %v4882
    %vm5073 = vweird.f32 %v5067
    %vm5074 = vmor %vm5072, %vm5073
    %v5075 = vsel %vm5074, %v5067, %v5071
    %v5076 = vand.u32 2147483647, %v4882
    %vm5077 = vcmp.eq.f32.partialorder %v5076, 8.507059e+37
    %v5078 = vand.u32 %v4882, 2147483648
    %v5079 = vor.u32 1.1754944e-38, %v5078
    %v5080 = vsel %vm5077, %v5079, %v5075
    %v5081 = vrcp.pop %v4883
    %v5082 = vmul.f32 %v4883, %v5081
    %v5083 = vsub.f32 1.0, %v5082
    %v5084 = vmul.f32 %v5081, %v5083
    %v5085 = vadd.f32 %v5081, %v5084
    %vm5086 = vweird.f32 %v4883
    %vm5087 = vweird.f32 %v5081
    %vm5088 = vmor %vm5086, %vm5087
    %v5089 = vsel %vm5088, %v5081, %v5085
    %v5090 = vand.u32 2147483647, %v4883
    %vm5091 = vcmp.eq.f32.partialorder %v5090, 8.507059e+37
    %v5092 = vand.u32 %v4883, 2147483648
    %v5093 = vor.u32 1.1754944e-38, %v5092
    %v5094 = vsel %vm5091, %v5093, %v5089
    %v5095 = vrcp.pop %v4884
    %v5096 = vmul.f32 %v4884, %v5095
    %v5097 = vsub.f32 1.0, %v5096
    %v5098 = vmul.f32 %v5095, %v5097
    %v5099 = vadd.f32 %v5095, %v5098
    %vm5100 = vweird.f32 %v4884
    %vm5101 = vweird.f32 %v5095
    %vm5102 = vmor %vm5100, %vm5101
    %v5103 = vsel %vm5102, %v5095, %v5099
    %v5104 = vand.u32 2147483647, %v4884
    %vm5105 = vcmp.eq.f32.partialorder %v5104, 8.507059e+37
    %v5106 = vand.u32 %v4884, 2147483648
    %v5107 = vor.u32 1.1754944e-38, %v5106
    %v5108 = vsel %vm5105, %v5107, %v5103
    %v5109 = vmul.f32 %v4790, %v4898
    %v5110 = vmul.f32 %v4792, %v4912
    %v5111 = vmul.f32 %v4794, %v4926
    %v5112 = vmul.f32 %v4796, %v4940
    %v5113 = vmul.f32 %v4798, %v4954
    %v5114 = vmul.f32 %v4800, %v4968
    %v5115 = vmul.f32 %v4802, %v4982
    %v5116 = vmul.f32 %v4804, %v4996
    %v5117 = vmul.f32 %v4806, %v5010
    %v5118 = vmul.f32 %v4808, %v5024
    %v5119 = vmul.f32 %v4810, %v5038
    %v5120 = vmul.f32 %v4812, %v5052
    %v5121 = vmul.f32 %v4814, %v5066
    %v5122 = vmul.f32 %v4816, %v5080
    %v5123 = vmul.f32 %v4818, %v5094
    %v5124 = vmul.f32 %v4820, %v5108
    %v5125 = vmul.f32 %v5109, %v2354
    %v5126 = vmul.f32 %v5110, %v2357
    %v5127 = vmul.f32 %v5111, %v2360
    %v5128 = vmul.f32 %v5112, %v2363
    %v5129 = vmul.f32 %v5113, %v2366
    %v5130 = vmul.f32 %v5114, %v2369
    %v5131 = vmul.f32 %v5115, %v2372
    %v5132 = vmul.f32 %v5116, %v2375
    %v5133 = vmul.f32 %v5117, %v2378
    %v5134 = vmul.f32 %v5118, %v2381
    %v5135 = vmul.f32 %v5119, %v2384
    %v5136 = vmul.f32 %v5120, %v2387
    %v5137 = vmul.f32 %v5121, %v2390
    %v5138 = vmul.f32 %v5122, %v2393
    %v5139 = vmul.f32 %v5123, %v2396
    %v5140 = vmul.f32 %v5124, %v2399
    %v5141 = vmul.f32 %v4838, %v4898
    %v5142 = vmul.f32 %v4840, %v4912
    %v5143 = vmul.f32 %v4842, %v4926
    %v5144 = vmul.f32 %v4844, %v4940
    %v5145 = vmul.f32 %v4846, %v4954
    %v5146 = vmul.f32 %v4848, %v4968
    %v5147 = vmul.f32 %v4850, %v4982
    %v5148 = vmul.f32 %v4852, %v4996
    %v5149 = vmul.f32 %v4854, %v5010
    %v5150 = vmul.f32 %v4856, %v5024
    %v5151 = vmul.f32 %v4858, %v5038
    %v5152 = vmul.f32 %v4860, %v5052
    %v5153 = vmul.f32 %v4862, %v5066
    %v5154 = vmul.f32 %v4864, %v5080
    %v5155 = vmul.f32 %v4866, %v5094
    %v5156 = vmul.f32 %v4868, %v5108
    %v5157 = vmul.f32 %v5141, %v2378
    %v5158 = vmul.f32 %v5142, %v2381
    %v5159 = vmul.f32 %v5143, %v2384
    %v5160 = vmul.f32 %v5144, %v2387
    %v5161 = vmul.f32 %v5145, %v2390
    %v5162 = vmul.f32 %v5146, %v2393
    %v5163 = vmul.f32 %v5147, %v2396
    %v5164 = vmul.f32 %v5148, %v2399
    %v5165 = vmul.f32 %v5149, %v2354
    %v5166 = vmul.f32 %v5150, %v2357
    %v5167 = vmul.f32 %v5151, %v2360
    %v5168 = vmul.f32 %v5152, %v2363
    %v5169 = vmul.f32 %v5153, %v2366
    %v5170 = vmul.f32 %v5154, %v2369
    %v5171 = vmul.f32 %v5155, %v2372
    %v5172 = vmul.f32 %v5156, %v2375
    %v5173 = vadd.f32 %v5125, %v5157
    %v5174 = vadd.f32 %v5126, %v5158
    %v5175 = vadd.f32 %v5127, %v5159
    %v5176 = vadd.f32 %v5128, %v5160
    %v5177 = vadd.f32 %v5129, %v5161
    %v5178 = vadd.f32 %v5130, %v5162
    %v5179 = vadd.f32 %v5131, %v5163
    %v5180 = vadd.f32 %v5132, %v5164
    %v5181 = vadd.f32 %v5133, %v5165
    %v5182 = vadd.f32 %v5134, %v5166
    %v5183 = vadd.f32 %v5135, %v5167
    %v5184 = vadd.f32 %v5136, %v5168
    %v5185 = vadd.f32 %v5137, %v5169
    %v5186 = vadd.f32 %v5138, %v5170
    %v5187 = vadd.f32 %v5139, %v5171
    %v5188 = vadd.f32 %v5140, %v5172
    %5197 = vrot.lane.b32.xlu0 %v5173, 96
    %v5198 = vpop.permute.xlu0 %5197
    %5199 = vrot.lane.b32.xlu0 %v5174, 96
    %v5200 = vpop.permute.xlu0 %5199
    %5201 = vrot.lane.b32.xlu0 %v5175, 96
    %v5202 = vpop.permute.xlu0 %5201
    %5203 = vrot.lane.b32.xlu0 %v5176, 96
    %v5204 = vpop.permute.xlu0 %5203
    %5205 = vrot.lane.b32.xlu0 %v5177, 96
    %v5206 = vpop.permute.xlu0 %5205
    %5207 = vrot.lane.b32.xlu0 %v5178, 96
    %v5208 = vpop.permute.xlu0 %5207
    %5209 = vrot.lane.b32.xlu0 %v5179, 96
    %v5210 = vpop.permute.xlu0 %5209
    %5211 = vrot.lane.b32.xlu0 %v5180, 96
    %v5212 = vpop.permute.xlu0 %5211
    %v5221 = vsel %vm73, %v5198, 0.0
    %v5222 = vsel %vm73, %v5200, 0.0
    %v5223 = vadd.f32 %v5221, %v5222
    %v5224 = vsel %vm73, %v5202, 0.0
    %v5225 = vadd.f32 %v5223, %v5224
    %v5226 = vsel %vm73, %v5204, 0.0
    %v5227 = vadd.f32 %v5225, %v5226
    %v5228 = vsel %vm73, %v5206, 0.0
    %v5229 = vadd.f32 %v5227, %v5228
    %v5230 = vsel %vm73, %v5208, 0.0
    %v5231 = vadd.f32 %v5229, %v5230
    %v5232 = vsel %vm73, %v5210, 0.0
    %v5233 = vadd.f32 %v5231, %v5232
    %v5234 = vsel %vm73, %v5212, 0.0
    %v5235 = vadd.f32 %v5233, %v5234
    %5236 = vadd.xlane.f32.xlu0 %v5235
    %v5237 = vpop.xlane.xlu0 %5236
    %v5238 = vrot.slane %v5237, 4
    %v5239 = vadd.f32 %v5237, %v5238
    %v5240 = vrot.slane %v5239, 2
    %v5241 = vadd.f32 %v5239, %v5240
    %v5242 = vrot.slane %v5241, 1
    %v5243 = vadd.f32 %v5241, %v5242
    %s5244 = vtos %v5243
    %s5245 = smul.f32 %s5244, 0.00048828125
    %v5246 = vmul.f32 %v5173, %v5173
    %v5247 = vmul.f32 %v5174, %v5174
    %v5248 = vmul.f32 %v5175, %v5175
    %v5249 = vmul.f32 %v5176, %v5176
    %v5250 = vmul.f32 %v5177, %v5177
    %v5251 = vmul.f32 %v5178, %v5178
    %v5252 = vmul.f32 %v5179, %v5179
    %v5253 = vmul.f32 %v5180, %v5180
    %5262 = vrot.lane.b32.xlu0 %v5246, 96
    %v5263 = vpop.permute.xlu0 %5262
    %5264 = vrot.lane.b32.xlu0 %v5247, 96
    %v5265 = vpop.permute.xlu0 %5264
    %5266 = vrot.lane.b32.xlu0 %v5248, 96
    %v5267 = vpop.permute.xlu0 %5266
    %5268 = vrot.lane.b32.xlu0 %v5249, 96
    %v5269 = vpop.permute.xlu0 %5268
    %5270 = vrot.lane.b32.xlu0 %v5250, 96
    %v5271 = vpop.permute.xlu0 %5270
    %5272 = vrot.lane.b32.xlu0 %v5251, 96
    %v5273 = vpop.permute.xlu0 %5272
    %5274 = vrot.lane.b32.xlu0 %v5252, 96
    %v5275 = vpop.permute.xlu0 %5274
    %5276 = vrot.lane.b32.xlu0 %v5253, 96
    %v5277 = vpop.permute.xlu0 %5276
    %v5286 = vsel %vm73, %v5263, 0.0
    %v5287 = vsel %vm73, %v5265, 0.0
    %v5288 = vadd.f32 %v5286, %v5287
    %v5289 = vsel %vm73, %v5267, 0.0
    %v5290 = vadd.f32 %v5288, %v5289
    %v5291 = vsel %vm73, %v5269, 0.0
    %v5292 = vadd.f32 %v5290, %v5291
    %v5293 = vsel %vm73, %v5271, 0.0
    %v5294 = vadd.f32 %v5292, %v5293
    %v5295 = vsel %vm73, %v5273, 0.0
    %v5296 = vadd.f32 %v5294, %v5295
    %v5297 = vsel %vm73, %v5275, 0.0
    %v5298 = vadd.f32 %v5296, %v5297
    %v5299 = vsel %vm73, %v5277, 0.0
    %v5300 = vadd.f32 %v5298, %v5299
    %5301 = vadd.xlane.f32.xlu0 %v5300
    %v5302 = vpop.xlane.xlu0 %5301
    %v5303 = vrot.slane %v5302, 4
    %v5304 = vadd.f32 %v5302, %v5303
    %v5305 = vrot.slane %v5304, 2
    %v5306 = vadd.f32 %v5304, %v5305
    %v5307 = vrot.slane %v5306, 1
    %v5308 = vadd.f32 %v5306, %v5307
    %s5309 = vtos %v5308
    %s5310 = smul.f32 %s5309, 0.00048828125
    %s5311 = smul.f32 %s5245, %s5245
    %s5312 = ssub.f32 %s5310, %s5311
    %v5313 = vstv %s5245
    %v5314 = vsub.f32 %v5173, %v5313
    %v5315 = vsub.f32 %v5174, %v5313
    %v5316 = vsub.f32 %v5175, %v5313
    %v5317 = vsub.f32 %v5176, %v5313
    %v5318 = vsub.f32 %v5177, %v5313
    %v5319 = vsub.f32 %v5178, %v5313
    %v5320 = vsub.f32 %v5179, %v5313
    %v5321 = vsub.f32 %v5180, %v5313
    %s5322 = sadd.f32 %s5312, 1e-05
    %v5323 = vstv %s5322
    %v5324 = vrsqrt.pop %v5323
    %v5325 = vmul.f32 %v5324, %v5323
    %v5326 = vmul.f32 %v5325, %v5324
    %v5327 = vmul.f32 0.5, %v5326
    %v5328 = vsub.f32 1.5, %v5327
    %v5329 = vmul.f32 %v5324, %v5328
    %vm5330 = vweird.f32 %v5323
    %vm5331 = vweird.f32 %v5324
    %vm5332 = vmor %vm5330, %vm5331
    %v5333 = vsel %vm5332, %v5324, %v5329
    %s5334 = vtos %v5333
    %v5335 = vstv %s5334
    %v5336 = vmul.f32 %v5314, %v5335
    %v5337 = vmul.f32 %v5315, %v5335
    %v5338 = vmul.f32 %v5316, %v5335
    %v5339 = vmul.f32 %v5317, %v5335
    %v5340 = vmul.f32 %v5318, %v5335
    %v5341 = vmul.f32 %v5319, %v5335
    %v5342 = vmul.f32 %v5320, %v5335
    %v5343 = vmul.f32 %v5321, %v5335
    %5344 = vrot.lane.b32.xlu0 %v3215, 32
    %v5345 = vpop.permute.xlu0 %5344
    %v5347 = vmul.f32 %v5336, %v5345
    %v5348 = vmul.f32 %v5337, %v5345
    %v5349 = vmul.f32 %v5338, %v5345
    %v5350 = vmul.f32 %v5339, %v5345
    %v5351 = vmul.f32 %v5340, %v5345
    %v5352 = vmul.f32 %v5341, %v5345
    %v5353 = vmul.f32 %v5342, %v5345
    %v5354 = vmul.f32 %v5343, %v5345
    %5355 = vrot.lane.b32.xlu0 %v3228, 32
    %v5356 = vpop.permute.xlu0 %5355
    %v5358 = vadd.f32 %v5347, %v5356
    %v5359 = vadd.f32 %v5348, %v5356
    %v5360 = vadd.f32 %v5349, %v5356
    %v5361 = vadd.f32 %v5350, %v5356
    %v5362 = vadd.f32 %v5351, %v5356
    %v5363 = vadd.f32 %v5352, %v5356
    %v5364 = vadd.f32 %v5353, %v5356
    %v5365 = vadd.f32 %v5354, %v5356
    %v5366 = vmax.f32 %v5358, 0.0
    %v5367 = vmax.f32 %v5359, 0.0
    %v5368 = vmax.f32 %v5360, 0.0
    %v5369 = vmax.f32 %v5361, 0.0
    %v5370 = vmax.f32 %v5362, 0.0
    %v5371 = vmax.f32 %v5363, 0.0
    %v5372 = vmax.f32 %v5364, 0.0
    %v5373 = vmax.f32 %v5365, 0.0
    %5382 = vrot.lane.b32.xlu0 %v5366, 96
    %v5383 = vpop.permute.xlu0 %5382
    %5384 = vrot.lane.b32.xlu0 %v5367, 96
    %v5385 = vpop.permute.xlu0 %5384
    %5386 = vrot.lane.b32.xlu0 %v5368, 96
    %v5387 = vpop.permute.xlu0 %5386
    %5388 = vrot.lane.b32.xlu0 %v5369, 96
    %v5389 = vpop.permute.xlu0 %5388
    %5390 = vrot.lane.b32.xlu0 %v5370, 96
    %v5391 = vpop.permute.xlu0 %5390
    %5392 = vrot.lane.b32.xlu0 %v5371, 96
    %v5393 = vpop.permute.xlu0 %5392
    %5394 = vrot.lane.b32.xlu0 %v5372, 96
    %v5395 = vpop.permute.xlu0 %5394
    %5396 = vrot.lane.b32.xlu0 %v5373, 96
    %v5397 = vpop.permute.xlu0 %5396
    %5406 = vst.msk [vmem:[%s131 + $0x1] sm:$0xff] %vm73, %v5383
    %5407 = vst.msk [vmem:[%s131 + $0x11] sm:$0xff] %vm73, %v5385
    %5408 = vst.msk [vmem:[%s131 + $0x21] sm:$0xff] %vm73, %v5387
    %5409 = vst.msk [vmem:[%s131 + $0x31] sm:$0xff] %vm73, %v5389
    %5410 = vst.msk [vmem:[%s131 + $0x41] sm:$0xff] %vm73, %v5391
    %5411 = vst.msk [vmem:[%s131 + $0x51] sm:$0xff] %vm73, %v5393
    %5412 = vst.msk [vmem:[%s131 + $0x61] sm:$0xff] %vm73, %v5395
    %5413 = vst.msk [vmem:[%s131 + $0x71] sm:$0xff] %vm73, %v5397
    %5422 = vrot.lane.b32.xlu0 %v5181, 96
    %v5423 = vpop.permute.xlu0 %5422
    %5424 = vrot.lane.b32.xlu0 %v5182, 96
    %v5425 = vpop.permute.xlu0 %5424
    %5426 = vrot.lane.b32.xlu0 %v5183, 96
    %v5427 = vpop.permute.xlu0 %5426
    %5428 = vrot.lane.b32.xlu0 %v5184, 96
    %v5429 = vpop.permute.xlu0 %5428
    %5430 = vrot.lane.b32.xlu0 %v5185, 96
    %v5431 = vpop.permute.xlu0 %5430
    %5432 = vrot.lane.b32.xlu0 %v5186, 96
    %v5433 = vpop.permute.xlu0 %5432
    %5434 = vrot.lane.b32.xlu0 %v5187, 96
    %v5435 = vpop.permute.xlu0 %5434
    %5436 = vrot.lane.b32.xlu0 %v5188, 96
    %v5437 = vpop.permute.xlu0 %5436
    %v5446 = vsel %vm73, %v5423, 0.0
    %v5447 = vsel %vm73, %v5425, 0.0
    %v5448 = vadd.f32 %v5446, %v5447
    %v5449 = vsel %vm73, %v5427, 0.0
    %v5450 = vadd.f32 %v5448, %v5449
    %v5451 = vsel %vm73, %v5429, 0.0
    %v5452 = vadd.f32 %v5450, %v5451
    %v5453 = vsel %vm73, %v5431, 0.0
    %v5454 = vadd.f32 %v5452, %v5453
    %v5455 = vsel %vm73, %v5433, 0.0
    %v5456 = vadd.f32 %v5454, %v5455
    %v5457 = vsel %vm73, %v5435, 0.0
    %v5458 = vadd.f32 %v5456, %v5457
    %v5459 = vsel %vm73, %v5437, 0.0
    %v5460 = vadd.f32 %v5458, %v5459
    %5461 = vadd.xlane.f32.xlu0 %v5460
    %v5462 = vpop.xlane.xlu0 %5461
    %v5463 = vrot.slane %v5462, 4
    %v5464 = vadd.f32 %v5462, %v5463
    %v5465 = vrot.slane %v5464, 2
    %v5466 = vadd.f32 %v5464, %v5465
    %v5467 = vrot.slane %v5466, 1
    %v5468 = vadd.f32 %v5466, %v5467
    %s5469 = vtos %v5468
    %s5470 = smul.f32 %s5469, 0.00048828125
    %v5471 = vmul.f32 %v5181, %v5181
    %v5472 = vmul.f32 %v5182, %v5182
    %v5473 = vmul.f32 %v5183, %v5183
    %v5474 = vmul.f32 %v5184, %v5184
    %v5475 = vmul.f32 %v5185, %v5185
    %v5476 = vmul.f32 %v5186, %v5186
    %v5477 = vmul.f32 %v5187, %v5187
    %v5478 = vmul.f32 %v5188, %v5188
    %5487 = vrot.lane.b32.xlu0 %v5471, 96
    %v5488 = vpop.permute.xlu0 %5487
    %5489 = vrot.lane.b32.xlu0 %v5472, 96
    %v5490 = vpop.permute.xlu0 %5489
    %5491 = vrot.lane.b32.xlu0 %v5473, 96
    %v5492 = vpop.permute.xlu0 %5491
    %5493 = vrot.lane.b32.xlu0 %v5474, 96
    %v5494 = vpop.permute.xlu0 %5493
    %5495 = vrot.lane.b32.xlu0 %v5475, 96
    %v5496 = vpop.permute.xlu0 %5495
    %5497 = vrot.lane.b32.xlu0 %v5476, 96
    %v5498 = vpop.permute.xlu0 %5497
    %5499 = vrot.lane.b32.xlu0 %v5477, 96
    %v5500 = vpop.permute.xlu0 %5499
    %5501 = vrot.lane.b32.xlu0 %v5478, 96
    %v5502 = vpop.permute.xlu0 %5501
    %v5511 = vsel %vm73, %v5488, 0.0
    %v5512 = vsel %vm73, %v5490, 0.0
    %v5513 = vadd.f32 %v5511, %v5512
    %v5514 = vsel %vm73, %v5492, 0.0
    %v5515 = vadd.f32 %v5513, %v5514
    %v5516 = vsel %vm73, %v5494, 0.0
    %v5517 = vadd.f32 %v5515, %v5516
    %v5518 = vsel %vm73, %v5496, 0.0
    %v5519 = vadd.f32 %v5517, %v5518
    %v5520 = vsel %vm73, %v5498, 0.0
    %v5521 = vadd.f32 %v5519, %v5520
    %v5522 = vsel %vm73, %v5500, 0.0
    %v5523 = vadd.f32 %v5521, %v5522
    %v5524 = vsel %vm73, %v5502, 0.0
    %v5525 = vadd.f32 %v5523, %v5524
    %5526 = vadd.xlane.f32.xlu0 %v5525
    %v5527 = vpop.xlane.xlu0 %5526
    %v5528 = vrot.slane %v5527, 4
    %v5529 = vadd.f32 %v5527, %v5528
    %v5530 = vrot.slane %v5529, 2
    %v5531 = vadd.f32 %v5529, %v5530
    %v5532 = vrot.slane %v5531, 1
    %v5533 = vadd.f32 %v5531, %v5532
    %s5534 = vtos %v5533
    %s5535 = smul.f32 %s5534, 0.00048828125
    %s5536 = smul.f32 %s5470, %s5470
    %s5537 = ssub.f32 %s5535, %s5536
    %v5538 = vstv %s5470
    %v5539 = vsub.f32 %v5181, %v5538
    %v5540 = vsub.f32 %v5182, %v5538
    %v5541 = vsub.f32 %v5183, %v5538
    %v5542 = vsub.f32 %v5184, %v5538
    %v5543 = vsub.f32 %v5185, %v5538
    %v5544 = vsub.f32 %v5186, %v5538
    %v5545 = vsub.f32 %v5187, %v5538
    %v5546 = vsub.f32 %v5188, %v5538
    %s5547 = sadd.f32 %s5537, 1e-05
    %v5548 = vstv %s5547
    %v5549 = vrsqrt.pop %v5548
    %v5550 = vmul.f32 %v5549, %v5548
    %v5551 = vmul.f32 %v5550, %v5549
    %v5552 = vmul.f32 0.5, %v5551
    %v5553 = vsub.f32 1.5, %v5552
    %v5554 = vmul.f32 %v5549, %v5553
    %vm5555 = vweird.f32 %v5548
    %vm5556 = vweird.f32 %v5549
    %vm5557 = vmor %vm5555, %vm5556
    %v5558 = vsel %vm5557, %v5549, %v5554
    %s5559 = vtos %v5558
    %v5560 = vstv %s5559
    %v5561 = vmul.f32 %v5539, %v5560
    %v5562 = vmul.f32 %v5540, %v5560
    %v5563 = vmul.f32 %v5541, %v5560
    %v5564 = vmul.f32 %v5542, %v5560
    %v5565 = vmul.f32 %v5543, %v5560
    %v5566 = vmul.f32 %v5544, %v5560
    %v5567 = vmul.f32 %v5545, %v5560
    %v5568 = vmul.f32 %v5546, %v5560
    %v5569 = vmul.f32 %v5561, %v5345
    %v5570 = vmul.f32 %v5562, %v5345
    %v5571 = vmul.f32 %v5563, %v5345
    %v5572 = vmul.f32 %v5564, %v5345
    %v5573 = vmul.f32 %v5565, %v5345
    %v5574 = vmul.f32 %v5566, %v5345
    %v5575 = vmul.f32 %v5567, %v5345
    %v5576 = vmul.f32 %v5568, %v5345
    %v5577 = vadd.f32 %v5569, %v5356
    %v5578 = vadd.f32 %v5570, %v5356
    %v5579 = vadd.f32 %v5571, %v5356
    %v5580 = vadd.f32 %v5572, %v5356
    %v5581 = vadd.f32 %v5573, %v5356
    %v5582 = vadd.f32 %v5574, %v5356
    %v5583 = vadd.f32 %v5575, %v5356
    %v5584 = vadd.f32 %v5576, %v5356
    %v5585 = vmax.f32 %v5577, 0.0
    %v5586 = vmax.f32 %v5578, 0.0
    %v5587 = vmax.f32 %v5579, 0.0
    %v5588 = vmax.f32 %v5580, 0.0
    %v5589 = vmax.f32 %v5581, 0.0
    %v5590 = vmax.f32 %v5582, 0.0
    %v5591 = vmax.f32 %v5583, 0.0
    %v5592 = vmax.f32 %v5584, 0.0
    %5601 = vrot.lane.b32.xlu0 %v5585, 96
    %v5602 = vpop.permute.xlu0 %5601
    %5603 = vrot.lane.b32.xlu0 %v5586, 96
    %v5604 = vpop.permute.xlu0 %5603
    %5605 = vrot.lane.b32.xlu0 %v5587, 96
    %v5606 = vpop.permute.xlu0 %5605
    %5607 = vrot.lane.b32.xlu0 %v5588, 96
    %v5608 = vpop.permute.xlu0 %5607
    %5609 = vrot.lane.b32.xlu0 %v5589, 96
    %v5610 = vpop.permute.xlu0 %5609
    %5611 = vrot.lane.b32.xlu0 %v5590, 96
    %v5612 = vpop.permute.xlu0 %5611
    %5613 = vrot.lane.b32.xlu0 %v5591, 96
    %v5614 = vpop.permute.xlu0 %5613
    %5615 = vrot.lane.b32.xlu0 %v5592, 96
    %v5616 = vpop.permute.xlu0 %5615
    %5625 = vst.msk [vmem:[%s3499 + $0x1] sm:$0xff] %vm73, %v5602
    %5626 = vst.msk [vmem:[%s3499 + $0x11] sm:$0xff] %vm73, %v5604
    %5627 = vst.msk [vmem:[%s3499 + $0x21] sm:$0xff] %vm73, %v5606
    %5628 = vst.msk [vmem:[%s3499 + $0x31] sm:$0xff] %vm73, %v5608
    %5629 = vst.msk [vmem:[%s3499 + $0x41] sm:$0xff] %vm73, %v5610
    %5630 = vst.msk [vmem:[%s3499 + $0x51] sm:$0xff] %vm73, %v5612
    %5631 = vst.msk [vmem:[%s3499 + $0x61] sm:$0xff] %vm73, %v5614
    %5632 = vst.msk [vmem:[%s3499 + $0x71] sm:$0xff] %vm73, %v5616
    %v5633 = vld [vmem:[#allocation2] sm:$0xff]
    %v5634 = vld [vmem:[#allocation2 + $0x8] sm:$0x3]
    %v5635 = vld [vmem:[#allocation2 + $0x10] sm:$0xff]
    %v5636 = vld [vmem:[#allocation2 + $0x18] sm:$0x3]
    %v5637 = vld [vmem:[#allocation2 + $0x20] sm:$0xff]
    %v5638 = vld [vmem:[#allocation2 + $0x28] sm:$0x3]
    %v5639 = vld [vmem:[#allocation2 + $0x30] sm:$0xff]
    %v5640 = vld [vmem:[#allocation2 + $0x38] sm:$0x3]
    %v5641 = vld [vmem:[#allocation2 + $0x40] sm:$0xff]
    %v5642 = vld [vmem:[#allocation2 + $0x48] sm:$0x3]
    %v5643 = vld [vmem:[#allocation2 + $0x50] sm:$0xff]
    %v5644 = vld [vmem:[#allocation2 + $0x58] sm:$0x3]
    %v5645 = vld [vmem:[#allocation2 + $0x60] sm:$0xff]
    %v5646 = vld [vmem:[#allocation2 + $0x68] sm:$0x3]
    %v5647 = vld [vmem:[#allocation2 + $0x70] sm:$0xff]
    %v5648 = vld [vmem:[#allocation2 + $0x78] sm:$0x3]
    %v5649 = vld [vmem:[#allocation2 + $0x80] sm:$0xff]
    %v5650 = vld [vmem:[#allocation2 + $0x88] sm:$0x3]
    %v5651 = vld [vmem:[#allocation2 + $0x90] sm:$0xff]
    %v5652 = vld [vmem:[#allocation2 + $0x98] sm:$0x3]
    %v5653 = vld [vmem:[#allocation2 + $0xa0] sm:$0xff]
    %v5654 = vld [vmem:[#allocation2 + $0xa8] sm:$0x3]
    %v5655 = vld [vmem:[#allocation2 + $0xb0] sm:$0xff]
    %v5656 = vld [vmem:[#allocation2 + $0xb8] sm:$0x3]
    %v5657 = vld [vmem:[#allocation2 + $0xc0] sm:$0xff]
    %v5658 = vld [vmem:[#allocation2 + $0xc8] sm:$0x3]
    %v5659 = vld [vmem:[#allocation2 + $0xd0] sm:$0xff]
    %v5660 = vld [vmem:[#allocation2 + $0xd8] sm:$0x3]
    %v5661 = vld [vmem:[#allocation2 + $0xe0] sm:$0xff]
    %v5662 = vld [vmem:[#allocation2 + $0xe8] sm:$0x3]
    %v5663 = vld [vmem:[#allocation2 + $0xf0] sm:$0xff]
    %v5664 = vld [vmem:[#allocation2 + $0xf8] sm:$0x3]
    %v5665 = vld [vmem:[#allocation2 + $0x100] sm:$0xff]
    %v5666 = vld [vmem:[#allocation2 + $0x108] sm:$0x3]
    %v5667 = vld [vmem:[#allocation2 + $0x110] sm:$0xff]
    %v5668 = vld [vmem:[#allocation2 + $0x118] sm:$0x3]
    %v5669 = vld [vmem:[#allocation2 + $0x120] sm:$0xff]
    %v5670 = vld [vmem:[#allocation2 + $0x128] sm:$0x3]
    %v5671 = vld [vmem:[#allocation2 + $0x130] sm:$0xff]
    %v5672 = vld [vmem:[#allocation2 + $0x138] sm:$0x3]
    %5673 = vst.msk [vmem:[#allocation3] sm:$0xff] %vm73, %v5633
    %5674 = vst.msk [vmem:[#allocation3 + $0x18] sm:$0xff] %vm73, %v5635
    %5675 = vst.msk [vmem:[#allocation3 + $0x30] sm:$0xff] %vm73, %v5637
    %5676 = vst.msk [vmem:[#allocation3 + $0x48] sm:$0xff] %vm73, %v5639
    %5677 = vst.msk [vmem:[#allocation3 + $0x60] sm:$0xff] %vm73, %v5641
    %5678 = vst.msk [vmem:[#allocation3 + $0x78] sm:$0xff] %vm73, %v5643
    %5679 = vst.msk [vmem:[#allocation3 + $0x90] sm:$0xff] %vm73, %v5645
    %5680 = vst.msk [vmem:[#allocation3 + $0xa8] sm:$0xff] %vm73, %v5647
    %5681 = vst.msk [vmem:[#allocation3 + $0xc0] sm:$0xff] %vm73, %v5653
    %5682 = vst.msk [vmem:[#allocation3 + $0xd8] sm:$0xff] %vm73, %v5655
    %5683 = vst.msk [vmem:[#allocation3 + $0xf0] sm:$0xff] %vm73, %v5657
    %5684 = vst.msk [vmem:[#allocation3 + $0x108] sm:$0xff] %vm73, %v5659
    %5685 = vst.msk [vmem:[#allocation3 + $0x120] sm:$0xff] %vm73, %v5661
    %5686 = vst.msk [vmem:[#allocation3 + $0x138] sm:$0xff] %vm73, %v5663
    %5687 = vst.msk [vmem:[#allocation3 + $0x150] sm:$0xff] %vm73, %v5665
    %5688 = vst.msk [vmem:[#allocation3 + $0x168] sm:$0xff] %vm73, %v5667
    %v5721 = vrot.slane %v5633, 1
    %v5722 = vrot.slane %v5634, 1
    %v5723 = vsel %vm237, %v5721, %v5722
    %v5724 = vrot.slane %v5635, 1
    %v5725 = vrot.slane %v5636, 1
    %v5726 = vsel %vm237, %v5724, %v5725
    %v5727 = vrot.slane %v5637, 1
    %v5728 = vrot.slane %v5638, 1
    %v5729 = vsel %vm237, %v5727, %v5728
    %v5730 = vrot.slane %v5639, 1
    %v5731 = vrot.slane %v5640, 1
    %v5732 = vsel %vm237, %v5730, %v5731
    %v5733 = vrot.slane %v5641, 1
    %v5734 = vrot.slane %v5642, 1
    %v5735 = vsel %vm237, %v5733, %v5734
    %v5736 = vrot.slane %v5643, 1
    %v5737 = vrot.slane %v5644, 1
    %v5738 = vsel %vm237, %v5736, %v5737
    %v5739 = vrot.slane %v5645, 1
    %v5740 = vrot.slane %v5646, 1
    %v5741 = vsel %vm237, %v5739, %v5740
    %v5742 = vrot.slane %v5647, 1
    %v5743 = vrot.slane %v5648, 1
    %v5744 = vsel %vm237, %v5742, %v5743
    %v5745 = vrot.slane %v5653, 1
    %v5746 = vrot.slane %v5654, 1
    %v5747 = vsel %vm237, %v5745, %v5746
    %v5748 = vrot.slane %v5655, 1
    %v5749 = vrot.slane %v5656, 1
    %v5750 = vsel %vm237, %v5748, %v5749
    %v5751 = vrot.slane %v5657, 1
    %v5752 = vrot.slane %v5658, 1
    %v5753 = vsel %vm237, %v5751, %v5752
    %v5754 = vrot.slane %v5659, 1
    %v5755 = vrot.slane %v5660, 1
    %v5756 = vsel %vm237, %v5754, %v5755
    %v5757 = vrot.slane %v5661, 1
    %v5758 = vrot.slane %v5662, 1
    %v5759 = vsel %vm237, %v5757, %v5758
    %v5760 = vrot.slane %v5663, 1
    %v5761 = vrot.slane %v5664, 1
    %v5762 = vsel %vm237, %v5760, %v5761
    %v5763 = vrot.slane %v5665, 1
    %v5764 = vrot.slane %v5666, 1
    %v5765 = vsel %vm237, %v5763, %v5764
    %v5766 = vrot.slane %v5667, 1
    %v5767 = vrot.slane %v5668, 1
    %v5768 = vsel %vm237, %v5766, %v5767
    %5769 = vrot.lane.b32.xlu0 %v5723, 32
    %v5770 = vpop.permute.xlu0 %5769
    %5771 = vrot.lane.b32.xlu0 %v5726, 32
    %v5772 = vpop.permute.xlu0 %5771
    %5773 = vrot.lane.b32.xlu0 %v5729, 32
    %v5774 = vpop.permute.xlu0 %5773
    %5775 = vrot.lane.b32.xlu0 %v5732, 32
    %v5776 = vpop.permute.xlu0 %5775
    %5777 = vrot.lane.b32.xlu0 %v5735, 32
    %v5778 = vpop.permute.xlu0 %5777
    %5779 = vrot.lane.b32.xlu0 %v5738, 32
    %v5780 = vpop.permute.xlu0 %5779
    %5781 = vrot.lane.b32.xlu0 %v5741, 32
    %v5782 = vpop.permute.xlu0 %5781
    %5783 = vrot.lane.b32.xlu0 %v5744, 32
    %v5784 = vpop.permute.xlu0 %5783
    %5785 = vrot.lane.b32.xlu0 %v5747, 32
    %v5786 = vpop.permute.xlu0 %5785
    %5787 = vrot.lane.b32.xlu0 %v5750, 32
    %v5788 = vpop.permute.xlu0 %5787
    %5789 = vrot.lane.b32.xlu0 %v5753, 32
    %v5790 = vpop.permute.xlu0 %5789
    %5791 = vrot.lane.b32.xlu0 %v5756, 32
    %v5792 = vpop.permute.xlu0 %5791
    %5793 = vrot.lane.b32.xlu0 %v5759, 32
    %v5794 = vpop.permute.xlu0 %5793
    %5795 = vrot.lane.b32.xlu0 %v5762, 32
    %v5796 = vpop.permute.xlu0 %5795
    %5797 = vrot.lane.b32.xlu0 %v5765, 32
    %v5798 = vpop.permute.xlu0 %5797
    %5799 = vrot.lane.b32.xlu0 %v5768, 32
    %v5800 = vpop.permute.xlu0 %5799
    %5817 = vst.msk [vmem:[#allocation3] sm:$0xff] %vm1360, %v5770
    %5818 = vst.msk [vmem:[#allocation3 + $0x18] sm:$0xff] %vm1360, %v5772
    %5819 = vst.msk [vmem:[#allocation3 + $0x30] sm:$0xff] %vm1360, %v5774
    %5820 = vst.msk [vmem:[#allocation3 + $0x48] sm:$0xff] %vm1360, %v5776
    %5821 = vst.msk [vmem:[#allocation3 + $0x60] sm:$0xff] %vm1360, %v5778
    %5822 = vst.msk [vmem:[#allocation3 + $0x78] sm:$0xff] %vm1360, %v5780
    %5823 = vst.msk [vmem:[#allocation3 + $0x90] sm:$0xff] %vm1360, %v5782
    %5824 = vst.msk [vmem:[#allocation3 + $0xa8] sm:$0xff] %vm1360, %v5784
    %5825 = vst.msk [vmem:[#allocation3 + $0xc0] sm:$0xff] %vm1360, %v5786
    %5826 = vst.msk [vmem:[#allocation3 + $0xd8] sm:$0xff] %vm1360, %v5788
    %5827 = vst.msk [vmem:[#allocation3 + $0xf0] sm:$0xff] %vm1360, %v5790
    %5828 = vst.msk [vmem:[#allocation3 + $0x108] sm:$0xff] %vm1360, %v5792
    %5829 = vst.msk [vmem:[#allocation3 + $0x120] sm:$0xff] %vm1360, %v5794
    %5830 = vst.msk [vmem:[#allocation3 + $0x138] sm:$0xff] %vm1360, %v5796
    %5831 = vst.msk [vmem:[#allocation3 + $0x150] sm:$0xff] %vm1360, %v5798
    %5832 = vst.msk [vmem:[#allocation3 + $0x168] sm:$0xff] %vm1360, %v5800
    %v5833 = vrot.slane %v5633, 2
    %v5834 = vrot.slane %v5634, 2
    %v5835 = vsel %vm351, %v5833, %v5834
    %v5836 = vrot.slane %v5635, 2
    %v5837 = vrot.slane %v5636, 2
    %v5838 = vsel %vm351, %v5836, %v5837
    %v5839 = vrot.slane %v5637, 2
    %v5840 = vrot.slane %v5638, 2
    %v5841 = vsel %vm351, %v5839, %v5840
    %v5842 = vrot.slane %v5639, 2
    %v5843 = vrot.slane %v5640, 2
    %v5844 = vsel %vm351, %v5842, %v5843
    %v5845 = vrot.slane %v5641, 2
    %v5846 = vrot.slane %v5642, 2
    %v5847 = vsel %vm351, %v5845, %v5846
    %v5848 = vrot.slane %v5643, 2
    %v5849 = vrot.slane %v5644, 2
    %v5850 = vsel %vm351, %v5848, %v5849
    %v5851 = vrot.slane %v5645, 2
    %v5852 = vrot.slane %v5646, 2
    %v5853 = vsel %vm351, %v5851, %v5852
    %v5854 = vrot.slane %v5647, 2
    %v5855 = vrot.slane %v5648, 2
    %v5856 = vsel %vm351, %v5854, %v5855
    %v5857 = vrot.slane %v5653, 2
    %v5858 = vrot.slane %v5654, 2
    %v5859 = vsel %vm351, %v5857, %v5858
    %v5860 = vrot.slane %v5655, 2
    %v5861 = vrot.slane %v5656, 2
    %v5862 = vsel %vm351, %v5860, %v5861
    %v5863 = vrot.slane %v5657, 2
    %v5864 = vrot.slane %v5658, 2
    %v5865 = vsel %vm351, %v5863, %v5864
    %v5866 = vrot.slane %v5659, 2
    %v5867 = vrot.slane %v5660, 2
    %v5868 = vsel %vm351, %v5866, %v5867
    %v5869 = vrot.slane %v5661, 2
    %v5870 = vrot.slane %v5662, 2
    %v5871 = vsel %vm351, %v5869, %v5870
    %v5872 = vrot.slane %v5663, 2
    %v5873 = vrot.slane %v5664, 2
    %v5874 = vsel %vm351, %v5872, %v5873
    %v5875 = vrot.slane %v5665, 2
    %v5876 = vrot.slane %v5666, 2
    %v5877 = vsel %vm351, %v5875, %v5876
    %v5878 = vrot.slane %v5667, 2
    %v5879 = vrot.slane %v5668, 2
    %v5880 = vsel %vm351, %v5878, %v5879
    %5881 = vrot.lane.b32.xlu0 %v5835, 64
    %v5882 = vpop.permute.xlu0 %5881
    %5883 = vrot.lane.b32.xlu0 %v5838, 64
    %v5884 = vpop.permute.xlu0 %5883
    %5885 = vrot.lane.b32.xlu0 %v5841, 64
    %v5886 = vpop.permute.xlu0 %5885
    %5887 = vrot.lane.b32.xlu0 %v5844, 64
    %v5888 = vpop.permute.xlu0 %5887
    %5889 = vrot.lane.b32.xlu0 %v5847, 64
    %v5890 = vpop.permute.xlu0 %5889
    %5891 = vrot.lane.b32.xlu0 %v5850, 64
    %v5892 = vpop.permute.xlu0 %5891
    %5893 = vrot.lane.b32.xlu0 %v5853, 64
    %v5894 = vpop.permute.xlu0 %5893
    %5895 = vrot.lane.b32.xlu0 %v5856, 64
    %v5896 = vpop.permute.xlu0 %5895
    %5897 = vrot.lane.b32.xlu0 %v5859, 64
    %v5898 = vpop.permute.xlu0 %5897
    %5899 = vrot.lane.b32.xlu0 %v5862, 64
    %v5900 = vpop.permute.xlu0 %5899
    %5901 = vrot.lane.b32.xlu0 %v5865, 64
    %v5902 = vpop.permute.xlu0 %5901
    %5903 = vrot.lane.b32.xlu0 %v5868, 64
    %v5904 = vpop.permute.xlu0 %5903
    %5905 = vrot.lane.b32.xlu0 %v5871, 64
    %v5906 = vpop.permute.xlu0 %5905
    %5907 = vrot.lane.b32.xlu0 %v5874, 64
    %v5908 = vpop.permute.xlu0 %5907
    %5909 = vrot.lane.b32.xlu0 %v5877, 64
    %v5910 = vpop.permute.xlu0 %5909
    %5911 = vrot.lane.b32.xlu0 %v5880, 64
    %v5912 = vpop.permute.xlu0 %5911
    %5929 = vst.msk [vmem:[#allocation3] sm:$0xff] %vm1473, %v5882
    %5930 = vst.msk [vmem:[#allocation3 + $0x18] sm:$0xff] %vm1473, %v5884
    %5931 = vst.msk [vmem:[#allocation3 + $0x30] sm:$0xff] %vm1473, %v5886
    %5932 = vst.msk [vmem:[#allocation3 + $0x48] sm:$0xff] %vm1473, %v5888
    %5933 = vst.msk [vmem:[#allocation3 + $0x60] sm:$0xff] %vm1473, %v5890
    %5934 = vst.msk [vmem:[#allocation3 + $0x78] sm:$0xff] %vm1473, %v5892
    %5935 = vst.msk [vmem:[#allocation3 + $0x90] sm:$0xff] %vm1473, %v5894
    %5936 = vst.msk [vmem:[#allocation3 + $0xa8] sm:$0xff] %vm1473, %v5896
    %5937 = vst.msk [vmem:[#allocation3 + $0xc0] sm:$0xff] %vm1473, %v5898
    %5938 = vst.msk [vmem:[#allocation3 + $0xd8] sm:$0xff] %vm1473, %v5900
    %5939 = vst.msk [vmem:[#allocation3 + $0xf0] sm:$0xff] %vm1473, %v5902
    %5940 = vst.msk [vmem:[#allocation3 + $0x108] sm:$0xff] %vm1473, %v5904
    %5941 = vst.msk [vmem:[#allocation3 + $0x120] sm:$0xff] %vm1473, %v5906
    %5942 = vst.msk [vmem:[#allocation3 + $0x138] sm:$0xff] %vm1473, %v5908
    %5943 = vst.msk [vmem:[#allocation3 + $0x150] sm:$0xff] %vm1473, %v5910
    %5944 = vst.msk [vmem:[#allocation3 + $0x168] sm:$0xff] %vm1473, %v5912
    %5947 = vrot.lane.b32.xlu0 %v5635, 96
    %v5948 = vpop.permute.xlu0 %5947
    %5949 = vrot.lane.b32.xlu0 %v5637, 96
    %v5950 = vpop.permute.xlu0 %5949
    %5951 = vrot.lane.b32.xlu0 %v5639, 96
    %v5952 = vpop.permute.xlu0 %5951
    %5953 = vrot.lane.b32.xlu0 %v5641, 96
    %v5954 = vpop.permute.xlu0 %5953
    %5955 = vrot.lane.b32.xlu0 %v5643, 96
    %v5956 = vpop.permute.xlu0 %5955
    %5957 = vrot.lane.b32.xlu0 %v5645, 96
    %v5958 = vpop.permute.xlu0 %5957
    %5959 = vrot.lane.b32.xlu0 %v5647, 96
    %v5960 = vpop.permute.xlu0 %5959
    %5961 = vrot.lane.b32.xlu0 %v5649, 96
    %v5962 = vpop.permute.xlu0 %5961
    %5963 = vrot.lane.b32.xlu0 %v5655, 96
    %v5964 = vpop.permute.xlu0 %5963
    %5965 = vrot.lane.b32.xlu0 %v5657, 96
    %v5966 = vpop.permute.xlu0 %5965
    %5967 = vrot.lane.b32.xlu0 %v5659, 96
    %v5968 = vpop.permute.xlu0 %5967
    %5969 = vrot.lane.b32.xlu0 %v5661, 96
    %v5970 = vpop.permute.xlu0 %5969
    %5971 = vrot.lane.b32.xlu0 %v5663, 96
    %v5972 = vpop.permute.xlu0 %5971
    %5973 = vrot.lane.b32.xlu0 %v5665, 96
    %v5974 = vpop.permute.xlu0 %5973
    %5975 = vrot.lane.b32.xlu0 %v5667, 96
    %v5976 = vpop.permute.xlu0 %5975
    %5977 = vrot.lane.b32.xlu0 %v5669, 96
    %v5978 = vpop.permute.xlu0 %5977
    %5995 = vst.msk [vmem:[#allocation3] sm:$0xff] %vm1540, %v5948
    %5996 = vst.msk [vmem:[#allocation3 + $0x18] sm:$0xff] %vm1540, %v5950
    %5997 = vst.msk [vmem:[#allocation3 + $0x30] sm:$0xff] %vm1540, %v5952
    %5998 = vst.msk [vmem:[#allocation3 + $0x48] sm:$0xff] %vm1540, %v5954
    %5999 = vst.msk [vmem:[#allocation3 + $0x60] sm:$0xff] %vm1540, %v5956
    %6000 = vst.msk [vmem:[#allocation3 + $0x78] sm:$0xff] %vm1540, %v5958
    %6001 = vst.msk [vmem:[#allocation3 + $0x90] sm:$0xff] %vm1540, %v5960
    %6002 = vst.msk [vmem:[#allocation3 + $0xa8] sm:$0xff] %vm1540, %v5962
    %6003 = vst.msk [vmem:[#allocation3 + $0xc0] sm:$0xff] %vm1540, %v5964
    %6004 = vst.msk [vmem:[#allocation3 + $0xd8] sm:$0xff] %vm1540, %v5966
    %6005 = vst.msk [vmem:[#allocation3 + $0xf0] sm:$0xff] %vm1540, %v5968
    %6006 = vst.msk [vmem:[#allocation3 + $0x108] sm:$0xff] %vm1540, %v5970
    %6007 = vst.msk [vmem:[#allocation3 + $0x120] sm:$0xff] %vm1540, %v5972
    %6008 = vst.msk [vmem:[#allocation3 + $0x138] sm:$0xff] %vm1540, %v5974
    %6009 = vst.msk [vmem:[#allocation3 + $0x150] sm:$0xff] %vm1540, %v5976
    %6010 = vst.msk [vmem:[#allocation3 + $0x168] sm:$0xff] %vm1540, %v5978
    %v6013 = vrot.slane %v5649, 1
    %v6014 = vrot.slane %v5650, 1
    %v6015 = vsel %vm237, %v6013, %v6014
    %v6016 = vrot.slane %v5669, 1
    %v6017 = vrot.slane %v5670, 1
    %v6018 = vsel %vm237, %v6016, %v6017
    %6035 = vst.msk [vmem:[#allocation3 + $0x8] sm:$0xff] %vm73, %v5726
    %6036 = vst.msk [vmem:[#allocation3 + $0x20] sm:$0xff] %vm73, %v5729
    %6037 = vst.msk [vmem:[#allocation3 + $0x38] sm:$0xff] %vm73, %v5732
    %6038 = vst.msk [vmem:[#allocation3 + $0x50] sm:$0xff] %vm73, %v5735
    %6039 = vst.msk [vmem:[#allocation3 + $0x68] sm:$0xff] %vm73, %v5738
    %6040 = vst.msk [vmem:[#allocation3 + $0x80] sm:$0xff] %vm73, %v5741
    %6041 = vst.msk [vmem:[#allocation3 + $0x98] sm:$0xff] %vm73, %v5744
    %6042 = vst.msk [vmem:[#allocation3 + $0xb0] sm:$0xff] %vm73, %v6015
    %6043 = vst.msk [vmem:[#allocation3 + $0xc8] sm:$0xff] %vm73, %v5750
    %6044 = vst.msk [vmem:[#allocation3 + $0xe0] sm:$0xff] %vm73, %v5753
    %6045 = vst.msk [vmem:[#allocation3 + $0xf8] sm:$0xff] %vm73, %v5756
    %6046 = vst.msk [vmem:[#allocation3 + $0x110] sm:$0xff] %vm73, %v5759
    %6047 = vst.msk [vmem:[#allocation3 + $0x128] sm:$0xff] %vm73, %v5762
    %6048 = vst.msk [vmem:[#allocation3 + $0x140] sm:$0xff] %vm73, %v5765
    %6049 = vst.msk [vmem:[#allocation3 + $0x158] sm:$0xff] %vm73, %v5768
    %6050 = vst.msk [vmem:[#allocation3 + $0x170] sm:$0xff] %vm73, %v6018
    %v6051 = vrot.slane %v5649, 2
    %v6052 = vrot.slane %v5650, 2
    %v6053 = vsel %vm351, %v6051, %v6052
    %v6054 = vrot.slane %v5669, 2
    %v6055 = vrot.slane %v5670, 2
    %v6056 = vsel %vm351, %v6054, %v6055
    %6057 = vrot.lane.b32.xlu0 %v5838, 32
    %v6058 = vpop.permute.xlu0 %6057
    %6059 = vrot.lane.b32.xlu0 %v5841, 32
    %v6060 = vpop.permute.xlu0 %6059
    %6061 = vrot.lane.b32.xlu0 %v5844, 32
    %v6062 = vpop.permute.xlu0 %6061
    %6063 = vrot.lane.b32.xlu0 %v5847, 32
    %v6064 = vpop.permute.xlu0 %6063
    %6065 = vrot.lane.b32.xlu0 %v5850, 32
    %v6066 = vpop.permute.xlu0 %6065
    %6067 = vrot.lane.b32.xlu0 %v5853, 32
    %v6068 = vpop.permute.xlu0 %6067
    %6069 = vrot.lane.b32.xlu0 %v5856, 32
    %v6070 = vpop.permute.xlu0 %6069
    %6071 = vrot.lane.b32.xlu0 %v6053, 32
    %v6072 = vpop.permute.xlu0 %6071
    %6073 = vrot.lane.b32.xlu0 %v5862, 32
    %v6074 = vpop.permute.xlu0 %6073
    %6075 = vrot.lane.b32.xlu0 %v5865, 32
    %v6076 = vpop.permute.xlu0 %6075
    %6077 = vrot.lane.b32.xlu0 %v5868, 32
    %v6078 = vpop.permute.xlu0 %6077
    %6079 = vrot.lane.b32.xlu0 %v5871, 32
    %v6080 = vpop.permute.xlu0 %6079
    %6081 = vrot.lane.b32.xlu0 %v5874, 32
    %v6082 = vpop.permute.xlu0 %6081
    %6083 = vrot.lane.b32.xlu0 %v5877, 32
    %v6084 = vpop.permute.xlu0 %6083
    %6085 = vrot.lane.b32.xlu0 %v5880, 32
    %v6086 = vpop.permute.xlu0 %6085
    %6087 = vrot.lane.b32.xlu0 %v6056, 32
    %v6088 = vpop.permute.xlu0 %6087
    %6105 = vst.msk [vmem:[#allocation3 + $0x8] sm:$0xff] %vm1360, %v6058
    %6106 = vst.msk [vmem:[#allocation3 + $0x20] sm:$0xff] %vm1360, %v6060
    %6107 = vst.msk [vmem:[#allocation3 + $0x38] sm:$0xff] %vm1360, %v6062
    %6108 = vst.msk [vmem:[#allocation3 + $0x50] sm:$0xff] %vm1360, %v6064
    %6109 = vst.msk [vmem:[#allocation3 + $0x68] sm:$0xff] %vm1360, %v6066
    %6110 = vst.msk [vmem:[#allocation3 + $0x80] sm:$0xff] %vm1360, %v6068
    %6111 = vst.msk [vmem:[#allocation3 + $0x98] sm:$0xff] %vm1360, %v6070
    %6112 = vst.msk [vmem:[#allocation3 + $0xb0] sm:$0xff] %vm1360, %v6072
    %6113 = vst.msk [vmem:[#allocation3 + $0xc8] sm:$0xff] %vm1360, %v6074
    %6114 = vst.msk [vmem:[#allocation3 + $0xe0] sm:$0xff] %vm1360, %v6076
    %6115 = vst.msk [vmem:[#allocation3 + $0xf8] sm:$0xff] %vm1360, %v6078
    %6116 = vst.msk [vmem:[#allocation3 + $0x110] sm:$0xff] %vm1360, %v6080
    %6117 = vst.msk [vmem:[#allocation3 + $0x128] sm:$0xff] %vm1360, %v6082
    %6118 = vst.msk [vmem:[#allocation3 + $0x140] sm:$0xff] %vm1360, %v6084
    %6119 = vst.msk [vmem:[#allocation3 + $0x158] sm:$0xff] %vm1360, %v6086
    %6120 = vst.msk [vmem:[#allocation3 + $0x170] sm:$0xff] %vm1360, %v6088
    %6123 = vrot.lane.b32.xlu0 %v5637, 64
    %v6124 = vpop.permute.xlu0 %6123
    %6125 = vrot.lane.b32.xlu0 %v5639, 64
    %v6126 = vpop.permute.xlu0 %6125
    %6127 = vrot.lane.b32.xlu0 %v5641, 64
    %v6128 = vpop.permute.xlu0 %6127
    %6129 = vrot.lane.b32.xlu0 %v5643, 64
    %v6130 = vpop.permute.xlu0 %6129
    %6131 = vrot.lane.b32.xlu0 %v5645, 64
    %v6132 = vpop.permute.xlu0 %6131
    %6133 = vrot.lane.b32.xlu0 %v5647, 64
    %v6134 = vpop.permute.xlu0 %6133
    %6135 = vrot.lane.b32.xlu0 %v5649, 64
    %v6136 = vpop.permute.xlu0 %6135
    %6137 = vrot.lane.b32.xlu0 %v5651, 64
    %v6138 = vpop.permute.xlu0 %6137
    %6139 = vrot.lane.b32.xlu0 %v5657, 64
    %v6140 = vpop.permute.xlu0 %6139
    %6141 = vrot.lane.b32.xlu0 %v5659, 64
    %v6142 = vpop.permute.xlu0 %6141
    %6143 = vrot.lane.b32.xlu0 %v5661, 64
    %v6144 = vpop.permute.xlu0 %6143
    %6145 = vrot.lane.b32.xlu0 %v5663, 64
    %v6146 = vpop.permute.xlu0 %6145
    %6147 = vrot.lane.b32.xlu0 %v5665, 64
    %v6148 = vpop.permute.xlu0 %6147
    %6149 = vrot.lane.b32.xlu0 %v5667, 64
    %v6150 = vpop.permute.xlu0 %6149
    %6151 = vrot.lane.b32.xlu0 %v5669, 64
    %v6152 = vpop.permute.xlu0 %6151
    %6153 = vrot.lane.b32.xlu0 %v5671, 64
    %v6154 = vpop.permute.xlu0 %6153
    %6171 = vst.msk [vmem:[#allocation3 + $0x8] sm:$0xff] %vm1473, %v6124
    %6172 = vst.msk [vmem:[#allocation3 + $0x20] sm:$0xff] %vm1473, %v6126
    %6173 = vst.msk [vmem:[#allocation3 + $0x38] sm:$0xff] %vm1473, %v6128
    %6174 = vst.msk [vmem:[#allocation3 + $0x50] sm:$0xff] %vm1473, %v6130
    %6175 = vst.msk [vmem:[#allocation3 + $0x68] sm:$0xff] %vm1473, %v6132
    %6176 = vst.msk [vmem:[#allocation3 + $0x80] sm:$0xff] %vm1473, %v6134
    %6177 = vst.msk [vmem:[#allocation3 + $0x98] sm:$0xff] %vm1473, %v6136
    %6178 = vst.msk [vmem:[#allocation3 + $0xb0] sm:$0xff] %vm1473, %v6138
    %6179 = vst.msk [vmem:[#allocation3 + $0xc8] sm:$0xff] %vm1473, %v6140
    %6180 = vst.msk [vmem:[#allocation3 + $0xe0] sm:$0xff] %vm1473, %v6142
    %6181 = vst.msk [vmem:[#allocation3 + $0xf8] sm:$0xff] %vm1473, %v6144
    %6182 = vst.msk [vmem:[#allocation3 + $0x110] sm:$0xff] %vm1473, %v6146
    %6183 = vst.msk [vmem:[#allocation3 + $0x128] sm:$0xff] %vm1473, %v6148
    %6184 = vst.msk [vmem:[#allocation3 + $0x140] sm:$0xff] %vm1473, %v6150
    %6185 = vst.msk [vmem:[#allocation3 + $0x158] sm:$0xff] %vm1473, %v6152
    %6186 = vst.msk [vmem:[#allocation3 + $0x170] sm:$0xff] %vm1473, %v6154
    %v6189 = vrot.slane %v5651, 1
    %v6190 = vrot.slane %v5652, 1
    %v6191 = vsel %vm237, %v6189, %v6190
    %v6192 = vrot.slane %v5671, 1
    %v6193 = vrot.slane %v5672, 1
    %v6194 = vsel %vm237, %v6192, %v6193
    %6195 = vrot.lane.b32.xlu0 %v5729, 96
    %v6196 = vpop.permute.xlu0 %6195
    %6197 = vrot.lane.b32.xlu0 %v5732, 96
    %v6198 = vpop.permute.xlu0 %6197
    %6199 = vrot.lane.b32.xlu0 %v5735, 96
    %v6200 = vpop.permute.xlu0 %6199
    %6201 = vrot.lane.b32.xlu0 %v5738, 96
    %v6202 = vpop.permute.xlu0 %6201
    %6203 = vrot.lane.b32.xlu0 %v5741, 96
    %v6204 = vpop.permute.xlu0 %6203
    %6205 = vrot.lane.b32.xlu0 %v5744, 96
    %v6206 = vpop.permute.xlu0 %6205
    %6207 = vrot.lane.b32.xlu0 %v6015, 96
    %v6208 = vpop.permute.xlu0 %6207
    %6209 = vrot.lane.b32.xlu0 %v6191, 96
    %v6210 = vpop.permute.xlu0 %6209
    %6211 = vrot.lane.b32.xlu0 %v5753, 96
    %v6212 = vpop.permute.xlu0 %6211
    %6213 = vrot.lane.b32.xlu0 %v5756, 96
    %v6214 = vpop.permute.xlu0 %6213
    %6215 = vrot.lane.b32.xlu0 %v5759, 96
    %v6216 = vpop.permute.xlu0 %6215
    %6217 = vrot.lane.b32.xlu0 %v5762, 96
    %v6218 = vpop.permute.xlu0 %6217
    %6219 = vrot.lane.b32.xlu0 %v5765, 96
    %v6220 = vpop.permute.xlu0 %6219
    %6221 = vrot.lane.b32.xlu0 %v5768, 96
    %v6222 = vpop.permute.xlu0 %6221
    %6223 = vrot.lane.b32.xlu0 %v6018, 96
    %v6224 = vpop.permute.xlu0 %6223
    %6225 = vrot.lane.b32.xlu0 %v6194, 96
    %v6226 = vpop.permute.xlu0 %6225
    %6243 = vst.msk [vmem:[#allocation3 + $0x8] sm:$0xff] %vm1540, %v6196
    %6244 = vst.msk [vmem:[#allocation3 + $0x20] sm:$0xff] %vm1540, %v6198
    %6245 = vst.msk [vmem:[#allocation3 + $0x38] sm:$0xff] %vm1540, %v6200
    %6246 = vst.msk [vmem:[#allocation3 + $0x50] sm:$0xff] %vm1540, %v6202
    %6247 = vst.msk [vmem:[#allocation3 + $0x68] sm:$0xff] %vm1540, %v6204
    %6248 = vst.msk [vmem:[#allocation3 + $0x80] sm:$0xff] %vm1540, %v6206
    %6249 = vst.msk [vmem:[#allocation3 + $0x98] sm:$0xff] %vm1540, %v6208
    %6250 = vst.msk [vmem:[#allocation3 + $0xb0] sm:$0xff] %vm1540, %v6210
    %6251 = vst.msk [vmem:[#allocation3 + $0xc8] sm:$0xff] %vm1540, %v6212
    %6252 = vst.msk [vmem:[#allocation3 + $0xe0] sm:$0xff] %vm1540, %v6214
    %6253 = vst.msk [vmem:[#allocation3 + $0xf8] sm:$0xff] %vm1540, %v6216
    %6254 = vst.msk [vmem:[#allocation3 + $0x110] sm:$0xff] %vm1540, %v6218
    %6255 = vst.msk [vmem:[#allocation3 + $0x128] sm:$0xff] %vm1540, %v6220
    %6256 = vst.msk [vmem:[#allocation3 + $0x140] sm:$0xff] %vm1540, %v6222
    %6257 = vst.msk [vmem:[#allocation3 + $0x158] sm:$0xff] %vm1540, %v6224
    %6258 = vst.msk [vmem:[#allocation3 + $0x170] sm:$0xff] %vm1540, %v6226
    %v6259 = vrot.slane %v5651, 2
    %v6260 = vrot.slane %v5652, 2
    %v6261 = vsel %vm351, %v6259, %v6260
    %v6262 = vrot.slane %v5671, 2
    %v6263 = vrot.slane %v5672, 2
    %v6264 = vsel %vm351, %v6262, %v6263
    %6281 = vst.msk [vmem:[#allocation3 + $0x10] sm:$0xff] %vm73, %v5841
    %6282 = vst.msk [vmem:[#allocation3 + $0x28] sm:$0xff] %vm73, %v5844
    %6283 = vst.msk [vmem:[#allocation3 + $0x40] sm:$0xff] %vm73, %v5847
    %6284 = vst.msk [vmem:[#allocation3 + $0x58] sm:$0xff] %vm73, %v5850
    %6285 = vst.msk [vmem:[#allocation3 + $0x70] sm:$0xff] %vm73, %v5853
    %6286 = vst.msk [vmem:[#allocation3 + $0x88] sm:$0xff] %vm73, %v5856
    %6287 = vst.msk [vmem:[#allocation3 + $0xa0] sm:$0xff] %vm73, %v6053
    %6288 = vst.msk [vmem:[#allocation3 + $0xb8] sm:$0xff] %vm73, %v6261
    %6289 = vst.msk [vmem:[#allocation3 + $0xd0] sm:$0xff] %vm73, %v5865
    %6290 = vst.msk [vmem:[#allocation3 + $0xe8] sm:$0xff] %vm73, %v5868
    %6291 = vst.msk [vmem:[#allocation3 + $0x100] sm:$0xff] %vm73, %v5871
    %6292 = vst.msk [vmem:[#allocation3 + $0x118] sm:$0xff] %vm73, %v5874
    %6293 = vst.msk [vmem:[#allocation3 + $0x130] sm:$0xff] %vm73, %v5877
    %6294 = vst.msk [vmem:[#allocation3 + $0x148] sm:$0xff] %vm73, %v5880
    %6295 = vst.msk [vmem:[#allocation3 + $0x160] sm:$0xff] %vm73, %v6056
    %6296 = vst.msk [vmem:[#allocation3 + $0x178] sm:$0xff] %vm73, %v6264
    %s6297 = scalar_lea.vmem %s4, 96
    %v6298 = vld [vmem:[%s6297] sm:$0xff]
    %v6299 = vld [vmem:[%s6297 + $0x8] sm:$0xff]
    %v6300 = vld [vmem:[%s6297 + $0x10] sm:$0xff]
    %v6301 = vld [vmem:[%s6297 + $0x18] sm:$0xff]
    %v6302 = vld [vmem:[%s6297 + $0x20] sm:$0xff]
    %v6303 = vld [vmem:[%s6297 + $0x28] sm:$0xff]
    %v6304 = vld [vmem:[%s6297 + $0x30] sm:$0xff]
    %v6305 = vld [vmem:[%s6297 + $0x38] sm:$0xff]
    %v6306 = vld [vmem:[%s6297 + $0x40] sm:$0xff]
    %v6307 = vld [vmem:[%s6297 + $0x48] sm:$0xff]
    %v6308 = vld [vmem:[%s6297 + $0x50] sm:$0xff]
    %v6309 = vld [vmem:[%s6297 + $0x58] sm:$0xff]
    %v6310 = vld [vmem:[#allocation3] sm:$0xff]
    %v6311 = vld [vmem:[#allocation3 + $0x8] sm:$0xff]
    %v6312 = vld [vmem:[#allocation3 + $0x10] sm:$0xff]
    %v6313 = vld [vmem:[#allocation3 + $0x18] sm:$0xff]
    %v6314 = vld [vmem:[#allocation3 + $0x20] sm:$0xff]
    %v6315 = vld [vmem:[#allocation3 + $0x28] sm:$0xff]
    %v6316 = vld [vmem:[#allocation3 + $0x30] sm:$0xff]
    %v6317 = vld [vmem:[#allocation3 + $0x38] sm:$0xff]
    %v6318 = vld [vmem:[#allocation3 + $0x40] sm:$0xff]
    %v6319 = vld [vmem:[#allocation3 + $0x48] sm:$0xff]
    %v6320 = vld [vmem:[#allocation3 + $0x50] sm:$0xff]
    %v6321 = vld [vmem:[#allocation3 + $0x58] sm:$0xff]
    %v6322 = vld [vmem:[#allocation3 + $0x60] sm:$0xff]
    %v6323 = vld [vmem:[#allocation3 + $0x68] sm:$0xff]
    %v6324 = vld [vmem:[#allocation3 + $0x70] sm:$0xff]
    %v6325 = vld [vmem:[#allocation3 + $0x78] sm:$0xff]
    %v6326 = vld [vmem:[#allocation3 + $0x80] sm:$0xff]
    %v6327 = vld [vmem:[#allocation3 + $0x88] sm:$0xff]
    %v6328 = vld [vmem:[#allocation3 + $0x90] sm:$0xff]
    %v6329 = vld [vmem:[#allocation3 + $0x98] sm:$0xff]
    %v6330 = vld [vmem:[#allocation3 + $0xa0] sm:$0xff]
    %v6331 = vld [vmem:[#allocation3 + $0xa8] sm:$0xff]
    %v6332 = vld [vmem:[#allocation3 + $0xb0] sm:$0xff]
    %v6333 = vld [vmem:[#allocation3 + $0xb8] sm:$0xff]
    %v6334 = vld [vmem:[#allocation3 + $0xc0] sm:$0xff]
    %v6335 = vld [vmem:[#allocation3 + $0xc8] sm:$0xff]
    %v6336 = vld [vmem:[#allocation3 + $0xd0] sm:$0xff]
    %v6337 = vld [vmem:[#allocation3 + $0xd8] sm:$0xff]
    %v6338 = vld [vmem:[#allocation3 + $0xe0] sm:$0xff]
    %v6339 = vld [vmem:[#allocation3 + $0xe8] sm:$0xff]
    %v6340 = vld [vmem:[#allocation3 + $0xf0] sm:$0xff]
    %v6341 = vld [vmem:[#allocation3 + $0xf8] sm:$0xff]
    %v6342 = vld [vmem:[#allocation3 + $0x100] sm:$0xff]
    %v6343 = vld [vmem:[#allocation3 + $0x108] sm:$0xff]
    %v6344 = vld [vmem:[#allocation3 + $0x110] sm:$0xff]
    %v6345 = vld [vmem:[#allocation3 + $0x118] sm:$0xff]
    %v6346 = vld [vmem:[#allocation3 + $0x120] sm:$0xff]
    %v6347 = vld [vmem:[#allocation3 + $0x128] sm:$0xff]
    %v6348 = vld [vmem:[#allocation3 + $0x130] sm:$0xff]
    %v6349 = vld [vmem:[#allocation3 + $0x138] sm:$0xff]
    %v6350 = vld [vmem:[#allocation3 + $0x140] sm:$0xff]
    %v6351 = vld [vmem:[#allocation3 + $0x148] sm:$0xff]
    %v6352 = vld [vmem:[#allocation3 + $0x150] sm:$0xff]
    %v6353 = vld [vmem:[#allocation3 + $0x158] sm:$0xff]
    %v6354 = vld [vmem:[#allocation3 + $0x160] sm:$0xff]
    %v6355 = vld [vmem:[#allocation3 + $0x168] sm:$0xff]
    %v6356 = vld [vmem:[#allocation3 + $0x170] sm:$0xff]
    %v6357 = vld [vmem:[#allocation3 + $0x178] sm:$0xff]
    %v6359 = vsel %vm73, %v6300, 0
    %v6362 = vsel %vm73, %v6303, 0
    %v6365 = vsel %vm73, %v6306, 0
    %v6368 = vsel %vm73, %v6309, 0
    %v6371 = vsel %vm73, %v6312, 0
    %v6374 = vsel %vm73, %v6315, 0
    %v6377 = vsel %vm73, %v6318, 0
    %v6380 = vsel %vm73, %v6321, 0
    %v6383 = vsel %vm73, %v6324, 0
    %v6386 = vsel %vm73, %v6327, 0
    %v6389 = vsel %vm73, %v6330, 0
    %v6392 = vsel %vm73, %v6333, 0
    %v6395 = vsel %vm73, %v6336, 0
    %v6398 = vsel %vm73, %v6339, 0
    %v6401 = vsel %vm73, %v6342, 0
    %v6404 = vsel %vm73, %v6345, 0
    %v6407 = vsel %vm73, %v6348, 0
    %v6410 = vsel %vm73, %v6351, 0
    %v6413 = vsel %vm73, %v6354, 0
    %v6416 = vsel %vm73, %v6357, 0
    %6418 = vmatpush.xpose.msra.mxu0 %v6355
    %6419 = vmatpush.xpose.msra.mxu0 %v6352
    %6420 = vmatpush.xpose.msra.mxu0 %v6349
    %6421 = vmatpush.xpose.msra.mxu0 %v6346
    %6422 = vmatpush.xpose.msra.mxu0 %v6343
    %6423 = vmatpush.xpose.msra.mxu0 %v6340
    %6424 = vmatpush.xpose.msra.mxu0 %v6337
    %6425 = vmatpush.xpose.msra.mxu0 %v6334
    %6426 = vmatpush.xpose.msra.mxu0 %v6331
    %6427 = vmatpush.xpose.msra.mxu0 %v6328
    %6428 = vmatpush.xpose.msra.mxu0 %v6325
    %6429 = vmatpush.xpose.msra.mxu0 %v6322
    %6430 = vmatpush.xpose.msra.mxu0 %v6319
    %6431 = vmatpush.xpose.msra.mxu0 %v6316
    %6432 = vmatpush.xpose.msra.mxu0 %v6313
    %6433 = vmatpush.xpose.msra.mxu0 %v6310
    %6434 = vmatmul.f32.gmra.mxu0 %v6298
    %v6435 = vpop.f32.mrf.mxu0
    %v6436 = vadd.f32 %v1149, %v6435
    %6437 = vmatmul.f32.gmra.mxu0 %v6301
    %v6438 = vpop.f32.mrf.mxu0
    %v6439 = vadd.f32 %v1152, %v6438
    %6440 = vmatmul.f32.gmra.mxu0 %v6304
    %v6441 = vpop.f32.mrf.mxu0
    %v6442 = vadd.f32 %v1155, %v6441
    %6443 = vmatmul.f32.gmra.mxu0 %v6307
    %v6444 = vpop.f32.mrf.mxu0
    %v6445 = vadd.f32 %v1158, %v6444
    %6446 = vdwg.mxu0
    %6447 = vmatpush.xpose.msra.mxu0 %v6356
    %6448 = vmatpush.xpose.msra.mxu0 %v6353
    %6449 = vmatpush.xpose.msra.mxu0 %v6350
    %6450 = vmatpush.xpose.msra.mxu0 %v6347
    %6451 = vmatpush.xpose.msra.mxu0 %v6344
    %6452 = vmatpush.xpose.msra.mxu0 %v6341
    %6453 = vmatpush.xpose.msra.mxu0 %v6338
    %6454 = vmatpush.xpose.msra.mxu0 %v6335
    %6455 = vmatpush.xpose.msra.mxu0 %v6332
    %6456 = vmatpush.xpose.msra.mxu0 %v6329
    %6457 = vmatpush.xpose.msra.mxu0 %v6326
    %6458 = vmatpush.xpose.msra.mxu0 %v6323
    %6459 = vmatpush.xpose.msra.mxu0 %v6320
    %6460 = vmatpush.xpose.msra.mxu0 %v6317
    %6461 = vmatpush.xpose.msra.mxu0 %v6314
    %6462 = vmatpush.xpose.msra.mxu0 %v6311
    %6463 = vmatmul.f32.gmra.mxu0 %v6299
    %v6464 = vpop.f32.mrf.mxu0
    %v6465 = vadd.f32 %v6436, %v6464
    %6466 = vmatmul.f32.gmra.mxu0 %v6302
    %v6467 = vpop.f32.mrf.mxu0
    %v6468 = vadd.f32 %v6439, %v6467
    %6469 = vmatmul.f32.gmra.mxu0 %v6305
    %v6470 = vpop.f32.mrf.mxu0
    %v6471 = vadd.f32 %v6442, %v6470
    %6472 = vmatmul.f32.gmra.mxu0 %v6308
    %v6473 = vpop.f32.mrf.mxu0
    %v6474 = vadd.f32 %v6445, %v6473
    %6475 = vdwg.mxu0
    %6476 = vmatpush.xpose.msra.mxu0 %v6416
    %6477 = vmatpush.xpose.msra.mxu0 %v6413
    %6478 = vmatpush.xpose.msra.mxu0 %v6410
    %6479 = vmatpush.xpose.msra.mxu0 %v6407
    %6480 = vmatpush.xpose.msra.mxu0 %v6404
    %6481 = vmatpush.xpose.msra.mxu0 %v6401
    %6482 = vmatpush.xpose.msra.mxu0 %v6398
    %6483 = vmatpush.xpose.msra.mxu0 %v6395
    %6484 = vmatpush.xpose.msra.mxu0 %v6392
    %6485 = vmatpush.xpose.msra.mxu0 %v6389
    %6486 = vmatpush.xpose.msra.mxu0 %v6386
    %6487 = vmatpush.xpose.msra.mxu0 %v6383
    %6488 = vmatpush.xpose.msra.mxu0 %v6380
    %6489 = vmatpush.xpose.msra.mxu0 %v6377
    %6490 = vmatpush.xpose.msra.mxu0 %v6374
    %6491 = vmatpush.xpose.msra.mxu0 %v6371
    %6492 = vmatmul.f32.gmra.mxu0 %v6359
    %v6493 = vpop.f32.mrf.mxu0
    %v6494 = vadd.f32 %v6465, %v6493
    %6495 = vmatmul.f32.gmra.mxu0 %v6362
    %v6496 = vpop.f32.mrf.mxu0
    %v6497 = vadd.f32 %v6468, %v6496
    %6498 = vmatmul.f32.gmra.mxu0 %v6365
    %v6499 = vpop.f32.mrf.mxu0
    %v6500 = vadd.f32 %v6471, %v6499
    %6501 = vmatmul.f32.gmra.mxu0 %v6368
    %v6502 = vpop.f32.mrf.mxu0
    %v6503 = vadd.f32 %v6474, %v6502
    %6504 = vdwg.mxu0
    %s6505 = scalar_lea.vmem %s7, 64
    %6506 = vst.msk [vmem:[%s6505] sm:$0xff] %vm4379, %v6494
    %6507 = vst.msk [vmem:[%s6505 + $0x8] sm:$0xff] %vm4379, %v6497
    %6508 = vst.msk [vmem:[%s6505 + $0x10] sm:$0xff] %vm4379, %v6500
    %6509 = vst.msk [vmem:[%s6505 + $0x18] sm:$0xff] %vm4379, %v6503
    %6514 = vrot.lane.b32.xlu0 %v6494, 64
    %v6515 = vpop.permute.xlu0 %6514
    %6516 = vrot.lane.b32.xlu0 %v6497, 64
    %v6517 = vpop.permute.xlu0 %6516
    %6518 = vrot.lane.b32.xlu0 %v6500, 64
    %v6519 = vpop.permute.xlu0 %6518
    %6520 = vrot.lane.b32.xlu0 %v6503, 64
    %v6521 = vpop.permute.xlu0 %6520
    %s6526 = scalar_lea.vmem %s7, 96
    %6527 = vst.msk [vmem:[%s6526] sm:$0xff] %vm4379, %v6515
    %6528 = vst.msk [vmem:[%s6526 + $0x8] sm:$0xff] %vm4379, %v6517
    %6529 = vst.msk [vmem:[%s6526 + $0x10] sm:$0xff] %vm4379, %v6519
    %6530 = vst.msk [vmem:[%s6526 + $0x18] sm:$0xff] %vm4379, %v6521
    // Predicated region
    $region42: #{monkey_forward.1} parent=1 // pred_check
      _
    $region43: #{monkey_forward.1} parent=1 // pred_check_branch
      %6532 = sbr.rel (0) target = $region45
    $region44: #{monkey_forward.1} parent=1 // pred_region
      _
    $region45: #{monkey_forward.1} parent=1 // pred_fallthru
      _
    // Predicated region
    $region46: #{monkey_forward.1} parent=1 // pred_check
      _
    $region47: #{monkey_forward.1} parent=1 // pred_check_branch
      %6534 = sbr.rel (0) target = $region49
    $region48: #{monkey_forward.1} parent=1 // pred_region
      _
    $region49: #{monkey_forward.1} parent=1 // pred_fallthru
      _
    %6535 = vsyncpa [#allocation5], 1
    %6536 = vsyncpa [#allocation7], 1

</llo_original>
